<compile_context>
chip_gen: v7x
topology: tpu7x:2x2x1
jax: 0.10.0
libtpu: 0.0.40
codegen_flags: <defaults>
</compile_context>

<pallas_src>
import functools

import jax
import jax.numpy as jnp
import numpy as np
from jax.experimental import pallas as pl
from jax.experimental.pallas import tpu as pltpu

LEAKY_SLOPE = 0.2


def _leaky(v):
    return jnp.where(v >= 0, v, LEAKY_SLOPE * v)


# ---------------------------------------------------------------------------
# Pallas kernel 1: lane-dense transposed conv GEMM, out(Cout, M) = leaky(W^T @ P)
# ---------------------------------------------------------------------------
def _convT_leaky_kernel(wt_ref, p_ref, o_ref):
    acc = jnp.dot(wt_ref[...], p_ref[...], preferred_element_type=jnp.float32)
    o_ref[...] = _leaky(acc)


def convT_leaky(wt, patches):
    """out(Cout, M) = LeakyReLU(wt(Cout,K) @ patches(K,M)); f32 in/out.

    M = N*OH*OW sits on the 128-lane axis (lane-dense stores).  No grid: the
    whole GEMM is a single VMEM-resident block (review: remove M tiling)."""
    Cout, K = wt.shape
    K2, M = patches.shape
    assert K == K2
    return pl.pallas_call(
        _convT_leaky_kernel,
        out_shape=jax.ShapeDtypeStruct((Cout, M), jnp.float32),
    )(wt, patches)


# ---------------------------------------------------------------------------
# Pallas kernel 2: fused tail -- conv5 + LeakyReLU + head 3x3 conv (+ bias) +
# LeakyReLU + head 4x4 valid conv + (optional) sigmoid.  Entirely VMEM-resident.
#
# Layout inside the kernel:
#   h5   : (4*N*4, 128)  rows ordered (x, n, y)          [conv5 output]
#   h2   : (N*4, 4*128)  rows (n, y), cols (x, ci)       [head-conv layout]
#   s    : (N*4, 3*512)  dy-stacked operand for the single banded contraction
# ---------------------------------------------------------------------------
def _tail_kernel(p5_ref, w5_ref, wband_ref, bvec_ref, w2t_ref, g_ref, o_ref,
                 h2_ref, s_ref, *, batch, use_sigmoid):
    C = w5_ref.shape[1]            # ndf*16 = 128
    W = 4 * C                      # x (4 positions) * channels

    # conv5 (k4 s2 p1, im2col'd in the wrapper; rows ordered (x, n, y)) + LeakyReLU.
    h5 = _leaky(jnp.dot(p5_ref[...], w5_ref[...],
                        preferred_element_type=jnp.float32))      # (16*N, C)

    # Re-pack into (row=(n,y), col=(x,ci)) with 4 static lane-block copies.
    for x in range(4):
        h2_ref[:, x * C:(x + 1) * C] = h5[x * 4 * batch:(x + 1) * 4 * batch, :]

    # Head 3x3 pad-1 conv as ONE K=3*512 contraction against a banded weight
    # (x-shifts folded into wband at pack time); y-shifts are slice copies.
    s_ref[...] = jnp.zeros_like(s_ref)
    for n in range(batch):
        r = n * 4
        s_ref[r:r + 4, W:2 * W] = h2_ref[r:r + 4, :]            # dy = 1 (no shift)
        s_ref[r + 1:r + 4, 0:W] = h2_ref[r:r + 3, :]            # dy = 0 (reads y-1)
        s_ref[r:r + 3, 2 * W:3 * W] = h2_ref[r + 1:r + 4, :]    # dy = 2 (reads y+1)
    h1 = jnp.dot(s_ref[...], wband_ref[...],
                 preferred_element_type=jnp.float32) + bvec_ref[...]
    h1 = _leaky(h1)                                             # (4*N, 512)

    # Head 4x4 valid conv (bias=False) on the 4x4 map == per-image reduction.
    prod = h1 * w2t_ref[...]                                    # VPU
    rowsum = jnp.sum(prod, axis=-1, keepdims=True)              # (4*N, 1), XLU
    out = jnp.dot(g_ref[...], rowsum, preferred_element_type=jnp.float32)  # (N, 1)
    if use_sigmoid:
        out = jax.nn.sigmoid(out)
    o_ref[...] = out


def tail_head(p5, w5, wband, bvec, w2t, g, *, batch, use_sigmoid):
    c5 = w5.shape[1]
    return pl.pallas_call(
        functools.partial(_tail_kernel, batch=batch, use_sigmoid=use_sigmoid),
        out_shape=jax.ShapeDtypeStruct((batch, 1), jnp.float32),
        scratch_shapes=[
            pltpu.VMEM((4 * batch, 4 * c5), jnp.float32),    # h2
            pltpu.VMEM((4 * batch, 12 * c5), jnp.float32),   # dy-stacked operand
        ],
    )(p5, w5, wband, bvec, w2t, g)


# ---------------------------------------------------------------------------
# XLA-side glue: transposed im2col, patches are (K, M) with M = N*OH*OW on lanes.
# TODO(synk): stride-2 window gather kept in XLA (no robust lane-strided
# in-kernel load); this is the one piece blocking full single-kernel fusion.
# ---------------------------------------------------------------------------
def _im2col_T(a, k, stride, pad):
    """a: (C, N, H, W) -> (k*k*C, N*OH*OW); row order (ky, kx, ci), cols (n, oy, ox)."""
    C, N, H, W = a.shape
    ap = jnp.pad(a, ((0, 0), (0, 0), (pad, pad), (pad, pad)))
    OH = (H + 2 * pad - k) // stride + 1
    OW = (W + 2 * pad - k) // stride + 1
    taps = [ap[:, :, ky:ky + stride * OH:stride, kx:kx + stride * OW:stride]
            for ky in range(k) for kx in range(k)]
    p = jnp.stack(taps, axis=0)                    # (k*k, C, N, OH, OW)
    return p.reshape(k * k * C, N * OH * OW), (N, OH, OW)


# ---------------------------------------------------------------------------
# Parameter init (deterministic, synthetic) and packing
# ---------------------------------------------------------------------------
def init_params(key, image_c=1, ndf=8):
    keys = jax.random.split(key, 8)

    def w(k, kh, kw, cin, cout):
        return jax.random.normal(k, (kh, kw, cin, cout), jnp.float32) * 0.05

    chans = [image_c, ndf, ndf * 2, ndf * 4, ndf * 8, ndf * 16]
    return {
        "main": [w(keys[i], 4, 4, chans[i], chans[i + 1]) for i in range(5)],
        # Discriminator_head(1, ndf): Conv2d(ndf*16, ndf*16, 3,1,1) has bias.
        "head0_w1": w(keys[5], 3, 3, ndf * 16, ndf * 16),
        "head0_b1": jax.random.normal(keys[6], (ndf * 16,), jnp.float32) * 0.05,
        # Conv2d(ndf*16, 1, 4, bias=False)
        "head0_w2": w(keys[7], 4, 4, ndf * 16, 1),
    }


def pack_params(params, batch):
    """Flatten / transpose weights once; build the banded head-conv matrix and
    the tiny constant operands used by the fused tail kernel."""
    c5 = params["head0_w1"].shape[-1]              # ndf * 16
    packed = {}
    # main convs 1..4: W^T (Cout, K); K row order (ky, kx, ci).
    packed["mainT"] = [jnp.asarray(w.reshape(-1, w.shape[-1]).T, jnp.float32)
                       for w in params["main"][:4]]
    # conv5 consumed by the tail kernel in (K, Cout) form.
    packed["w5"] = jnp.asarray(params["main"][4].reshape(-1, c5), jnp.float32)

    # Banded weight for the head 3x3 pad-1 conv in (row=(n,y), col=(x,ci)) layout:
    # wband[dy*4c5 + x_in*c5 + ci, x_out*c5 + co] = W1[dy, x_in-x_out+1, ci, co].
    w1 = np.asarray(params["head0_w1"], np.float32)           # (3,3,c5,c5) HWIO
    wband = np.zeros((3 * 4 * c5, 4 * c5), np.float32)
    for dy in range(3):
        for x_out in range(4):
            for dx in range(3):
                x_in = x_out + dx - 1
                if 0 <= x_in < 4:
                    wband[dy * 4 * c5 + x_in * c5:dy * 4 * c5 + (x_in + 1) * c5,
                          x_out * c5:(x_out + 1) * c5] = w1[dy, dx]
    packed["wband"] = jnp.asarray(wband)                       # (1536, 512)

    b1 = np.asarray(params["head0_b1"], np.float32)
    packed["bvec"] = jnp.asarray(np.tile(b1, 4).reshape(1, 4 * c5))   # (1, 512)

    # Head 4x4 valid-conv weight in (y, (x,ci)) layout, tiled over the batch.
    w2 = np.asarray(params["head0_w2"], np.float32)[..., 0]    # (4,4,c5)
    w2l = w2.reshape(4, 4 * c5)
    packed["w2t"] = jnp.asarray(np.tile(w2l, (batch, 1)))      # (4*batch, 512)

    # Per-image pooling matrix for the final scalar output.
    g = np.zeros((batch, 4 * batch), np.float32)
    for n in range(batch):
        g[n, n * 4:(n + 1) * 4] = 1.0
    packed["g"] = jnp.asarray(g)
    return packed


# ---------------------------------------------------------------------------
# Forward passes
# ---------------------------------------------------------------------------
def discriminator_forward(x_nchw, packed, *, batch, use_sigmoid):
    """Pallas-backed forward.  Returns [out.view(-1)] like the PyTorch module."""
    N, _, H, W = x_nchw.shape
    # Fail loudly on shapes the packed tail constants were not built for.
    assert (N, H, W) == (batch, 128, 128), (N, H, W)
    a = jnp.transpose(x_nchw, (1, 0, 2, 3)).astype(jnp.float32)   # (C, N, H, W)
    for wt in packed["mainT"]:                                    # convs 1..4
        p, (n, oh, ow) = _im2col_T(a, 4, 2, 1)
        out = convT_leaky(wt, p)                                  # (Cout, N*OH*OW)
        a = out.reshape(out.shape[0], n, oh, ow)
    # conv5 patches, rows re-ordered to (x, n, y) so the tail kernel can re-pack
    # h5 into the head's (row=(n,y), col=(x,ci)) layout with plain block copies.
    p5t, (n, oh, ow) = _im2col_T(a, 4, 2, 1)                      # (1024, N*16)
    k5 = p5t.shape[0]
    p5 = (p5t.T.reshape(n, oh, ow, k5)
          .transpose(2, 0, 1, 3).reshape(n * oh * ow, k5))        # (N*16, 1024)
    out = tail_head(p5, packed["w5"], packed["wband"], packed["bvec"],
                    packed["w2t"], packed["g"],
                    batch=batch, use_sigmoid=use_sigmoid)         # (N, 1)
    # PyTorch: output.view(-1, n_class) then out.view(-1)
    return [out.reshape(-1)]


def reference_forward(x_nchw, params, head_cfg):
    """Pure-JAX reference (lax.conv, f32, HIGHEST) for correctness checking."""
    dn = ("NHWC", "HWIO", "NHWC")

    def conv(h, w, stride, pad):
        return jax.lax.conv_general_dilated(
            h, w, (stride, stride), [(pad, pad), (pad, pad)],
            dimension_numbers=dn, precision=jax.lax.Precision.HIGHEST)

    h = jnp.transpose(x_nchw, (0, 2, 3, 1))
    for w in params["main"]:
        h = _leaky(conv(h, w, 2, 1))
    h0 = _leaky(conv(h, params["head0_w1"], 1, 1) + params["head0_b1"])
    out0 = conv(h0, params["head0_w2"], 1, 0)
    if head_cfg[0]:
        out0 = jax.nn.sigmoid(out0)
    return [out0.reshape(-1)]


if __name__ == "__main__":
    key = jax.random.PRNGKey(0)
    kx, kp = jax.random.split(key)

    head_cfg = [1]          # len(head)==1 branch; head[0] truthy -> sigmoid on output
    image_c, ndf, batch = 1, 8, 2
    # NCHW input (PyTorch convention); 128x128 so the 4x4 head conv is valid.
    x = jax.random.normal(kx, (batch, image_c, 128, 128), jnp.float32)
    params = init_params(kp, image_c=image_c, ndf=ndf)
    packed = pack_params(params, batch=batch)

    fwd = jax.jit(functools.partial(discriminator_forward, batch=batch,
                                    use_sigmoid=bool(head_cfg[0])))
    outs = fwd(x, packed)
    outs = [jax.block_until_ready(o) for o in outs]

    refs = reference_forward(x, params, head_cfg)
    for o, r in zip(outs, refs):
        assert o.shape == r.shape, (o.shape, r.shape)
        np.testing.assert_allclose(np.asarray(o, np.float32),
                                   np.asarray(r, np.float32),
                                   rtol=1e-3, atol=1e-3)

    print("KERNEL_OK")
</pallas_src>

<mosaic_0001>
module attributes {stable_mosaic.version = 11 : i64} {
  func.func @_convT_leaky_kernel(%arg0: memref<8x16xf32, #tpu.memory_space<vmem>>, %arg1: memref<16x8192xf32, #tpu.memory_space<vmem>>, %arg2: memref<8x8192xf32, #tpu.memory_space<vmem>>) attributes {dimension_semantics = [], scalar_prefetch = 0 : i64, scratch_operands = 0 : i64, tpu.core_type = #tpu.core_type<tc>} {
    %c0 = arith.constant 0 : index
    %c0_0 = arith.constant 0 : index
    %0 = vector.load %arg0[%c0, %c0_0] : memref<8x16xf32, #tpu.memory_space<vmem>>, vector<8x16xf32>
    %c0_1 = arith.constant 0 : index
    %c0_2 = arith.constant 0 : index
    %1 = vector.load %arg1[%c0_1, %c0_2] : memref<16x8192xf32, #tpu.memory_space<vmem>>, vector<16x8192xf32>
    %cst = arith.constant dense<0.000000e+00> : vector<8x8192xf32>
    %2 = tpu.matmul %0, %1, %cst {dimension_numbers = #tpu.dot_dimension_numbers<[1], [0], [0], [1], [0, 0, 1, 1], [], []>} : vector<8x16xf32>, vector<16x8192xf32>, vector<8x8192xf32> -> vector<8x8192xf32>
    %cst_3 = arith.constant 0.000000e+00 : f32
    %3 = vector.broadcast %cst_3 : f32 to vector<8x8192xf32>
    %4 = arith.cmpf oge, %2, %3 : vector<8x8192xf32>
    %cst_4 = arith.constant 2.000000e-01 : f32
    %5 = vector.broadcast %cst_4 : f32 to vector<8x8192xf32>
    %6 = arith.mulf %5, %2 : vector<8x8192xf32>
    %7 = arith.select %4, %2, %6 : vector<8x8192xi1>, vector<8x8192xf32>
    %c0_5 = arith.constant 0 : index
    %c0_6 = arith.constant 0 : index
    %8 = vector.load %arg2[%c0_5, %c0_6] : memref<8x8192xf32, #tpu.memory_space<vmem>>, vector<8x8192xf32>
    tpu.vector_store %arg2[%c0_5, %c0_6], %7 {strides = array<i32>} : memref<8x8192xf32, #tpu.memory_space<vmem>>, vector<8x8192xf32>,
    return
  }
}

module attributes {stable_mosaic.version = 11 : i64} {
  func.func @_convT_leaky_kernel(%arg0: memref<16x128xf32, #tpu.memory_space<vmem>>, %arg1: memref<128x2048xf32, #tpu.memory_space<vmem>>, %arg2: memref<16x2048xf32, #tpu.memory_space<vmem>>) attributes {dimension_semantics = [], scalar_prefetch = 0 : i64, scratch_operands = 0 : i64, tpu.core_type = #tpu.core_type<tc>} {
    %c0 = arith.constant 0 : index
    %c0_0 = arith.constant 0 : index
    %0 = vector.load %arg0[%c0, %c0_0] : memref<16x128xf32, #tpu.memory_space<vmem>>, vector<16x128xf32>
    %c0_1 = arith.constant 0 : index
    %c0_2 = arith.constant 0 : index
    %1 = vector.load %arg1[%c0_1, %c0_2] : memref<128x2048xf32, #tpu.memory_space<vmem>>, vector<128x2048xf32>
    %cst = arith.constant dense<0.000000e+00> : vector<16x2048xf32>
    %2 = tpu.matmul %0, %1, %cst {dimension_numbers = #tpu.dot_dimension_numbers<[1], [0], [0], [1], [0, 0, 1, 1], [], []>} : vector<16x128xf32>, vector<128x2048xf32>, vector<16x2048xf32> -> vector<16x2048xf32>
    %cst_3 = arith.constant 0.000000e+00 : f32
    %3 = vector.broadcast %cst_3 : f32 to vector<16x2048xf32>
    %4 = arith.cmpf oge, %2, %3 : vector<16x2048xf32>
    %cst_4 = arith.constant 2.000000e-01 : f32
    %5 = vector.broadcast %cst_4 : f32 to vector<16x2048xf32>
    %6 = arith.mulf %5, %2 : vector<16x2048xf32>
    %7 = arith.select %4, %2, %6 : vector<16x2048xi1>, vector<16x2048xf32>
    %c0_5 = arith.constant 0 : index
    %c0_6 = arith.constant 0 : index
    %8 = vector.load %arg2[%c0_5, %c0_6] : memref<16x2048xf32, #tpu.memory_space<vmem>>, vector<16x2048xf32>
    tpu.vector_store %arg2[%c0_5, %c0_6], %7 {strides = array<i32>} : memref<16x2048xf32, #tpu.memory_space<vmem>>, vector<16x2048xf32>,
    return
  }
}

module attributes {stable_mosaic.version = 11 : i64} {
  func.func @_convT_leaky_kernel(%arg0: memref<32x256xf32, #tpu.memory_space<vmem>>, %arg1: memref<256x512xf32, #tpu.memory_space<vmem>>, %arg2: memref<32x512xf32, #tpu.memory_space<vmem>>) attributes {dimension_semantics = [], scalar_prefetch = 0 : i64, scratch_operands = 0 : i64, tpu.core_type = #tpu.core_type<tc>} {
    %c0 = arith.constant 0 : index
    %c0_0 = arith.constant 0 : index
    %0 = vector.load %arg0[%c0, %c0_0] : memref<32x256xf32, #tpu.memory_space<vmem>>, vector<32x256xf32>
    %c0_1 = arith.constant 0 : index
    %c0_2 = arith.constant 0 : index
    %1 = vector.load %arg1[%c0_1, %c0_2] : memref<256x512xf32, #tpu.memory_space<vmem>>, vector<256x512xf32>
    %cst = arith.constant dense<0.000000e+00> : vector<32x512xf32>
    %2 = tpu.matmul %0, %1, %cst {dimension_numbers = #tpu.dot_dimension_numbers<[1], [0], [0], [1], [0, 0, 1, 1], [], []>} : vector<32x256xf32>, vector<256x512xf32>, vector<32x512xf32> -> vector<32x512xf32>
    %cst_3 = arith.constant 0.000000e+00 : f32
    %3 = vector.broadcast %cst_3 : f32 to vector<32x512xf32>
    %4 = arith.cmpf oge, %2, %3 : vector<32x512xf32>
    %cst_4 = arith.constant 2.000000e-01 : f32
    %5 = vector.broadcast %cst_4 : f32 to vector<32x512xf32>
    %6 = arith.mulf %5, %2 : vector<32x512xf32>
    %7 = arith.select %4, %2, %6 : vector<32x512xi1>, vector<32x512xf32>
    %c0_5 = arith.constant 0 : index
    %c0_6 = arith.constant 0 : index
    %8 = vector.load %arg2[%c0_5, %c0_6] : memref<32x512xf32, #tpu.memory_space<vmem>>, vector<32x512xf32>
    tpu.vector_store %arg2[%c0_5, %c0_6], %7 {strides = array<i32>} : memref<32x512xf32, #tpu.memory_space<vmem>>, vector<32x512xf32>,
    return
  }
}

module attributes {stable_mosaic.version = 11 : i64} {
  func.func @_convT_leaky_kernel(%arg0: memref<64x512xf32, #tpu.memory_space<vmem>>, %arg1: memref<512x128xf32, #tpu.memory_space<vmem>>, %arg2: memref<64x128xf32, #tpu.memory_space<vmem>>) attributes {dimension_semantics = [], scalar_prefetch = 0 : i64, scratch_operands = 0 : i64, tpu.core_type = #tpu.core_type<tc>} {
    %c0 = arith.constant 0 : index
    %c0_0 = arith.constant 0 : index
    %0 = vector.load %arg0[%c0, %c0_0] : memref<64x512xf32, #tpu.memory_space<vmem>>, vector<64x512xf32>
    %c0_1 = arith.constant 0 : index
    %c0_2 = arith.constant 0 : index
    %1 = vector.load %arg1[%c0_1, %c0_2] : memref<512x128xf32, #tpu.memory_space<vmem>>, vector<512x128xf32>
    %cst = arith.constant dense<0.000000e+00> : vector<64x128xf32>
    %2 = tpu.matmul %0, %1, %cst {dimension_numbers = #tpu.dot_dimension_numbers<[1], [0], [0], [1], [0, 0, 1, 1], [], []>} : vector<64x512xf32>, vector<512x128xf32>, vector<64x128xf32> -> vector<64x128xf32>
    %cst_3 = arith.constant 0.000000e+00 : f32
    %3 = vector.broadcast %cst_3 : f32 to vector<64x128xf32>
    %4 = arith.cmpf oge, %2, %3 : vector<64x128xf32>
    %cst_4 = arith.constant 2.000000e-01 : f32
    %5 = vector.broadcast %cst_4 : f32 to vector<64x128xf32>
    %6 = arith.mulf %5, %2 : vector<64x128xf32>
    %7 = arith.select %4, %2, %6 : vector<64x128xi1>, vector<64x128xf32>
    %c0_5 = arith.constant 0 : index
    %c0_6 = arith.constant 0 : index
    %8 = vector.load %arg2[%c0_5, %c0_6] : memref<64x128xf32, #tpu.memory_space<vmem>>, vector<64x128xf32>
    tpu.vector_store %arg2[%c0_5, %c0_6], %7 {strides = array<i32>} : memref<64x128xf32, #tpu.memory_space<vmem>>, vector<64x128xf32>,
    return
  }
}

module attributes {stable_mosaic.version = 11 : i64} {
  func.func @_tail_kernel(%arg0: memref<32x1024xf32, #tpu.memory_space<vmem>>, %arg1: memref<1024x128xf32, #tpu.memory_space<vmem>>, %arg2: memref<1536x512xf32, #tpu.memory_space<vmem>>, %arg3: memref<1x512xf32, #tpu.memory_space<vmem>>, %arg4: memref<8x512xf32, #tpu.memory_space<vmem>>, %arg5: memref<2x8xf32, #tpu.memory_space<vmem>>, %arg6: memref<2x1xf32, #tpu.memory_space<vmem>>, %arg7: memref<8x512xf32, #tpu.memory_space<vmem>>, %arg8: memref<8x1536xf32, #tpu.memory_space<vmem>>) attributes {dimension_semantics = [], scalar_prefetch = 0 : i64, scratch_operands = 2 : i64, tpu.core_type = #tpu.core_type<tc>} {
    %c0 = arith.constant 0 : index
    %c0_0 = arith.constant 0 : index
    %0 = vector.load %arg0[%c0, %c0_0] : memref<32x1024xf32, #tpu.memory_space<vmem>>, vector<32x1024xf32>
    %c0_1 = arith.constant 0 : index
    %c0_2 = arith.constant 0 : index
    %1 = vector.load %arg1[%c0_1, %c0_2] : memref<1024x128xf32, #tpu.memory_space<vmem>>, vector<1024x128xf32>
    %cst = arith.constant dense<0.000000e+00> : vector<32x128xf32>
    %2 = tpu.matmul %0, %1, %cst {dimension_numbers = #tpu.dot_dimension_numbers<[1], [0], [0], [1], [0, 0, 1, 1], [], []>} : vector<32x1024xf32>, vector<1024x128xf32>, vector<32x128xf32> -> vector<32x128xf32>
    %cst_3 = arith.constant 0.000000e+00 : f32
    %3 = vector.broadcast %cst_3 : f32 to vector<32x128xf32>
    %4 = arith.cmpf oge, %2, %3 : vector<32x128xf32>
    %cst_4 = arith.constant 2.000000e-01 : f32
    %5 = vector.broadcast %cst_4 : f32 to vector<32x128xf32>
    %6 = arith.mulf %5, %2 : vector<32x128xf32>
    %7 = arith.select %4, %2, %6 : vector<32x128xi1>, vector<32x128xf32>
    %8 = vector.extract_strided_slice %7 {offsets = [0, 0], sizes = [8, 128], strides = [1, 1]} : vector<32x128xf32> to vector<8x128xf32>
    %c0_5 = arith.constant 0 : index
    %c0_6 = arith.constant 0 : index
    %9 = vector.load %arg7[%c0_5, %c0_6] : memref<8x512xf32, #tpu.memory_space<vmem>>, vector<8x128xf32>
    tpu.vector_store %arg7[%c0_5, %c0_6], %8 {strides = array<i32>} : memref<8x512xf32, #tpu.memory_space<vmem>>, vector<8x128xf32>,
    %10 = vector.extract_strided_slice %7 {offsets = [8, 0], sizes = [8, 128], strides = [1, 1]} : vector<32x128xf32> to vector<8x128xf32>
    %c0_7 = arith.constant 0 : index
    %c128 = arith.constant 128 : index
    %11 = vector.load %arg7[%c0_7, %c128] : memref<8x512xf32, #tpu.memory_space<vmem>>, vector<8x128xf32>
    tpu.vector_store %arg7[%c0_7, %c128], %10 {strides = array<i32>} : memref<8x512xf32, #tpu.memory_space<vmem>>, vector<8x128xf32>,
    %12 = vector.extract_strided_slice %7 {offsets = [16, 0], sizes = [8, 128], strides = [1, 1]} : vector<32x128xf32> to vector<8x128xf32>
    %c0_8 = arith.constant 0 : index
    %c256 = arith.constant 256 : index
    %13 = vector.load %arg7[%c0_8, %c256] : memref<8x512xf32, #tpu.memory_space<vmem>>, vector<8x128xf32>
    tpu.vector_store %arg7[%c0_8, %c256], %12 {strides = array<i32>} : memref<8x512xf32, #tpu.memory_space<vmem>>, vector<8x128xf32>,
    %14 = vector.extract_strided_slice %7 {offsets = [24, 0], sizes = [8, 128], strides = [1, 1]} : vector<32x128xf32> to vector<8x128xf32>
    %c0_9 = arith.constant 0 : index
    %c384 = arith.constant 384 : index
    %15 = vector.load %arg7[%c0_9, %c384] : memref<8x512xf32, #tpu.memory_space<vmem>>, vector<8x128xf32>
    tpu.vector_store %arg7[%c0_9, %c384], %14 {strides = array<i32>} : memref<8x512xf32, #tpu.memory_space<vmem>>, vector<8x128xf32>,
    %cst_10 = arith.constant 0.000000e+00 : f32
    %16 = vector.broadcast %cst_10 : f32 to vector<8x1536xf32>
    %c0_11 = arith.constant 0 : index
    %c0_12 = arith.constant 0 : index
    %17 = vector.load %arg8[%c0_11, %c0_12] : memref<8x1536xf32, #tpu.memory_space<vmem>>, vector<8x1536xf32>
    tpu.vector_store %arg8[%c0_11, %c0_12], %16 {strides = array<i32>} : memref<8x1536xf32, #tpu.memory_space<vmem>>, vector<8x1536xf32>,
    %c0_13 = arith.constant 0 : index
    %c0_14 = arith.constant 0 : index
    %18 = vector.load %arg7[%c0_13, %c0_14] : memref<8x512xf32, #tpu.memory_space<vmem>>, vector<4x512xf32>
    %c0_15 = arith.constant 0 : index
    %c512 = arith.constant 512 : index
    %19 = vector.load %arg8[%c0_15, %c512] : memref<8x1536xf32, #tpu.memory_space<vmem>>, vector<4x512xf32>
    tpu.vector_store %arg8[%c0_15, %c512], %18 {strides = array<i32>} : memref<8x1536xf32, #tpu.memory_space<vmem>>, vector<4x512xf32>,
    %c0_16 = arith.constant 0 : index
    %c0_17 = arith.constant 0 : index
    %20 = vector.load %arg7[%c0_16, %c0_17] : memref<8x512xf32, #tpu.memory_space<vmem>>, vector<3x512xf32>
    %c1 = arith.constant 1 : index
    %c0_18 = arith.constant 0 : index
    %21 = vector.load %arg8[%c1, %c0_18] : memref<8x1536xf32, #tpu.memory_space<vmem>>, vector<3x512xf32>
    tpu.vector_store %arg8[%c1, %c0_18], %20 {strides = array<i32>} : memref<8x1536xf32, #tpu.memory_space<vmem>>, vector<3x512xf32>,
    %c1_19 = arith.constant 1 : index
    %c0_20 = arith.constant 0 : index
    %22 = vector.load %arg7[%c1_19, %c0_20] : memref<8x512xf32, #tpu.memory_space<vmem>>, vector<3x512xf32>
    %c0_21 = arith.constant 0 : index
    %c1024 = arith.constant 1024 : index
    %23 = vector.load %arg8[%c0_21, %c1024] : memref<8x1536xf32, #tpu.memory_space<vmem>>, vector<3x512xf32>
    tpu.vector_store %arg8[%c0_21, %c1024], %22 {strides = array<i32>} : memref<8x1536xf32, #tpu.memory_space<vmem>>, vector<3x512xf32>,
    %c4 = arith.constant 4 : index
    %c0_22 = arith.constant 0 : index
    %24 = vector.load %arg7[%c4, %c0_22] : memref<8x512xf32, #tpu.memory_space<vmem>>, vector<4x512xf32>
    %c4_23 = arith.constant 4 : index
    %c512_24 = arith.constant 512 : index
    %25 = vector.load %arg8[%c4_23, %c512_24] : memref<8x1536xf32, #tpu.memory_space<vmem>>, vector<4x512xf32>
    tpu.vector_store %arg8[%c4_23, %c512_24], %24 {strides = array<i32>} : memref<8x1536xf32, #tpu.memory_space<vmem>>, vector<4x512xf32>,
    %c4_25 = arith.constant 4 : index
    %c0_26 = arith.constant 0 : index
    %26 = vector.load %arg7[%c4_25, %c0_26] : memref<8x512xf32, #tpu.memory_space<vmem>>, vector<3x512xf32>
    %c5 = arith.constant 5 : index
    %c0_27 = arith.constant 0 : index
    %27 = vector.load %arg8[%c5, %c0_27] : memref<8x1536xf32, #tpu.memory_space<vmem>>, vector<3x512xf32>
    tpu.vector_store %arg8[%c5, %c0_27], %26 {strides = array<i32>} : memref<8x1536xf32, #tpu.memory_space<vmem>>, vector<3x512xf32>,
    %c5_28 = arith.constant 5 : index
    %c0_29 = arith.constant 0 : index
    %28 = vector.load %arg7[%c5_28, %c0_29] : memref<8x512xf32, #tpu.memory_space<vmem>>, vector<3x512xf32>
    %c4_30 = arith.constant 4 : index
    %c1024_31 = arith.constant 1024 : index
    %29 = vector.load %arg8[%c4_30, %c1024_31] : memref<8x1536xf32, #tpu.memory_space<vmem>>, vector<3x512xf32>
    tpu.vector_store %arg8[%c4_30, %c1024_31], %28 {strides = array<i32>} : memref<8x1536xf32, #tpu.memory_space<vmem>>, vector<3x512xf32>,
    %c0_32 = arith.constant 0 : index
    %c0_33 = arith.constant 0 : index
    %30 = vector.load %arg8[%c0_32, %c0_33] : memref<8x1536xf32, #tpu.memory_space<vmem>>, vector<8x1536xf32>
    %c0_34 = arith.constant 0 : index
    %c0_35 = arith.constant 0 : index
    %31 = vector.load %arg2[%c0_34, %c0_35] : memref<1536x512xf32, #tpu.memory_space<vmem>>, vector<1536x512xf32>
    %cst_36 = arith.constant dense<0.000000e+00> : vector<8x512xf32>
    %32 = tpu.matmul %30, %31, %cst_36 {dimension_numbers = #tpu.dot_dimension_numbers<[1], [0], [0], [1], [0, 0, 1, 1], [], []>} : vector<8x1536xf32>, vector<1536x512xf32>, vector<8x512xf32> -> vector<8x512xf32>
    %c0_37 = arith.constant 0 : index
    %c0_38 = arith.constant 0 : index
    %33 = vector.load %arg3[%c0_37, %c0_38] : memref<1x512xf32, #tpu.memory_space<vmem>>, vector<1x512xf32>
    %34 = vector.broadcast %33 : vector<1x512xf32> to vector<8x512xf32>
    %35 = arith.addf %32, %34 : vector<8x512xf32>
    %cst_39 = arith.constant 0.000000e+00 : f32
    %36 = vector.broadcast %cst_39 : f32 to vector<8x512xf32>
    %37 = arith.cmpf oge, %35, %36 : vector<8x512xf32>
    %cst_40 = arith.constant 2.000000e-01 : f32
    %38 = vector.broadcast %cst_40 : f32 to vector<8x512xf32>
    %39 = arith.mulf %38, %35 : vector<8x512xf32>
    %40 = arith.select %37, %35, %39 : vector<8x512xi1>, vector<8x512xf32>
    %c0_41 = arith.constant 0 : index
    %c0_42 = arith.constant 0 : index
    %41 = vector.load %arg4[%c0_41, %c0_42] : memref<8x512xf32, #tpu.memory_space<vmem>>, vector<8x512xf32>
    %42 = arith.mulf %40, %41 : vector<8x512xf32>
    %cst_43 = arith.constant dense<0.000000e+00> : vector<8xf32>
    %43 = vector.multi_reduction <add>, %42, %cst_43 [1] : vector<8x512xf32> to vector<8xf32>
    %44 = vector.shape_cast %43 : vector<8xf32> to vector<8x1xf32>
    %c0_44 = arith.constant 0 : index
    %c0_45 = arith.constant 0 : index
    %45 = vector.load %arg5[%c0_44, %c0_45] : memref<2x8xf32, #tpu.memory_space<vmem>>, vector<2x8xf32>
    %cst_46 = arith.constant dense<0.000000e+00> : vector<2x1xf32>
    %46 = tpu.matmul %45, %44, %cst_46 {dimension_numbers = #tpu.dot_dimension_numbers<[1], [0], [0], [1], [0, 0, 1, 1], [], []>} : vector<2x8xf32>, vector<8x1xf32>, vector<2x1xf32> -> vector<2x1xf32>
    %47 = arith.negf %46 : vector<2x1xf32>
    %48 = math.exp %47 : vector<2x1xf32>
    %cst_47 = arith.constant 1.000000e+00 : f32
    %49 = vector.broadcast %cst_47 : f32 to vector<2x1xf32>
    %50 = arith.addf %49, %48 : vector<2x1xf32>
    %51 = arith.divf %49, %50 : vector<2x1xf32>
    %c0_48 = arith.constant 0 : index
    %c0_49 = arith.constant 0 : index
    %52 = vector.load %arg6[%c0_48, %c0_49] : memref<2x1xf32, #tpu.memory_space<vmem>>, vector<2x1xf32>
    tpu.vector_store %arg6[%c0_48, %c0_49], %51 {strides = array<i32>} : memref<2x1xf32, #tpu.memory_space<vmem>>, vector<2x1xf32>,
    return
  }
}

</mosaic_0001>

<llo_original>
// kernel: discriminator_forward.5
$region0: #{discriminator_forward.5}
  #allocation0 [shape = 'u32[]', space=smem, size = 0x4, offset = 0x4, fixed_abs, tag = 'smem constant byte address 0x4 - core index']
  #allocation1 [shape = 'u32[144,128]{1,0:T(1,128)}', space=vmem, size = 0x12000, scoped, tag = 'internal scratch']
  %s0 = inlined_call_operand.vmem [shape: f32[8,16], index: 0, kind: input, shape index: {}]
  %s1 = inlined_call_operand.vmem [shape: f32[16,8192], index: 1, kind: input, shape index: {}]
  %s2 = inlined_call_operand.vmem [shape: f32[8,8192], index: 2, kind: output, shape index: {}]
  %s3 = sld [smem:[#allocation0]]
  $region18: #{discriminator_forward.5} parent=0
    _
  %s5 = ssub.s32 1, %s3
  %s6 = scalar_select 0, %s5, %s3
  // Predicated region
  $region2: #{discriminator_forward.5} parent=0 // pred_check
    _
  $region3: #{discriminator_forward.5} parent=0 // pred_check_branch
    %8 = sbr.rel (0) target = $region5
  $region4: #{discriminator_forward.5} parent=0 // pred_region
    _
  $region5: #{discriminator_forward.5} parent=0 // pred_fallthru
    _
  // Predicated region
  $region6: #{discriminator_forward.5} parent=0 // pred_check
    _
  $region7: #{discriminator_forward.5} parent=0 // pred_check_branch
    %10 = sbr.rel (0) target = $region9
  $region8: #{discriminator_forward.5} parent=0 // pred_region
    _
  $region9: #{discriminator_forward.5} parent=0 // pred_fallthru
    _
  %v11 = vld [vmem:[%s0] sm:$0xff]
  %v12 = vld [vmem:[%s1] sm:$0xff]
  %v13 = vld [vmem:[%s1 + $0x8] sm:$0xff]
  %v14 = vld [vmem:[%s1 + $0x10] sm:$0xff]
  %v15 = vld [vmem:[%s1 + $0x18] sm:$0xff]
  %v16 = vld [vmem:[%s1 + $0x20] sm:$0xff]
  %v17 = vld [vmem:[%s1 + $0x28] sm:$0xff]
  %v18 = vld [vmem:[%s1 + $0x30] sm:$0xff]
  %v19 = vld [vmem:[%s1 + $0x38] sm:$0xff]
  %v20 = vld [vmem:[%s1 + $0x40] sm:$0xff]
  %v21 = vld [vmem:[%s1 + $0x48] sm:$0xff]
  %v22 = vld [vmem:[%s1 + $0x50] sm:$0xff]
  %v23 = vld [vmem:[%s1 + $0x58] sm:$0xff]
  %v24 = vld [vmem:[%s1 + $0x60] sm:$0xff]
  %v25 = vld [vmem:[%s1 + $0x68] sm:$0xff]
  %v26 = vld [vmem:[%s1 + $0x70] sm:$0xff]
  %v27 = vld [vmem:[%s1 + $0x78] sm:$0xff]
  %v28 = vld [vmem:[%s1 + $0x80] sm:$0xff]
  %v29 = vld [vmem:[%s1 + $0x88] sm:$0xff]
  %v30 = vld [vmem:[%s1 + $0x90] sm:$0xff]
  %v31 = vld [vmem:[%s1 + $0x98] sm:$0xff]
  %v32 = vld [vmem:[%s1 + $0xa0] sm:$0xff]
  %v33 = vld [vmem:[%s1 + $0xa8] sm:$0xff]
  %v34 = vld [vmem:[%s1 + $0xb0] sm:$0xff]
  %v35 = vld [vmem:[%s1 + $0xb8] sm:$0xff]
  %v36 = vld [vmem:[%s1 + $0xc0] sm:$0xff]
  %v37 = vld [vmem:[%s1 + $0xc8] sm:$0xff]
  %v38 = vld [vmem:[%s1 + $0xd0] sm:$0xff]
  %v39 = vld [vmem:[%s1 + $0xd8] sm:$0xff]
  %v40 = vld [vmem:[%s1 + $0xe0] sm:$0xff]
  %v41 = vld [vmem:[%s1 + $0xe8] sm:$0xff]
  %v42 = vld [vmem:[%s1 + $0xf0] sm:$0xff]
  %v43 = vld [vmem:[%s1 + $0xf8] sm:$0xff]
  %v44 = vld [vmem:[%s1 + $0x100] sm:$0xff]
  %v45 = vld [vmem:[%s1 + $0x108] sm:$0xff]
  %v46 = vld [vmem:[%s1 + $0x110] sm:$0xff]
  %v47 = vld [vmem:[%s1 + $0x118] sm:$0xff]
  %v48 = vld [vmem:[%s1 + $0x120] sm:$0xff]
  %v49 = vld [vmem:[%s1 + $0x128] sm:$0xff]
  %v50 = vld [vmem:[%s1 + $0x130] sm:$0xff]
  %v51 = vld [vmem:[%s1 + $0x138] sm:$0xff]
  %v52 = vld [vmem:[%s1 + $0x140] sm:$0xff]
  %v53 = vld [vmem:[%s1 + $0x148] sm:$0xff]
  %v54 = vld [vmem:[%s1 + $0x150] sm:$0xff]
  %v55 = vld [vmem:[%s1 + $0x158] sm:$0xff]
  %v56 = vld [vmem:[%s1 + $0x160] sm:$0xff]
  %v57 = vld [vmem:[%s1 + $0x168] sm:$0xff]
  %v58 = vld [vmem:[%s1 + $0x170] sm:$0xff]
  %v59 = vld [vmem:[%s1 + $0x178] sm:$0xff]
  %v60 = vld [vmem:[%s1 + $0x180] sm:$0xff]
  %v61 = vld [vmem:[%s1 + $0x188] sm:$0xff]
  %v62 = vld [vmem:[%s1 + $0x190] sm:$0xff]
  %v63 = vld [vmem:[%s1 + $0x198] sm:$0xff]
  %v64 = vld [vmem:[%s1 + $0x1a0] sm:$0xff]
  %v65 = vld [vmem:[%s1 + $0x1a8] sm:$0xff]
  %v66 = vld [vmem:[%s1 + $0x1b0] sm:$0xff]
  %v67 = vld [vmem:[%s1 + $0x1b8] sm:$0xff]
  %v68 = vld [vmem:[%s1 + $0x1c0] sm:$0xff]
  %v69 = vld [vmem:[%s1 + $0x1c8] sm:$0xff]
  %v70 = vld [vmem:[%s1 + $0x1d0] sm:$0xff]
  %v71 = vld [vmem:[%s1 + $0x1d8] sm:$0xff]
  %v72 = vld [vmem:[%s1 + $0x1e0] sm:$0xff]
  %v73 = vld [vmem:[%s1 + $0x1e8] sm:$0xff]
  %v74 = vld [vmem:[%s1 + $0x1f0] sm:$0xff]
  %v75 = vld [vmem:[%s1 + $0x1f8] sm:$0xff]
  %v76 = vld [vmem:[%s1 + $0x200] sm:$0xff]
  %v77 = vld [vmem:[%s1 + $0x208] sm:$0xff]
  %v78 = vld [vmem:[%s1 + $0x210] sm:$0xff]
  %v79 = vld [vmem:[%s1 + $0x218] sm:$0xff]
  %v80 = vld [vmem:[%s1 + $0x220] sm:$0xff]
  %v81 = vld [vmem:[%s1 + $0x228] sm:$0xff]
  %v82 = vld [vmem:[%s1 + $0x230] sm:$0xff]
  %v83 = vld [vmem:[%s1 + $0x238] sm:$0xff]
  %v84 = vld [vmem:[%s1 + $0x240] sm:$0xff]
  %v85 = vld [vmem:[%s1 + $0x248] sm:$0xff]
  %v86 = vld [vmem:[%s1 + $0x250] sm:$0xff]
  %v87 = vld [vmem:[%s1 + $0x258] sm:$0xff]
  %v88 = vld [vmem:[%s1 + $0x260] sm:$0xff]
  %v89 = vld [vmem:[%s1 + $0x268] sm:$0xff]
  %v90 = vld [vmem:[%s1 + $0x270] sm:$0xff]
  %v91 = vld [vmem:[%s1 + $0x278] sm:$0xff]
  %v92 = vld [vmem:[%s1 + $0x280] sm:$0xff]
  %v93 = vld [vmem:[%s1 + $0x288] sm:$0xff]
  %v94 = vld [vmem:[%s1 + $0x290] sm:$0xff]
  %v95 = vld [vmem:[%s1 + $0x298] sm:$0xff]
  %v96 = vld [vmem:[%s1 + $0x2a0] sm:$0xff]
  %v97 = vld [vmem:[%s1 + $0x2a8] sm:$0xff]
  %v98 = vld [vmem:[%s1 + $0x2b0] sm:$0xff]
  %v99 = vld [vmem:[%s1 + $0x2b8] sm:$0xff]
  %v100 = vld [vmem:[%s1 + $0x2c0] sm:$0xff]
  %v101 = vld [vmem:[%s1 + $0x2c8] sm:$0xff]
  %v102 = vld [vmem:[%s1 + $0x2d0] sm:$0xff]
  %v103 = vld [vmem:[%s1 + $0x2d8] sm:$0xff]
  %v104 = vld [vmem:[%s1 + $0x2e0] sm:$0xff]
  %v105 = vld [vmem:[%s1 + $0x2e8] sm:$0xff]
  %v106 = vld [vmem:[%s1 + $0x2f0] sm:$0xff]
  %v107 = vld [vmem:[%s1 + $0x2f8] sm:$0xff]
  %v108 = vld [vmem:[%s1 + $0x300] sm:$0xff]
  %v109 = vld [vmem:[%s1 + $0x308] sm:$0xff]
  %v110 = vld [vmem:[%s1 + $0x310] sm:$0xff]
  %v111 = vld [vmem:[%s1 + $0x318] sm:$0xff]
  %v112 = vld [vmem:[%s1 + $0x320] sm:$0xff]
  %v113 = vld [vmem:[%s1 + $0x328] sm:$0xff]
  %v114 = vld [vmem:[%s1 + $0x330] sm:$0xff]
  %v115 = vld [vmem:[%s1 + $0x338] sm:$0xff]
  %v116 = vld [vmem:[%s1 + $0x340] sm:$0xff]
  %v117 = vld [vmem:[%s1 + $0x348] sm:$0xff]
  %v118 = vld [vmem:[%s1 + $0x350] sm:$0xff]
  %v119 = vld [vmem:[%s1 + $0x358] sm:$0xff]
  %v120 = vld [vmem:[%s1 + $0x360] sm:$0xff]
  %v121 = vld [vmem:[%s1 + $0x368] sm:$0xff]
  %v122 = vld [vmem:[%s1 + $0x370] sm:$0xff]
  %v123 = vld [vmem:[%s1 + $0x378] sm:$0xff]
  %v124 = vld [vmem:[%s1 + $0x380] sm:$0xff]
  %v125 = vld [vmem:[%s1 + $0x388] sm:$0xff]
  %v126 = vld [vmem:[%s1 + $0x390] sm:$0xff]
  %v127 = vld [vmem:[%s1 + $0x398] sm:$0xff]
  %v128 = vld [vmem:[%s1 + $0x3a0] sm:$0xff]
  %v129 = vld [vmem:[%s1 + $0x3a8] sm:$0xff]
  %v130 = vld [vmem:[%s1 + $0x3b0] sm:$0xff]
  %v131 = vld [vmem:[%s1 + $0x3b8] sm:$0xff]
  %v132 = vld [vmem:[%s1 + $0x3c0] sm:$0xff]
  %v133 = vld [vmem:[%s1 + $0x3c8] sm:$0xff]
  %v134 = vld [vmem:[%s1 + $0x3d0] sm:$0xff]
  %v135 = vld [vmem:[%s1 + $0x3d8] sm:$0xff]
  %v136 = vld [vmem:[%s1 + $0x3e0] sm:$0xff]
  %v137 = vld [vmem:[%s1 + $0x3e8] sm:$0xff]
  %v138 = vld [vmem:[%s1 + $0x3f0] sm:$0xff]
  %v139 = vld [vmem:[%s1 + $0x3f8] sm:$0xff]
  %vm140 = vcmask 130048
  %v142 = vsel %vm140, %v11, 0
  %144 = vmatprep.subr.mxu0 %v13
  %145 = vmatpush1.msra.mxu0 %v12
  %146 = vmatprep.subr.mxu0 %v77
  %147 = vmatpush1.msra.mxu0 %v76
  %148 = vmatprep.subr.mxu0 0.0
  %149 = vmatpush1.msra.mxu0 0.0
  %150 = vmatprep.subr.mxu0 0.0
  %151 = vmatpush1.msra.mxu0 0.0
  %152 = vmatprep.subr.mxu0 0.0
  %153 = vmatpush1.msra.mxu0 0.0
  %154 = vmatprep.subr.mxu0 0.0
  %155 = vmatpush1.msra.mxu0 0.0
  %156 = vmatprep.subr.mxu0 0.0
  %157 = vmatpush1.msra.mxu0 0.0
  %158 = vmatprep.subr.mxu0 0.0
  %159 = vmatpush1.msra.mxu0 0.0
  %160 = vmatprep.subr.mxu0 0.0
  %161 = vmatpush1.msra.mxu0 0.0
  %162 = vmatprep.subr.mxu0 0.0
  %163 = vmatpush1.msra.mxu0 0.0
  %164 = vmatprep.subr.mxu0 0.0
  %165 = vmatpush1.msra.mxu0 0.0
  %166 = vmatprep.subr.mxu0 0.0
  %167 = vmatpush1.msra.mxu0 0.0
  %168 = vmatprep.subr.mxu0 0.0
  %169 = vmatpush1.msra.mxu0 0.0
  %170 = vmatprep.subr.mxu0 0.0
  %171 = vmatpush1.msra.mxu0 0.0
  %172 = vmatprep.subr.mxu0 0.0
  %173 = vmatpush1.msra.mxu0 0.0
  %174 = vmatprep.subr.mxu0 0.0
  %175 = vmatpush1.msra.mxu0 0.0
  %176 = vmatprep.subr.mxu0 0.0
  %177 = vmatpush1.msra.mxu0 0.0
  %178 = vmatprep.subr.mxu0 0.0
  %179 = vmatpush1.msra.mxu0 0.0
  %180 = vmatprep.subr.mxu0 0.0
  %181 = vmatpush1.msra.mxu0 0.0
  %182 = vmatprep.subr.mxu0 0.0
  %183 = vmatpush1.msra.mxu0 0.0
  %184 = vmatprep.subr.mxu0 0.0
  %185 = vmatpush1.msra.mxu0 0.0
  %186 = vmatprep.subr.mxu0 0.0
  %187 = vmatpush1.msra.mxu0 0.0
  %188 = vmatprep.subr.mxu0 0.0
  %189 = vmatpush1.msra.mxu0 0.0
  %190 = vmatprep.subr.mxu0 0.0
  %191 = vmatpush1.msra.mxu0 0.0
  %192 = vmatprep.subr.mxu0 0.0
  %193 = vmatpush1.msra.mxu0 0.0
  %194 = vmatprep.subr.mxu0 0.0
  %195 = vmatpush1.msra.mxu0 0.0
  %196 = vmatprep.subr.mxu0 0.0
  %197 = vmatpush1.msra.mxu0 0.0
  %198 = vmatprep.subr.mxu0 0.0
  %199 = vmatpush1.msra.mxu0 0.0
  %200 = vmatprep.subr.mxu0 0.0
  %201 = vmatpush1.msra.mxu0 0.0
  %202 = vmatprep.subr.mxu0 0.0
  %203 = vmatpush1.msra.mxu0 0.0
  %204 = vmatprep.subr.mxu0 0.0
  %205 = vmatpush1.msra.mxu0 0.0
  %206 = vmatprep.subr.mxu0 0.0
  %207 = vmatpush1.msra.mxu0 0.0
  %208 = vmatprep.mubr.f32.mxu0 0.0
  %209 = vmatmul.mubr.f32.gmra.mrb[0].mxu0 %v142
  %v210 = vpop.f32.mrb[0].mxu0
  %v211 = vadd.f32 0.0, %v210
  %v212 = vpop.f32.mrb[0].mxu0
  %v213 = vadd.f32 0.0, %v212
  %214 = vdwg.mxu0
  %215 = vmatprep.subr.mxu0 %v15
  %216 = vmatpush1.msra.mxu0 %v14
  %217 = vmatprep.subr.mxu0 %v79
  %218 = vmatpush1.msra.mxu0 %v78
  %219 = vmatprep.subr.mxu0 0.0
  %220 = vmatpush1.msra.mxu0 0.0
  %221 = vmatprep.subr.mxu0 0.0
  %222 = vmatpush1.msra.mxu0 0.0
  %223 = vmatprep.subr.mxu0 0.0
  %224 = vmatpush1.msra.mxu0 0.0
  %225 = vmatprep.subr.mxu0 0.0
  %226 = vmatpush1.msra.mxu0 0.0
  %227 = vmatprep.subr.mxu0 0.0
  %228 = vmatpush1.msra.mxu0 0.0
  %229 = vmatprep.subr.mxu0 0.0
  %230 = vmatpush1.msra.mxu0 0.0
  %231 = vmatprep.subr.mxu0 0.0
  %232 = vmatpush1.msra.mxu0 0.0
  %233 = vmatprep.subr.mxu0 0.0
  %234 = vmatpush1.msra.mxu0 0.0
  %235 = vmatprep.subr.mxu0 0.0
  %236 = vmatpush1.msra.mxu0 0.0
  %237 = vmatprep.subr.mxu0 0.0
  %238 = vmatpush1.msra.mxu0 0.0
  %239 = vmatprep.subr.mxu0 0.0
  %240 = vmatpush1.msra.mxu0 0.0
  %241 = vmatprep.subr.mxu0 0.0
  %242 = vmatpush1.msra.mxu0 0.0
  %243 = vmatprep.subr.mxu0 0.0
  %244 = vmatpush1.msra.mxu0 0.0
  %245 = vmatprep.subr.mxu0 0.0
  %246 = vmatpush1.msra.mxu0 0.0
  %247 = vmatprep.subr.mxu0 0.0
  %248 = vmatpush1.msra.mxu0 0.0
  %249 = vmatprep.subr.mxu0 0.0
  %250 = vmatpush1.msra.mxu0 0.0
  %251 = vmatprep.subr.mxu0 0.0
  %252 = vmatpush1.msra.mxu0 0.0
  %253 = vmatprep.subr.mxu0 0.0
  %254 = vmatpush1.msra.mxu0 0.0
  %255 = vmatprep.subr.mxu0 0.0
  %256 = vmatpush1.msra.mxu0 0.0
  %257 = vmatprep.subr.mxu0 0.0
  %258 = vmatpush1.msra.mxu0 0.0
  %259 = vmatprep.subr.mxu0 0.0
  %260 = vmatpush1.msra.mxu0 0.0
  %261 = vmatprep.subr.mxu0 0.0
  %262 = vmatpush1.msra.mxu0 0.0
  %263 = vmatprep.subr.mxu0 0.0
  %264 = vmatpush1.msra.mxu0 0.0
  %265 = vmatprep.subr.mxu0 0.0
  %266 = vmatpush1.msra.mxu0 0.0
  %267 = vmatprep.subr.mxu0 0.0
  %268 = vmatpush1.msra.mxu0 0.0
  %269 = vmatprep.subr.mxu0 0.0
  %270 = vmatpush1.msra.mxu0 0.0
  %271 = vmatprep.subr.mxu0 0.0
  %272 = vmatpush1.msra.mxu0 0.0
  %273 = vmatprep.subr.mxu0 0.0
  %274 = vmatpush1.msra.mxu0 0.0
  %275 = vmatprep.subr.mxu0 0.0
  %276 = vmatpush1.msra.mxu0 0.0
  %277 = vmatprep.subr.mxu0 0.0
  %278 = vmatpush1.msra.mxu0 0.0
  %279 = vmatprep.mubr.f32.mxu0 0.0
  %280 = vmatmul.mubr.f32.gmra.mrb[0].mxu0 %v142
  %v281 = vpop.f32.mrb[0].mxu0
  %v282 = vadd.f32 0.0, %v281
  %v283 = vpop.f32.mrb[0].mxu0
  %v284 = vadd.f32 0.0, %v283
  %285 = vdwg.mxu0
  %286 = vmatprep.subr.mxu0 %v17
  %287 = vmatpush1.msra.mxu0 %v16
  %288 = vmatprep.subr.mxu0 %v81
  %289 = vmatpush1.msra.mxu0 %v80
  %290 = vmatprep.subr.mxu0 0.0
  %291 = vmatpush1.msra.mxu0 0.0
  %292 = vmatprep.subr.mxu0 0.0
  %293 = vmatpush1.msra.mxu0 0.0
  %294 = vmatprep.subr.mxu0 0.0
  %295 = vmatpush1.msra.mxu0 0.0
  %296 = vmatprep.subr.mxu0 0.0
  %297 = vmatpush1.msra.mxu0 0.0
  %298 = vmatprep.subr.mxu0 0.0
  %299 = vmatpush1.msra.mxu0 0.0
  %300 = vmatprep.subr.mxu0 0.0
  %301 = vmatpush1.msra.mxu0 0.0
  %302 = vmatprep.subr.mxu0 0.0
  %303 = vmatpush1.msra.mxu0 0.0
  %304 = vmatprep.subr.mxu0 0.0
  %305 = vmatpush1.msra.mxu0 0.0
  %306 = vmatprep.subr.mxu0 0.0
  %307 = vmatpush1.msra.mxu0 0.0
  %308 = vmatprep.subr.mxu0 0.0
  %309 = vmatpush1.msra.mxu0 0.0
  %310 = vmatprep.subr.mxu0 0.0
  %311 = vmatpush1.msra.mxu0 0.0
  %312 = vmatprep.subr.mxu0 0.0
  %313 = vmatpush1.msra.mxu0 0.0
  %314 = vmatprep.subr.mxu0 0.0
  %315 = vmatpush1.msra.mxu0 0.0
  %316 = vmatprep.subr.mxu0 0.0
  %317 = vmatpush1.msra.mxu0 0.0
  %318 = vmatprep.subr.mxu0 0.0
  %319 = vmatpush1.msra.mxu0 0.0
  %320 = vmatprep.subr.mxu0 0.0
  %321 = vmatpush1.msra.mxu0 0.0
  %322 = vmatprep.subr.mxu0 0.0
  %323 = vmatpush1.msra.mxu0 0.0
  %324 = vmatprep.subr.mxu0 0.0
  %325 = vmatpush1.msra.mxu0 0.0
  %326 = vmatprep.subr.mxu0 0.0
  %327 = vmatpush1.msra.mxu0 0.0
  %328 = vmatprep.subr.mxu0 0.0
  %329 = vmatpush1.msra.mxu0 0.0
  %330 = vmatprep.subr.mxu0 0.0
  %331 = vmatpush1.msra.mxu0 0.0
  %332 = vmatprep.subr.mxu0 0.0
  %333 = vmatpush1.msra.mxu0 0.0
  %334 = vmatprep.subr.mxu0 0.0
  %335 = vmatpush1.msra.mxu0 0.0
  %336 = vmatprep.subr.mxu0 0.0
  %337 = vmatpush1.msra.mxu0 0.0
  %338 = vmatprep.subr.mxu0 0.0
  %339 = vmatpush1.msra.mxu0 0.0
  %340 = vmatprep.subr.mxu0 0.0
  %341 = vmatpush1.msra.mxu0 0.0
  %342 = vmatprep.subr.mxu0 0.0
  %343 = vmatpush1.msra.mxu0 0.0
  %344 = vmatprep.subr.mxu0 0.0
  %345 = vmatpush1.msra.mxu0 0.0
  %346 = vmatprep.subr.mxu0 0.0
  %347 = vmatpush1.msra.mxu0 0.0
  %348 = vmatprep.subr.mxu0 0.0
  %349 = vmatpush1.msra.mxu0 0.0
  %350 = vmatprep.mubr.f32.mxu0 0.0
  %351 = vmatmul.mubr.f32.gmra.mrb[0].mxu0 %v142
  %v352 = vpop.f32.mrb[0].mxu0
  %v353 = vadd.f32 0.0, %v352
  %v354 = vpop.f32.mrb[0].mxu0
  %v355 = vadd.f32 0.0, %v354
  %356 = vdwg.mxu0
  %357 = vmatprep.subr.mxu0 %v19
  %358 = vmatpush1.msra.mxu0 %v18
  %359 = vmatprep.subr.mxu0 %v83
  %360 = vmatpush1.msra.mxu0 %v82
  %361 = vmatprep.subr.mxu0 0.0
  %362 = vmatpush1.msra.mxu0 0.0
  %363 = vmatprep.subr.mxu0 0.0
  %364 = vmatpush1.msra.mxu0 0.0
  %365 = vmatprep.subr.mxu0 0.0
  %366 = vmatpush1.msra.mxu0 0.0
  %367 = vmatprep.subr.mxu0 0.0
  %368 = vmatpush1.msra.mxu0 0.0
  %369 = vmatprep.subr.mxu0 0.0
  %370 = vmatpush1.msra.mxu0 0.0
  %371 = vmatprep.subr.mxu0 0.0
  %372 = vmatpush1.msra.mxu0 0.0
  %373 = vmatprep.subr.mxu0 0.0
  %374 = vmatpush1.msra.mxu0 0.0
  %375 = vmatprep.subr.mxu0 0.0
  %376 = vmatpush1.msra.mxu0 0.0
  %377 = vmatprep.subr.mxu0 0.0
  %378 = vmatpush1.msra.mxu0 0.0
  %379 = vmatprep.subr.mxu0 0.0
  %380 = vmatpush1.msra.mxu0 0.0
  %381 = vmatprep.subr.mxu0 0.0
  %382 = vmatpush1.msra.mxu0 0.0
  %383 = vmatprep.subr.mxu0 0.0
  %384 = vmatpush1.msra.mxu0 0.0
  %385 = vmatprep.subr.mxu0 0.0
  %386 = vmatpush1.msra.mxu0 0.0
  %387 = vmatprep.subr.mxu0 0.0
  %388 = vmatpush1.msra.mxu0 0.0
  %389 = vmatprep.subr.mxu0 0.0
  %390 = vmatpush1.msra.mxu0 0.0
  %391 = vmatprep.subr.mxu0 0.0
  %392 = vmatpush1.msra.mxu0 0.0
  %393 = vmatprep.subr.mxu0 0.0
  %394 = vmatpush1.msra.mxu0 0.0
  %395 = vmatprep.subr.mxu0 0.0
  %396 = vmatpush1.msra.mxu0 0.0
  %397 = vmatprep.subr.mxu0 0.0
  %398 = vmatpush1.msra.mxu0 0.0
  %399 = vmatprep.subr.mxu0 0.0
  %400 = vmatpush1.msra.mxu0 0.0
  %401 = vmatprep.subr.mxu0 0.0
  %402 = vmatpush1.msra.mxu0 0.0
  %403 = vmatprep.subr.mxu0 0.0
  %404 = vmatpush1.msra.mxu0 0.0
  %405 = vmatprep.subr.mxu0 0.0
  %406 = vmatpush1.msra.mxu0 0.0
  %407 = vmatprep.subr.mxu0 0.0
  %408 = vmatpush1.msra.mxu0 0.0
  %409 = vmatprep.subr.mxu0 0.0
  %410 = vmatpush1.msra.mxu0 0.0
  %411 = vmatprep.subr.mxu0 0.0
  %412 = vmatpush1.msra.mxu0 0.0
  %413 = vmatprep.subr.mxu0 0.0
  %414 = vmatpush1.msra.mxu0 0.0
  %415 = vmatprep.subr.mxu0 0.0
  %416 = vmatpush1.msra.mxu0 0.0
  %417 = vmatprep.subr.mxu0 0.0
  %418 = vmatpush1.msra.mxu0 0.0
  %419 = vmatprep.subr.mxu0 0.0
  %420 = vmatpush1.msra.mxu0 0.0
  %421 = vmatprep.mubr.f32.mxu0 0.0
  %422 = vmatmul.mubr.f32.gmra.mrb[0].mxu0 %v142
  %v423 = vpop.f32.mrb[0].mxu0
  %v424 = vadd.f32 0.0, %v423
  %v425 = vpop.f32.mrb[0].mxu0
  %v426 = vadd.f32 0.0, %v425
  %427 = vdwg.mxu0
  %428 = vmatprep.subr.mxu0 %v21
  %429 = vmatpush1.msra.mxu0 %v20
  %430 = vmatprep.subr.mxu0 %v85
  %431 = vmatpush1.msra.mxu0 %v84
  %432 = vmatprep.subr.mxu0 0.0
  %433 = vmatpush1.msra.mxu0 0.0
  %434 = vmatprep.subr.mxu0 0.0
  %435 = vmatpush1.msra.mxu0 0.0
  %436 = vmatprep.subr.mxu0 0.0
  %437 = vmatpush1.msra.mxu0 0.0
  %438 = vmatprep.subr.mxu0 0.0
  %439 = vmatpush1.msra.mxu0 0.0
  %440 = vmatprep.subr.mxu0 0.0
  %441 = vmatpush1.msra.mxu0 0.0
  %442 = vmatprep.subr.mxu0 0.0
  %443 = vmatpush1.msra.mxu0 0.0
  %444 = vmatprep.subr.mxu0 0.0
  %445 = vmatpush1.msra.mxu0 0.0
  %446 = vmatprep.subr.mxu0 0.0
  %447 = vmatpush1.msra.mxu0 0.0
  %448 = vmatprep.subr.mxu0 0.0
  %449 = vmatpush1.msra.mxu0 0.0
  %450 = vmatprep.subr.mxu0 0.0
  %451 = vmatpush1.msra.mxu0 0.0
  %452 = vmatprep.subr.mxu0 0.0
  %453 = vmatpush1.msra.mxu0 0.0
  %454 = vmatprep.subr.mxu0 0.0
  %455 = vmatpush1.msra.mxu0 0.0
  %456 = vmatprep.subr.mxu0 0.0
  %457 = vmatpush1.msra.mxu0 0.0
  %458 = vmatprep.subr.mxu0 0.0
  %459 = vmatpush1.msra.mxu0 0.0
  %460 = vmatprep.subr.mxu0 0.0
  %461 = vmatpush1.msra.mxu0 0.0
  %462 = vmatprep.subr.mxu0 0.0
  %463 = vmatpush1.msra.mxu0 0.0
  %464 = vmatprep.subr.mxu0 0.0
  %465 = vmatpush1.msra.mxu0 0.0
  %466 = vmatprep.subr.mxu0 0.0
  %467 = vmatpush1.msra.mxu0 0.0
  %468 = vmatprep.subr.mxu0 0.0
  %469 = vmatpush1.msra.mxu0 0.0
  %470 = vmatprep.subr.mxu0 0.0
  %471 = vmatpush1.msra.mxu0 0.0
  %472 = vmatprep.subr.mxu0 0.0
  %473 = vmatpush1.msra.mxu0 0.0
  %474 = vmatprep.subr.mxu0 0.0
  %475 = vmatpush1.msra.mxu0 0.0
  %476 = vmatprep.subr.mxu0 0.0
  %477 = vmatpush1.msra.mxu0 0.0
  %478 = vmatprep.subr.mxu0 0.0
  %479 = vmatpush1.msra.mxu0 0.0
  %480 = vmatprep.subr.mxu0 0.0
  %481 = vmatpush1.msra.mxu0 0.0
  %482 = vmatprep.subr.mxu0 0.0
  %483 = vmatpush1.msra.mxu0 0.0
  %484 = vmatprep.subr.mxu0 0.0
  %485 = vmatpush1.msra.mxu0 0.0
  %486 = vmatprep.subr.mxu0 0.0
  %487 = vmatpush1.msra.mxu0 0.0
  %488 = vmatprep.subr.mxu0 0.0
  %489 = vmatpush1.msra.mxu0 0.0
  %490 = vmatprep.subr.mxu0 0.0
  %491 = vmatpush1.msra.mxu0 0.0
  %492 = vmatprep.mubr.f32.mxu0 0.0
  %493 = vmatmul.mubr.f32.gmra.mrb[0].mxu0 %v142
  %v494 = vpop.f32.mrb[0].mxu0
  %v495 = vadd.f32 0.0, %v494
  %v496 = vpop.f32.mrb[0].mxu0
  %v497 = vadd.f32 0.0, %v496
  %498 = vdwg.mxu0
  %499 = vmatprep.subr.mxu0 %v23
  %500 = vmatpush1.msra.mxu0 %v22
  %501 = vmatprep.subr.mxu0 %v87
  %502 = vmatpush1.msra.mxu0 %v86
  %503 = vmatprep.subr.mxu0 0.0
  %504 = vmatpush1.msra.mxu0 0.0
  %505 = vmatprep.subr.mxu0 0.0
  %506 = vmatpush1.msra.mxu0 0.0
  %507 = vmatprep.subr.mxu0 0.0
  %508 = vmatpush1.msra.mxu0 0.0
  %509 = vmatprep.subr.mxu0 0.0
  %510 = vmatpush1.msra.mxu0 0.0
  %511 = vmatprep.subr.mxu0 0.0
  %512 = vmatpush1.msra.mxu0 0.0
  %513 = vmatprep.subr.mxu0 0.0
  %514 = vmatpush1.msra.mxu0 0.0
  %515 = vmatprep.subr.mxu0 0.0
  %516 = vmatpush1.msra.mxu0 0.0
  %517 = vmatprep.subr.mxu0 0.0
  %518 = vmatpush1.msra.mxu0 0.0
  %519 = vmatprep.subr.mxu0 0.0
  %520 = vmatpush1.msra.mxu0 0.0
  %521 = vmatprep.subr.mxu0 0.0
  %522 = vmatpush1.msra.mxu0 0.0
  %523 = vmatprep.subr.mxu0 0.0
  %524 = vmatpush1.msra.mxu0 0.0
  %525 = vmatprep.subr.mxu0 0.0
  %526 = vmatpush1.msra.mxu0 0.0
  %527 = vmatprep.subr.mxu0 0.0
  %528 = vmatpush1.msra.mxu0 0.0
  %529 = vmatprep.subr.mxu0 0.0
  %530 = vmatpush1.msra.mxu0 0.0
  %531 = vmatprep.subr.mxu0 0.0
  %532 = vmatpush1.msra.mxu0 0.0
  %533 = vmatprep.subr.mxu0 0.0
  %534 = vmatpush1.msra.mxu0 0.0
  %535 = vmatprep.subr.mxu0 0.0
  %536 = vmatpush1.msra.mxu0 0.0
  %537 = vmatprep.subr.mxu0 0.0
  %538 = vmatpush1.msra.mxu0 0.0
  %539 = vmatprep.subr.mxu0 0.0
  %540 = vmatpush1.msra.mxu0 0.0
  %541 = vmatprep.subr.mxu0 0.0
  %542 = vmatpush1.msra.mxu0 0.0
  %543 = vmatprep.subr.mxu0 0.0
  %544 = vmatpush1.msra.mxu0 0.0
  %545 = vmatprep.subr.mxu0 0.0
  %546 = vmatpush1.msra.mxu0 0.0
  %547 = vmatprep.subr.mxu0 0.0
  %548 = vmatpush1.msra.mxu0 0.0
  %549 = vmatprep.subr.mxu0 0.0
  %550 = vmatpush1.msra.mxu0 0.0
  %551 = vmatprep.subr.mxu0 0.0
  %552 = vmatpush1.msra.mxu0 0.0
  %553 = vmatprep.subr.mxu0 0.0
  %554 = vmatpush1.msra.mxu0 0.0
  %555 = vmatprep.subr.mxu0 0.0
  %556 = vmatpush1.msra.mxu0 0.0
  %557 = vmatprep.subr.mxu0 0.0
  %558 = vmatpush1.msra.mxu0 0.0
  %559 = vmatprep.subr.mxu0 0.0
  %560 = vmatpush1.msra.mxu0 0.0
  %561 = vmatprep.subr.mxu0 0.0
  %562 = vmatpush1.msra.mxu0 0.0
  %563 = vmatprep.mubr.f32.mxu0 0.0
  %564 = vmatmul.mubr.f32.gmra.mrb[0].mxu0 %v142
  %v565 = vpop.f32.mrb[0].mxu0
  %v566 = vadd.f32 0.0, %v565
  %v567 = vpop.f32.mrb[0].mxu0
  %v568 = vadd.f32 0.0, %v567
  %569 = vdwg.mxu0
  %570 = vmatprep.subr.mxu0 %v25
  %571 = vmatpush1.msra.mxu0 %v24
  %572 = vmatprep.subr.mxu0 %v89
  %573 = vmatpush1.msra.mxu0 %v88
  %574 = vmatprep.subr.mxu0 0.0
  %575 = vmatpush1.msra.mxu0 0.0
  %576 = vmatprep.subr.mxu0 0.0
  %577 = vmatpush1.msra.mxu0 0.0
  %578 = vmatprep.subr.mxu0 0.0
  %579 = vmatpush1.msra.mxu0 0.0
  %580 = vmatprep.subr.mxu0 0.0
  %581 = vmatpush1.msra.mxu0 0.0
  %582 = vmatprep.subr.mxu0 0.0
  %583 = vmatpush1.msra.mxu0 0.0
  %584 = vmatprep.subr.mxu0 0.0
  %585 = vmatpush1.msra.mxu0 0.0
  %586 = vmatprep.subr.mxu0 0.0
  %587 = vmatpush1.msra.mxu0 0.0
  %588 = vmatprep.subr.mxu0 0.0
  %589 = vmatpush1.msra.mxu0 0.0
  %590 = vmatprep.subr.mxu0 0.0
  %591 = vmatpush1.msra.mxu0 0.0
  %592 = vmatprep.subr.mxu0 0.0
  %593 = vmatpush1.msra.mxu0 0.0
  %594 = vmatprep.subr.mxu0 0.0
  %595 = vmatpush1.msra.mxu0 0.0
  %596 = vmatprep.subr.mxu0 0.0
  %597 = vmatpush1.msra.mxu0 0.0
  %598 = vmatprep.subr.mxu0 0.0
  %599 = vmatpush1.msra.mxu0 0.0
  %600 = vmatprep.subr.mxu0 0.0
  %601 = vmatpush1.msra.mxu0 0.0
  %602 = vmatprep.subr.mxu0 0.0
  %603 = vmatpush1.msra.mxu0 0.0
  %604 = vmatprep.subr.mxu0 0.0
  %605 = vmatpush1.msra.mxu0 0.0
  %606 = vmatprep.subr.mxu0 0.0
  %607 = vmatpush1.msra.mxu0 0.0
  %608 = vmatprep.subr.mxu0 0.0
  %609 = vmatpush1.msra.mxu0 0.0
  %610 = vmatprep.subr.mxu0 0.0
  %611 = vmatpush1.msra.mxu0 0.0
  %612 = vmatprep.subr.mxu0 0.0
  %613 = vmatpush1.msra.mxu0 0.0
  %614 = vmatprep.subr.mxu0 0.0
  %615 = vmatpush1.msra.mxu0 0.0
  %616 = vmatprep.subr.mxu0 0.0
  %617 = vmatpush1.msra.mxu0 0.0
  %618 = vmatprep.subr.mxu0 0.0
  %619 = vmatpush1.msra.mxu0 0.0
  %620 = vmatprep.subr.mxu0 0.0
  %621 = vmatpush1.msra.mxu0 0.0
  %622 = vmatprep.subr.mxu0 0.0
  %623 = vmatpush1.msra.mxu0 0.0
  %624 = vmatprep.subr.mxu0 0.0
  %625 = vmatpush1.msra.mxu0 0.0
  %626 = vmatprep.subr.mxu0 0.0
  %627 = vmatpush1.msra.mxu0 0.0
  %628 = vmatprep.subr.mxu0 0.0
  %629 = vmatpush1.msra.mxu0 0.0
  %630 = vmatprep.subr.mxu0 0.0
  %631 = vmatpush1.msra.mxu0 0.0
  %632 = vmatprep.subr.mxu0 0.0
  %633 = vmatpush1.msra.mxu0 0.0
  %634 = vmatprep.mubr.f32.mxu0 0.0
  %635 = vmatmul.mubr.f32.gmra.mrb[0].mxu0 %v142
  %v636 = vpop.f32.mrb[0].mxu0
  %v637 = vadd.f32 0.0, %v636
  %v638 = vpop.f32.mrb[0].mxu0
  %v639 = vadd.f32 0.0, %v638
  %640 = vdwg.mxu0
  %641 = vmatprep.subr.mxu0 %v27
  %642 = vmatpush1.msra.mxu0 %v26
  %643 = vmatprep.subr.mxu0 %v91
  %644 = vmatpush1.msra.mxu0 %v90
  %645 = vmatprep.subr.mxu0 0.0
  %646 = vmatpush1.msra.mxu0 0.0
  %647 = vmatprep.subr.mxu0 0.0
  %648 = vmatpush1.msra.mxu0 0.0
  %649 = vmatprep.subr.mxu0 0.0
  %650 = vmatpush1.msra.mxu0 0.0
  %651 = vmatprep.subr.mxu0 0.0
  %652 = vmatpush1.msra.mxu0 0.0
  %653 = vmatprep.subr.mxu0 0.0
  %654 = vmatpush1.msra.mxu0 0.0
  %655 = vmatprep.subr.mxu0 0.0
  %656 = vmatpush1.msra.mxu0 0.0
  %657 = vmatprep.subr.mxu0 0.0
  %658 = vmatpush1.msra.mxu0 0.0
  %659 = vmatprep.subr.mxu0 0.0
  %660 = vmatpush1.msra.mxu0 0.0
  %661 = vmatprep.subr.mxu0 0.0
  %662 = vmatpush1.msra.mxu0 0.0
  %663 = vmatprep.subr.mxu0 0.0
  %664 = vmatpush1.msra.mxu0 0.0
  %665 = vmatprep.subr.mxu0 0.0
  %666 = vmatpush1.msra.mxu0 0.0
  %667 = vmatprep.subr.mxu0 0.0
  %668 = vmatpush1.msra.mxu0 0.0
  %669 = vmatprep.subr.mxu0 0.0
  %670 = vmatpush1.msra.mxu0 0.0
  %671 = vmatprep.subr.mxu0 0.0
  %672 = vmatpush1.msra.mxu0 0.0
  %673 = vmatprep.subr.mxu0 0.0
  %674 = vmatpush1.msra.mxu0 0.0
  %675 = vmatprep.subr.mxu0 0.0
  %676 = vmatpush1.msra.mxu0 0.0
  %677 = vmatprep.subr.mxu0 0.0
  %678 = vmatpush1.msra.mxu0 0.0
  %679 = vmatprep.subr.mxu0 0.0
  %680 = vmatpush1.msra.mxu0 0.0
  %681 = vmatprep.subr.mxu0 0.0
  %682 = vmatpush1.msra.mxu0 0.0
  %683 = vmatprep.subr.mxu0 0.0
  %684 = vmatpush1.msra.mxu0 0.0
  %685 = vmatprep.subr.mxu0 0.0
  %686 = vmatpush1.msra.mxu0 0.0
  %687 = vmatprep.subr.mxu0 0.0
  %688 = vmatpush1.msra.mxu0 0.0
  %689 = vmatprep.subr.mxu0 0.0
  %690 = vmatpush1.msra.mxu0 0.0
  %691 = vmatprep.subr.mxu0 0.0
  %692 = vmatpush1.msra.mxu0 0.0
  %693 = vmatprep.subr.mxu0 0.0
  %694 = vmatpush1.msra.mxu0 0.0
  %695 = vmatprep.subr.mxu0 0.0
  %696 = vmatpush1.msra.mxu0 0.0
  %697 = vmatprep.subr.mxu0 0.0
  %698 = vmatpush1.msra.mxu0 0.0
  %699 = vmatprep.subr.mxu0 0.0
  %700 = vmatpush1.msra.mxu0 0.0
  %701 = vmatprep.subr.mxu0 0.0
  %702 = vmatpush1.msra.mxu0 0.0
  %703 = vmatprep.subr.mxu0 0.0
  %704 = vmatpush1.msra.mxu0 0.0
  %705 = vmatprep.mubr.f32.mxu0 0.0
  %706 = vmatmul.mubr.f32.gmra.mrb[0].mxu0 %v142
  %v707 = vpop.f32.mrb[0].mxu0
  %v708 = vadd.f32 0.0, %v707
  %v709 = vpop.f32.mrb[0].mxu0
  %v710 = vadd.f32 0.0, %v709
  %711 = vdwg.mxu0
  %712 = vmatprep.subr.mxu0 %v29
  %713 = vmatpush1.msra.mxu0 %v28
  %714 = vmatprep.subr.mxu0 %v93
  %715 = vmatpush1.msra.mxu0 %v92
  %716 = vmatprep.subr.mxu0 0.0
  %717 = vmatpush1.msra.mxu0 0.0
  %718 = vmatprep.subr.mxu0 0.0
  %719 = vmatpush1.msra.mxu0 0.0
  %720 = vmatprep.subr.mxu0 0.0
  %721 = vmatpush1.msra.mxu0 0.0
  %722 = vmatprep.subr.mxu0 0.0
  %723 = vmatpush1.msra.mxu0 0.0
  %724 = vmatprep.subr.mxu0 0.0
  %725 = vmatpush1.msra.mxu0 0.0
  %726 = vmatprep.subr.mxu0 0.0
  %727 = vmatpush1.msra.mxu0 0.0
  %728 = vmatprep.subr.mxu0 0.0
  %729 = vmatpush1.msra.mxu0 0.0
  %730 = vmatprep.subr.mxu0 0.0
  %731 = vmatpush1.msra.mxu0 0.0
  %732 = vmatprep.subr.mxu0 0.0
  %733 = vmatpush1.msra.mxu0 0.0
  %734 = vmatprep.subr.mxu0 0.0
  %735 = vmatpush1.msra.mxu0 0.0
  %736 = vmatprep.subr.mxu0 0.0
  %737 = vmatpush1.msra.mxu0 0.0
  %738 = vmatprep.subr.mxu0 0.0
  %739 = vmatpush1.msra.mxu0 0.0
  %740 = vmatprep.subr.mxu0 0.0
  %741 = vmatpush1.msra.mxu0 0.0
  %742 = vmatprep.subr.mxu0 0.0
  %743 = vmatpush1.msra.mxu0 0.0
  %744 = vmatprep.subr.mxu0 0.0
  %745 = vmatpush1.msra.mxu0 0.0
  %746 = vmatprep.subr.mxu0 0.0
  %747 = vmatpush1.msra.mxu0 0.0
  %748 = vmatprep.subr.mxu0 0.0
  %749 = vmatpush1.msra.mxu0 0.0
  %750 = vmatprep.subr.mxu0 0.0
  %751 = vmatpush1.msra.mxu0 0.0
  %752 = vmatprep.subr.mxu0 0.0
  %753 = vmatpush1.msra.mxu0 0.0
  %754 = vmatprep.subr.mxu0 0.0
  %755 = vmatpush1.msra.mxu0 0.0
  %756 = vmatprep.subr.mxu0 0.0
  %757 = vmatpush1.msra.mxu0 0.0
  %758 = vmatprep.subr.mxu0 0.0
  %759 = vmatpush1.msra.mxu0 0.0
  %760 = vmatprep.subr.mxu0 0.0
  %761 = vmatpush1.msra.mxu0 0.0
  %762 = vmatprep.subr.mxu0 0.0
  %763 = vmatpush1.msra.mxu0 0.0
  %764 = vmatprep.subr.mxu0 0.0
  %765 = vmatpush1.msra.mxu0 0.0
  %766 = vmatprep.subr.mxu0 0.0
  %767 = vmatpush1.msra.mxu0 0.0
  %768 = vmatprep.subr.mxu0 0.0
  %769 = vmatpush1.msra.mxu0 0.0
  %770 = vmatprep.subr.mxu0 0.0
  %771 = vmatpush1.msra.mxu0 0.0
  %772 = vmatprep.subr.mxu0 0.0
  %773 = vmatpush1.msra.mxu0 0.0
  %774 = vmatprep.subr.mxu0 0.0
  %775 = vmatpush1.msra.mxu0 0.0
  %776 = vmatprep.mubr.f32.mxu0 0.0
  %777 = vmatmul.mubr.f32.gmra.mrb[0].mxu0 %v142
  %v778 = vpop.f32.mrb[0].mxu0
  %v779 = vadd.f32 0.0, %v778
  %v780 = vpop.f32.mrb[0].mxu0
  %v781 = vadd.f32 0.0, %v780
  %782 = vdwg.mxu0
  %783 = vmatprep.subr.mxu0 %v31
  %784 = vmatpush1.msra.mxu0 %v30
  %785 = vmatprep.subr.mxu0 %v95
  %786 = vmatpush1.msra.mxu0 %v94
  %787 = vmatprep.subr.mxu0 0.0
  %788 = vmatpush1.msra.mxu0 0.0
  %789 = vmatprep.subr.mxu0 0.0
  %790 = vmatpush1.msra.mxu0 0.0
  %791 = vmatprep.subr.mxu0 0.0
  %792 = vmatpush1.msra.mxu0 0.0
  %793 = vmatprep.subr.mxu0 0.0
  %794 = vmatpush1.msra.mxu0 0.0
  %795 = vmatprep.subr.mxu0 0.0
  %796 = vmatpush1.msra.mxu0 0.0
  %797 = vmatprep.subr.mxu0 0.0
  %798 = vmatpush1.msra.mxu0 0.0
  %799 = vmatprep.subr.mxu0 0.0
  %800 = vmatpush1.msra.mxu0 0.0
  %801 = vmatprep.subr.mxu0 0.0
  %802 = vmatpush1.msra.mxu0 0.0
  %803 = vmatprep.subr.mxu0 0.0
  %804 = vmatpush1.msra.mxu0 0.0
  %805 = vmatprep.subr.mxu0 0.0
  %806 = vmatpush1.msra.mxu0 0.0
  %807 = vmatprep.subr.mxu0 0.0
  %808 = vmatpush1.msra.mxu0 0.0
  %809 = vmatprep.subr.mxu0 0.0
  %810 = vmatpush1.msra.mxu0 0.0
  %811 = vmatprep.subr.mxu0 0.0
  %812 = vmatpush1.msra.mxu0 0.0
  %813 = vmatprep.subr.mxu0 0.0
  %814 = vmatpush1.msra.mxu0 0.0
  %815 = vmatprep.subr.mxu0 0.0
  %816 = vmatpush1.msra.mxu0 0.0
  %817 = vmatprep.subr.mxu0 0.0
  %818 = vmatpush1.msra.mxu0 0.0
  %819 = vmatprep.subr.mxu0 0.0
  %820 = vmatpush1.msra.mxu0 0.0
  %821 = vmatprep.subr.mxu0 0.0
  %822 = vmatpush1.msra.mxu0 0.0
  %823 = vmatprep.subr.mxu0 0.0
  %824 = vmatpush1.msra.mxu0 0.0
  %825 = vmatprep.subr.mxu0 0.0
  %826 = vmatpush1.msra.mxu0 0.0
  %827 = vmatprep.subr.mxu0 0.0
  %828 = vmatpush1.msra.mxu0 0.0
  %829 = vmatprep.subr.mxu0 0.0
  %830 = vmatpush1.msra.mxu0 0.0
  %831 = vmatprep.subr.mxu0 0.0
  %832 = vmatpush1.msra.mxu0 0.0
  %833 = vmatprep.subr.mxu0 0.0
  %834 = vmatpush1.msra.mxu0 0.0
  %835 = vmatprep.subr.mxu0 0.0
  %836 = vmatpush1.msra.mxu0 0.0
  %837 = vmatprep.subr.mxu0 0.0
  %838 = vmatpush1.msra.mxu0 0.0
  %839 = vmatprep.subr.mxu0 0.0
  %840 = vmatpush1.msra.mxu0 0.0
  %841 = vmatprep.subr.mxu0 0.0
  %842 = vmatpush1.msra.mxu0 0.0
  %843 = vmatprep.subr.mxu0 0.0
  %844 = vmatpush1.msra.mxu0 0.0
  %845 = vmatprep.subr.mxu0 0.0
  %846 = vmatpush1.msra.mxu0 0.0
  %847 = vmatprep.mubr.f32.mxu0 0.0
  %848 = vmatmul.mubr.f32.gmra.mrb[0].mxu0 %v142
  %v849 = vpop.f32.mrb[0].mxu0
  %v850 = vadd.f32 0.0, %v849
  %v851 = vpop.f32.mrb[0].mxu0
  %v852 = vadd.f32 0.0, %v851
  %853 = vdwg.mxu0
  %854 = vmatprep.subr.mxu0 %v33
  %855 = vmatpush1.msra.mxu0 %v32
  %856 = vmatprep.subr.mxu0 %v97
  %857 = vmatpush1.msra.mxu0 %v96
  %858 = vmatprep.subr.mxu0 0.0
  %859 = vmatpush1.msra.mxu0 0.0
  %860 = vmatprep.subr.mxu0 0.0
  %861 = vmatpush1.msra.mxu0 0.0
  %862 = vmatprep.subr.mxu0 0.0
  %863 = vmatpush1.msra.mxu0 0.0
  %864 = vmatprep.subr.mxu0 0.0
  %865 = vmatpush1.msra.mxu0 0.0
  %866 = vmatprep.subr.mxu0 0.0
  %867 = vmatpush1.msra.mxu0 0.0
  %868 = vmatprep.subr.mxu0 0.0
  %869 = vmatpush1.msra.mxu0 0.0
  %870 = vmatprep.subr.mxu0 0.0
  %871 = vmatpush1.msra.mxu0 0.0
  %872 = vmatprep.subr.mxu0 0.0
  %873 = vmatpush1.msra.mxu0 0.0
  %874 = vmatprep.subr.mxu0 0.0
  %875 = vmatpush1.msra.mxu0 0.0
  %876 = vmatprep.subr.mxu0 0.0
  %877 = vmatpush1.msra.mxu0 0.0
  %878 = vmatprep.subr.mxu0 0.0
  %879 = vmatpush1.msra.mxu0 0.0
  %880 = vmatprep.subr.mxu0 0.0
  %881 = vmatpush1.msra.mxu0 0.0
  %882 = vmatprep.subr.mxu0 0.0
  %883 = vmatpush1.msra.mxu0 0.0
  %884 = vmatprep.subr.mxu0 0.0
  %885 = vmatpush1.msra.mxu0 0.0
  %886 = vmatprep.subr.mxu0 0.0
  %887 = vmatpush1.msra.mxu0 0.0
  %888 = vmatprep.subr.mxu0 0.0
  %889 = vmatpush1.msra.mxu0 0.0
  %890 = vmatprep.subr.mxu0 0.0
  %891 = vmatpush1.msra.mxu0 0.0
  %892 = vmatprep.subr.mxu0 0.0
  %893 = vmatpush1.msra.mxu0 0.0
  %894 = vmatprep.subr.mxu0 0.0
  %895 = vmatpush1.msra.mxu0 0.0
  %896 = vmatprep.subr.mxu0 0.0
  %897 = vmatpush1.msra.mxu0 0.0
  %898 = vmatprep.subr.mxu0 0.0
  %899 = vmatpush1.msra.mxu0 0.0
  %900 = vmatprep.subr.mxu0 0.0
  %901 = vmatpush1.msra.mxu0 0.0
  %902 = vmatprep.subr.mxu0 0.0
  %903 = vmatpush1.msra.mxu0 0.0
  %904 = vmatprep.subr.mxu0 0.0
  %905 = vmatpush1.msra.mxu0 0.0
  %906 = vmatprep.subr.mxu0 0.0
  %907 = vmatpush1.msra.mxu0 0.0
  %908 = vmatprep.subr.mxu0 0.0
  %909 = vmatpush1.msra.mxu0 0.0
  %910 = vmatprep.subr.mxu0 0.0
  %911 = vmatpush1.msra.mxu0 0.0
  %912 = vmatprep.subr.mxu0 0.0
  %913 = vmatpush1.msra.mxu0 0.0
  %914 = vmatprep.subr.mxu0 0.0
  %915 = vmatpush1.msra.mxu0 0.0
  %916 = vmatprep.subr.mxu0 0.0
  %917 = vmatpush1.msra.mxu0 0.0
  %918 = vmatprep.mubr.f32.mxu0 0.0
  %919 = vmatmul.mubr.f32.gmra.mrb[0].mxu0 %v142
  %v920 = vpop.f32.mrb[0].mxu0
  %v921 = vadd.f32 0.0, %v920
  %v922 = vpop.f32.mrb[0].mxu0
  %v923 = vadd.f32 0.0, %v922
  %924 = vdwg.mxu0
  %925 = vmatprep.subr.mxu0 %v35
  %926 = vmatpush1.msra.mxu0 %v34
  %927 = vmatprep.subr.mxu0 %v99
  %928 = vmatpush1.msra.mxu0 %v98
  %929 = vmatprep.subr.mxu0 0.0
  %930 = vmatpush1.msra.mxu0 0.0
  %931 = vmatprep.subr.mxu0 0.0
  %932 = vmatpush1.msra.mxu0 0.0
  %933 = vmatprep.subr.mxu0 0.0
  %934 = vmatpush1.msra.mxu0 0.0
  %935 = vmatprep.subr.mxu0 0.0
  %936 = vmatpush1.msra.mxu0 0.0
  %937 = vmatprep.subr.mxu0 0.0
  %938 = vmatpush1.msra.mxu0 0.0
  %939 = vmatprep.subr.mxu0 0.0
  %940 = vmatpush1.msra.mxu0 0.0
  %941 = vmatprep.subr.mxu0 0.0
  %942 = vmatpush1.msra.mxu0 0.0
  %943 = vmatprep.subr.mxu0 0.0
  %944 = vmatpush1.msra.mxu0 0.0
  %945 = vmatprep.subr.mxu0 0.0
  %946 = vmatpush1.msra.mxu0 0.0
  %947 = vmatprep.subr.mxu0 0.0
  %948 = vmatpush1.msra.mxu0 0.0
  %949 = vmatprep.subr.mxu0 0.0
  %950 = vmatpush1.msra.mxu0 0.0
  %951 = vmatprep.subr.mxu0 0.0
  %952 = vmatpush1.msra.mxu0 0.0
  %953 = vmatprep.subr.mxu0 0.0
  %954 = vmatpush1.msra.mxu0 0.0
  %955 = vmatprep.subr.mxu0 0.0
  %956 = vmatpush1.msra.mxu0 0.0
  %957 = vmatprep.subr.mxu0 0.0
  %958 = vmatpush1.msra.mxu0 0.0
  %959 = vmatprep.subr.mxu0 0.0
  %960 = vmatpush1.msra.mxu0 0.0
  %961 = vmatprep.subr.mxu0 0.0
  %962 = vmatpush1.msra.mxu0 0.0
  %963 = vmatprep.subr.mxu0 0.0
  %964 = vmatpush1.msra.mxu0 0.0
  %965 = vmatprep.subr.mxu0 0.0
  %966 = vmatpush1.msra.mxu0 0.0
  %967 = vmatprep.subr.mxu0 0.0
  %968 = vmatpush1.msra.mxu0 0.0
  %969 = vmatprep.subr.mxu0 0.0
  %970 = vmatpush1.msra.mxu0 0.0
  %971 = vmatprep.subr.mxu0 0.0
  %972 = vmatpush1.msra.mxu0 0.0
  %973 = vmatprep.subr.mxu0 0.0
  %974 = vmatpush1.msra.mxu0 0.0
  %975 = vmatprep.subr.mxu0 0.0
  %976 = vmatpush1.msra.mxu0 0.0
  %977 = vmatprep.subr.mxu0 0.0
  %978 = vmatpush1.msra.mxu0 0.0
  %979 = vmatprep.subr.mxu0 0.0
  %980 = vmatpush1.msra.mxu0 0.0
  %981 = vmatprep.subr.mxu0 0.0
  %982 = vmatpush1.msra.mxu0 0.0
  %983 = vmatprep.subr.mxu0 0.0
  %984 = vmatpush1.msra.mxu0 0.0
  %985 = vmatprep.subr.mxu0 0.0
  %986 = vmatpush1.msra.mxu0 0.0
  %987 = vmatprep.subr.mxu0 0.0
  %988 = vmatpush1.msra.mxu0 0.0
  %989 = vmatprep.mubr.f32.mxu0 0.0
  %990 = vmatmul.mubr.f32.gmra.mrb[0].mxu0 %v142
  %v991 = vpop.f32.mrb[0].mxu0
  %v992 = vadd.f32 0.0, %v991
  %v993 = vpop.f32.mrb[0].mxu0
  %v994 = vadd.f32 0.0, %v993
  %995 = vdwg.mxu0
  %996 = vmatprep.subr.mxu0 %v37
  %997 = vmatpush1.msra.mxu0 %v36
  %998 = vmatprep.subr.mxu0 %v101
  %999 = vmatpush1.msra.mxu0 %v100
  %1000 = vmatprep.subr.mxu0 0.0
  %1001 = vmatpush1.msra.mxu0 0.0
  %1002 = vmatprep.subr.mxu0 0.0
  %1003 = vmatpush1.msra.mxu0 0.0
  %1004 = vmatprep.subr.mxu0 0.0
  %1005 = vmatpush1.msra.mxu0 0.0
  %1006 = vmatprep.subr.mxu0 0.0
  %1007 = vmatpush1.msra.mxu0 0.0
  %1008 = vmatprep.subr.mxu0 0.0
  %1009 = vmatpush1.msra.mxu0 0.0
  %1010 = vmatprep.subr.mxu0 0.0
  %1011 = vmatpush1.msra.mxu0 0.0
  %1012 = vmatprep.subr.mxu0 0.0
  %1013 = vmatpush1.msra.mxu0 0.0
  %1014 = vmatprep.subr.mxu0 0.0
  %1015 = vmatpush1.msra.mxu0 0.0
  %1016 = vmatprep.subr.mxu0 0.0
  %1017 = vmatpush1.msra.mxu0 0.0
  %1018 = vmatprep.subr.mxu0 0.0
  %1019 = vmatpush1.msra.mxu0 0.0
  %1020 = vmatprep.subr.mxu0 0.0
  %1021 = vmatpush1.msra.mxu0 0.0
  %1022 = vmatprep.subr.mxu0 0.0
  %1023 = vmatpush1.msra.mxu0 0.0
  %1024 = vmatprep.subr.mxu0 0.0
  %1025 = vmatpush1.msra.mxu0 0.0
  %1026 = vmatprep.subr.mxu0 0.0
  %1027 = vmatpush1.msra.mxu0 0.0
  %1028 = vmatprep.subr.mxu0 0.0
  %1029 = vmatpush1.msra.mxu0 0.0
  %1030 = vmatprep.subr.mxu0 0.0
  %1031 = vmatpush1.msra.mxu0 0.0
  %1032 = vmatprep.subr.mxu0 0.0
  %1033 = vmatpush1.msra.mxu0 0.0
  %1034 = vmatprep.subr.mxu0 0.0
  %1035 = vmatpush1.msra.mxu0 0.0
  %1036 = vmatprep.subr.mxu0 0.0
  %1037 = vmatpush1.msra.mxu0 0.0
  %1038 = vmatprep.subr.mxu0 0.0
  %1039 = vmatpush1.msra.mxu0 0.0
  %1040 = vmatprep.subr.mxu0 0.0
  %1041 = vmatpush1.msra.mxu0 0.0
  %1042 = vmatprep.subr.mxu0 0.0
  %1043 = vmatpush1.msra.mxu0 0.0
  %1044 = vmatprep.subr.mxu0 0.0
  %1045 = vmatpush1.msra.mxu0 0.0
  %1046 = vmatprep.subr.mxu0 0.0
  %1047 = vmatpush1.msra.mxu0 0.0
  %1048 = vmatprep.subr.mxu0 0.0
  %1049 = vmatpush1.msra.mxu0 0.0
  %1050 = vmatprep.subr.mxu0 0.0
  %1051 = vmatpush1.msra.mxu0 0.0
  %1052 = vmatprep.subr.mxu0 0.0
  %1053 = vmatpush1.msra.mxu0 0.0
  %1054 = vmatprep.subr.mxu0 0.0
  %1055 = vmatpush1.msra.mxu0 0.0
  %1056 = vmatprep.subr.mxu0 0.0
  %1057 = vmatpush1.msra.mxu0 0.0
  %1058 = vmatprep.subr.mxu0 0.0
  %1059 = vmatpush1.msra.mxu0 0.0
  %1060 = vmatprep.mubr.f32.mxu0 0.0
  %1061 = vmatmul.mubr.f32.gmra.mrb[0].mxu0 %v142
  %v1062 = vpop.f32.mrb[0].mxu0
  %v1063 = vadd.f32 0.0, %v1062
  %v1064 = vpop.f32.mrb[0].mxu0
  %v1065 = vadd.f32 0.0, %v1064
  %1066 = vdwg.mxu0
  %1067 = vmatprep.subr.mxu0 %v39
  %1068 = vmatpush1.msra.mxu0 %v38
  %1069 = vmatprep.subr.mxu0 %v103
  %1070 = vmatpush1.msra.mxu0 %v102
  %1071 = vmatprep.subr.mxu0 0.0
  %1072 = vmatpush1.msra.mxu0 0.0
  %1073 = vmatprep.subr.mxu0 0.0
  %1074 = vmatpush1.msra.mxu0 0.0
  %1075 = vmatprep.subr.mxu0 0.0
  %1076 = vmatpush1.msra.mxu0 0.0
  %1077 = vmatprep.subr.mxu0 0.0
  %1078 = vmatpush1.msra.mxu0 0.0
  %1079 = vmatprep.subr.mxu0 0.0
  %1080 = vmatpush1.msra.mxu0 0.0
  %1081 = vmatprep.subr.mxu0 0.0
  %1082 = vmatpush1.msra.mxu0 0.0
  %1083 = vmatprep.subr.mxu0 0.0
  %1084 = vmatpush1.msra.mxu0 0.0
  %1085 = vmatprep.subr.mxu0 0.0
  %1086 = vmatpush1.msra.mxu0 0.0
  %1087 = vmatprep.subr.mxu0 0.0
  %1088 = vmatpush1.msra.mxu0 0.0
  %1089 = vmatprep.subr.mxu0 0.0
  %1090 = vmatpush1.msra.mxu0 0.0
  %1091 = vmatprep.subr.mxu0 0.0
  %1092 = vmatpush1.msra.mxu0 0.0
  %1093 = vmatprep.subr.mxu0 0.0
  %1094 = vmatpush1.msra.mxu0 0.0
  %1095 = vmatprep.subr.mxu0 0.0
  %1096 = vmatpush1.msra.mxu0 0.0
  %1097 = vmatprep.subr.mxu0 0.0
  %1098 = vmatpush1.msra.mxu0 0.0
  %1099 = vmatprep.subr.mxu0 0.0
  %1100 = vmatpush1.msra.mxu0 0.0
  %1101 = vmatprep.subr.mxu0 0.0
  %1102 = vmatpush1.msra.mxu0 0.0
  %1103 = vmatprep.subr.mxu0 0.0
  %1104 = vmatpush1.msra.mxu0 0.0
  %1105 = vmatprep.subr.mxu0 0.0
  %1106 = vmatpush1.msra.mxu0 0.0
  %1107 = vmatprep.subr.mxu0 0.0
  %1108 = vmatpush1.msra.mxu0 0.0
  %1109 = vmatprep.subr.mxu0 0.0
  %1110 = vmatpush1.msra.mxu0 0.0
  %1111 = vmatprep.subr.mxu0 0.0
  %1112 = vmatpush1.msra.mxu0 0.0
  %1113 = vmatprep.subr.mxu0 0.0
  %1114 = vmatpush1.msra.mxu0 0.0
  %1115 = vmatprep.subr.mxu0 0.0
  %1116 = vmatpush1.msra.mxu0 0.0
  %1117 = vmatprep.subr.mxu0 0.0
  %1118 = vmatpush1.msra.mxu0 0.0
  %1119 = vmatprep.subr.mxu0 0.0
  %1120 = vmatpush1.msra.mxu0 0.0
  %1121 = vmatprep.subr.mxu0 0.0
  %1122 = vmatpush1.msra.mxu0 0.0
  %1123 = vmatprep.subr.mxu0 0.0
  %1124 = vmatpush1.msra.mxu0 0.0
  %1125 = vmatprep.subr.mxu0 0.0
  %1126 = vmatpush1.msra.mxu0 0.0
  %1127 = vmatprep.subr.mxu0 0.0
  %1128 = vmatpush1.msra.mxu0 0.0
  %1129 = vmatprep.subr.mxu0 0.0
  %1130 = vmatpush1.msra.mxu0 0.0
  %1131 = vmatprep.mubr.f32.mxu0 0.0
  %1132 = vmatmul.mubr.f32.gmra.mrb[0].mxu0 %v142
  %v1133 = vpop.f32.mrb[0].mxu0
  %v1134 = vadd.f32 0.0, %v1133
  %v1135 = vpop.f32.mrb[0].mxu0
  %v1136 = vadd.f32 0.0, %v1135
  %1137 = vdwg.mxu0
  %1138 = vmatprep.subr.mxu0 %v41
  %1139 = vmatpush1.msra.mxu0 %v40
  %1140 = vmatprep.subr.mxu0 %v105
  %1141 = vmatpush1.msra.mxu0 %v104
  %1142 = vmatprep.subr.mxu0 0.0
  %1143 = vmatpush1.msra.mxu0 0.0
  %1144 = vmatprep.subr.mxu0 0.0
  %1145 = vmatpush1.msra.mxu0 0.0
  %1146 = vmatprep.subr.mxu0 0.0
  %1147 = vmatpush1.msra.mxu0 0.0
  %1148 = vmatprep.subr.mxu0 0.0
  %1149 = vmatpush1.msra.mxu0 0.0
  %1150 = vmatprep.subr.mxu0 0.0
  %1151 = vmatpush1.msra.mxu0 0.0
  %1152 = vmatprep.subr.mxu0 0.0
  %1153 = vmatpush1.msra.mxu0 0.0
  %1154 = vmatprep.subr.mxu0 0.0
  %1155 = vmatpush1.msra.mxu0 0.0
  %1156 = vmatprep.subr.mxu0 0.0
  %1157 = vmatpush1.msra.mxu0 0.0
  %1158 = vmatprep.subr.mxu0 0.0
  %1159 = vmatpush1.msra.mxu0 0.0
  %1160 = vmatprep.subr.mxu0 0.0
  %1161 = vmatpush1.msra.mxu0 0.0
  %1162 = vmatprep.subr.mxu0 0.0
  %1163 = vmatpush1.msra.mxu0 0.0
  %1164 = vmatprep.subr.mxu0 0.0
  %1165 = vmatpush1.msra.mxu0 0.0
  %1166 = vmatprep.subr.mxu0 0.0
  %1167 = vmatpush1.msra.mxu0 0.0
  %1168 = vmatprep.subr.mxu0 0.0
  %1169 = vmatpush1.msra.mxu0 0.0
  %1170 = vmatprep.subr.mxu0 0.0
  %1171 = vmatpush1.msra.mxu0 0.0
  %1172 = vmatprep.subr.mxu0 0.0
  %1173 = vmatpush1.msra.mxu0 0.0
  %1174 = vmatprep.subr.mxu0 0.0
  %1175 = vmatpush1.msra.mxu0 0.0
  %1176 = vmatprep.subr.mxu0 0.0
  %1177 = vmatpush1.msra.mxu0 0.0
  %1178 = vmatprep.subr.mxu0 0.0
  %1179 = vmatpush1.msra.mxu0 0.0
  %1180 = vmatprep.subr.mxu0 0.0
  %1181 = vmatpush1.msra.mxu0 0.0
  %1182 = vmatprep.subr.mxu0 0.0
  %1183 = vmatpush1.msra.mxu0 0.0
  %1184 = vmatprep.subr.mxu0 0.0
  %1185 = vmatpush1.msra.mxu0 0.0
  %1186 = vmatprep.subr.mxu0 0.0
  %1187 = vmatpush1.msra.mxu0 0.0
  %1188 = vmatprep.subr.mxu0 0.0
  %1189 = vmatpush1.msra.mxu0 0.0
  %1190 = vmatprep.subr.mxu0 0.0
  %1191 = vmatpush1.msra.mxu0 0.0
  %1192 = vmatprep.subr.mxu0 0.0
  %1193 = vmatpush1.msra.mxu0 0.0
  %1194 = vmatprep.subr.mxu0 0.0
  %1195 = vmatpush1.msra.mxu0 0.0
  %1196 = vmatprep.subr.mxu0 0.0
  %1197 = vmatpush1.msra.mxu0 0.0
  %1198 = vmatprep.subr.mxu0 0.0
  %1199 = vmatpush1.msra.mxu0 0.0
  %1200 = vmatprep.subr.mxu0 0.0
  %1201 = vmatpush1.msra.mxu0 0.0
  %1202 = vmatprep.mubr.f32.mxu0 0.0
  %1203 = vmatmul.mubr.f32.gmra.mrb[0].mxu0 %v142
  %v1204 = vpop.f32.mrb[0].mxu0
  %v1205 = vadd.f32 0.0, %v1204
  %v1206 = vpop.f32.mrb[0].mxu0
  %v1207 = vadd.f32 0.0, %v1206
  %1208 = vdwg.mxu0
  %1209 = vmatprep.subr.mxu0 %v43
  %1210 = vmatpush1.msra.mxu0 %v42
  %1211 = vmatprep.subr.mxu0 %v107
  %1212 = vmatpush1.msra.mxu0 %v106
  %1213 = vmatprep.subr.mxu0 0.0
  %1214 = vmatpush1.msra.mxu0 0.0
  %1215 = vmatprep.subr.mxu0 0.0
  %1216 = vmatpush1.msra.mxu0 0.0
  %1217 = vmatprep.subr.mxu0 0.0
  %1218 = vmatpush1.msra.mxu0 0.0
  %1219 = vmatprep.subr.mxu0 0.0
  %1220 = vmatpush1.msra.mxu0 0.0
  %1221 = vmatprep.subr.mxu0 0.0
  %1222 = vmatpush1.msra.mxu0 0.0
  %1223 = vmatprep.subr.mxu0 0.0
  %1224 = vmatpush1.msra.mxu0 0.0
  %1225 = vmatprep.subr.mxu0 0.0
  %1226 = vmatpush1.msra.mxu0 0.0
  %1227 = vmatprep.subr.mxu0 0.0
  %1228 = vmatpush1.msra.mxu0 0.0
  %1229 = vmatprep.subr.mxu0 0.0
  %1230 = vmatpush1.msra.mxu0 0.0
  %1231 = vmatprep.subr.mxu0 0.0
  %1232 = vmatpush1.msra.mxu0 0.0
  %1233 = vmatprep.subr.mxu0 0.0
  %1234 = vmatpush1.msra.mxu0 0.0
  %1235 = vmatprep.subr.mxu0 0.0
  %1236 = vmatpush1.msra.mxu0 0.0
  %1237 = vmatprep.subr.mxu0 0.0
  %1238 = vmatpush1.msra.mxu0 0.0
  %1239 = vmatprep.subr.mxu0 0.0
  %1240 = vmatpush1.msra.mxu0 0.0
  %1241 = vmatprep.subr.mxu0 0.0
  %1242 = vmatpush1.msra.mxu0 0.0
  %1243 = vmatprep.subr.mxu0 0.0
  %1244 = vmatpush1.msra.mxu0 0.0
  %1245 = vmatprep.subr.mxu0 0.0
  %1246 = vmatpush1.msra.mxu0 0.0
  %1247 = vmatprep.subr.mxu0 0.0
  %1248 = vmatpush1.msra.mxu0 0.0
  %1249 = vmatprep.subr.mxu0 0.0
  %1250 = vmatpush1.msra.mxu0 0.0
  %1251 = vmatprep.subr.mxu0 0.0
  %1252 = vmatpush1.msra.mxu0 0.0
  %1253 = vmatprep.subr.mxu0 0.0
  %1254 = vmatpush1.msra.mxu0 0.0
  %1255 = vmatprep.subr.mxu0 0.0
  %1256 = vmatpush1.msra.mxu0 0.0
  %1257 = vmatprep.subr.mxu0 0.0
  %1258 = vmatpush1.msra.mxu0 0.0
  %1259 = vmatprep.subr.mxu0 0.0
  %1260 = vmatpush1.msra.mxu0 0.0
  %1261 = vmatprep.subr.mxu0 0.0
  %1262 = vmatpush1.msra.mxu0 0.0
  %1263 = vmatprep.subr.mxu0 0.0
  %1264 = vmatpush1.msra.mxu0 0.0
  %1265 = vmatprep.subr.mxu0 0.0
  %1266 = vmatpush1.msra.mxu0 0.0
  %1267 = vmatprep.subr.mxu0 0.0
  %1268 = vmatpush1.msra.mxu0 0.0
  %1269 = vmatprep.subr.mxu0 0.0
  %1270 = vmatpush1.msra.mxu0 0.0
  %1271 = vmatprep.subr.mxu0 0.0
  %1272 = vmatpush1.msra.mxu0 0.0
  %1273 = vmatprep.mubr.f32.mxu0 0.0
  %1274 = vmatmul.mubr.f32.gmra.mrb[0].mxu0 %v142
  %v1275 = vpop.f32.mrb[0].mxu0
  %v1276 = vadd.f32 0.0, %v1275
  %v1277 = vpop.f32.mrb[0].mxu0
  %v1278 = vadd.f32 0.0, %v1277
  %1279 = vdwg.mxu0
  %1280 = vmatprep.subr.mxu0 %v45
  %1281 = vmatpush1.msra.mxu0 %v44
  %1282 = vmatprep.subr.mxu0 %v109
  %1283 = vmatpush1.msra.mxu0 %v108
  %1284 = vmatprep.subr.mxu0 0.0
  %1285 = vmatpush1.msra.mxu0 0.0
  %1286 = vmatprep.subr.mxu0 0.0
  %1287 = vmatpush1.msra.mxu0 0.0
  %1288 = vmatprep.subr.mxu0 0.0
  %1289 = vmatpush1.msra.mxu0 0.0
  %1290 = vmatprep.subr.mxu0 0.0
  %1291 = vmatpush1.msra.mxu0 0.0
  %1292 = vmatprep.subr.mxu0 0.0
  %1293 = vmatpush1.msra.mxu0 0.0
  %1294 = vmatprep.subr.mxu0 0.0
  %1295 = vmatpush1.msra.mxu0 0.0
  %1296 = vmatprep.subr.mxu0 0.0
  %1297 = vmatpush1.msra.mxu0 0.0
  %1298 = vmatprep.subr.mxu0 0.0
  %1299 = vmatpush1.msra.mxu0 0.0
  %1300 = vmatprep.subr.mxu0 0.0
  %1301 = vmatpush1.msra.mxu0 0.0
  %1302 = vmatprep.subr.mxu0 0.0
  %1303 = vmatpush1.msra.mxu0 0.0
  %1304 = vmatprep.subr.mxu0 0.0
  %1305 = vmatpush1.msra.mxu0 0.0
  %1306 = vmatprep.subr.mxu0 0.0
  %1307 = vmatpush1.msra.mxu0 0.0
  %1308 = vmatprep.subr.mxu0 0.0
  %1309 = vmatpush1.msra.mxu0 0.0
  %1310 = vmatprep.subr.mxu0 0.0
  %1311 = vmatpush1.msra.mxu0 0.0
  %1312 = vmatprep.subr.mxu0 0.0
  %1313 = vmatpush1.msra.mxu0 0.0
  %1314 = vmatprep.subr.mxu0 0.0
  %1315 = vmatpush1.msra.mxu0 0.0
  %1316 = vmatprep.subr.mxu0 0.0
  %1317 = vmatpush1.msra.mxu0 0.0
  %1318 = vmatprep.subr.mxu0 0.0
  %1319 = vmatpush1.msra.mxu0 0.0
  %1320 = vmatprep.subr.mxu0 0.0
  %1321 = vmatpush1.msra.mxu0 0.0
  %1322 = vmatprep.subr.mxu0 0.0
  %1323 = vmatpush1.msra.mxu0 0.0
  %1324 = vmatprep.subr.mxu0 0.0
  %1325 = vmatpush1.msra.mxu0 0.0
  %1326 = vmatprep.subr.mxu0 0.0
  %1327 = vmatpush1.msra.mxu0 0.0
  %1328 = vmatprep.subr.mxu0 0.0
  %1329 = vmatpush1.msra.mxu0 0.0
  %1330 = vmatprep.subr.mxu0 0.0
  %1331 = vmatpush1.msra.mxu0 0.0
  %1332 = vmatprep.subr.mxu0 0.0
  %1333 = vmatpush1.msra.mxu0 0.0
  %1334 = vmatprep.subr.mxu0 0.0
  %1335 = vmatpush1.msra.mxu0 0.0
  %1336 = vmatprep.subr.mxu0 0.0
  %1337 = vmatpush1.msra.mxu0 0.0
  %1338 = vmatprep.subr.mxu0 0.0
  %1339 = vmatpush1.msra.mxu0 0.0
  %1340 = vmatprep.subr.mxu0 0.0
  %1341 = vmatpush1.msra.mxu0 0.0
  %1342 = vmatprep.subr.mxu0 0.0
  %1343 = vmatpush1.msra.mxu0 0.0
  %1344 = vmatprep.mubr.f32.mxu0 0.0
  %1345 = vmatmul.mubr.f32.gmra.mrb[0].mxu0 %v142
  %v1346 = vpop.f32.mrb[0].mxu0
  %v1347 = vadd.f32 0.0, %v1346
  %v1348 = vpop.f32.mrb[0].mxu0
  %v1349 = vadd.f32 0.0, %v1348
  %1350 = vdwg.mxu0
  %1351 = vmatprep.subr.mxu0 %v47
  %1352 = vmatpush1.msra.mxu0 %v46
  %1353 = vmatprep.subr.mxu0 %v111
  %1354 = vmatpush1.msra.mxu0 %v110
  %1355 = vmatprep.subr.mxu0 0.0
  %1356 = vmatpush1.msra.mxu0 0.0
  %1357 = vmatprep.subr.mxu0 0.0
  %1358 = vmatpush1.msra.mxu0 0.0
  %1359 = vmatprep.subr.mxu0 0.0
  %1360 = vmatpush1.msra.mxu0 0.0
  %1361 = vmatprep.subr.mxu0 0.0
  %1362 = vmatpush1.msra.mxu0 0.0
  %1363 = vmatprep.subr.mxu0 0.0
  %1364 = vmatpush1.msra.mxu0 0.0
  %1365 = vmatprep.subr.mxu0 0.0
  %1366 = vmatpush1.msra.mxu0 0.0
  %1367 = vmatprep.subr.mxu0 0.0
  %1368 = vmatpush1.msra.mxu0 0.0
  %1369 = vmatprep.subr.mxu0 0.0
  %1370 = vmatpush1.msra.mxu0 0.0
  %1371 = vmatprep.subr.mxu0 0.0
  %1372 = vmatpush1.msra.mxu0 0.0
  %1373 = vmatprep.subr.mxu0 0.0
  %1374 = vmatpush1.msra.mxu0 0.0
  %1375 = vmatprep.subr.mxu0 0.0
  %1376 = vmatpush1.msra.mxu0 0.0
  %1377 = vmatprep.subr.mxu0 0.0
  %1378 = vmatpush1.msra.mxu0 0.0
  %1379 = vmatprep.subr.mxu0 0.0
  %1380 = vmatpush1.msra.mxu0 0.0
  %1381 = vmatprep.subr.mxu0 0.0
  %1382 = vmatpush1.msra.mxu0 0.0
  %1383 = vmatprep.subr.mxu0 0.0
  %1384 = vmatpush1.msra.mxu0 0.0
  %1385 = vmatprep.subr.mxu0 0.0
  %1386 = vmatpush1.msra.mxu0 0.0
  %1387 = vmatprep.subr.mxu0 0.0
  %1388 = vmatpush1.msra.mxu0 0.0
  %1389 = vmatprep.subr.mxu0 0.0
  %1390 = vmatpush1.msra.mxu0 0.0
  %1391 = vmatprep.subr.mxu0 0.0
  %1392 = vmatpush1.msra.mxu0 0.0
  %1393 = vmatprep.subr.mxu0 0.0
  %1394 = vmatpush1.msra.mxu0 0.0
  %1395 = vmatprep.subr.mxu0 0.0
  %1396 = vmatpush1.msra.mxu0 0.0
  %1397 = vmatprep.subr.mxu0 0.0
  %1398 = vmatpush1.msra.mxu0 0.0
  %1399 = vmatprep.subr.mxu0 0.0
  %1400 = vmatpush1.msra.mxu0 0.0
  %1401 = vmatprep.subr.mxu0 0.0
  %1402 = vmatpush1.msra.mxu0 0.0
  %1403 = vmatprep.subr.mxu0 0.0
  %1404 = vmatpush1.msra.mxu0 0.0
  %1405 = vmatprep.subr.mxu0 0.0
  %1406 = vmatpush1.msra.mxu0 0.0
  %1407 = vmatprep.subr.mxu0 0.0
  %1408 = vmatpush1.msra.mxu0 0.0
  %1409 = vmatprep.subr.mxu0 0.0
  %1410 = vmatpush1.msra.mxu0 0.0
  %1411 = vmatprep.subr.mxu0 0.0
  %1412 = vmatpush1.msra.mxu0 0.0
  %1413 = vmatprep.subr.mxu0 0.0
  %1414 = vmatpush1.msra.mxu0 0.0
  %1415 = vmatprep.mubr.f32.mxu0 0.0
  %1416 = vmatmul.mubr.f32.gmra.mrb[0].mxu0 %v142
  %v1417 = vpop.f32.mrb[0].mxu0
  %v1418 = vadd.f32 0.0, %v1417
  %v1419 = vpop.f32.mrb[0].mxu0
  %v1420 = vadd.f32 0.0, %v1419
  %1421 = vdwg.mxu0
  %1422 = vmatprep.subr.mxu0 %v49
  %1423 = vmatpush1.msra.mxu0 %v48
  %1424 = vmatprep.subr.mxu0 %v113
  %1425 = vmatpush1.msra.mxu0 %v112
  %1426 = vmatprep.subr.mxu0 0.0
  %1427 = vmatpush1.msra.mxu0 0.0
  %1428 = vmatprep.subr.mxu0 0.0
  %1429 = vmatpush1.msra.mxu0 0.0
  %1430 = vmatprep.subr.mxu0 0.0
  %1431 = vmatpush1.msra.mxu0 0.0
  %1432 = vmatprep.subr.mxu0 0.0
  %1433 = vmatpush1.msra.mxu0 0.0
  %1434 = vmatprep.subr.mxu0 0.0
  %1435 = vmatpush1.msra.mxu0 0.0
  %1436 = vmatprep.subr.mxu0 0.0
  %1437 = vmatpush1.msra.mxu0 0.0
  %1438 = vmatprep.subr.mxu0 0.0
  %1439 = vmatpush1.msra.mxu0 0.0
  %1440 = vmatprep.subr.mxu0 0.0
  %1441 = vmatpush1.msra.mxu0 0.0
  %1442 = vmatprep.subr.mxu0 0.0
  %1443 = vmatpush1.msra.mxu0 0.0
  %1444 = vmatprep.subr.mxu0 0.0
  %1445 = vmatpush1.msra.mxu0 0.0
  %1446 = vmatprep.subr.mxu0 0.0
  %1447 = vmatpush1.msra.mxu0 0.0
  %1448 = vmatprep.subr.mxu0 0.0
  %1449 = vmatpush1.msra.mxu0 0.0
  %1450 = vmatprep.subr.mxu0 0.0
  %1451 = vmatpush1.msra.mxu0 0.0
  %1452 = vmatprep.subr.mxu0 0.0
  %1453 = vmatpush1.msra.mxu0 0.0
  %1454 = vmatprep.subr.mxu0 0.0
  %1455 = vmatpush1.msra.mxu0 0.0
  %1456 = vmatprep.subr.mxu0 0.0
  %1457 = vmatpush1.msra.mxu0 0.0
  %1458 = vmatprep.subr.mxu0 0.0
  %1459 = vmatpush1.msra.mxu0 0.0
  %1460 = vmatprep.subr.mxu0 0.0
  %1461 = vmatpush1.msra.mxu0 0.0
  %1462 = vmatprep.subr.mxu0 0.0
  %1463 = vmatpush1.msra.mxu0 0.0
  %1464 = vmatprep.subr.mxu0 0.0
  %1465 = vmatpush1.msra.mxu0 0.0
  %1466 = vmatprep.subr.mxu0 0.0
  %1467 = vmatpush1.msra.mxu0 0.0
  %1468 = vmatprep.subr.mxu0 0.0
  %1469 = vmatpush1.msra.mxu0 0.0
  %1470 = vmatprep.subr.mxu0 0.0
  %1471 = vmatpush1.msra.mxu0 0.0
  %1472 = vmatprep.subr.mxu0 0.0
  %1473 = vmatpush1.msra.mxu0 0.0
  %1474 = vmatprep.subr.mxu0 0.0
  %1475 = vmatpush1.msra.mxu0 0.0
  %1476 = vmatprep.subr.mxu0 0.0
  %1477 = vmatpush1.msra.mxu0 0.0
  %1478 = vmatprep.subr.mxu0 0.0
  %1479 = vmatpush1.msra.mxu0 0.0
  %1480 = vmatprep.subr.mxu0 0.0
  %1481 = vmatpush1.msra.mxu0 0.0
  %1482 = vmatprep.subr.mxu0 0.0
  %1483 = vmatpush1.msra.mxu0 0.0
  %1484 = vmatprep.subr.mxu0 0.0
  %1485 = vmatpush1.msra.mxu0 0.0
  %1486 = vmatprep.mubr.f32.mxu0 0.0
  %1487 = vmatmul.mubr.f32.gmra.mrb[0].mxu0 %v142
  %v1488 = vpop.f32.mrb[0].mxu0
  %v1489 = vadd.f32 0.0, %v1488
  %v1490 = vpop.f32.mrb[0].mxu0
  %v1491 = vadd.f32 0.0, %v1490
  %1492 = vdwg.mxu0
  %1493 = vmatprep.subr.mxu0 %v51
  %1494 = vmatpush1.msra.mxu0 %v50
  %1495 = vmatprep.subr.mxu0 %v115
  %1496 = vmatpush1.msra.mxu0 %v114
  %1497 = vmatprep.subr.mxu0 0.0
  %1498 = vmatpush1.msra.mxu0 0.0
  %1499 = vmatprep.subr.mxu0 0.0
  %1500 = vmatpush1.msra.mxu0 0.0
  %1501 = vmatprep.subr.mxu0 0.0
  %1502 = vmatpush1.msra.mxu0 0.0
  %1503 = vmatprep.subr.mxu0 0.0
  %1504 = vmatpush1.msra.mxu0 0.0
  %1505 = vmatprep.subr.mxu0 0.0
  %1506 = vmatpush1.msra.mxu0 0.0
  %1507 = vmatprep.subr.mxu0 0.0
  %1508 = vmatpush1.msra.mxu0 0.0
  %1509 = vmatprep.subr.mxu0 0.0
  %1510 = vmatpush1.msra.mxu0 0.0
  %1511 = vmatprep.subr.mxu0 0.0
  %1512 = vmatpush1.msra.mxu0 0.0
  %1513 = vmatprep.subr.mxu0 0.0
  %1514 = vmatpush1.msra.mxu0 0.0
  %1515 = vmatprep.subr.mxu0 0.0
  %1516 = vmatpush1.msra.mxu0 0.0
  %1517 = vmatprep.subr.mxu0 0.0
  %1518 = vmatpush1.msra.mxu0 0.0
  %1519 = vmatprep.subr.mxu0 0.0
  %1520 = vmatpush1.msra.mxu0 0.0
  %1521 = vmatprep.subr.mxu0 0.0
  %1522 = vmatpush1.msra.mxu0 0.0
  %1523 = vmatprep.subr.mxu0 0.0
  %1524 = vmatpush1.msra.mxu0 0.0
  %1525 = vmatprep.subr.mxu0 0.0
  %1526 = vmatpush1.msra.mxu0 0.0
  %1527 = vmatprep.subr.mxu0 0.0
  %1528 = vmatpush1.msra.mxu0 0.0
  %1529 = vmatprep.subr.mxu0 0.0
  %1530 = vmatpush1.msra.mxu0 0.0
  %1531 = vmatprep.subr.mxu0 0.0
  %1532 = vmatpush1.msra.mxu0 0.0
  %1533 = vmatprep.subr.mxu0 0.0
  %1534 = vmatpush1.msra.mxu0 0.0
  %1535 = vmatprep.subr.mxu0 0.0
  %1536 = vmatpush1.msra.mxu0 0.0
  %1537 = vmatprep.subr.mxu0 0.0
  %1538 = vmatpush1.msra.mxu0 0.0
  %1539 = vmatprep.subr.mxu0 0.0
  %1540 = vmatpush1.msra.mxu0 0.0
  %1541 = vmatprep.subr.mxu0 0.0
  %1542 = vmatpush1.msra.mxu0 0.0
  %1543 = vmatprep.subr.mxu0 0.0
  %1544 = vmatpush1.msra.mxu0 0.0
  %1545 = vmatprep.subr.mxu0 0.0
  %1546 = vmatpush1.msra.mxu0 0.0
  %1547 = vmatprep.subr.mxu0 0.0
  %1548 = vmatpush1.msra.mxu0 0.0
  %1549 = vmatprep.subr.mxu0 0.0
  %1550 = vmatpush1.msra.mxu0 0.0
  %1551 = vmatprep.subr.mxu0 0.0
  %1552 = vmatpush1.msra.mxu0 0.0
  %1553 = vmatprep.subr.mxu0 0.0
  %1554 = vmatpush1.msra.mxu0 0.0
  %1555 = vmatprep.subr.mxu0 0.0
  %1556 = vmatpush1.msra.mxu0 0.0
  %1557 = vmatprep.mubr.f32.mxu0 0.0
  %1558 = vmatmul.mubr.f32.gmra.mrb[0].mxu0 %v142
  %v1559 = vpop.f32.mrb[0].mxu0
  %v1560 = vadd.f32 0.0, %v1559
  %v1561 = vpop.f32.mrb[0].mxu0
  %v1562 = vadd.f32 0.0, %v1561
  %1563 = vdwg.mxu0
  %1564 = vmatprep.subr.mxu0 %v53
  %1565 = vmatpush1.msra.mxu0 %v52
  %1566 = vmatprep.subr.mxu0 %v117
  %1567 = vmatpush1.msra.mxu0 %v116
  %1568 = vmatprep.subr.mxu0 0.0
  %1569 = vmatpush1.msra.mxu0 0.0
  %1570 = vmatprep.subr.mxu0 0.0
  %1571 = vmatpush1.msra.mxu0 0.0
  %1572 = vmatprep.subr.mxu0 0.0
  %1573 = vmatpush1.msra.mxu0 0.0
  %1574 = vmatprep.subr.mxu0 0.0
  %1575 = vmatpush1.msra.mxu0 0.0
  %1576 = vmatprep.subr.mxu0 0.0
  %1577 = vmatpush1.msra.mxu0 0.0
  %1578 = vmatprep.subr.mxu0 0.0
  %1579 = vmatpush1.msra.mxu0 0.0
  %1580 = vmatprep.subr.mxu0 0.0
  %1581 = vmatpush1.msra.mxu0 0.0
  %1582 = vmatprep.subr.mxu0 0.0
  %1583 = vmatpush1.msra.mxu0 0.0
  %1584 = vmatprep.subr.mxu0 0.0
  %1585 = vmatpush1.msra.mxu0 0.0
  %1586 = vmatprep.subr.mxu0 0.0
  %1587 = vmatpush1.msra.mxu0 0.0
  %1588 = vmatprep.subr.mxu0 0.0
  %1589 = vmatpush1.msra.mxu0 0.0
  %1590 = vmatprep.subr.mxu0 0.0
  %1591 = vmatpush1.msra.mxu0 0.0
  %1592 = vmatprep.subr.mxu0 0.0
  %1593 = vmatpush1.msra.mxu0 0.0
  %1594 = vmatprep.subr.mxu0 0.0
  %1595 = vmatpush1.msra.mxu0 0.0
  %1596 = vmatprep.subr.mxu0 0.0
  %1597 = vmatpush1.msra.mxu0 0.0
  %1598 = vmatprep.subr.mxu0 0.0
  %1599 = vmatpush1.msra.mxu0 0.0
  %1600 = vmatprep.subr.mxu0 0.0
  %1601 = vmatpush1.msra.mxu0 0.0
  %1602 = vmatprep.subr.mxu0 0.0
  %1603 = vmatpush1.msra.mxu0 0.0
  %1604 = vmatprep.subr.mxu0 0.0
  %1605 = vmatpush1.msra.mxu0 0.0
  %1606 = vmatprep.subr.mxu0 0.0
  %1607 = vmatpush1.msra.mxu0 0.0
  %1608 = vmatprep.subr.mxu0 0.0
  %1609 = vmatpush1.msra.mxu0 0.0
  %1610 = vmatprep.subr.mxu0 0.0
  %1611 = vmatpush1.msra.mxu0 0.0
  %1612 = vmatprep.subr.mxu0 0.0
  %1613 = vmatpush1.msra.mxu0 0.0
  %1614 = vmatprep.subr.mxu0 0.0
  %1615 = vmatpush1.msra.mxu0 0.0
  %1616 = vmatprep.subr.mxu0 0.0
  %1617 = vmatpush1.msra.mxu0 0.0
  %1618 = vmatprep.subr.mxu0 0.0
  %1619 = vmatpush1.msra.mxu0 0.0
  %1620 = vmatprep.subr.mxu0 0.0
  %1621 = vmatpush1.msra.mxu0 0.0
  %1622 = vmatprep.subr.mxu0 0.0
  %1623 = vmatpush1.msra.mxu0 0.0
  %1624 = vmatprep.subr.mxu0 0.0
  %1625 = vmatpush1.msra.mxu0 0.0
  %1626 = vmatprep.subr.mxu0 0.0
  %1627 = vmatpush1.msra.mxu0 0.0
  %1628 = vmatprep.mubr.f32.mxu0 0.0
  %1629 = vmatmul.mubr.f32.gmra.mrb[0].mxu0 %v142
  %v1630 = vpop.f32.mrb[0].mxu0
  %v1631 = vadd.f32 0.0, %v1630
  %v1632 = vpop.f32.mrb[0].mxu0
  %v1633 = vadd.f32 0.0, %v1632
  %1634 = vdwg.mxu0
  %1635 = vmatprep.subr.mxu0 %v55
  %1636 = vmatpush1.msra.mxu0 %v54
  %1637 = vmatprep.subr.mxu0 %v119
  %1638 = vmatpush1.msra.mxu0 %v118
  %1639 = vmatprep.subr.mxu0 0.0
  %1640 = vmatpush1.msra.mxu0 0.0
  %1641 = vmatprep.subr.mxu0 0.0
  %1642 = vmatpush1.msra.mxu0 0.0
  %1643 = vmatprep.subr.mxu0 0.0
  %1644 = vmatpush1.msra.mxu0 0.0
  %1645 = vmatprep.subr.mxu0 0.0
  %1646 = vmatpush1.msra.mxu0 0.0
  %1647 = vmatprep.subr.mxu0 0.0
  %1648 = vmatpush1.msra.mxu0 0.0
  %1649 = vmatprep.subr.mxu0 0.0
  %1650 = vmatpush1.msra.mxu0 0.0
  %1651 = vmatprep.subr.mxu0 0.0
  %1652 = vmatpush1.msra.mxu0 0.0
  %1653 = vmatprep.subr.mxu0 0.0
  %1654 = vmatpush1.msra.mxu0 0.0
  %1655 = vmatprep.subr.mxu0 0.0
  %1656 = vmatpush1.msra.mxu0 0.0
  %1657 = vmatprep.subr.mxu0 0.0
  %1658 = vmatpush1.msra.mxu0 0.0
  %1659 = vmatprep.subr.mxu0 0.0
  %1660 = vmatpush1.msra.mxu0 0.0
  %1661 = vmatprep.subr.mxu0 0.0
  %1662 = vmatpush1.msra.mxu0 0.0
  %1663 = vmatprep.subr.mxu0 0.0
  %1664 = vmatpush1.msra.mxu0 0.0
  %1665 = vmatprep.subr.mxu0 0.0
  %1666 = vmatpush1.msra.mxu0 0.0
  %1667 = vmatprep.subr.mxu0 0.0
  %1668 = vmatpush1.msra.mxu0 0.0
  %1669 = vmatprep.subr.mxu0 0.0
  %1670 = vmatpush1.msra.mxu0 0.0
  %1671 = vmatprep.subr.mxu0 0.0
  %1672 = vmatpush1.msra.mxu0 0.0
  %1673 = vmatprep.subr.mxu0 0.0
  %1674 = vmatpush1.msra.mxu0 0.0
  %1675 = vmatprep.subr.mxu0 0.0
  %1676 = vmatpush1.msra.mxu0 0.0
  %1677 = vmatprep.subr.mxu0 0.0
  %1678 = vmatpush1.msra.mxu0 0.0
  %1679 = vmatprep.subr.mxu0 0.0
  %1680 = vmatpush1.msra.mxu0 0.0
  %1681 = vmatprep.subr.mxu0 0.0
  %1682 = vmatpush1.msra.mxu0 0.0
  %1683 = vmatprep.subr.mxu0 0.0
  %1684 = vmatpush1.msra.mxu0 0.0
  %1685 = vmatprep.subr.mxu0 0.0
  %1686 = vmatpush1.msra.mxu0 0.0
  %1687 = vmatprep.subr.mxu0 0.0
  %1688 = vmatpush1.msra.mxu0 0.0
  %1689 = vmatprep.subr.mxu0 0.0
  %1690 = vmatpush1.msra.mxu0 0.0
  %1691 = vmatprep.subr.mxu0 0.0
  %1692 = vmatpush1.msra.mxu0 0.0
  %1693 = vmatprep.subr.mxu0 0.0
  %1694 = vmatpush1.msra.mxu0 0.0
  %1695 = vmatprep.subr.mxu0 0.0
  %1696 = vmatpush1.msra.mxu0 0.0
  %1697 = vmatprep.subr.mxu0 0.0
  %1698 = vmatpush1.msra.mxu0 0.0
  %1699 = vmatprep.mubr.f32.mxu0 0.0
  %1700 = vmatmul.mubr.f32.gmra.mrb[0].mxu0 %v142
  %v1701 = vpop.f32.mrb[0].mxu0
  %v1702 = vadd.f32 0.0, %v1701
  %v1703 = vpop.f32.mrb[0].mxu0
  %v1704 = vadd.f32 0.0, %v1703
  %1705 = vdwg.mxu0
  %1706 = vmatprep.subr.mxu0 %v57
  %1707 = vmatpush1.msra.mxu0 %v56
  %1708 = vmatprep.subr.mxu0 %v121
  %1709 = vmatpush1.msra.mxu0 %v120
  %1710 = vmatprep.subr.mxu0 0.0
  %1711 = vmatpush1.msra.mxu0 0.0
  %1712 = vmatprep.subr.mxu0 0.0
  %1713 = vmatpush1.msra.mxu0 0.0
  %1714 = vmatprep.subr.mxu0 0.0
  %1715 = vmatpush1.msra.mxu0 0.0
  %1716 = vmatprep.subr.mxu0 0.0
  %1717 = vmatpush1.msra.mxu0 0.0
  %1718 = vmatprep.subr.mxu0 0.0
  %1719 = vmatpush1.msra.mxu0 0.0
  %1720 = vmatprep.subr.mxu0 0.0
  %1721 = vmatpush1.msra.mxu0 0.0
  %1722 = vmatprep.subr.mxu0 0.0
  %1723 = vmatpush1.msra.mxu0 0.0
  %1724 = vmatprep.subr.mxu0 0.0
  %1725 = vmatpush1.msra.mxu0 0.0
  %1726 = vmatprep.subr.mxu0 0.0
  %1727 = vmatpush1.msra.mxu0 0.0
  %1728 = vmatprep.subr.mxu0 0.0
  %1729 = vmatpush1.msra.mxu0 0.0
  %1730 = vmatprep.subr.mxu0 0.0
  %1731 = vmatpush1.msra.mxu0 0.0
  %1732 = vmatprep.subr.mxu0 0.0
  %1733 = vmatpush1.msra.mxu0 0.0
  %1734 = vmatprep.subr.mxu0 0.0
  %1735 = vmatpush1.msra.mxu0 0.0
  %1736 = vmatprep.subr.mxu0 0.0
  %1737 = vmatpush1.msra.mxu0 0.0
  %1738 = vmatprep.subr.mxu0 0.0
  %1739 = vmatpush1.msra.mxu0 0.0
  %1740 = vmatprep.subr.mxu0 0.0
  %1741 = vmatpush1.msra.mxu0 0.0
  %1742 = vmatprep.subr.mxu0 0.0
  %1743 = vmatpush1.msra.mxu0 0.0
  %1744 = vmatprep.subr.mxu0 0.0
  %1745 = vmatpush1.msra.mxu0 0.0
  %1746 = vmatprep.subr.mxu0 0.0
  %1747 = vmatpush1.msra.mxu0 0.0
  %1748 = vmatprep.subr.mxu0 0.0
  %1749 = vmatpush1.msra.mxu0 0.0
  %1750 = vmatprep.subr.mxu0 0.0
  %1751 = vmatpush1.msra.mxu0 0.0
  %1752 = vmatprep.subr.mxu0 0.0
  %1753 = vmatpush1.msra.mxu0 0.0
  %1754 = vmatprep.subr.mxu0 0.0
  %1755 = vmatpush1.msra.mxu0 0.0
  %1756 = vmatprep.subr.mxu0 0.0
  %1757 = vmatpush1.msra.mxu0 0.0
  %1758 = vmatprep.subr.mxu0 0.0
  %1759 = vmatpush1.msra.mxu0 0.0
  %1760 = vmatprep.subr.mxu0 0.0
  %1761 = vmatpush1.msra.mxu0 0.0
  %1762 = vmatprep.subr.mxu0 0.0
  %1763 = vmatpush1.msra.mxu0 0.0
  %1764 = vmatprep.subr.mxu0 0.0
  %1765 = vmatpush1.msra.mxu0 0.0
  %1766 = vmatprep.subr.mxu0 0.0
  %1767 = vmatpush1.msra.mxu0 0.0
  %1768 = vmatprep.subr.mxu0 0.0
  %1769 = vmatpush1.msra.mxu0 0.0
  %1770 = vmatprep.mubr.f32.mxu0 0.0
  %1771 = vmatmul.mubr.f32.gmra.mrb[0].mxu0 %v142
  %v1772 = vpop.f32.mrb[0].mxu0
  %v1773 = vadd.f32 0.0, %v1772
  %v1774 = vpop.f32.mrb[0].mxu0
  %v1775 = vadd.f32 0.0, %v1774
  %1776 = vdwg.mxu0
  %1777 = vmatprep.subr.mxu0 %v59
  %1778 = vmatpush1.msra.mxu0 %v58
  %1779 = vmatprep.subr.mxu0 %v123
  %1780 = vmatpush1.msra.mxu0 %v122
  %1781 = vmatprep.subr.mxu0 0.0
  %1782 = vmatpush1.msra.mxu0 0.0
  %1783 = vmatprep.subr.mxu0 0.0
  %1784 = vmatpush1.msra.mxu0 0.0
  %1785 = vmatprep.subr.mxu0 0.0
  %1786 = vmatpush1.msra.mxu0 0.0
  %1787 = vmatprep.subr.mxu0 0.0
  %1788 = vmatpush1.msra.mxu0 0.0
  %1789 = vmatprep.subr.mxu0 0.0
  %1790 = vmatpush1.msra.mxu0 0.0
  %1791 = vmatprep.subr.mxu0 0.0
  %1792 = vmatpush1.msra.mxu0 0.0
  %1793 = vmatprep.subr.mxu0 0.0
  %1794 = vmatpush1.msra.mxu0 0.0
  %1795 = vmatprep.subr.mxu0 0.0
  %1796 = vmatpush1.msra.mxu0 0.0
  %1797 = vmatprep.subr.mxu0 0.0
  %1798 = vmatpush1.msra.mxu0 0.0
  %1799 = vmatprep.subr.mxu0 0.0
  %1800 = vmatpush1.msra.mxu0 0.0
  %1801 = vmatprep.subr.mxu0 0.0
  %1802 = vmatpush1.msra.mxu0 0.0
  %1803 = vmatprep.subr.mxu0 0.0
  %1804 = vmatpush1.msra.mxu0 0.0
  %1805 = vmatprep.subr.mxu0 0.0
  %1806 = vmatpush1.msra.mxu0 0.0
  %1807 = vmatprep.subr.mxu0 0.0
  %1808 = vmatpush1.msra.mxu0 0.0
  %1809 = vmatprep.subr.mxu0 0.0
  %1810 = vmatpush1.msra.mxu0 0.0
  %1811 = vmatprep.subr.mxu0 0.0
  %1812 = vmatpush1.msra.mxu0 0.0
  %1813 = vmatprep.subr.mxu0 0.0
  %1814 = vmatpush1.msra.mxu0 0.0
  %1815 = vmatprep.subr.mxu0 0.0
  %1816 = vmatpush1.msra.mxu0 0.0
  %1817 = vmatprep.subr.mxu0 0.0
  %1818 = vmatpush1.msra.mxu0 0.0
  %1819 = vmatprep.subr.mxu0 0.0
  %1820 = vmatpush1.msra.mxu0 0.0
  %1821 = vmatprep.subr.mxu0 0.0
  %1822 = vmatpush1.msra.mxu0 0.0
  %1823 = vmatprep.subr.mxu0 0.0
  %1824 = vmatpush1.msra.mxu0 0.0
  %1825 = vmatprep.subr.mxu0 0.0
  %1826 = vmatpush1.msra.mxu0 0.0
  %1827 = vmatprep.subr.mxu0 0.0
  %1828 = vmatpush1.msra.mxu0 0.0
  %1829 = vmatprep.subr.mxu0 0.0
  %1830 = vmatpush1.msra.mxu0 0.0
  %1831 = vmatprep.subr.mxu0 0.0
  %1832 = vmatpush1.msra.mxu0 0.0
  %1833 = vmatprep.subr.mxu0 0.0
  %1834 = vmatpush1.msra.mxu0 0.0
  %1835 = vmatprep.subr.mxu0 0.0
  %1836 = vmatpush1.msra.mxu0 0.0
  %1837 = vmatprep.subr.mxu0 0.0
  %1838 = vmatpush1.msra.mxu0 0.0
  %1839 = vmatprep.subr.mxu0 0.0
  %1840 = vmatpush1.msra.mxu0 0.0
  %1841 = vmatprep.mubr.f32.mxu0 0.0
  %1842 = vmatmul.mubr.f32.gmra.mrb[0].mxu0 %v142
  %v1843 = vpop.f32.mrb[0].mxu0
  %v1844 = vadd.f32 0.0, %v1843
  %v1845 = vpop.f32.mrb[0].mxu0
  %v1846 = vadd.f32 0.0, %v1845
  %1847 = vdwg.mxu0
  %1848 = vmatprep.subr.mxu0 %v61
  %1849 = vmatpush1.msra.mxu0 %v60
  %1850 = vmatprep.subr.mxu0 %v125
  %1851 = vmatpush1.msra.mxu0 %v124
  %1852 = vmatprep.subr.mxu0 0.0
  %1853 = vmatpush1.msra.mxu0 0.0
  %1854 = vmatprep.subr.mxu0 0.0
  %1855 = vmatpush1.msra.mxu0 0.0
  %1856 = vmatprep.subr.mxu0 0.0
  %1857 = vmatpush1.msra.mxu0 0.0
  %1858 = vmatprep.subr.mxu0 0.0
  %1859 = vmatpush1.msra.mxu0 0.0
  %1860 = vmatprep.subr.mxu0 0.0
  %1861 = vmatpush1.msra.mxu0 0.0
  %1862 = vmatprep.subr.mxu0 0.0
  %1863 = vmatpush1.msra.mxu0 0.0
  %1864 = vmatprep.subr.mxu0 0.0
  %1865 = vmatpush1.msra.mxu0 0.0
  %1866 = vmatprep.subr.mxu0 0.0
  %1867 = vmatpush1.msra.mxu0 0.0
  %1868 = vmatprep.subr.mxu0 0.0
  %1869 = vmatpush1.msra.mxu0 0.0
  %1870 = vmatprep.subr.mxu0 0.0
  %1871 = vmatpush1.msra.mxu0 0.0
  %1872 = vmatprep.subr.mxu0 0.0
  %1873 = vmatpush1.msra.mxu0 0.0
  %1874 = vmatprep.subr.mxu0 0.0
  %1875 = vmatpush1.msra.mxu0 0.0
  %1876 = vmatprep.subr.mxu0 0.0
  %1877 = vmatpush1.msra.mxu0 0.0
  %1878 = vmatprep.subr.mxu0 0.0
  %1879 = vmatpush1.msra.mxu0 0.0
  %1880 = vmatprep.subr.mxu0 0.0
  %1881 = vmatpush1.msra.mxu0 0.0
  %1882 = vmatprep.subr.mxu0 0.0
  %1883 = vmatpush1.msra.mxu0 0.0
  %1884 = vmatprep.subr.mxu0 0.0
  %1885 = vmatpush1.msra.mxu0 0.0
  %1886 = vmatprep.subr.mxu0 0.0
  %1887 = vmatpush1.msra.mxu0 0.0
  %1888 = vmatprep.subr.mxu0 0.0
  %1889 = vmatpush1.msra.mxu0 0.0
  %1890 = vmatprep.subr.mxu0 0.0
  %1891 = vmatpush1.msra.mxu0 0.0
  %1892 = vmatprep.subr.mxu0 0.0
  %1893 = vmatpush1.msra.mxu0 0.0
  %1894 = vmatprep.subr.mxu0 0.0
  %1895 = vmatpush1.msra.mxu0 0.0
  %1896 = vmatprep.subr.mxu0 0.0
  %1897 = vmatpush1.msra.mxu0 0.0
  %1898 = vmatprep.subr.mxu0 0.0
  %1899 = vmatpush1.msra.mxu0 0.0
  %1900 = vmatprep.subr.mxu0 0.0
  %1901 = vmatpush1.msra.mxu0 0.0
  %1902 = vmatprep.subr.mxu0 0.0
  %1903 = vmatpush1.msra.mxu0 0.0
  %1904 = vmatprep.subr.mxu0 0.0
  %1905 = vmatpush1.msra.mxu0 0.0
  %1906 = vmatprep.subr.mxu0 0.0
  %1907 = vmatpush1.msra.mxu0 0.0
  %1908 = vmatprep.subr.mxu0 0.0
  %1909 = vmatpush1.msra.mxu0 0.0
  %1910 = vmatprep.subr.mxu0 0.0
  %1911 = vmatpush1.msra.mxu0 0.0
  %1912 = vmatprep.mubr.f32.mxu0 0.0
  %1913 = vmatmul.mubr.f32.gmra.mrb[0].mxu0 %v142
  %v1914 = vpop.f32.mrb[0].mxu0
  %v1915 = vadd.f32 0.0, %v1914
  %v1916 = vpop.f32.mrb[0].mxu0
  %v1917 = vadd.f32 0.0, %v1916
  %1918 = vdwg.mxu0
  %1919 = vmatprep.subr.mxu0 %v63
  %1920 = vmatpush1.msra.mxu0 %v62
  %1921 = vmatprep.subr.mxu0 %v127
  %1922 = vmatpush1.msra.mxu0 %v126
  %1923 = vmatprep.subr.mxu0 0.0
  %1924 = vmatpush1.msra.mxu0 0.0
  %1925 = vmatprep.subr.mxu0 0.0
  %1926 = vmatpush1.msra.mxu0 0.0
  %1927 = vmatprep.subr.mxu0 0.0
  %1928 = vmatpush1.msra.mxu0 0.0
  %1929 = vmatprep.subr.mxu0 0.0
  %1930 = vmatpush1.msra.mxu0 0.0
  %1931 = vmatprep.subr.mxu0 0.0
  %1932 = vmatpush1.msra.mxu0 0.0
  %1933 = vmatprep.subr.mxu0 0.0
  %1934 = vmatpush1.msra.mxu0 0.0
  %1935 = vmatprep.subr.mxu0 0.0
  %1936 = vmatpush1.msra.mxu0 0.0
  %1937 = vmatprep.subr.mxu0 0.0
  %1938 = vmatpush1.msra.mxu0 0.0
  %1939 = vmatprep.subr.mxu0 0.0
  %1940 = vmatpush1.msra.mxu0 0.0
  %1941 = vmatprep.subr.mxu0 0.0
  %1942 = vmatpush1.msra.mxu0 0.0
  %1943 = vmatprep.subr.mxu0 0.0
  %1944 = vmatpush1.msra.mxu0 0.0
  %1945 = vmatprep.subr.mxu0 0.0
  %1946 = vmatpush1.msra.mxu0 0.0
  %1947 = vmatprep.subr.mxu0 0.0
  %1948 = vmatpush1.msra.mxu0 0.0
  %1949 = vmatprep.subr.mxu0 0.0
  %1950 = vmatpush1.msra.mxu0 0.0
  %1951 = vmatprep.subr.mxu0 0.0
  %1952 = vmatpush1.msra.mxu0 0.0
  %1953 = vmatprep.subr.mxu0 0.0
  %1954 = vmatpush1.msra.mxu0 0.0
  %1955 = vmatprep.subr.mxu0 0.0
  %1956 = vmatpush1.msra.mxu0 0.0
  %1957 = vmatprep.subr.mxu0 0.0
  %1958 = vmatpush1.msra.mxu0 0.0
  %1959 = vmatprep.subr.mxu0 0.0
  %1960 = vmatpush1.msra.mxu0 0.0
  %1961 = vmatprep.subr.mxu0 0.0
  %1962 = vmatpush1.msra.mxu0 0.0
  %1963 = vmatprep.subr.mxu0 0.0
  %1964 = vmatpush1.msra.mxu0 0.0
  %1965 = vmatprep.subr.mxu0 0.0
  %1966 = vmatpush1.msra.mxu0 0.0
  %1967 = vmatprep.subr.mxu0 0.0
  %1968 = vmatpush1.msra.mxu0 0.0
  %1969 = vmatprep.subr.mxu0 0.0
  %1970 = vmatpush1.msra.mxu0 0.0
  %1971 = vmatprep.subr.mxu0 0.0
  %1972 = vmatpush1.msra.mxu0 0.0
  %1973 = vmatprep.subr.mxu0 0.0
  %1974 = vmatpush1.msra.mxu0 0.0
  %1975 = vmatprep.subr.mxu0 0.0
  %1976 = vmatpush1.msra.mxu0 0.0
  %1977 = vmatprep.subr.mxu0 0.0
  %1978 = vmatpush1.msra.mxu0 0.0
  %1979 = vmatprep.subr.mxu0 0.0
  %1980 = vmatpush1.msra.mxu0 0.0
  %1981 = vmatprep.subr.mxu0 0.0
  %1982 = vmatpush1.msra.mxu0 0.0
  %1983 = vmatprep.mubr.f32.mxu0 0.0
  %1984 = vmatmul.mubr.f32.gmra.mrb[0].mxu0 %v142
  %v1985 = vpop.f32.mrb[0].mxu0
  %v1986 = vadd.f32 0.0, %v1985
  %v1987 = vpop.f32.mrb[0].mxu0
  %v1988 = vadd.f32 0.0, %v1987
  %1989 = vdwg.mxu0
  %1990 = vmatprep.subr.mxu0 %v65
  %1991 = vmatpush1.msra.mxu0 %v64
  %1992 = vmatprep.subr.mxu0 %v129
  %1993 = vmatpush1.msra.mxu0 %v128
  %1994 = vmatprep.subr.mxu0 0.0
  %1995 = vmatpush1.msra.mxu0 0.0
  %1996 = vmatprep.subr.mxu0 0.0
  %1997 = vmatpush1.msra.mxu0 0.0
  %1998 = vmatprep.subr.mxu0 0.0
  %1999 = vmatpush1.msra.mxu0 0.0
  %2000 = vmatprep.subr.mxu0 0.0
  %2001 = vmatpush1.msra.mxu0 0.0
  %2002 = vmatprep.subr.mxu0 0.0
  %2003 = vmatpush1.msra.mxu0 0.0
  %2004 = vmatprep.subr.mxu0 0.0
  %2005 = vmatpush1.msra.mxu0 0.0
  %2006 = vmatprep.subr.mxu0 0.0
  %2007 = vmatpush1.msra.mxu0 0.0
  %2008 = vmatprep.subr.mxu0 0.0
  %2009 = vmatpush1.msra.mxu0 0.0
  %2010 = vmatprep.subr.mxu0 0.0
  %2011 = vmatpush1.msra.mxu0 0.0
  %2012 = vmatprep.subr.mxu0 0.0
  %2013 = vmatpush1.msra.mxu0 0.0
  %2014 = vmatprep.subr.mxu0 0.0
  %2015 = vmatpush1.msra.mxu0 0.0
  %2016 = vmatprep.subr.mxu0 0.0
  %2017 = vmatpush1.msra.mxu0 0.0
  %2018 = vmatprep.subr.mxu0 0.0
  %2019 = vmatpush1.msra.mxu0 0.0
  %2020 = vmatprep.subr.mxu0 0.0
  %2021 = vmatpush1.msra.mxu0 0.0
  %2022 = vmatprep.subr.mxu0 0.0
  %2023 = vmatpush1.msra.mxu0 0.0
  %2024 = vmatprep.subr.mxu0 0.0
  %2025 = vmatpush1.msra.mxu0 0.0
  %2026 = vmatprep.subr.mxu0 0.0
  %2027 = vmatpush1.msra.mxu0 0.0
  %2028 = vmatprep.subr.mxu0 0.0
  %2029 = vmatpush1.msra.mxu0 0.0
  %2030 = vmatprep.subr.mxu0 0.0
  %2031 = vmatpush1.msra.mxu0 0.0
  %2032 = vmatprep.subr.mxu0 0.0
  %2033 = vmatpush1.msra.mxu0 0.0
  %2034 = vmatprep.subr.mxu0 0.0
  %2035 = vmatpush1.msra.mxu0 0.0
  %2036 = vmatprep.subr.mxu0 0.0
  %2037 = vmatpush1.msra.mxu0 0.0
  %2038 = vmatprep.subr.mxu0 0.0
  %2039 = vmatpush1.msra.mxu0 0.0
  %2040 = vmatprep.subr.mxu0 0.0
  %2041 = vmatpush1.msra.mxu0 0.0
  %2042 = vmatprep.subr.mxu0 0.0
  %2043 = vmatpush1.msra.mxu0 0.0
  %2044 = vmatprep.subr.mxu0 0.0
  %2045 = vmatpush1.msra.mxu0 0.0
  %2046 = vmatprep.subr.mxu0 0.0
  %2047 = vmatpush1.msra.mxu0 0.0
  %2048 = vmatprep.subr.mxu0 0.0
  %2049 = vmatpush1.msra.mxu0 0.0
  %2050 = vmatprep.subr.mxu0 0.0
  %2051 = vmatpush1.msra.mxu0 0.0
  %2052 = vmatprep.subr.mxu0 0.0
  %2053 = vmatpush1.msra.mxu0 0.0
  %2054 = vmatprep.mubr.f32.mxu0 0.0
  %2055 = vmatmul.mubr.f32.gmra.mrb[0].mxu0 %v142
  %v2056 = vpop.f32.mrb[0].mxu0
  %v2057 = vadd.f32 0.0, %v2056
  %v2058 = vpop.f32.mrb[0].mxu0
  %v2059 = vadd.f32 0.0, %v2058
  %2060 = vdwg.mxu0
  %2061 = vmatprep.subr.mxu0 %v67
  %2062 = vmatpush1.msra.mxu0 %v66
  %2063 = vmatprep.subr.mxu0 %v131
  %2064 = vmatpush1.msra.mxu0 %v130
  %2065 = vmatprep.subr.mxu0 0.0
  %2066 = vmatpush1.msra.mxu0 0.0
  %2067 = vmatprep.subr.mxu0 0.0
  %2068 = vmatpush1.msra.mxu0 0.0
  %2069 = vmatprep.subr.mxu0 0.0
  %2070 = vmatpush1.msra.mxu0 0.0
  %2071 = vmatprep.subr.mxu0 0.0
  %2072 = vmatpush1.msra.mxu0 0.0
  %2073 = vmatprep.subr.mxu0 0.0
  %2074 = vmatpush1.msra.mxu0 0.0
  %2075 = vmatprep.subr.mxu0 0.0
  %2076 = vmatpush1.msra.mxu0 0.0
  %2077 = vmatprep.subr.mxu0 0.0
  %2078 = vmatpush1.msra.mxu0 0.0
  %2079 = vmatprep.subr.mxu0 0.0
  %2080 = vmatpush1.msra.mxu0 0.0
  %2081 = vmatprep.subr.mxu0 0.0
  %2082 = vmatpush1.msra.mxu0 0.0
  %2083 = vmatprep.subr.mxu0 0.0
  %2084 = vmatpush1.msra.mxu0 0.0
  %2085 = vmatprep.subr.mxu0 0.0
  %2086 = vmatpush1.msra.mxu0 0.0
  %2087 = vmatprep.subr.mxu0 0.0
  %2088 = vmatpush1.msra.mxu0 0.0
  %2089 = vmatprep.subr.mxu0 0.0
  %2090 = vmatpush1.msra.mxu0 0.0
  %2091 = vmatprep.subr.mxu0 0.0
  %2092 = vmatpush1.msra.mxu0 0.0
  %2093 = vmatprep.subr.mxu0 0.0
  %2094 = vmatpush1.msra.mxu0 0.0
  %2095 = vmatprep.subr.mxu0 0.0
  %2096 = vmatpush1.msra.mxu0 0.0
  %2097 = vmatprep.subr.mxu0 0.0
  %2098 = vmatpush1.msra.mxu0 0.0
  %2099 = vmatprep.subr.mxu0 0.0
  %2100 = vmatpush1.msra.mxu0 0.0
  %2101 = vmatprep.subr.mxu0 0.0
  %2102 = vmatpush1.msra.mxu0 0.0
  %2103 = vmatprep.subr.mxu0 0.0
  %2104 = vmatpush1.msra.mxu0 0.0
  %2105 = vmatprep.subr.mxu0 0.0
  %2106 = vmatpush1.msra.mxu0 0.0
  %2107 = vmatprep.subr.mxu0 0.0
  %2108 = vmatpush1.msra.mxu0 0.0
  %2109 = vmatprep.subr.mxu0 0.0
  %2110 = vmatpush1.msra.mxu0 0.0
  %2111 = vmatprep.subr.mxu0 0.0
  %2112 = vmatpush1.msra.mxu0 0.0
  %2113 = vmatprep.subr.mxu0 0.0
  %2114 = vmatpush1.msra.mxu0 0.0
  %2115 = vmatprep.subr.mxu0 0.0
  %2116 = vmatpush1.msra.mxu0 0.0
  %2117 = vmatprep.subr.mxu0 0.0
  %2118 = vmatpush1.msra.mxu0 0.0
  %2119 = vmatprep.subr.mxu0 0.0
  %2120 = vmatpush1.msra.mxu0 0.0
  %2121 = vmatprep.subr.mxu0 0.0
  %2122 = vmatpush1.msra.mxu0 0.0
  %2123 = vmatprep.subr.mxu0 0.0
  %2124 = vmatpush1.msra.mxu0 0.0
  %2125 = vmatprep.mubr.f32.mxu0 0.0
  %2126 = vmatmul.mubr.f32.gmra.mrb[0].mxu0 %v142
  %v2127 = vpop.f32.mrb[0].mxu0
  %v2128 = vadd.f32 0.0, %v2127
  %v2129 = vpop.f32.mrb[0].mxu0
  %v2130 = vadd.f32 0.0, %v2129
  %2131 = vdwg.mxu0
  %2132 = vmatprep.subr.mxu0 %v69
  %2133 = vmatpush1.msra.mxu0 %v68
  %2134 = vmatprep.subr.mxu0 %v133
  %2135 = vmatpush1.msra.mxu0 %v132
  %2136 = vmatprep.subr.mxu0 0.0
  %2137 = vmatpush1.msra.mxu0 0.0
  %2138 = vmatprep.subr.mxu0 0.0
  %2139 = vmatpush1.msra.mxu0 0.0
  %2140 = vmatprep.subr.mxu0 0.0
  %2141 = vmatpush1.msra.mxu0 0.0
  %2142 = vmatprep.subr.mxu0 0.0
  %2143 = vmatpush1.msra.mxu0 0.0
  %2144 = vmatprep.subr.mxu0 0.0
  %2145 = vmatpush1.msra.mxu0 0.0
  %2146 = vmatprep.subr.mxu0 0.0
  %2147 = vmatpush1.msra.mxu0 0.0
  %2148 = vmatprep.subr.mxu0 0.0
  %2149 = vmatpush1.msra.mxu0 0.0
  %2150 = vmatprep.subr.mxu0 0.0
  %2151 = vmatpush1.msra.mxu0 0.0
  %2152 = vmatprep.subr.mxu0 0.0
  %2153 = vmatpush1.msra.mxu0 0.0
  %2154 = vmatprep.subr.mxu0 0.0
  %2155 = vmatpush1.msra.mxu0 0.0
  %2156 = vmatprep.subr.mxu0 0.0
  %2157 = vmatpush1.msra.mxu0 0.0
  %2158 = vmatprep.subr.mxu0 0.0
  %2159 = vmatpush1.msra.mxu0 0.0
  %2160 = vmatprep.subr.mxu0 0.0
  %2161 = vmatpush1.msra.mxu0 0.0
  %2162 = vmatprep.subr.mxu0 0.0
  %2163 = vmatpush1.msra.mxu0 0.0
  %2164 = vmatprep.subr.mxu0 0.0
  %2165 = vmatpush1.msra.mxu0 0.0
  %2166 = vmatprep.subr.mxu0 0.0
  %2167 = vmatpush1.msra.mxu0 0.0
  %2168 = vmatprep.subr.mxu0 0.0
  %2169 = vmatpush1.msra.mxu0 0.0
  %2170 = vmatprep.subr.mxu0 0.0
  %2171 = vmatpush1.msra.mxu0 0.0
  %2172 = vmatprep.subr.mxu0 0.0
  %2173 = vmatpush1.msra.mxu0 0.0
  %2174 = vmatprep.subr.mxu0 0.0
  %2175 = vmatpush1.msra.mxu0 0.0
  %2176 = vmatprep.subr.mxu0 0.0
  %2177 = vmatpush1.msra.mxu0 0.0
  %2178 = vmatprep.subr.mxu0 0.0
  %2179 = vmatpush1.msra.mxu0 0.0
  %2180 = vmatprep.subr.mxu0 0.0
  %2181 = vmatpush1.msra.mxu0 0.0
  %2182 = vmatprep.subr.mxu0 0.0
  %2183 = vmatpush1.msra.mxu0 0.0
  %2184 = vmatprep.subr.mxu0 0.0
  %2185 = vmatpush1.msra.mxu0 0.0
  %2186 = vmatprep.subr.mxu0 0.0
  %2187 = vmatpush1.msra.mxu0 0.0
  %2188 = vmatprep.subr.mxu0 0.0
  %2189 = vmatpush1.msra.mxu0 0.0
  %2190 = vmatprep.subr.mxu0 0.0
  %2191 = vmatpush1.msra.mxu0 0.0
  %2192 = vmatprep.subr.mxu0 0.0
  %2193 = vmatpush1.msra.mxu0 0.0
  %2194 = vmatprep.subr.mxu0 0.0
  %2195 = vmatpush1.msra.mxu0 0.0
  %2196 = vmatprep.mubr.f32.mxu0 0.0
  %2197 = vmatmul.mubr.f32.gmra.mrb[0].mxu0 %v142
  %v2198 = vpop.f32.mrb[0].mxu0
  %v2199 = vadd.f32 0.0, %v2198
  %v2200 = vpop.f32.mrb[0].mxu0
  %v2201 = vadd.f32 0.0, %v2200
  %2202 = vdwg.mxu0
  %2203 = vmatprep.subr.mxu0 %v71
  %2204 = vmatpush1.msra.mxu0 %v70
  %2205 = vmatprep.subr.mxu0 %v135
  %2206 = vmatpush1.msra.mxu0 %v134
  %2207 = vmatprep.subr.mxu0 0.0
  %2208 = vmatpush1.msra.mxu0 0.0
  %2209 = vmatprep.subr.mxu0 0.0
  %2210 = vmatpush1.msra.mxu0 0.0
  %2211 = vmatprep.subr.mxu0 0.0
  %2212 = vmatpush1.msra.mxu0 0.0
  %2213 = vmatprep.subr.mxu0 0.0
  %2214 = vmatpush1.msra.mxu0 0.0
  %2215 = vmatprep.subr.mxu0 0.0
  %2216 = vmatpush1.msra.mxu0 0.0
  %2217 = vmatprep.subr.mxu0 0.0
  %2218 = vmatpush1.msra.mxu0 0.0
  %2219 = vmatprep.subr.mxu0 0.0
  %2220 = vmatpush1.msra.mxu0 0.0
  %2221 = vmatprep.subr.mxu0 0.0
  %2222 = vmatpush1.msra.mxu0 0.0
  %2223 = vmatprep.subr.mxu0 0.0
  %2224 = vmatpush1.msra.mxu0 0.0
  %2225 = vmatprep.subr.mxu0 0.0
  %2226 = vmatpush1.msra.mxu0 0.0
  %2227 = vmatprep.subr.mxu0 0.0
  %2228 = vmatpush1.msra.mxu0 0.0
  %2229 = vmatprep.subr.mxu0 0.0
  %2230 = vmatpush1.msra.mxu0 0.0
  %2231 = vmatprep.subr.mxu0 0.0
  %2232 = vmatpush1.msra.mxu0 0.0
  %2233 = vmatprep.subr.mxu0 0.0
  %2234 = vmatpush1.msra.mxu0 0.0
  %2235 = vmatprep.subr.mxu0 0.0
  %2236 = vmatpush1.msra.mxu0 0.0
  %2237 = vmatprep.subr.mxu0 0.0
  %2238 = vmatpush1.msra.mxu0 0.0
  %2239 = vmatprep.subr.mxu0 0.0
  %2240 = vmatpush1.msra.mxu0 0.0
  %2241 = vmatprep.subr.mxu0 0.0
  %2242 = vmatpush1.msra.mxu0 0.0
  %2243 = vmatprep.subr.mxu0 0.0
  %2244 = vmatpush1.msra.mxu0 0.0
  %2245 = vmatprep.subr.mxu0 0.0
  %2246 = vmatpush1.msra.mxu0 0.0
  %2247 = vmatprep.subr.mxu0 0.0
  %2248 = vmatpush1.msra.mxu0 0.0
  %2249 = vmatprep.subr.mxu0 0.0
  %2250 = vmatpush1.msra.mxu0 0.0
  %2251 = vmatprep.subr.mxu0 0.0
  %2252 = vmatpush1.msra.mxu0 0.0
  %2253 = vmatprep.subr.mxu0 0.0
  %2254 = vmatpush1.msra.mxu0 0.0
  %2255 = vmatprep.subr.mxu0 0.0
  %2256 = vmatpush1.msra.mxu0 0.0
  %2257 = vmatprep.subr.mxu0 0.0
  %2258 = vmatpush1.msra.mxu0 0.0
  %2259 = vmatprep.subr.mxu0 0.0
  %2260 = vmatpush1.msra.mxu0 0.0
  %2261 = vmatprep.subr.mxu0 0.0
  %2262 = vmatpush1.msra.mxu0 0.0
  %2263 = vmatprep.subr.mxu0 0.0
  %2264 = vmatpush1.msra.mxu0 0.0
  %2265 = vmatprep.subr.mxu0 0.0
  %2266 = vmatpush1.msra.mxu0 0.0
  %2267 = vmatprep.mubr.f32.mxu0 0.0
  %2268 = vmatmul.mubr.f32.gmra.mrb[0].mxu0 %v142
  %v2269 = vpop.f32.mrb[0].mxu0
  %v2270 = vadd.f32 0.0, %v2269
  %v2271 = vpop.f32.mrb[0].mxu0
  %v2272 = vadd.f32 0.0, %v2271
  %2273 = vdwg.mxu0
  %2274 = vmatprep.subr.mxu0 %v73
  %2275 = vmatpush1.msra.mxu0 %v72
  %2276 = vmatprep.subr.mxu0 %v137
  %2277 = vmatpush1.msra.mxu0 %v136
  %2278 = vmatprep.subr.mxu0 0.0
  %2279 = vmatpush1.msra.mxu0 0.0
  %2280 = vmatprep.subr.mxu0 0.0
  %2281 = vmatpush1.msra.mxu0 0.0
  %2282 = vmatprep.subr.mxu0 0.0
  %2283 = vmatpush1.msra.mxu0 0.0
  %2284 = vmatprep.subr.mxu0 0.0
  %2285 = vmatpush1.msra.mxu0 0.0
  %2286 = vmatprep.subr.mxu0 0.0
  %2287 = vmatpush1.msra.mxu0 0.0
  %2288 = vmatprep.subr.mxu0 0.0
  %2289 = vmatpush1.msra.mxu0 0.0
  %2290 = vmatprep.subr.mxu0 0.0
  %2291 = vmatpush1.msra.mxu0 0.0
  %2292 = vmatprep.subr.mxu0 0.0
  %2293 = vmatpush1.msra.mxu0 0.0
  %2294 = vmatprep.subr.mxu0 0.0
  %2295 = vmatpush1.msra.mxu0 0.0
  %2296 = vmatprep.subr.mxu0 0.0
  %2297 = vmatpush1.msra.mxu0 0.0
  %2298 = vmatprep.subr.mxu0 0.0
  %2299 = vmatpush1.msra.mxu0 0.0
  %2300 = vmatprep.subr.mxu0 0.0
  %2301 = vmatpush1.msra.mxu0 0.0
  %2302 = vmatprep.subr.mxu0 0.0
  %2303 = vmatpush1.msra.mxu0 0.0
  %2304 = vmatprep.subr.mxu0 0.0
  %2305 = vmatpush1.msra.mxu0 0.0
  %2306 = vmatprep.subr.mxu0 0.0
  %2307 = vmatpush1.msra.mxu0 0.0
  %2308 = vmatprep.subr.mxu0 0.0
  %2309 = vmatpush1.msra.mxu0 0.0
  %2310 = vmatprep.subr.mxu0 0.0
  %2311 = vmatpush1.msra.mxu0 0.0
  %2312 = vmatprep.subr.mxu0 0.0
  %2313 = vmatpush1.msra.mxu0 0.0
  %2314 = vmatprep.subr.mxu0 0.0
  %2315 = vmatpush1.msra.mxu0 0.0
  %2316 = vmatprep.subr.mxu0 0.0
  %2317 = vmatpush1.msra.mxu0 0.0
  %2318 = vmatprep.subr.mxu0 0.0
  %2319 = vmatpush1.msra.mxu0 0.0
  %2320 = vmatprep.subr.mxu0 0.0
  %2321 = vmatpush1.msra.mxu0 0.0
  %2322 = vmatprep.subr.mxu0 0.0
  %2323 = vmatpush1.msra.mxu0 0.0
  %2324 = vmatprep.subr.mxu0 0.0
  %2325 = vmatpush1.msra.mxu0 0.0
  %2326 = vmatprep.subr.mxu0 0.0
  %2327 = vmatpush1.msra.mxu0 0.0
  %2328 = vmatprep.subr.mxu0 0.0
  %2329 = vmatpush1.msra.mxu0 0.0
  %2330 = vmatprep.subr.mxu0 0.0
  %2331 = vmatpush1.msra.mxu0 0.0
  %2332 = vmatprep.subr.mxu0 0.0
  %2333 = vmatpush1.msra.mxu0 0.0
  %2334 = vmatprep.subr.mxu0 0.0
  %2335 = vmatpush1.msra.mxu0 0.0
  %2336 = vmatprep.subr.mxu0 0.0
  %2337 = vmatpush1.msra.mxu0 0.0
  %2338 = vmatprep.mubr.f32.mxu0 0.0
  %2339 = vmatmul.mubr.f32.gmra.mrb[0].mxu0 %v142
  %v2340 = vpop.f32.mrb[0].mxu0
  %v2341 = vadd.f32 0.0, %v2340
  %v2342 = vpop.f32.mrb[0].mxu0
  %v2343 = vadd.f32 0.0, %v2342
  %2344 = vdwg.mxu0
  %2345 = vmatprep.subr.mxu0 %v75
  %2346 = vmatpush1.msra.mxu0 %v74
  %2347 = vmatprep.subr.mxu0 %v139
  %2348 = vmatpush1.msra.mxu0 %v138
  %2349 = vmatprep.subr.mxu0 0.0
  %2350 = vmatpush1.msra.mxu0 0.0
  %2351 = vmatprep.subr.mxu0 0.0
  %2352 = vmatpush1.msra.mxu0 0.0
  %2353 = vmatprep.subr.mxu0 0.0
  %2354 = vmatpush1.msra.mxu0 0.0
  %2355 = vmatprep.subr.mxu0 0.0
  %2356 = vmatpush1.msra.mxu0 0.0
  %2357 = vmatprep.subr.mxu0 0.0
  %2358 = vmatpush1.msra.mxu0 0.0
  %2359 = vmatprep.subr.mxu0 0.0
  %2360 = vmatpush1.msra.mxu0 0.0
  %2361 = vmatprep.subr.mxu0 0.0
  %2362 = vmatpush1.msra.mxu0 0.0
  %2363 = vmatprep.subr.mxu0 0.0
  %2364 = vmatpush1.msra.mxu0 0.0
  %2365 = vmatprep.subr.mxu0 0.0
  %2366 = vmatpush1.msra.mxu0 0.0
  %2367 = vmatprep.subr.mxu0 0.0
  %2368 = vmatpush1.msra.mxu0 0.0
  %2369 = vmatprep.subr.mxu0 0.0
  %2370 = vmatpush1.msra.mxu0 0.0
  %2371 = vmatprep.subr.mxu0 0.0
  %2372 = vmatpush1.msra.mxu0 0.0
  %2373 = vmatprep.subr.mxu0 0.0
  %2374 = vmatpush1.msra.mxu0 0.0
  %2375 = vmatprep.subr.mxu0 0.0
  %2376 = vmatpush1.msra.mxu0 0.0
  %2377 = vmatprep.subr.mxu0 0.0
  %2378 = vmatpush1.msra.mxu0 0.0
  %2379 = vmatprep.subr.mxu0 0.0
  %2380 = vmatpush1.msra.mxu0 0.0
  %2381 = vmatprep.subr.mxu0 0.0
  %2382 = vmatpush1.msra.mxu0 0.0
  %2383 = vmatprep.subr.mxu0 0.0
  %2384 = vmatpush1.msra.mxu0 0.0
  %2385 = vmatprep.subr.mxu0 0.0
  %2386 = vmatpush1.msra.mxu0 0.0
  %2387 = vmatprep.subr.mxu0 0.0
  %2388 = vmatpush1.msra.mxu0 0.0
  %2389 = vmatprep.subr.mxu0 0.0
  %2390 = vmatpush1.msra.mxu0 0.0
  %2391 = vmatprep.subr.mxu0 0.0
  %2392 = vmatpush1.msra.mxu0 0.0
  %2393 = vmatprep.subr.mxu0 0.0
  %2394 = vmatpush1.msra.mxu0 0.0
  %2395 = vmatprep.subr.mxu0 0.0
  %2396 = vmatpush1.msra.mxu0 0.0
  %2397 = vmatprep.subr.mxu0 0.0
  %2398 = vmatpush1.msra.mxu0 0.0
  %2399 = vmatprep.subr.mxu0 0.0
  %2400 = vmatpush1.msra.mxu0 0.0
  %2401 = vmatprep.subr.mxu0 0.0
  %2402 = vmatpush1.msra.mxu0 0.0
  %2403 = vmatprep.subr.mxu0 0.0
  %2404 = vmatpush1.msra.mxu0 0.0
  %2405 = vmatprep.subr.mxu0 0.0
  %2406 = vmatpush1.msra.mxu0 0.0
  %2407 = vmatprep.subr.mxu0 0.0
  %2408 = vmatpush1.msra.mxu0 0.0
  %2409 = vmatprep.mubr.f32.mxu0 0.0
  %2410 = vmatmul.mubr.f32.gmra.mrb[0].mxu0 %v142
  %v2411 = vpop.f32.mrb[0].mxu0
  %v2412 = vadd.f32 0.0, %v2411
  %v2413 = vpop.f32.mrb[0].mxu0
  %v2414 = vadd.f32 0.0, %v2413
  %2415 = vdwg.mxu0
  %vm2416 = vcmp.ge.f32.partialorder %v211, 0.0
  %vm2417 = vcmp.ge.f32.partialorder %v213, 0.0
  %vm2418 = vcmp.ge.f32.partialorder %v282, 0.0
  %vm2419 = vcmp.ge.f32.partialorder %v284, 0.0
  %vm2420 = vcmp.ge.f32.partialorder %v353, 0.0
  %vm2421 = vcmp.ge.f32.partialorder %v355, 0.0
  %vm2422 = vcmp.ge.f32.partialorder %v424, 0.0
  %vm2423 = vcmp.ge.f32.partialorder %v426, 0.0
  %vm2424 = vcmp.ge.f32.partialorder %v495, 0.0
  %vm2425 = vcmp.ge.f32.partialorder %v497, 0.0
  %vm2426 = vcmp.ge.f32.partialorder %v566, 0.0
  %vm2427 = vcmp.ge.f32.partialorder %v568, 0.0
  %vm2428 = vcmp.ge.f32.partialorder %v637, 0.0
  %vm2429 = vcmp.ge.f32.partialorder %v639, 0.0
  %vm2430 = vcmp.ge.f32.partialorder %v708, 0.0
  %vm2431 = vcmp.ge.f32.partialorder %v710, 0.0
  %vm2432 = vcmp.ge.f32.partialorder %v779, 0.0
  %vm2433 = vcmp.ge.f32.partialorder %v781, 0.0
  %vm2434 = vcmp.ge.f32.partialorder %v850, 0.0
  %vm2435 = vcmp.ge.f32.partialorder %v852, 0.0
  %vm2436 = vcmp.ge.f32.partialorder %v921, 0.0
  %vm2437 = vcmp.ge.f32.partialorder %v923, 0.0
  %vm2438 = vcmp.ge.f32.partialorder %v992, 0.0
  %vm2439 = vcmp.ge.f32.partialorder %v994, 0.0
  %vm2440 = vcmp.ge.f32.partialorder %v1063, 0.0
  %vm2441 = vcmp.ge.f32.partialorder %v1065, 0.0
  %vm2442 = vcmp.ge.f32.partialorder %v1134, 0.0
  %vm2443 = vcmp.ge.f32.partialorder %v1136, 0.0
  %vm2444 = vcmp.ge.f32.partialorder %v1205, 0.0
  %vm2445 = vcmp.ge.f32.partialorder %v1207, 0.0
  %vm2446 = vcmp.ge.f32.partialorder %v1276, 0.0
  %vm2447 = vcmp.ge.f32.partialorder %v1278, 0.0
  %vm2448 = vcmp.ge.f32.partialorder %v1347, 0.0
  %vm2449 = vcmp.ge.f32.partialorder %v1349, 0.0
  %vm2450 = vcmp.ge.f32.partialorder %v1418, 0.0
  %vm2451 = vcmp.ge.f32.partialorder %v1420, 0.0
  %vm2452 = vcmp.ge.f32.partialorder %v1489, 0.0
  %vm2453 = vcmp.ge.f32.partialorder %v1491, 0.0
  %vm2454 = vcmp.ge.f32.partialorder %v1560, 0.0
  %vm2455 = vcmp.ge.f32.partialorder %v1562, 0.0
  %vm2456 = vcmp.ge.f32.partialorder %v1631, 0.0
  %vm2457 = vcmp.ge.f32.partialorder %v1633, 0.0
  %vm2458 = vcmp.ge.f32.partialorder %v1702, 0.0
  %vm2459 = vcmp.ge.f32.partialorder %v1704, 0.0
  %vm2460 = vcmp.ge.f32.partialorder %v1773, 0.0
  %vm2461 = vcmp.ge.f32.partialorder %v1775, 0.0
  %vm2462 = vcmp.ge.f32.partialorder %v1844, 0.0
  %vm2463 = vcmp.ge.f32.partialorder %v1846, 0.0
  %vm2464 = vcmp.ge.f32.partialorder %v1915, 0.0
  %vm2465 = vcmp.ge.f32.partialorder %v1917, 0.0
  %vm2466 = vcmp.ge.f32.partialorder %v1986, 0.0
  %vm2467 = vcmp.ge.f32.partialorder %v1988, 0.0
  %vm2468 = vcmp.ge.f32.partialorder %v2057, 0.0
  %vm2469 = vcmp.ge.f32.partialorder %v2059, 0.0
  %vm2470 = vcmp.ge.f32.partialorder %v2128, 0.0
  %vm2471 = vcmp.ge.f32.partialorder %v2130, 0.0
  %vm2472 = vcmp.ge.f32.partialorder %v2199, 0.0
  %vm2473 = vcmp.ge.f32.partialorder %v2201, 0.0
  %vm2474 = vcmp.ge.f32.partialorder %v2270, 0.0
  %vm2475 = vcmp.ge.f32.partialorder %v2272, 0.0
  %vm2476 = vcmp.ge.f32.partialorder %v2341, 0.0
  %vm2477 = vcmp.ge.f32.partialorder %v2343, 0.0
  %vm2478 = vcmp.ge.f32.partialorder %v2412, 0.0
  %vm2479 = vcmp.ge.f32.partialorder %v2414, 0.0
  %v2480 = vmul.f32 %v211, 0.2
  %v2481 = vmul.f32 %v213, 0.2
  %v2482 = vmul.f32 %v282, 0.2
  %v2483 = vmul.f32 %v284, 0.2
  %v2484 = vmul.f32 %v353, 0.2
  %v2485 = vmul.f32 %v355, 0.2
  %v2486 = vmul.f32 %v424, 0.2
  %v2487 = vmul.f32 %v426, 0.2
  %v2488 = vmul.f32 %v495, 0.2
  %v2489 = vmul.f32 %v497, 0.2
  %v2490 = vmul.f32 %v566, 0.2
  %v2491 = vmul.f32 %v568, 0.2
  %v2492 = vmul.f32 %v637, 0.2
  %v2493 = vmul.f32 %v639, 0.2
  %v2494 = vmul.f32 %v708, 0.2
  %v2495 = vmul.f32 %v710, 0.2
  %v2496 = vmul.f32 %v779, 0.2
  %v2497 = vmul.f32 %v781, 0.2
  %v2498 = vmul.f32 %v850, 0.2
  %v2499 = vmul.f32 %v852, 0.2
  %v2500 = vmul.f32 %v921, 0.2
  %v2501 = vmul.f32 %v923, 0.2
  %v2502 = vmul.f32 %v992, 0.2
  %v2503 = vmul.f32 %v994, 0.2
  %v2504 = vmul.f32 %v1063, 0.2
  %v2505 = vmul.f32 %v1065, 0.2
  %v2506 = vmul.f32 %v1134, 0.2
  %v2507 = vmul.f32 %v1136, 0.2
  %v2508 = vmul.f32 %v1205, 0.2
  %v2509 = vmul.f32 %v1207, 0.2
  %v2510 = vmul.f32 %v1276, 0.2
  %v2511 = vmul.f32 %v1278, 0.2
  %v2512 = vmul.f32 %v1347, 0.2
  %v2513 = vmul.f32 %v1349, 0.2
  %v2514 = vmul.f32 %v1418, 0.2
  %v2515 = vmul.f32 %v1420, 0.2
  %v2516 = vmul.f32 %v1489, 0.2
  %v2517 = vmul.f32 %v1491, 0.2
  %v2518 = vmul.f32 %v1560, 0.2
  %v2519 = vmul.f32 %v1562, 0.2
  %v2520 = vmul.f32 %v1631, 0.2
  %v2521 = vmul.f32 %v1633, 0.2
  %v2522 = vmul.f32 %v1702, 0.2
  %v2523 = vmul.f32 %v1704, 0.2
  %v2524 = vmul.f32 %v1773, 0.2
  %v2525 = vmul.f32 %v1775, 0.2
  %v2526 = vmul.f32 %v1844, 0.2
  %v2527 = vmul.f32 %v1846, 0.2
  %v2528 = vmul.f32 %v1915, 0.2
  %v2529 = vmul.f32 %v1917, 0.2
  %v2530 = vmul.f32 %v1986, 0.2
  %v2531 = vmul.f32 %v1988, 0.2
  %v2532 = vmul.f32 %v2057, 0.2
  %v2533 = vmul.f32 %v2059, 0.2
  %v2534 = vmul.f32 %v2128, 0.2
  %v2535 = vmul.f32 %v2130, 0.2
  %v2536 = vmul.f32 %v2199, 0.2
  %v2537 = vmul.f32 %v2201, 0.2
  %v2538 = vmul.f32 %v2270, 0.2
  %v2539 = vmul.f32 %v2272, 0.2
  %v2540 = vmul.f32 %v2341, 0.2
  %v2541 = vmul.f32 %v2343, 0.2
  %v2542 = vmul.f32 %v2412, 0.2
  %v2543 = vmul.f32 %v2414, 0.2
  %v2544 = vsel %vm2416, %v211, %v2480
  %v2545 = vsel %vm2417, %v213, %v2481
  %v2546 = vsel %vm2418, %v282, %v2482
  %v2547 = vsel %vm2419, %v284, %v2483
  %v2548 = vsel %vm2420, %v353, %v2484
  %v2549 = vsel %vm2421, %v355, %v2485
  %v2550 = vsel %vm2422, %v424, %v2486
  %v2551 = vsel %vm2423, %v426, %v2487
  %v2552 = vsel %vm2424, %v495, %v2488
  %v2553 = vsel %vm2425, %v497, %v2489
  %v2554 = vsel %vm2426, %v566, %v2490
  %v2555 = vsel %vm2427, %v568, %v2491
  %v2556 = vsel %vm2428, %v637, %v2492
  %v2557 = vsel %vm2429, %v639, %v2493
  %v2558 = vsel %vm2430, %v708, %v2494
  %v2559 = vsel %vm2431, %v710, %v2495
  %v2560 = vsel %vm2432, %v779, %v2496
  %v2561 = vsel %vm2433, %v781, %v2497
  %v2562 = vsel %vm2434, %v850, %v2498
  %v2563 = vsel %vm2435, %v852, %v2499
  %v2564 = vsel %vm2436, %v921, %v2500
  %v2565 = vsel %vm2437, %v923, %v2501
  %v2566 = vsel %vm2438, %v992, %v2502
  %v2567 = vsel %vm2439, %v994, %v2503
  %v2568 = vsel %vm2440, %v1063, %v2504
  %v2569 = vsel %vm2441, %v1065, %v2505
  %v2570 = vsel %vm2442, %v1134, %v2506
  %v2571 = vsel %vm2443, %v1136, %v2507
  %v2572 = vsel %vm2444, %v1205, %v2508
  %v2573 = vsel %vm2445, %v1207, %v2509
  %v2574 = vsel %vm2446, %v1276, %v2510
  %v2575 = vsel %vm2447, %v1278, %v2511
  %v2576 = vsel %vm2448, %v1347, %v2512
  %v2577 = vsel %vm2449, %v1349, %v2513
  %v2578 = vsel %vm2450, %v1418, %v2514
  %v2579 = vsel %vm2451, %v1420, %v2515
  %v2580 = vsel %vm2452, %v1489, %v2516
  %v2581 = vsel %vm2453, %v1491, %v2517
  %v2582 = vsel %vm2454, %v1560, %v2518
  %v2583 = vsel %vm2455, %v1562, %v2519
  %v2584 = vsel %vm2456, %v1631, %v2520
  %v2585 = vsel %vm2457, %v1633, %v2521
  %v2586 = vsel %vm2458, %v1702, %v2522
  %v2587 = vsel %vm2459, %v1704, %v2523
  %v2588 = vsel %vm2460, %v1773, %v2524
  %v2589 = vsel %vm2461, %v1775, %v2525
  %v2590 = vsel %vm2462, %v1844, %v2526
  %v2591 = vsel %vm2463, %v1846, %v2527
  %v2592 = vsel %vm2464, %v1915, %v2528
  %v2593 = vsel %vm2465, %v1917, %v2529
  %v2594 = vsel %vm2466, %v1986, %v2530
  %v2595 = vsel %vm2467, %v1988, %v2531
  %v2596 = vsel %vm2468, %v2057, %v2532
  %v2597 = vsel %vm2469, %v2059, %v2533
  %v2598 = vsel %vm2470, %v2128, %v2534
  %v2599 = vsel %vm2471, %v2130, %v2535
  %v2600 = vsel %vm2472, %v2199, %v2536
  %v2601 = vsel %vm2473, %v2201, %v2537
  %v2602 = vsel %vm2474, %v2270, %v2538
  %v2603 = vsel %vm2475, %v2272, %v2539
  %v2604 = vsel %vm2476, %v2341, %v2540
  %v2605 = vsel %vm2477, %v2343, %v2541
  %v2606 = vsel %vm2478, %v2412, %v2542
  %v2607 = vsel %vm2479, %v2414, %v2543
  %2608 = vst [vmem:[%s2] sm:$0xff] %v2544
  %2609 = vst [vmem:[%s2 + $0x8] sm:$0xff] %v2545
  %2610 = vst [vmem:[%s2 + $0x10] sm:$0xff] %v2546
  %2611 = vst [vmem:[%s2 + $0x18] sm:$0xff] %v2547
  %2612 = vst [vmem:[%s2 + $0x20] sm:$0xff] %v2548
  %2613 = vst [vmem:[%s2 + $0x28] sm:$0xff] %v2549
  %2614 = vst [vmem:[%s2 + $0x30] sm:$0xff] %v2550
  %2615 = vst [vmem:[%s2 + $0x38] sm:$0xff] %v2551
  %2616 = vst [vmem:[%s2 + $0x40] sm:$0xff] %v2552
  %2617 = vst [vmem:[%s2 + $0x48] sm:$0xff] %v2553
  %2618 = vst [vmem:[%s2 + $0x50] sm:$0xff] %v2554
  %2619 = vst [vmem:[%s2 + $0x58] sm:$0xff] %v2555
  %2620 = vst [vmem:[%s2 + $0x60] sm:$0xff] %v2556
  %2621 = vst [vmem:[%s2 + $0x68] sm:$0xff] %v2557
  %2622 = vst [vmem:[%s2 + $0x70] sm:$0xff] %v2558
  %2623 = vst [vmem:[%s2 + $0x78] sm:$0xff] %v2559
  %2624 = vst [vmem:[%s2 + $0x80] sm:$0xff] %v2560
  %2625 = vst [vmem:[%s2 + $0x88] sm:$0xff] %v2561
  %2626 = vst [vmem:[%s2 + $0x90] sm:$0xff] %v2562
  %2627 = vst [vmem:[%s2 + $0x98] sm:$0xff] %v2563
  %2628 = vst [vmem:[%s2 + $0xa0] sm:$0xff] %v2564
  %2629 = vst [vmem:[%s2 + $0xa8] sm:$0xff] %v2565
  %2630 = vst [vmem:[%s2 + $0xb0] sm:$0xff] %v2566
  %2631 = vst [vmem:[%s2 + $0xb8] sm:$0xff] %v2567
  %2632 = vst [vmem:[%s2 + $0xc0] sm:$0xff] %v2568
  %2633 = vst [vmem:[%s2 + $0xc8] sm:$0xff] %v2569
  %2634 = vst [vmem:[%s2 + $0xd0] sm:$0xff] %v2570
  %2635 = vst [vmem:[%s2 + $0xd8] sm:$0xff] %v2571
  %2636 = vst [vmem:[%s2 + $0xe0] sm:$0xff] %v2572
  %2637 = vst [vmem:[%s2 + $0xe8] sm:$0xff] %v2573
  %2638 = vst [vmem:[%s2 + $0xf0] sm:$0xff] %v2574
  %2639 = vst [vmem:[%s2 + $0xf8] sm:$0xff] %v2575
  %2640 = vst [vmem:[%s2 + $0x100] sm:$0xff] %v2576
  %2641 = vst [vmem:[%s2 + $0x108] sm:$0xff] %v2577
  %2642 = vst [vmem:[%s2 + $0x110] sm:$0xff] %v2578
  %2643 = vst [vmem:[%s2 + $0x118] sm:$0xff] %v2579
  %2644 = vst [vmem:[%s2 + $0x120] sm:$0xff] %v2580
  %2645 = vst [vmem:[%s2 + $0x128] sm:$0xff] %v2581
  %2646 = vst [vmem:[%s2 + $0x130] sm:$0xff] %v2582
  %2647 = vst [vmem:[%s2 + $0x138] sm:$0xff] %v2583
  %2648 = vst [vmem:[%s2 + $0x140] sm:$0xff] %v2584
  %2649 = vst [vmem:[%s2 + $0x148] sm:$0xff] %v2585
  %2650 = vst [vmem:[%s2 + $0x150] sm:$0xff] %v2586
  %2651 = vst [vmem:[%s2 + $0x158] sm:$0xff] %v2587
  %2652 = vst [vmem:[%s2 + $0x160] sm:$0xff] %v2588
  %2653 = vst [vmem:[%s2 + $0x168] sm:$0xff] %v2589
  %2654 = vst [vmem:[%s2 + $0x170] sm:$0xff] %v2590
  %2655 = vst [vmem:[%s2 + $0x178] sm:$0xff] %v2591
  %2656 = vst [vmem:[%s2 + $0x180] sm:$0xff] %v2592
  %2657 = vst [vmem:[%s2 + $0x188] sm:$0xff] %v2593
  %2658 = vst [vmem:[%s2 + $0x190] sm:$0xff] %v2594
  %2659 = vst [vmem:[%s2 + $0x198] sm:$0xff] %v2595
  %2660 = vst [vmem:[%s2 + $0x1a0] sm:$0xff] %v2596
  %2661 = vst [vmem:[%s2 + $0x1a8] sm:$0xff] %v2597
  %2662 = vst [vmem:[%s2 + $0x1b0] sm:$0xff] %v2598
  %2663 = vst [vmem:[%s2 + $0x1b8] sm:$0xff] %v2599
  %2664 = vst [vmem:[%s2 + $0x1c0] sm:$0xff] %v2600
  %2665 = vst [vmem:[%s2 + $0x1c8] sm:$0xff] %v2601
  %2666 = vst [vmem:[%s2 + $0x1d0] sm:$0xff] %v2602
  %2667 = vst [vmem:[%s2 + $0x1d8] sm:$0xff] %v2603
  %2668 = vst [vmem:[%s2 + $0x1e0] sm:$0xff] %v2604
  %2669 = vst [vmem:[%s2 + $0x1e8] sm:$0xff] %v2605
  %2670 = vst [vmem:[%s2 + $0x1f0] sm:$0xff] %v2606
  %2671 = vst [vmem:[%s2 + $0x1f8] sm:$0xff] %v2607
  // Predicated region
  $region10: #{discriminator_forward.5} parent=0 // pred_check
    _
  $region11: #{discriminator_forward.5} parent=0 // pred_check_branch
    %2673 = sbr.rel (0) target = $region13
  $region12: #{discriminator_forward.5} parent=0 // pred_region
    _
  $region13: #{discriminator_forward.5} parent=0 // pred_fallthru
    _
  // Predicated region
  $region14: #{discriminator_forward.5} parent=0 // pred_check
    _
  $region15: #{discriminator_forward.5} parent=0 // pred_check_branch
    %2675 = sbr.rel (0) target = $region17
  $region16: #{discriminator_forward.5} parent=0 // pred_region
    _
  $region17: #{discriminator_forward.5} parent=0 // pred_fallthru
    _

// kernel: discriminator_forward.6
$region0: #{discriminator_forward.6}
  #allocation0 [shape = 'u32[]', space=smem, size = 0x4, offset = 0x4, fixed_abs, tag = 'smem constant byte address 0x4 - core index']
  #allocation1 [shape = 'u32[144,128]{1,0:T(1,128)}', space=vmem, size = 0x12000, scoped, tag = 'internal scratch']
  %s0 = inlined_call_operand.vmem [shape: f32[16,128], index: 0, kind: input, shape index: {}]
  %s1 = inlined_call_operand.vmem [shape: f32[128,2048], index: 1, kind: input, shape index: {}]
  %s2 = inlined_call_operand.vmem [shape: f32[16,2048], index: 2, kind: output, shape index: {}]
  %s3 = sld [smem:[#allocation0]]
  $region18: #{discriminator_forward.6} parent=0
    _
  %s5 = ssub.s32 1, %s3
  %s6 = scalar_select 0, %s5, %s3
  // Predicated region
  $region2: #{discriminator_forward.6} parent=0 // pred_check
    _
  $region3: #{discriminator_forward.6} parent=0 // pred_check_branch
    %8 = sbr.rel (0) target = $region5
  $region4: #{discriminator_forward.6} parent=0 // pred_region
    _
  $region5: #{discriminator_forward.6} parent=0 // pred_fallthru
    _
  // Predicated region
  $region6: #{discriminator_forward.6} parent=0 // pred_check
    _
  $region7: #{discriminator_forward.6} parent=0 // pred_check_branch
    %10 = sbr.rel (0) target = $region9
  $region8: #{discriminator_forward.6} parent=0 // pred_region
    _
  $region9: #{discriminator_forward.6} parent=0 // pred_fallthru
    _
  %v11 = vld [vmem:[%s0] sm:$0xff]
  %v12 = vld [vmem:[%s0 + $0x8] sm:$0xff]
  %v13 = vld [vmem:[%s1] sm:$0xff]
  %v14 = vld [vmem:[%s1 + $0x8] sm:$0xff]
  %v15 = vld [vmem:[%s1 + $0x10] sm:$0xff]
  %v16 = vld [vmem:[%s1 + $0x18] sm:$0xff]
  %v17 = vld [vmem:[%s1 + $0x20] sm:$0xff]
  %v18 = vld [vmem:[%s1 + $0x28] sm:$0xff]
  %v19 = vld [vmem:[%s1 + $0x30] sm:$0xff]
  %v20 = vld [vmem:[%s1 + $0x38] sm:$0xff]
  %v21 = vld [vmem:[%s1 + $0x40] sm:$0xff]
  %v22 = vld [vmem:[%s1 + $0x48] sm:$0xff]
  %v23 = vld [vmem:[%s1 + $0x50] sm:$0xff]
  %v24 = vld [vmem:[%s1 + $0x58] sm:$0xff]
  %v25 = vld [vmem:[%s1 + $0x60] sm:$0xff]
  %v26 = vld [vmem:[%s1 + $0x68] sm:$0xff]
  %v27 = vld [vmem:[%s1 + $0x70] sm:$0xff]
  %v28 = vld [vmem:[%s1 + $0x78] sm:$0xff]
  %v29 = vld [vmem:[%s1 + $0x80] sm:$0xff]
  %v30 = vld [vmem:[%s1 + $0x88] sm:$0xff]
  %v31 = vld [vmem:[%s1 + $0x90] sm:$0xff]
  %v32 = vld [vmem:[%s1 + $0x98] sm:$0xff]
  %v33 = vld [vmem:[%s1 + $0xa0] sm:$0xff]
  %v34 = vld [vmem:[%s1 + $0xa8] sm:$0xff]
  %v35 = vld [vmem:[%s1 + $0xb0] sm:$0xff]
  %v36 = vld [vmem:[%s1 + $0xb8] sm:$0xff]
  %v37 = vld [vmem:[%s1 + $0xc0] sm:$0xff]
  %v38 = vld [vmem:[%s1 + $0xc8] sm:$0xff]
  %v39 = vld [vmem:[%s1 + $0xd0] sm:$0xff]
  %v40 = vld [vmem:[%s1 + $0xd8] sm:$0xff]
  %v41 = vld [vmem:[%s1 + $0xe0] sm:$0xff]
  %v42 = vld [vmem:[%s1 + $0xe8] sm:$0xff]
  %v43 = vld [vmem:[%s1 + $0xf0] sm:$0xff]
  %v44 = vld [vmem:[%s1 + $0xf8] sm:$0xff]
  %v45 = vld [vmem:[%s1 + $0x100] sm:$0xff]
  %v46 = vld [vmem:[%s1 + $0x108] sm:$0xff]
  %v47 = vld [vmem:[%s1 + $0x110] sm:$0xff]
  %v48 = vld [vmem:[%s1 + $0x118] sm:$0xff]
  %v49 = vld [vmem:[%s1 + $0x120] sm:$0xff]
  %v50 = vld [vmem:[%s1 + $0x128] sm:$0xff]
  %v51 = vld [vmem:[%s1 + $0x130] sm:$0xff]
  %v52 = vld [vmem:[%s1 + $0x138] sm:$0xff]
  %v53 = vld [vmem:[%s1 + $0x140] sm:$0xff]
  %v54 = vld [vmem:[%s1 + $0x148] sm:$0xff]
  %v55 = vld [vmem:[%s1 + $0x150] sm:$0xff]
  %v56 = vld [vmem:[%s1 + $0x158] sm:$0xff]
  %v57 = vld [vmem:[%s1 + $0x160] sm:$0xff]
  %v58 = vld [vmem:[%s1 + $0x168] sm:$0xff]
  %v59 = vld [vmem:[%s1 + $0x170] sm:$0xff]
  %v60 = vld [vmem:[%s1 + $0x178] sm:$0xff]
  %v61 = vld [vmem:[%s1 + $0x180] sm:$0xff]
  %v62 = vld [vmem:[%s1 + $0x188] sm:$0xff]
  %v63 = vld [vmem:[%s1 + $0x190] sm:$0xff]
  %v64 = vld [vmem:[%s1 + $0x198] sm:$0xff]
  %v65 = vld [vmem:[%s1 + $0x1a0] sm:$0xff]
  %v66 = vld [vmem:[%s1 + $0x1a8] sm:$0xff]
  %v67 = vld [vmem:[%s1 + $0x1b0] sm:$0xff]
  %v68 = vld [vmem:[%s1 + $0x1b8] sm:$0xff]
  %v69 = vld [vmem:[%s1 + $0x1c0] sm:$0xff]
  %v70 = vld [vmem:[%s1 + $0x1c8] sm:$0xff]
  %v71 = vld [vmem:[%s1 + $0x1d0] sm:$0xff]
  %v72 = vld [vmem:[%s1 + $0x1d8] sm:$0xff]
  %v73 = vld [vmem:[%s1 + $0x1e0] sm:$0xff]
  %v74 = vld [vmem:[%s1 + $0x1e8] sm:$0xff]
  %v75 = vld [vmem:[%s1 + $0x1f0] sm:$0xff]
  %v76 = vld [vmem:[%s1 + $0x1f8] sm:$0xff]
  %v77 = vld [vmem:[%s1 + $0x200] sm:$0xff]
  %v78 = vld [vmem:[%s1 + $0x208] sm:$0xff]
  %v79 = vld [vmem:[%s1 + $0x210] sm:$0xff]
  %v80 = vld [vmem:[%s1 + $0x218] sm:$0xff]
  %v81 = vld [vmem:[%s1 + $0x220] sm:$0xff]
  %v82 = vld [vmem:[%s1 + $0x228] sm:$0xff]
  %v83 = vld [vmem:[%s1 + $0x230] sm:$0xff]
  %v84 = vld [vmem:[%s1 + $0x238] sm:$0xff]
  %v85 = vld [vmem:[%s1 + $0x240] sm:$0xff]
  %v86 = vld [vmem:[%s1 + $0x248] sm:$0xff]
  %v87 = vld [vmem:[%s1 + $0x250] sm:$0xff]
  %v88 = vld [vmem:[%s1 + $0x258] sm:$0xff]
  %v89 = vld [vmem:[%s1 + $0x260] sm:$0xff]
  %v90 = vld [vmem:[%s1 + $0x268] sm:$0xff]
  %v91 = vld [vmem:[%s1 + $0x270] sm:$0xff]
  %v92 = vld [vmem:[%s1 + $0x278] sm:$0xff]
  %v93 = vld [vmem:[%s1 + $0x280] sm:$0xff]
  %v94 = vld [vmem:[%s1 + $0x288] sm:$0xff]
  %v95 = vld [vmem:[%s1 + $0x290] sm:$0xff]
  %v96 = vld [vmem:[%s1 + $0x298] sm:$0xff]
  %v97 = vld [vmem:[%s1 + $0x2a0] sm:$0xff]
  %v98 = vld [vmem:[%s1 + $0x2a8] sm:$0xff]
  %v99 = vld [vmem:[%s1 + $0x2b0] sm:$0xff]
  %v100 = vld [vmem:[%s1 + $0x2b8] sm:$0xff]
  %v101 = vld [vmem:[%s1 + $0x2c0] sm:$0xff]
  %v102 = vld [vmem:[%s1 + $0x2c8] sm:$0xff]
  %v103 = vld [vmem:[%s1 + $0x2d0] sm:$0xff]
  %v104 = vld [vmem:[%s1 + $0x2d8] sm:$0xff]
  %v105 = vld [vmem:[%s1 + $0x2e0] sm:$0xff]
  %v106 = vld [vmem:[%s1 + $0x2e8] sm:$0xff]
  %v107 = vld [vmem:[%s1 + $0x2f0] sm:$0xff]
  %v108 = vld [vmem:[%s1 + $0x2f8] sm:$0xff]
  %v109 = vld [vmem:[%s1 + $0x300] sm:$0xff]
  %v110 = vld [vmem:[%s1 + $0x308] sm:$0xff]
  %v111 = vld [vmem:[%s1 + $0x310] sm:$0xff]
  %v112 = vld [vmem:[%s1 + $0x318] sm:$0xff]
  %v113 = vld [vmem:[%s1 + $0x320] sm:$0xff]
  %v114 = vld [vmem:[%s1 + $0x328] sm:$0xff]
  %v115 = vld [vmem:[%s1 + $0x330] sm:$0xff]
  %v116 = vld [vmem:[%s1 + $0x338] sm:$0xff]
  %v117 = vld [vmem:[%s1 + $0x340] sm:$0xff]
  %v118 = vld [vmem:[%s1 + $0x348] sm:$0xff]
  %v119 = vld [vmem:[%s1 + $0x350] sm:$0xff]
  %v120 = vld [vmem:[%s1 + $0x358] sm:$0xff]
  %v121 = vld [vmem:[%s1 + $0x360] sm:$0xff]
  %v122 = vld [vmem:[%s1 + $0x368] sm:$0xff]
  %v123 = vld [vmem:[%s1 + $0x370] sm:$0xff]
  %v124 = vld [vmem:[%s1 + $0x378] sm:$0xff]
  %v125 = vld [vmem:[%s1 + $0x380] sm:$0xff]
  %v126 = vld [vmem:[%s1 + $0x388] sm:$0xff]
  %v127 = vld [vmem:[%s1 + $0x390] sm:$0xff]
  %v128 = vld [vmem:[%s1 + $0x398] sm:$0xff]
  %v129 = vld [vmem:[%s1 + $0x3a0] sm:$0xff]
  %v130 = vld [vmem:[%s1 + $0x3a8] sm:$0xff]
  %v131 = vld [vmem:[%s1 + $0x3b0] sm:$0xff]
  %v132 = vld [vmem:[%s1 + $0x3b8] sm:$0xff]
  %v133 = vld [vmem:[%s1 + $0x3c0] sm:$0xff]
  %v134 = vld [vmem:[%s1 + $0x3c8] sm:$0xff]
  %v135 = vld [vmem:[%s1 + $0x3d0] sm:$0xff]
  %v136 = vld [vmem:[%s1 + $0x3d8] sm:$0xff]
  %v137 = vld [vmem:[%s1 + $0x3e0] sm:$0xff]
  %v138 = vld [vmem:[%s1 + $0x3e8] sm:$0xff]
  %v139 = vld [vmem:[%s1 + $0x3f0] sm:$0xff]
  %v140 = vld [vmem:[%s1 + $0x3f8] sm:$0xff]
  %v141 = vld [vmem:[%s1 + $0x400] sm:$0xff]
  %v142 = vld [vmem:[%s1 + $0x408] sm:$0xff]
  %v143 = vld [vmem:[%s1 + $0x410] sm:$0xff]
  %v144 = vld [vmem:[%s1 + $0x418] sm:$0xff]
  %v145 = vld [vmem:[%s1 + $0x420] sm:$0xff]
  %v146 = vld [vmem:[%s1 + $0x428] sm:$0xff]
  %v147 = vld [vmem:[%s1 + $0x430] sm:$0xff]
  %v148 = vld [vmem:[%s1 + $0x438] sm:$0xff]
  %v149 = vld [vmem:[%s1 + $0x440] sm:$0xff]
  %v150 = vld [vmem:[%s1 + $0x448] sm:$0xff]
  %v151 = vld [vmem:[%s1 + $0x450] sm:$0xff]
  %v152 = vld [vmem:[%s1 + $0x458] sm:$0xff]
  %v153 = vld [vmem:[%s1 + $0x460] sm:$0xff]
  %v154 = vld [vmem:[%s1 + $0x468] sm:$0xff]
  %v155 = vld [vmem:[%s1 + $0x470] sm:$0xff]
  %v156 = vld [vmem:[%s1 + $0x478] sm:$0xff]
  %v157 = vld [vmem:[%s1 + $0x480] sm:$0xff]
  %v158 = vld [vmem:[%s1 + $0x488] sm:$0xff]
  %v159 = vld [vmem:[%s1 + $0x490] sm:$0xff]
  %v160 = vld [vmem:[%s1 + $0x498] sm:$0xff]
  %v161 = vld [vmem:[%s1 + $0x4a0] sm:$0xff]
  %v162 = vld [vmem:[%s1 + $0x4a8] sm:$0xff]
  %v163 = vld [vmem:[%s1 + $0x4b0] sm:$0xff]
  %v164 = vld [vmem:[%s1 + $0x4b8] sm:$0xff]
  %v165 = vld [vmem:[%s1 + $0x4c0] sm:$0xff]
  %v166 = vld [vmem:[%s1 + $0x4c8] sm:$0xff]
  %v167 = vld [vmem:[%s1 + $0x4d0] sm:$0xff]
  %v168 = vld [vmem:[%s1 + $0x4d8] sm:$0xff]
  %v169 = vld [vmem:[%s1 + $0x4e0] sm:$0xff]
  %v170 = vld [vmem:[%s1 + $0x4e8] sm:$0xff]
  %v171 = vld [vmem:[%s1 + $0x4f0] sm:$0xff]
  %v172 = vld [vmem:[%s1 + $0x4f8] sm:$0xff]
  %v173 = vld [vmem:[%s1 + $0x500] sm:$0xff]
  %v174 = vld [vmem:[%s1 + $0x508] sm:$0xff]
  %v175 = vld [vmem:[%s1 + $0x510] sm:$0xff]
  %v176 = vld [vmem:[%s1 + $0x518] sm:$0xff]
  %v177 = vld [vmem:[%s1 + $0x520] sm:$0xff]
  %v178 = vld [vmem:[%s1 + $0x528] sm:$0xff]
  %v179 = vld [vmem:[%s1 + $0x530] sm:$0xff]
  %v180 = vld [vmem:[%s1 + $0x538] sm:$0xff]
  %v181 = vld [vmem:[%s1 + $0x540] sm:$0xff]
  %v182 = vld [vmem:[%s1 + $0x548] sm:$0xff]
  %v183 = vld [vmem:[%s1 + $0x550] sm:$0xff]
  %v184 = vld [vmem:[%s1 + $0x558] sm:$0xff]
  %v185 = vld [vmem:[%s1 + $0x560] sm:$0xff]
  %v186 = vld [vmem:[%s1 + $0x568] sm:$0xff]
  %v187 = vld [vmem:[%s1 + $0x570] sm:$0xff]
  %v188 = vld [vmem:[%s1 + $0x578] sm:$0xff]
  %v189 = vld [vmem:[%s1 + $0x580] sm:$0xff]
  %v190 = vld [vmem:[%s1 + $0x588] sm:$0xff]
  %v191 = vld [vmem:[%s1 + $0x590] sm:$0xff]
  %v192 = vld [vmem:[%s1 + $0x598] sm:$0xff]
  %v193 = vld [vmem:[%s1 + $0x5a0] sm:$0xff]
  %v194 = vld [vmem:[%s1 + $0x5a8] sm:$0xff]
  %v195 = vld [vmem:[%s1 + $0x5b0] sm:$0xff]
  %v196 = vld [vmem:[%s1 + $0x5b8] sm:$0xff]
  %v197 = vld [vmem:[%s1 + $0x5c0] sm:$0xff]
  %v198 = vld [vmem:[%s1 + $0x5c8] sm:$0xff]
  %v199 = vld [vmem:[%s1 + $0x5d0] sm:$0xff]
  %v200 = vld [vmem:[%s1 + $0x5d8] sm:$0xff]
  %v201 = vld [vmem:[%s1 + $0x5e0] sm:$0xff]
  %v202 = vld [vmem:[%s1 + $0x5e8] sm:$0xff]
  %v203 = vld [vmem:[%s1 + $0x5f0] sm:$0xff]
  %v204 = vld [vmem:[%s1 + $0x5f8] sm:$0xff]
  %v205 = vld [vmem:[%s1 + $0x600] sm:$0xff]
  %v206 = vld [vmem:[%s1 + $0x608] sm:$0xff]
  %v207 = vld [vmem:[%s1 + $0x610] sm:$0xff]
  %v208 = vld [vmem:[%s1 + $0x618] sm:$0xff]
  %v209 = vld [vmem:[%s1 + $0x620] sm:$0xff]
  %v210 = vld [vmem:[%s1 + $0x628] sm:$0xff]
  %v211 = vld [vmem:[%s1 + $0x630] sm:$0xff]
  %v212 = vld [vmem:[%s1 + $0x638] sm:$0xff]
  %v213 = vld [vmem:[%s1 + $0x640] sm:$0xff]
  %v214 = vld [vmem:[%s1 + $0x648] sm:$0xff]
  %v215 = vld [vmem:[%s1 + $0x650] sm:$0xff]
  %v216 = vld [vmem:[%s1 + $0x658] sm:$0xff]
  %v217 = vld [vmem:[%s1 + $0x660] sm:$0xff]
  %v218 = vld [vmem:[%s1 + $0x668] sm:$0xff]
  %v219 = vld [vmem:[%s1 + $0x670] sm:$0xff]
  %v220 = vld [vmem:[%s1 + $0x678] sm:$0xff]
  %v221 = vld [vmem:[%s1 + $0x680] sm:$0xff]
  %v222 = vld [vmem:[%s1 + $0x688] sm:$0xff]
  %v223 = vld [vmem:[%s1 + $0x690] sm:$0xff]
  %v224 = vld [vmem:[%s1 + $0x698] sm:$0xff]
  %v225 = vld [vmem:[%s1 + $0x6a0] sm:$0xff]
  %v226 = vld [vmem:[%s1 + $0x6a8] sm:$0xff]
  %v227 = vld [vmem:[%s1 + $0x6b0] sm:$0xff]
  %v228 = vld [vmem:[%s1 + $0x6b8] sm:$0xff]
  %v229 = vld [vmem:[%s1 + $0x6c0] sm:$0xff]
  %v230 = vld [vmem:[%s1 + $0x6c8] sm:$0xff]
  %v231 = vld [vmem:[%s1 + $0x6d0] sm:$0xff]
  %v232 = vld [vmem:[%s1 + $0x6d8] sm:$0xff]
  %v233 = vld [vmem:[%s1 + $0x6e0] sm:$0xff]
  %v234 = vld [vmem:[%s1 + $0x6e8] sm:$0xff]
  %v235 = vld [vmem:[%s1 + $0x6f0] sm:$0xff]
  %v236 = vld [vmem:[%s1 + $0x6f8] sm:$0xff]
  %v237 = vld [vmem:[%s1 + $0x700] sm:$0xff]
  %v238 = vld [vmem:[%s1 + $0x708] sm:$0xff]
  %v239 = vld [vmem:[%s1 + $0x710] sm:$0xff]
  %v240 = vld [vmem:[%s1 + $0x718] sm:$0xff]
  %v241 = vld [vmem:[%s1 + $0x720] sm:$0xff]
  %v242 = vld [vmem:[%s1 + $0x728] sm:$0xff]
  %v243 = vld [vmem:[%s1 + $0x730] sm:$0xff]
  %v244 = vld [vmem:[%s1 + $0x738] sm:$0xff]
  %v245 = vld [vmem:[%s1 + $0x740] sm:$0xff]
  %v246 = vld [vmem:[%s1 + $0x748] sm:$0xff]
  %v247 = vld [vmem:[%s1 + $0x750] sm:$0xff]
  %v248 = vld [vmem:[%s1 + $0x758] sm:$0xff]
  %v249 = vld [vmem:[%s1 + $0x760] sm:$0xff]
  %v250 = vld [vmem:[%s1 + $0x768] sm:$0xff]
  %v251 = vld [vmem:[%s1 + $0x770] sm:$0xff]
  %v252 = vld [vmem:[%s1 + $0x778] sm:$0xff]
  %v253 = vld [vmem:[%s1 + $0x780] sm:$0xff]
  %v254 = vld [vmem:[%s1 + $0x788] sm:$0xff]
  %v255 = vld [vmem:[%s1 + $0x790] sm:$0xff]
  %v256 = vld [vmem:[%s1 + $0x798] sm:$0xff]
  %v257 = vld [vmem:[%s1 + $0x7a0] sm:$0xff]
  %v258 = vld [vmem:[%s1 + $0x7a8] sm:$0xff]
  %v259 = vld [vmem:[%s1 + $0x7b0] sm:$0xff]
  %v260 = vld [vmem:[%s1 + $0x7b8] sm:$0xff]
  %v261 = vld [vmem:[%s1 + $0x7c0] sm:$0xff]
  %v262 = vld [vmem:[%s1 + $0x7c8] sm:$0xff]
  %v263 = vld [vmem:[%s1 + $0x7d0] sm:$0xff]
  %v264 = vld [vmem:[%s1 + $0x7d8] sm:$0xff]
  %v265 = vld [vmem:[%s1 + $0x7e0] sm:$0xff]
  %v266 = vld [vmem:[%s1 + $0x7e8] sm:$0xff]
  %v267 = vld [vmem:[%s1 + $0x7f0] sm:$0xff]
  %v268 = vld [vmem:[%s1 + $0x7f8] sm:$0xff]
  %269 = vmatprep.subr.mxu0 %v14
  %270 = vmatpush1.msra.mxu0 %v13
  %271 = vmatprep.subr.mxu0 %v30
  %272 = vmatpush1.msra.mxu0 %v29
  %273 = vmatprep.subr.mxu0 %v46
  %274 = vmatpush1.msra.mxu0 %v45
  %275 = vmatprep.subr.mxu0 %v62
  %276 = vmatpush1.msra.mxu0 %v61
  %277 = vmatprep.subr.mxu0 %v78
  %278 = vmatpush1.msra.mxu0 %v77
  %279 = vmatprep.subr.mxu0 %v94
  %280 = vmatpush1.msra.mxu0 %v93
  %281 = vmatprep.subr.mxu0 %v110
  %282 = vmatpush1.msra.mxu0 %v109
  %283 = vmatprep.subr.mxu0 %v126
  %284 = vmatpush1.msra.mxu0 %v125
  %285 = vmatprep.subr.mxu0 %v142
  %286 = vmatpush1.msra.mxu0 %v141
  %287 = vmatprep.subr.mxu0 %v158
  %288 = vmatpush1.msra.mxu0 %v157
  %289 = vmatprep.subr.mxu0 %v174
  %290 = vmatpush1.msra.mxu0 %v173
  %291 = vmatprep.subr.mxu0 %v190
  %292 = vmatpush1.msra.mxu0 %v189
  %293 = vmatprep.subr.mxu0 %v206
  %294 = vmatpush1.msra.mxu0 %v205
  %295 = vmatprep.subr.mxu0 %v222
  %296 = vmatpush1.msra.mxu0 %v221
  %297 = vmatprep.subr.mxu0 %v238
  %298 = vmatpush1.msra.mxu0 %v237
  %299 = vmatprep.subr.mxu0 %v254
  %300 = vmatpush1.msra.mxu0 %v253
  %301 = vmatprep.subr.mxu0 0.0
  %302 = vmatpush1.msra.mxu0 0.0
  %303 = vmatprep.subr.mxu0 0.0
  %304 = vmatpush1.msra.mxu0 0.0
  %305 = vmatprep.subr.mxu0 0.0
  %306 = vmatpush1.msra.mxu0 0.0
  %307 = vmatprep.subr.mxu0 0.0
  %308 = vmatpush1.msra.mxu0 0.0
  %309 = vmatprep.subr.mxu0 0.0
  %310 = vmatpush1.msra.mxu0 0.0
  %311 = vmatprep.subr.mxu0 0.0
  %312 = vmatpush1.msra.mxu0 0.0
  %313 = vmatprep.subr.mxu0 0.0
  %314 = vmatpush1.msra.mxu0 0.0
  %315 = vmatprep.subr.mxu0 0.0
  %316 = vmatpush1.msra.mxu0 0.0
  %317 = vmatprep.subr.mxu0 0.0
  %318 = vmatpush1.msra.mxu0 0.0
  %319 = vmatprep.subr.mxu0 0.0
  %320 = vmatpush1.msra.mxu0 0.0
  %321 = vmatprep.subr.mxu0 0.0
  %322 = vmatpush1.msra.mxu0 0.0
  %323 = vmatprep.subr.mxu0 0.0
  %324 = vmatpush1.msra.mxu0 0.0
  %325 = vmatprep.subr.mxu0 0.0
  %326 = vmatpush1.msra.mxu0 0.0
  %327 = vmatprep.subr.mxu0 0.0
  %328 = vmatpush1.msra.mxu0 0.0
  %329 = vmatprep.subr.mxu0 0.0
  %330 = vmatpush1.msra.mxu0 0.0
  %331 = vmatprep.subr.mxu0 0.0
  %332 = vmatpush1.msra.mxu0 0.0
  %333 = vmatprep.mubr.f32.mxu0 0.0
  %334 = vmatmul.mubr.f32.gmra.mrb[0].mxu0 %v11
  %v335 = vpop.f32.mrb[0].mxu0
  %v336 = vadd.f32 0.0, %v335
  %v337 = vpop.f32.mrb[0].mxu0
  %v338 = vadd.f32 0.0, %v337
  %339 = vmatprep.mubr.f32.mxu0 0.0
  %340 = vmatmul.mubr.f32.gmra.mrb[0].mxu0 %v12
  %v341 = vpop.f32.mrb[0].mxu0
  %v342 = vadd.f32 0.0, %v341
  %v343 = vpop.f32.mrb[0].mxu0
  %v344 = vadd.f32 0.0, %v343
  %345 = vdwg.mxu0
  %346 = vmatprep.subr.mxu0 %v16
  %347 = vmatpush1.msra.mxu0 %v15
  %348 = vmatprep.subr.mxu0 %v32
  %349 = vmatpush1.msra.mxu0 %v31
  %350 = vmatprep.subr.mxu0 %v48
  %351 = vmatpush1.msra.mxu0 %v47
  %352 = vmatprep.subr.mxu0 %v64
  %353 = vmatpush1.msra.mxu0 %v63
  %354 = vmatprep.subr.mxu0 %v80
  %355 = vmatpush1.msra.mxu0 %v79
  %356 = vmatprep.subr.mxu0 %v96
  %357 = vmatpush1.msra.mxu0 %v95
  %358 = vmatprep.subr.mxu0 %v112
  %359 = vmatpush1.msra.mxu0 %v111
  %360 = vmatprep.subr.mxu0 %v128
  %361 = vmatpush1.msra.mxu0 %v127
  %362 = vmatprep.subr.mxu0 %v144
  %363 = vmatpush1.msra.mxu0 %v143
  %364 = vmatprep.subr.mxu0 %v160
  %365 = vmatpush1.msra.mxu0 %v159
  %366 = vmatprep.subr.mxu0 %v176
  %367 = vmatpush1.msra.mxu0 %v175
  %368 = vmatprep.subr.mxu0 %v192
  %369 = vmatpush1.msra.mxu0 %v191
  %370 = vmatprep.subr.mxu0 %v208
  %371 = vmatpush1.msra.mxu0 %v207
  %372 = vmatprep.subr.mxu0 %v224
  %373 = vmatpush1.msra.mxu0 %v223
  %374 = vmatprep.subr.mxu0 %v240
  %375 = vmatpush1.msra.mxu0 %v239
  %376 = vmatprep.subr.mxu0 %v256
  %377 = vmatpush1.msra.mxu0 %v255
  %378 = vmatprep.subr.mxu0 0.0
  %379 = vmatpush1.msra.mxu0 0.0
  %380 = vmatprep.subr.mxu0 0.0
  %381 = vmatpush1.msra.mxu0 0.0
  %382 = vmatprep.subr.mxu0 0.0
  %383 = vmatpush1.msra.mxu0 0.0
  %384 = vmatprep.subr.mxu0 0.0
  %385 = vmatpush1.msra.mxu0 0.0
  %386 = vmatprep.subr.mxu0 0.0
  %387 = vmatpush1.msra.mxu0 0.0
  %388 = vmatprep.subr.mxu0 0.0
  %389 = vmatpush1.msra.mxu0 0.0
  %390 = vmatprep.subr.mxu0 0.0
  %391 = vmatpush1.msra.mxu0 0.0
  %392 = vmatprep.subr.mxu0 0.0
  %393 = vmatpush1.msra.mxu0 0.0
  %394 = vmatprep.subr.mxu0 0.0
  %395 = vmatpush1.msra.mxu0 0.0
  %396 = vmatprep.subr.mxu0 0.0
  %397 = vmatpush1.msra.mxu0 0.0
  %398 = vmatprep.subr.mxu0 0.0
  %399 = vmatpush1.msra.mxu0 0.0
  %400 = vmatprep.subr.mxu0 0.0
  %401 = vmatpush1.msra.mxu0 0.0
  %402 = vmatprep.subr.mxu0 0.0
  %403 = vmatpush1.msra.mxu0 0.0
  %404 = vmatprep.subr.mxu0 0.0
  %405 = vmatpush1.msra.mxu0 0.0
  %406 = vmatprep.subr.mxu0 0.0
  %407 = vmatpush1.msra.mxu0 0.0
  %408 = vmatprep.subr.mxu0 0.0
  %409 = vmatpush1.msra.mxu0 0.0
  %410 = vmatprep.mubr.f32.mxu0 0.0
  %411 = vmatmul.mubr.f32.gmra.mrb[0].mxu0 %v11
  %v412 = vpop.f32.mrb[0].mxu0
  %v413 = vadd.f32 0.0, %v412
  %v414 = vpop.f32.mrb[0].mxu0
  %v415 = vadd.f32 0.0, %v414
  %416 = vmatprep.mubr.f32.mxu0 0.0
  %417 = vmatmul.mubr.f32.gmra.mrb[0].mxu0 %v12
  %v418 = vpop.f32.mrb[0].mxu0
  %v419 = vadd.f32 0.0, %v418
  %v420 = vpop.f32.mrb[0].mxu0
  %v421 = vadd.f32 0.0, %v420
  %422 = vdwg.mxu0
  %423 = vmatprep.subr.mxu0 %v18
  %424 = vmatpush1.msra.mxu0 %v17
  %425 = vmatprep.subr.mxu0 %v34
  %426 = vmatpush1.msra.mxu0 %v33
  %427 = vmatprep.subr.mxu0 %v50
  %428 = vmatpush1.msra.mxu0 %v49
  %429 = vmatprep.subr.mxu0 %v66
  %430 = vmatpush1.msra.mxu0 %v65
  %431 = vmatprep.subr.mxu0 %v82
  %432 = vmatpush1.msra.mxu0 %v81
  %433 = vmatprep.subr.mxu0 %v98
  %434 = vmatpush1.msra.mxu0 %v97
  %435 = vmatprep.subr.mxu0 %v114
  %436 = vmatpush1.msra.mxu0 %v113
  %437 = vmatprep.subr.mxu0 %v130
  %438 = vmatpush1.msra.mxu0 %v129
  %439 = vmatprep.subr.mxu0 %v146
  %440 = vmatpush1.msra.mxu0 %v145
  %441 = vmatprep.subr.mxu0 %v162
  %442 = vmatpush1.msra.mxu0 %v161
  %443 = vmatprep.subr.mxu0 %v178
  %444 = vmatpush1.msra.mxu0 %v177
  %445 = vmatprep.subr.mxu0 %v194
  %446 = vmatpush1.msra.mxu0 %v193
  %447 = vmatprep.subr.mxu0 %v210
  %448 = vmatpush1.msra.mxu0 %v209
  %449 = vmatprep.subr.mxu0 %v226
  %450 = vmatpush1.msra.mxu0 %v225
  %451 = vmatprep.subr.mxu0 %v242
  %452 = vmatpush1.msra.mxu0 %v241
  %453 = vmatprep.subr.mxu0 %v258
  %454 = vmatpush1.msra.mxu0 %v257
  %455 = vmatprep.subr.mxu0 0.0
  %456 = vmatpush1.msra.mxu0 0.0
  %457 = vmatprep.subr.mxu0 0.0
  %458 = vmatpush1.msra.mxu0 0.0
  %459 = vmatprep.subr.mxu0 0.0
  %460 = vmatpush1.msra.mxu0 0.0
  %461 = vmatprep.subr.mxu0 0.0
  %462 = vmatpush1.msra.mxu0 0.0
  %463 = vmatprep.subr.mxu0 0.0
  %464 = vmatpush1.msra.mxu0 0.0
  %465 = vmatprep.subr.mxu0 0.0
  %466 = vmatpush1.msra.mxu0 0.0
  %467 = vmatprep.subr.mxu0 0.0
  %468 = vmatpush1.msra.mxu0 0.0
  %469 = vmatprep.subr.mxu0 0.0
  %470 = vmatpush1.msra.mxu0 0.0
  %471 = vmatprep.subr.mxu0 0.0
  %472 = vmatpush1.msra.mxu0 0.0
  %473 = vmatprep.subr.mxu0 0.0
  %474 = vmatpush1.msra.mxu0 0.0
  %475 = vmatprep.subr.mxu0 0.0
  %476 = vmatpush1.msra.mxu0 0.0
  %477 = vmatprep.subr.mxu0 0.0
  %478 = vmatpush1.msra.mxu0 0.0
  %479 = vmatprep.subr.mxu0 0.0
  %480 = vmatpush1.msra.mxu0 0.0
  %481 = vmatprep.subr.mxu0 0.0
  %482 = vmatpush1.msra.mxu0 0.0
  %483 = vmatprep.subr.mxu0 0.0
  %484 = vmatpush1.msra.mxu0 0.0
  %485 = vmatprep.subr.mxu0 0.0
  %486 = vmatpush1.msra.mxu0 0.0
  %487 = vmatprep.mubr.f32.mxu0 0.0
  %488 = vmatmul.mubr.f32.gmra.mrb[0].mxu0 %v11
  %v489 = vpop.f32.mrb[0].mxu0
  %v490 = vadd.f32 0.0, %v489
  %v491 = vpop.f32.mrb[0].mxu0
  %v492 = vadd.f32 0.0, %v491
  %493 = vmatprep.mubr.f32.mxu0 0.0
  %494 = vmatmul.mubr.f32.gmra.mrb[0].mxu0 %v12
  %v495 = vpop.f32.mrb[0].mxu0
  %v496 = vadd.f32 0.0, %v495
  %v497 = vpop.f32.mrb[0].mxu0
  %v498 = vadd.f32 0.0, %v497
  %499 = vdwg.mxu0
  %500 = vmatprep.subr.mxu0 %v20
  %501 = vmatpush1.msra.mxu0 %v19
  %502 = vmatprep.subr.mxu0 %v36
  %503 = vmatpush1.msra.mxu0 %v35
  %504 = vmatprep.subr.mxu0 %v52
  %505 = vmatpush1.msra.mxu0 %v51
  %506 = vmatprep.subr.mxu0 %v68
  %507 = vmatpush1.msra.mxu0 %v67
  %508 = vmatprep.subr.mxu0 %v84
  %509 = vmatpush1.msra.mxu0 %v83
  %510 = vmatprep.subr.mxu0 %v100
  %511 = vmatpush1.msra.mxu0 %v99
  %512 = vmatprep.subr.mxu0 %v116
  %513 = vmatpush1.msra.mxu0 %v115
  %514 = vmatprep.subr.mxu0 %v132
  %515 = vmatpush1.msra.mxu0 %v131
  %516 = vmatprep.subr.mxu0 %v148
  %517 = vmatpush1.msra.mxu0 %v147
  %518 = vmatprep.subr.mxu0 %v164
  %519 = vmatpush1.msra.mxu0 %v163
  %520 = vmatprep.subr.mxu0 %v180
  %521 = vmatpush1.msra.mxu0 %v179
  %522 = vmatprep.subr.mxu0 %v196
  %523 = vmatpush1.msra.mxu0 %v195
  %524 = vmatprep.subr.mxu0 %v212
  %525 = vmatpush1.msra.mxu0 %v211
  %526 = vmatprep.subr.mxu0 %v228
  %527 = vmatpush1.msra.mxu0 %v227
  %528 = vmatprep.subr.mxu0 %v244
  %529 = vmatpush1.msra.mxu0 %v243
  %530 = vmatprep.subr.mxu0 %v260
  %531 = vmatpush1.msra.mxu0 %v259
  %532 = vmatprep.subr.mxu0 0.0
  %533 = vmatpush1.msra.mxu0 0.0
  %534 = vmatprep.subr.mxu0 0.0
  %535 = vmatpush1.msra.mxu0 0.0
  %536 = vmatprep.subr.mxu0 0.0
  %537 = vmatpush1.msra.mxu0 0.0
  %538 = vmatprep.subr.mxu0 0.0
  %539 = vmatpush1.msra.mxu0 0.0
  %540 = vmatprep.subr.mxu0 0.0
  %541 = vmatpush1.msra.mxu0 0.0
  %542 = vmatprep.subr.mxu0 0.0
  %543 = vmatpush1.msra.mxu0 0.0
  %544 = vmatprep.subr.mxu0 0.0
  %545 = vmatpush1.msra.mxu0 0.0
  %546 = vmatprep.subr.mxu0 0.0
  %547 = vmatpush1.msra.mxu0 0.0
  %548 = vmatprep.subr.mxu0 0.0
  %549 = vmatpush1.msra.mxu0 0.0
  %550 = vmatprep.subr.mxu0 0.0
  %551 = vmatpush1.msra.mxu0 0.0
  %552 = vmatprep.subr.mxu0 0.0
  %553 = vmatpush1.msra.mxu0 0.0
  %554 = vmatprep.subr.mxu0 0.0
  %555 = vmatpush1.msra.mxu0 0.0
  %556 = vmatprep.subr.mxu0 0.0
  %557 = vmatpush1.msra.mxu0 0.0
  %558 = vmatprep.subr.mxu0 0.0
  %559 = vmatpush1.msra.mxu0 0.0
  %560 = vmatprep.subr.mxu0 0.0
  %561 = vmatpush1.msra.mxu0 0.0
  %562 = vmatprep.subr.mxu0 0.0
  %563 = vmatpush1.msra.mxu0 0.0
  %564 = vmatprep.mubr.f32.mxu0 0.0
  %565 = vmatmul.mubr.f32.gmra.mrb[0].mxu0 %v11
  %v566 = vpop.f32.mrb[0].mxu0
  %v567 = vadd.f32 0.0, %v566
  %v568 = vpop.f32.mrb[0].mxu0
  %v569 = vadd.f32 0.0, %v568
  %570 = vmatprep.mubr.f32.mxu0 0.0
  %571 = vmatmul.mubr.f32.gmra.mrb[0].mxu0 %v12
  %v572 = vpop.f32.mrb[0].mxu0
  %v573 = vadd.f32 0.0, %v572
  %v574 = vpop.f32.mrb[0].mxu0
  %v575 = vadd.f32 0.0, %v574
  %576 = vdwg.mxu0
  %577 = vmatprep.subr.mxu0 %v22
  %578 = vmatpush1.msra.mxu0 %v21
  %579 = vmatprep.subr.mxu0 %v38
  %580 = vmatpush1.msra.mxu0 %v37
  %581 = vmatprep.subr.mxu0 %v54
  %582 = vmatpush1.msra.mxu0 %v53
  %583 = vmatprep.subr.mxu0 %v70
  %584 = vmatpush1.msra.mxu0 %v69
  %585 = vmatprep.subr.mxu0 %v86
  %586 = vmatpush1.msra.mxu0 %v85
  %587 = vmatprep.subr.mxu0 %v102
  %588 = vmatpush1.msra.mxu0 %v101
  %589 = vmatprep.subr.mxu0 %v118
  %590 = vmatpush1.msra.mxu0 %v117
  %591 = vmatprep.subr.mxu0 %v134
  %592 = vmatpush1.msra.mxu0 %v133
  %593 = vmatprep.subr.mxu0 %v150
  %594 = vmatpush1.msra.mxu0 %v149
  %595 = vmatprep.subr.mxu0 %v166
  %596 = vmatpush1.msra.mxu0 %v165
  %597 = vmatprep.subr.mxu0 %v182
  %598 = vmatpush1.msra.mxu0 %v181
  %599 = vmatprep.subr.mxu0 %v198
  %600 = vmatpush1.msra.mxu0 %v197
  %601 = vmatprep.subr.mxu0 %v214
  %602 = vmatpush1.msra.mxu0 %v213
  %603 = vmatprep.subr.mxu0 %v230
  %604 = vmatpush1.msra.mxu0 %v229
  %605 = vmatprep.subr.mxu0 %v246
  %606 = vmatpush1.msra.mxu0 %v245
  %607 = vmatprep.subr.mxu0 %v262
  %608 = vmatpush1.msra.mxu0 %v261
  %609 = vmatprep.subr.mxu0 0.0
  %610 = vmatpush1.msra.mxu0 0.0
  %611 = vmatprep.subr.mxu0 0.0
  %612 = vmatpush1.msra.mxu0 0.0
  %613 = vmatprep.subr.mxu0 0.0
  %614 = vmatpush1.msra.mxu0 0.0
  %615 = vmatprep.subr.mxu0 0.0
  %616 = vmatpush1.msra.mxu0 0.0
  %617 = vmatprep.subr.mxu0 0.0
  %618 = vmatpush1.msra.mxu0 0.0
  %619 = vmatprep.subr.mxu0 0.0
  %620 = vmatpush1.msra.mxu0 0.0
  %621 = vmatprep.subr.mxu0 0.0
  %622 = vmatpush1.msra.mxu0 0.0
  %623 = vmatprep.subr.mxu0 0.0
  %624 = vmatpush1.msra.mxu0 0.0
  %625 = vmatprep.subr.mxu0 0.0
  %626 = vmatpush1.msra.mxu0 0.0
  %627 = vmatprep.subr.mxu0 0.0
  %628 = vmatpush1.msra.mxu0 0.0
  %629 = vmatprep.subr.mxu0 0.0
  %630 = vmatpush1.msra.mxu0 0.0
  %631 = vmatprep.subr.mxu0 0.0
  %632 = vmatpush1.msra.mxu0 0.0
  %633 = vmatprep.subr.mxu0 0.0
  %634 = vmatpush1.msra.mxu0 0.0
  %635 = vmatprep.subr.mxu0 0.0
  %636 = vmatpush1.msra.mxu0 0.0
  %637 = vmatprep.subr.mxu0 0.0
  %638 = vmatpush1.msra.mxu0 0.0
  %639 = vmatprep.subr.mxu0 0.0
  %640 = vmatpush1.msra.mxu0 0.0
  %641 = vmatprep.mubr.f32.mxu0 0.0
  %642 = vmatmul.mubr.f32.gmra.mrb[0].mxu0 %v11
  %v643 = vpop.f32.mrb[0].mxu0
  %v644 = vadd.f32 0.0, %v643
  %v645 = vpop.f32.mrb[0].mxu0
  %v646 = vadd.f32 0.0, %v645
  %647 = vmatprep.mubr.f32.mxu0 0.0
  %648 = vmatmul.mubr.f32.gmra.mrb[0].mxu0 %v12
  %v649 = vpop.f32.mrb[0].mxu0
  %v650 = vadd.f32 0.0, %v649
  %v651 = vpop.f32.mrb[0].mxu0
  %v652 = vadd.f32 0.0, %v651
  %653 = vdwg.mxu0
  %654 = vmatprep.subr.mxu0 %v24
  %655 = vmatpush1.msra.mxu0 %v23
  %656 = vmatprep.subr.mxu0 %v40
  %657 = vmatpush1.msra.mxu0 %v39
  %658 = vmatprep.subr.mxu0 %v56
  %659 = vmatpush1.msra.mxu0 %v55
  %660 = vmatprep.subr.mxu0 %v72
  %661 = vmatpush1.msra.mxu0 %v71
  %662 = vmatprep.subr.mxu0 %v88
  %663 = vmatpush1.msra.mxu0 %v87
  %664 = vmatprep.subr.mxu0 %v104
  %665 = vmatpush1.msra.mxu0 %v103
  %666 = vmatprep.subr.mxu0 %v120
  %667 = vmatpush1.msra.mxu0 %v119
  %668 = vmatprep.subr.mxu0 %v136
  %669 = vmatpush1.msra.mxu0 %v135
  %670 = vmatprep.subr.mxu0 %v152
  %671 = vmatpush1.msra.mxu0 %v151
  %672 = vmatprep.subr.mxu0 %v168
  %673 = vmatpush1.msra.mxu0 %v167
  %674 = vmatprep.subr.mxu0 %v184
  %675 = vmatpush1.msra.mxu0 %v183
  %676 = vmatprep.subr.mxu0 %v200
  %677 = vmatpush1.msra.mxu0 %v199
  %678 = vmatprep.subr.mxu0 %v216
  %679 = vmatpush1.msra.mxu0 %v215
  %680 = vmatprep.subr.mxu0 %v232
  %681 = vmatpush1.msra.mxu0 %v231
  %682 = vmatprep.subr.mxu0 %v248
  %683 = vmatpush1.msra.mxu0 %v247
  %684 = vmatprep.subr.mxu0 %v264
  %685 = vmatpush1.msra.mxu0 %v263
  %686 = vmatprep.subr.mxu0 0.0
  %687 = vmatpush1.msra.mxu0 0.0
  %688 = vmatprep.subr.mxu0 0.0
  %689 = vmatpush1.msra.mxu0 0.0
  %690 = vmatprep.subr.mxu0 0.0
  %691 = vmatpush1.msra.mxu0 0.0
  %692 = vmatprep.subr.mxu0 0.0
  %693 = vmatpush1.msra.mxu0 0.0
  %694 = vmatprep.subr.mxu0 0.0
  %695 = vmatpush1.msra.mxu0 0.0
  %696 = vmatprep.subr.mxu0 0.0
  %697 = vmatpush1.msra.mxu0 0.0
  %698 = vmatprep.subr.mxu0 0.0
  %699 = vmatpush1.msra.mxu0 0.0
  %700 = vmatprep.subr.mxu0 0.0
  %701 = vmatpush1.msra.mxu0 0.0
  %702 = vmatprep.subr.mxu0 0.0
  %703 = vmatpush1.msra.mxu0 0.0
  %704 = vmatprep.subr.mxu0 0.0
  %705 = vmatpush1.msra.mxu0 0.0
  %706 = vmatprep.subr.mxu0 0.0
  %707 = vmatpush1.msra.mxu0 0.0
  %708 = vmatprep.subr.mxu0 0.0
  %709 = vmatpush1.msra.mxu0 0.0
  %710 = vmatprep.subr.mxu0 0.0
  %711 = vmatpush1.msra.mxu0 0.0
  %712 = vmatprep.subr.mxu0 0.0
  %713 = vmatpush1.msra.mxu0 0.0
  %714 = vmatprep.subr.mxu0 0.0
  %715 = vmatpush1.msra.mxu0 0.0
  %716 = vmatprep.subr.mxu0 0.0
  %717 = vmatpush1.msra.mxu0 0.0
  %718 = vmatprep.mubr.f32.mxu0 0.0
  %719 = vmatmul.mubr.f32.gmra.mrb[0].mxu0 %v11
  %v720 = vpop.f32.mrb[0].mxu0
  %v721 = vadd.f32 0.0, %v720
  %v722 = vpop.f32.mrb[0].mxu0
  %v723 = vadd.f32 0.0, %v722
  %724 = vmatprep.mubr.f32.mxu0 0.0
  %725 = vmatmul.mubr.f32.gmra.mrb[0].mxu0 %v12
  %v726 = vpop.f32.mrb[0].mxu0
  %v727 = vadd.f32 0.0, %v726
  %v728 = vpop.f32.mrb[0].mxu0
  %v729 = vadd.f32 0.0, %v728
  %730 = vdwg.mxu0
  %731 = vmatprep.subr.mxu0 %v26
  %732 = vmatpush1.msra.mxu0 %v25
  %733 = vmatprep.subr.mxu0 %v42
  %734 = vmatpush1.msra.mxu0 %v41
  %735 = vmatprep.subr.mxu0 %v58
  %736 = vmatpush1.msra.mxu0 %v57
  %737 = vmatprep.subr.mxu0 %v74
  %738 = vmatpush1.msra.mxu0 %v73
  %739 = vmatprep.subr.mxu0 %v90
  %740 = vmatpush1.msra.mxu0 %v89
  %741 = vmatprep.subr.mxu0 %v106
  %742 = vmatpush1.msra.mxu0 %v105
  %743 = vmatprep.subr.mxu0 %v122
  %744 = vmatpush1.msra.mxu0 %v121
  %745 = vmatprep.subr.mxu0 %v138
  %746 = vmatpush1.msra.mxu0 %v137
  %747 = vmatprep.subr.mxu0 %v154
  %748 = vmatpush1.msra.mxu0 %v153
  %749 = vmatprep.subr.mxu0 %v170
  %750 = vmatpush1.msra.mxu0 %v169
  %751 = vmatprep.subr.mxu0 %v186
  %752 = vmatpush1.msra.mxu0 %v185
  %753 = vmatprep.subr.mxu0 %v202
  %754 = vmatpush1.msra.mxu0 %v201
  %755 = vmatprep.subr.mxu0 %v218
  %756 = vmatpush1.msra.mxu0 %v217
  %757 = vmatprep.subr.mxu0 %v234
  %758 = vmatpush1.msra.mxu0 %v233
  %759 = vmatprep.subr.mxu0 %v250
  %760 = vmatpush1.msra.mxu0 %v249
  %761 = vmatprep.subr.mxu0 %v266
  %762 = vmatpush1.msra.mxu0 %v265
  %763 = vmatprep.subr.mxu0 0.0
  %764 = vmatpush1.msra.mxu0 0.0
  %765 = vmatprep.subr.mxu0 0.0
  %766 = vmatpush1.msra.mxu0 0.0
  %767 = vmatprep.subr.mxu0 0.0
  %768 = vmatpush1.msra.mxu0 0.0
  %769 = vmatprep.subr.mxu0 0.0
  %770 = vmatpush1.msra.mxu0 0.0
  %771 = vmatprep.subr.mxu0 0.0
  %772 = vmatpush1.msra.mxu0 0.0
  %773 = vmatprep.subr.mxu0 0.0
  %774 = vmatpush1.msra.mxu0 0.0
  %775 = vmatprep.subr.mxu0 0.0
  %776 = vmatpush1.msra.mxu0 0.0
  %777 = vmatprep.subr.mxu0 0.0
  %778 = vmatpush1.msra.mxu0 0.0
  %779 = vmatprep.subr.mxu0 0.0
  %780 = vmatpush1.msra.mxu0 0.0
  %781 = vmatprep.subr.mxu0 0.0
  %782 = vmatpush1.msra.mxu0 0.0
  %783 = vmatprep.subr.mxu0 0.0
  %784 = vmatpush1.msra.mxu0 0.0
  %785 = vmatprep.subr.mxu0 0.0
  %786 = vmatpush1.msra.mxu0 0.0
  %787 = vmatprep.subr.mxu0 0.0
  %788 = vmatpush1.msra.mxu0 0.0
  %789 = vmatprep.subr.mxu0 0.0
  %790 = vmatpush1.msra.mxu0 0.0
  %791 = vmatprep.subr.mxu0 0.0
  %792 = vmatpush1.msra.mxu0 0.0
  %793 = vmatprep.subr.mxu0 0.0
  %794 = vmatpush1.msra.mxu0 0.0
  %795 = vmatprep.mubr.f32.mxu0 0.0
  %796 = vmatmul.mubr.f32.gmra.mrb[0].mxu0 %v11
  %v797 = vpop.f32.mrb[0].mxu0
  %v798 = vadd.f32 0.0, %v797
  %v799 = vpop.f32.mrb[0].mxu0
  %v800 = vadd.f32 0.0, %v799
  %801 = vmatprep.mubr.f32.mxu0 0.0
  %802 = vmatmul.mubr.f32.gmra.mrb[0].mxu0 %v12
  %v803 = vpop.f32.mrb[0].mxu0
  %v804 = vadd.f32 0.0, %v803
  %v805 = vpop.f32.mrb[0].mxu0
  %v806 = vadd.f32 0.0, %v805
  %807 = vdwg.mxu0
  %808 = vmatprep.subr.mxu0 %v28
  %809 = vmatpush1.msra.mxu0 %v27
  %810 = vmatprep.subr.mxu0 %v44
  %811 = vmatpush1.msra.mxu0 %v43
  %812 = vmatprep.subr.mxu0 %v60
  %813 = vmatpush1.msra.mxu0 %v59
  %814 = vmatprep.subr.mxu0 %v76
  %815 = vmatpush1.msra.mxu0 %v75
  %816 = vmatprep.subr.mxu0 %v92
  %817 = vmatpush1.msra.mxu0 %v91
  %818 = vmatprep.subr.mxu0 %v108
  %819 = vmatpush1.msra.mxu0 %v107
  %820 = vmatprep.subr.mxu0 %v124
  %821 = vmatpush1.msra.mxu0 %v123
  %822 = vmatprep.subr.mxu0 %v140
  %823 = vmatpush1.msra.mxu0 %v139
  %824 = vmatprep.subr.mxu0 %v156
  %825 = vmatpush1.msra.mxu0 %v155
  %826 = vmatprep.subr.mxu0 %v172
  %827 = vmatpush1.msra.mxu0 %v171
  %828 = vmatprep.subr.mxu0 %v188
  %829 = vmatpush1.msra.mxu0 %v187
  %830 = vmatprep.subr.mxu0 %v204
  %831 = vmatpush1.msra.mxu0 %v203
  %832 = vmatprep.subr.mxu0 %v220
  %833 = vmatpush1.msra.mxu0 %v219
  %834 = vmatprep.subr.mxu0 %v236
  %835 = vmatpush1.msra.mxu0 %v235
  %836 = vmatprep.subr.mxu0 %v252
  %837 = vmatpush1.msra.mxu0 %v251
  %838 = vmatprep.subr.mxu0 %v268
  %839 = vmatpush1.msra.mxu0 %v267
  %840 = vmatprep.subr.mxu0 0.0
  %841 = vmatpush1.msra.mxu0 0.0
  %842 = vmatprep.subr.mxu0 0.0
  %843 = vmatpush1.msra.mxu0 0.0
  %844 = vmatprep.subr.mxu0 0.0
  %845 = vmatpush1.msra.mxu0 0.0
  %846 = vmatprep.subr.mxu0 0.0
  %847 = vmatpush1.msra.mxu0 0.0
  %848 = vmatprep.subr.mxu0 0.0
  %849 = vmatpush1.msra.mxu0 0.0
  %850 = vmatprep.subr.mxu0 0.0
  %851 = vmatpush1.msra.mxu0 0.0
  %852 = vmatprep.subr.mxu0 0.0
  %853 = vmatpush1.msra.mxu0 0.0
  %854 = vmatprep.subr.mxu0 0.0
  %855 = vmatpush1.msra.mxu0 0.0
  %856 = vmatprep.subr.mxu0 0.0
  %857 = vmatpush1.msra.mxu0 0.0
  %858 = vmatprep.subr.mxu0 0.0
  %859 = vmatpush1.msra.mxu0 0.0
  %860 = vmatprep.subr.mxu0 0.0
  %861 = vmatpush1.msra.mxu0 0.0
  %862 = vmatprep.subr.mxu0 0.0
  %863 = vmatpush1.msra.mxu0 0.0
  %864 = vmatprep.subr.mxu0 0.0
  %865 = vmatpush1.msra.mxu0 0.0
  %866 = vmatprep.subr.mxu0 0.0
  %867 = vmatpush1.msra.mxu0 0.0
  %868 = vmatprep.subr.mxu0 0.0
  %869 = vmatpush1.msra.mxu0 0.0
  %870 = vmatprep.subr.mxu0 0.0
  %871 = vmatpush1.msra.mxu0 0.0
  %872 = vmatprep.mubr.f32.mxu0 0.0
  %873 = vmatmul.mubr.f32.gmra.mrb[0].mxu0 %v11
  %v874 = vpop.f32.mrb[0].mxu0
  %v875 = vadd.f32 0.0, %v874
  %v876 = vpop.f32.mrb[0].mxu0
  %v877 = vadd.f32 0.0, %v876
  %878 = vmatprep.mubr.f32.mxu0 0.0
  %879 = vmatmul.mubr.f32.gmra.mrb[0].mxu0 %v12
  %v880 = vpop.f32.mrb[0].mxu0
  %v881 = vadd.f32 0.0, %v880
  %v882 = vpop.f32.mrb[0].mxu0
  %v883 = vadd.f32 0.0, %v882
  %884 = vdwg.mxu0
  %vm885 = vcmp.ge.f32.partialorder %v336, 0.0
  %vm886 = vcmp.ge.f32.partialorder %v338, 0.0
  %vm887 = vcmp.ge.f32.partialorder %v413, 0.0
  %vm888 = vcmp.ge.f32.partialorder %v415, 0.0
  %vm889 = vcmp.ge.f32.partialorder %v490, 0.0
  %vm890 = vcmp.ge.f32.partialorder %v492, 0.0
  %vm891 = vcmp.ge.f32.partialorder %v567, 0.0
  %vm892 = vcmp.ge.f32.partialorder %v569, 0.0
  %vm893 = vcmp.ge.f32.partialorder %v644, 0.0
  %vm894 = vcmp.ge.f32.partialorder %v646, 0.0
  %vm895 = vcmp.ge.f32.partialorder %v721, 0.0
  %vm896 = vcmp.ge.f32.partialorder %v723, 0.0
  %vm897 = vcmp.ge.f32.partialorder %v798, 0.0
  %vm898 = vcmp.ge.f32.partialorder %v800, 0.0
  %vm899 = vcmp.ge.f32.partialorder %v875, 0.0
  %vm900 = vcmp.ge.f32.partialorder %v877, 0.0
  %vm901 = vcmp.ge.f32.partialorder %v342, 0.0
  %vm902 = vcmp.ge.f32.partialorder %v344, 0.0
  %vm903 = vcmp.ge.f32.partialorder %v419, 0.0
  %vm904 = vcmp.ge.f32.partialorder %v421, 0.0
  %vm905 = vcmp.ge.f32.partialorder %v496, 0.0
  %vm906 = vcmp.ge.f32.partialorder %v498, 0.0
  %vm907 = vcmp.ge.f32.partialorder %v573, 0.0
  %vm908 = vcmp.ge.f32.partialorder %v575, 0.0
  %vm909 = vcmp.ge.f32.partialorder %v650, 0.0
  %vm910 = vcmp.ge.f32.partialorder %v652, 0.0
  %vm911 = vcmp.ge.f32.partialorder %v727, 0.0
  %vm912 = vcmp.ge.f32.partialorder %v729, 0.0
  %vm913 = vcmp.ge.f32.partialorder %v804, 0.0
  %vm914 = vcmp.ge.f32.partialorder %v806, 0.0
  %vm915 = vcmp.ge.f32.partialorder %v881, 0.0
  %vm916 = vcmp.ge.f32.partialorder %v883, 0.0
  %v917 = vmul.f32 %v336, 0.2
  %v918 = vmul.f32 %v338, 0.2
  %v919 = vmul.f32 %v413, 0.2
  %v920 = vmul.f32 %v415, 0.2
  %v921 = vmul.f32 %v490, 0.2
  %v922 = vmul.f32 %v492, 0.2
  %v923 = vmul.f32 %v567, 0.2
  %v924 = vmul.f32 %v569, 0.2
  %v925 = vmul.f32 %v644, 0.2
  %v926 = vmul.f32 %v646, 0.2
  %v927 = vmul.f32 %v721, 0.2
  %v928 = vmul.f32 %v723, 0.2
  %v929 = vmul.f32 %v798, 0.2
  %v930 = vmul.f32 %v800, 0.2
  %v931 = vmul.f32 %v875, 0.2
  %v932 = vmul.f32 %v877, 0.2
  %v933 = vmul.f32 %v342, 0.2
  %v934 = vmul.f32 %v344, 0.2
  %v935 = vmul.f32 %v419, 0.2
  %v936 = vmul.f32 %v421, 0.2
  %v937 = vmul.f32 %v496, 0.2
  %v938 = vmul.f32 %v498, 0.2
  %v939 = vmul.f32 %v573, 0.2
  %v940 = vmul.f32 %v575, 0.2
  %v941 = vmul.f32 %v650, 0.2
  %v942 = vmul.f32 %v652, 0.2
  %v943 = vmul.f32 %v727, 0.2
  %v944 = vmul.f32 %v729, 0.2
  %v945 = vmul.f32 %v804, 0.2
  %v946 = vmul.f32 %v806, 0.2
  %v947 = vmul.f32 %v881, 0.2
  %v948 = vmul.f32 %v883, 0.2
  %v949 = vsel %vm885, %v336, %v917
  %v950 = vsel %vm886, %v338, %v918
  %v951 = vsel %vm887, %v413, %v919
  %v952 = vsel %vm888, %v415, %v920
  %v953 = vsel %vm889, %v490, %v921
  %v954 = vsel %vm890, %v492, %v922
  %v955 = vsel %vm891, %v567, %v923
  %v956 = vsel %vm892, %v569, %v924
  %v957 = vsel %vm893, %v644, %v925
  %v958 = vsel %vm894, %v646, %v926
  %v959 = vsel %vm895, %v721, %v927
  %v960 = vsel %vm896, %v723, %v928
  %v961 = vsel %vm897, %v798, %v929
  %v962 = vsel %vm898, %v800, %v930
  %v963 = vsel %vm899, %v875, %v931
  %v964 = vsel %vm900, %v877, %v932
  %v965 = vsel %vm901, %v342, %v933
  %v966 = vsel %vm902, %v344, %v934
  %v967 = vsel %vm903, %v419, %v935
  %v968 = vsel %vm904, %v421, %v936
  %v969 = vsel %vm905, %v496, %v937
  %v970 = vsel %vm906, %v498, %v938
  %v971 = vsel %vm907, %v573, %v939
  %v972 = vsel %vm908, %v575, %v940
  %v973 = vsel %vm909, %v650, %v941
  %v974 = vsel %vm910, %v652, %v942
  %v975 = vsel %vm911, %v727, %v943
  %v976 = vsel %vm912, %v729, %v944
  %v977 = vsel %vm913, %v804, %v945
  %v978 = vsel %vm914, %v806, %v946
  %v979 = vsel %vm915, %v881, %v947
  %v980 = vsel %vm916, %v883, %v948
  %981 = vst [vmem:[%s2] sm:$0xff] %v949
  %982 = vst [vmem:[%s2 + $0x8] sm:$0xff] %v950
  %983 = vst [vmem:[%s2 + $0x10] sm:$0xff] %v951
  %984 = vst [vmem:[%s2 + $0x18] sm:$0xff] %v952
  %985 = vst [vmem:[%s2 + $0x20] sm:$0xff] %v953
  %986 = vst [vmem:[%s2 + $0x28] sm:$0xff] %v954
  %987 = vst [vmem:[%s2 + $0x30] sm:$0xff] %v955
  %988 = vst [vmem:[%s2 + $0x38] sm:$0xff] %v956
  %989 = vst [vmem:[%s2 + $0x40] sm:$0xff] %v957
  %990 = vst [vmem:[%s2 + $0x48] sm:$0xff] %v958
  %991 = vst [vmem:[%s2 + $0x50] sm:$0xff] %v959
  %992 = vst [vmem:[%s2 + $0x58] sm:$0xff] %v960
  %993 = vst [vmem:[%s2 + $0x60] sm:$0xff] %v961
  %994 = vst [vmem:[%s2 + $0x68] sm:$0xff] %v962
  %995 = vst [vmem:[%s2 + $0x70] sm:$0xff] %v963
  %996 = vst [vmem:[%s2 + $0x78] sm:$0xff] %v964
  %997 = vst [vmem:[%s2 + $0x80] sm:$0xff] %v965
  %998 = vst [vmem:[%s2 + $0x88] sm:$0xff] %v966
  %999 = vst [vmem:[%s2 + $0x90] sm:$0xff] %v967
  %1000 = vst [vmem:[%s2 + $0x98] sm:$0xff] %v968
  %1001 = vst [vmem:[%s2 + $0xa0] sm:$0xff] %v969
  %1002 = vst [vmem:[%s2 + $0xa8] sm:$0xff] %v970
  %1003 = vst [vmem:[%s2 + $0xb0] sm:$0xff] %v971
  %1004 = vst [vmem:[%s2 + $0xb8] sm:$0xff] %v972
  %1005 = vst [vmem:[%s2 + $0xc0] sm:$0xff] %v973
  %1006 = vst [vmem:[%s2 + $0xc8] sm:$0xff] %v974
  %1007 = vst [vmem:[%s2 + $0xd0] sm:$0xff] %v975
  %1008 = vst [vmem:[%s2 + $0xd8] sm:$0xff] %v976
  %1009 = vst [vmem:[%s2 + $0xe0] sm:$0xff] %v977
  %1010 = vst [vmem:[%s2 + $0xe8] sm:$0xff] %v978
  %1011 = vst [vmem:[%s2 + $0xf0] sm:$0xff] %v979
  %1012 = vst [vmem:[%s2 + $0xf8] sm:$0xff] %v980
  // Predicated region
  $region10: #{discriminator_forward.6} parent=0 // pred_check
    _
  $region11: #{discriminator_forward.6} parent=0 // pred_check_branch
    %1014 = sbr.rel (0) target = $region13
  $region12: #{discriminator_forward.6} parent=0 // pred_region
    _
  $region13: #{discriminator_forward.6} parent=0 // pred_fallthru
    _
  // Predicated region
  $region14: #{discriminator_forward.6} parent=0 // pred_check
    _
  $region15: #{discriminator_forward.6} parent=0 // pred_check_branch
    %1016 = sbr.rel (0) target = $region17
  $region16: #{discriminator_forward.6} parent=0 // pred_region
    _
  $region17: #{discriminator_forward.6} parent=0 // pred_fallthru
    _

// kernel: discriminator_forward.7
$region0: #{discriminator_forward.7}
  #allocation0 [shape = 'u32[]', space=smem, size = 0x4, offset = 0x4, fixed_abs, tag = 'smem constant byte address 0x4 - core index']
  #allocation1 [shape = 'u32[144,128]{1,0:T(1,128)}', space=vmem, size = 0x12000, scoped, tag = 'internal scratch']
  %s0 = inlined_call_operand.vmem [shape: f32[32,256], index: 0, kind: input, shape index: {}]
  %s1 = inlined_call_operand.vmem [shape: f32[256,512], index: 1, kind: input, shape index: {}]
  %s2 = inlined_call_operand.vmem [shape: f32[32,512], index: 2, kind: output, shape index: {}]
  %s3 = sld [smem:[#allocation0]]
  $region18: #{discriminator_forward.7} parent=0
    _
  %s5 = ssub.s32 1, %s3
  %s6 = scalar_select 0, %s5, %s3
  // Predicated region
  $region2: #{discriminator_forward.7} parent=0 // pred_check
    _
  $region3: #{discriminator_forward.7} parent=0 // pred_check_branch
    %8 = sbr.rel (0) target = $region5
  $region4: #{discriminator_forward.7} parent=0 // pred_region
    _
  $region5: #{discriminator_forward.7} parent=0 // pred_fallthru
    _
  // Predicated region
  $region6: #{discriminator_forward.7} parent=0 // pred_check
    _
  $region7: #{discriminator_forward.7} parent=0 // pred_check_branch
    %10 = sbr.rel (0) target = $region9
  $region8: #{discriminator_forward.7} parent=0 // pred_region
    _
  $region9: #{discriminator_forward.7} parent=0 // pred_fallthru
    _
  %v11 = vld [vmem:[%s0] sm:$0xff]
  %v12 = vld [vmem:[%s0 + $0x8] sm:$0xff]
  %v13 = vld [vmem:[%s0 + $0x10] sm:$0xff]
  %v14 = vld [vmem:[%s0 + $0x18] sm:$0xff]
  %v15 = vld [vmem:[%s0 + $0x20] sm:$0xff]
  %v16 = vld [vmem:[%s0 + $0x28] sm:$0xff]
  %v17 = vld [vmem:[%s0 + $0x30] sm:$0xff]
  %v18 = vld [vmem:[%s0 + $0x38] sm:$0xff]
  %v19 = vld [vmem:[%s1] sm:$0xff]
  %v20 = vld [vmem:[%s1 + $0x8] sm:$0xff]
  %v21 = vld [vmem:[%s1 + $0x10] sm:$0xff]
  %v22 = vld [vmem:[%s1 + $0x18] sm:$0xff]
  %v23 = vld [vmem:[%s1 + $0x20] sm:$0xff]
  %v24 = vld [vmem:[%s1 + $0x28] sm:$0xff]
  %v25 = vld [vmem:[%s1 + $0x30] sm:$0xff]
  %v26 = vld [vmem:[%s1 + $0x38] sm:$0xff]
  %v27 = vld [vmem:[%s1 + $0x40] sm:$0xff]
  %v28 = vld [vmem:[%s1 + $0x48] sm:$0xff]
  %v29 = vld [vmem:[%s1 + $0x50] sm:$0xff]
  %v30 = vld [vmem:[%s1 + $0x58] sm:$0xff]
  %v31 = vld [vmem:[%s1 + $0x60] sm:$0xff]
  %v32 = vld [vmem:[%s1 + $0x68] sm:$0xff]
  %v33 = vld [vmem:[%s1 + $0x70] sm:$0xff]
  %v34 = vld [vmem:[%s1 + $0x78] sm:$0xff]
  %v35 = vld [vmem:[%s1 + $0x80] sm:$0xff]
  %v36 = vld [vmem:[%s1 + $0x88] sm:$0xff]
  %v37 = vld [vmem:[%s1 + $0x90] sm:$0xff]
  %v38 = vld [vmem:[%s1 + $0x98] sm:$0xff]
  %v39 = vld [vmem:[%s1 + $0xa0] sm:$0xff]
  %v40 = vld [vmem:[%s1 + $0xa8] sm:$0xff]
  %v41 = vld [vmem:[%s1 + $0xb0] sm:$0xff]
  %v42 = vld [vmem:[%s1 + $0xb8] sm:$0xff]
  %v43 = vld [vmem:[%s1 + $0xc0] sm:$0xff]
  %v44 = vld [vmem:[%s1 + $0xc8] sm:$0xff]
  %v45 = vld [vmem:[%s1 + $0xd0] sm:$0xff]
  %v46 = vld [vmem:[%s1 + $0xd8] sm:$0xff]
  %v47 = vld [vmem:[%s1 + $0xe0] sm:$0xff]
  %v48 = vld [vmem:[%s1 + $0xe8] sm:$0xff]
  %v49 = vld [vmem:[%s1 + $0xf0] sm:$0xff]
  %v50 = vld [vmem:[%s1 + $0xf8] sm:$0xff]
  %v51 = vld [vmem:[%s1 + $0x100] sm:$0xff]
  %v52 = vld [vmem:[%s1 + $0x108] sm:$0xff]
  %v53 = vld [vmem:[%s1 + $0x110] sm:$0xff]
  %v54 = vld [vmem:[%s1 + $0x118] sm:$0xff]
  %v55 = vld [vmem:[%s1 + $0x120] sm:$0xff]
  %v56 = vld [vmem:[%s1 + $0x128] sm:$0xff]
  %v57 = vld [vmem:[%s1 + $0x130] sm:$0xff]
  %v58 = vld [vmem:[%s1 + $0x138] sm:$0xff]
  %v59 = vld [vmem:[%s1 + $0x140] sm:$0xff]
  %v60 = vld [vmem:[%s1 + $0x148] sm:$0xff]
  %v61 = vld [vmem:[%s1 + $0x150] sm:$0xff]
  %v62 = vld [vmem:[%s1 + $0x158] sm:$0xff]
  %v63 = vld [vmem:[%s1 + $0x160] sm:$0xff]
  %v64 = vld [vmem:[%s1 + $0x168] sm:$0xff]
  %v65 = vld [vmem:[%s1 + $0x170] sm:$0xff]
  %v66 = vld [vmem:[%s1 + $0x178] sm:$0xff]
  %v67 = vld [vmem:[%s1 + $0x180] sm:$0xff]
  %v68 = vld [vmem:[%s1 + $0x188] sm:$0xff]
  %v69 = vld [vmem:[%s1 + $0x190] sm:$0xff]
  %v70 = vld [vmem:[%s1 + $0x198] sm:$0xff]
  %v71 = vld [vmem:[%s1 + $0x1a0] sm:$0xff]
  %v72 = vld [vmem:[%s1 + $0x1a8] sm:$0xff]
  %v73 = vld [vmem:[%s1 + $0x1b0] sm:$0xff]
  %v74 = vld [vmem:[%s1 + $0x1b8] sm:$0xff]
  %v75 = vld [vmem:[%s1 + $0x1c0] sm:$0xff]
  %v76 = vld [vmem:[%s1 + $0x1c8] sm:$0xff]
  %v77 = vld [vmem:[%s1 + $0x1d0] sm:$0xff]
  %v78 = vld [vmem:[%s1 + $0x1d8] sm:$0xff]
  %v79 = vld [vmem:[%s1 + $0x1e0] sm:$0xff]
  %v80 = vld [vmem:[%s1 + $0x1e8] sm:$0xff]
  %v81 = vld [vmem:[%s1 + $0x1f0] sm:$0xff]
  %v82 = vld [vmem:[%s1 + $0x1f8] sm:$0xff]
  %v83 = vld [vmem:[%s1 + $0x200] sm:$0xff]
  %v84 = vld [vmem:[%s1 + $0x208] sm:$0xff]
  %v85 = vld [vmem:[%s1 + $0x210] sm:$0xff]
  %v86 = vld [vmem:[%s1 + $0x218] sm:$0xff]
  %v87 = vld [vmem:[%s1 + $0x220] sm:$0xff]
  %v88 = vld [vmem:[%s1 + $0x228] sm:$0xff]
  %v89 = vld [vmem:[%s1 + $0x230] sm:$0xff]
  %v90 = vld [vmem:[%s1 + $0x238] sm:$0xff]
  %v91 = vld [vmem:[%s1 + $0x240] sm:$0xff]
  %v92 = vld [vmem:[%s1 + $0x248] sm:$0xff]
  %v93 = vld [vmem:[%s1 + $0x250] sm:$0xff]
  %v94 = vld [vmem:[%s1 + $0x258] sm:$0xff]
  %v95 = vld [vmem:[%s1 + $0x260] sm:$0xff]
  %v96 = vld [vmem:[%s1 + $0x268] sm:$0xff]
  %v97 = vld [vmem:[%s1 + $0x270] sm:$0xff]
  %v98 = vld [vmem:[%s1 + $0x278] sm:$0xff]
  %v99 = vld [vmem:[%s1 + $0x280] sm:$0xff]
  %v100 = vld [vmem:[%s1 + $0x288] sm:$0xff]
  %v101 = vld [vmem:[%s1 + $0x290] sm:$0xff]
  %v102 = vld [vmem:[%s1 + $0x298] sm:$0xff]
  %v103 = vld [vmem:[%s1 + $0x2a0] sm:$0xff]
  %v104 = vld [vmem:[%s1 + $0x2a8] sm:$0xff]
  %v105 = vld [vmem:[%s1 + $0x2b0] sm:$0xff]
  %v106 = vld [vmem:[%s1 + $0x2b8] sm:$0xff]
  %v107 = vld [vmem:[%s1 + $0x2c0] sm:$0xff]
  %v108 = vld [vmem:[%s1 + $0x2c8] sm:$0xff]
  %v109 = vld [vmem:[%s1 + $0x2d0] sm:$0xff]
  %v110 = vld [vmem:[%s1 + $0x2d8] sm:$0xff]
  %v111 = vld [vmem:[%s1 + $0x2e0] sm:$0xff]
  %v112 = vld [vmem:[%s1 + $0x2e8] sm:$0xff]
  %v113 = vld [vmem:[%s1 + $0x2f0] sm:$0xff]
  %v114 = vld [vmem:[%s1 + $0x2f8] sm:$0xff]
  %v115 = vld [vmem:[%s1 + $0x300] sm:$0xff]
  %v116 = vld [vmem:[%s1 + $0x308] sm:$0xff]
  %v117 = vld [vmem:[%s1 + $0x310] sm:$0xff]
  %v118 = vld [vmem:[%s1 + $0x318] sm:$0xff]
  %v119 = vld [vmem:[%s1 + $0x320] sm:$0xff]
  %v120 = vld [vmem:[%s1 + $0x328] sm:$0xff]
  %v121 = vld [vmem:[%s1 + $0x330] sm:$0xff]
  %v122 = vld [vmem:[%s1 + $0x338] sm:$0xff]
  %v123 = vld [vmem:[%s1 + $0x340] sm:$0xff]
  %v124 = vld [vmem:[%s1 + $0x348] sm:$0xff]
  %v125 = vld [vmem:[%s1 + $0x350] sm:$0xff]
  %v126 = vld [vmem:[%s1 + $0x358] sm:$0xff]
  %v127 = vld [vmem:[%s1 + $0x360] sm:$0xff]
  %v128 = vld [vmem:[%s1 + $0x368] sm:$0xff]
  %v129 = vld [vmem:[%s1 + $0x370] sm:$0xff]
  %v130 = vld [vmem:[%s1 + $0x378] sm:$0xff]
  %v131 = vld [vmem:[%s1 + $0x380] sm:$0xff]
  %v132 = vld [vmem:[%s1 + $0x388] sm:$0xff]
  %v133 = vld [vmem:[%s1 + $0x390] sm:$0xff]
  %v134 = vld [vmem:[%s1 + $0x398] sm:$0xff]
  %v135 = vld [vmem:[%s1 + $0x3a0] sm:$0xff]
  %v136 = vld [vmem:[%s1 + $0x3a8] sm:$0xff]
  %v137 = vld [vmem:[%s1 + $0x3b0] sm:$0xff]
  %v138 = vld [vmem:[%s1 + $0x3b8] sm:$0xff]
  %v139 = vld [vmem:[%s1 + $0x3c0] sm:$0xff]
  %v140 = vld [vmem:[%s1 + $0x3c8] sm:$0xff]
  %v141 = vld [vmem:[%s1 + $0x3d0] sm:$0xff]
  %v142 = vld [vmem:[%s1 + $0x3d8] sm:$0xff]
  %v143 = vld [vmem:[%s1 + $0x3e0] sm:$0xff]
  %v144 = vld [vmem:[%s1 + $0x3e8] sm:$0xff]
  %v145 = vld [vmem:[%s1 + $0x3f0] sm:$0xff]
  %v146 = vld [vmem:[%s1 + $0x3f8] sm:$0xff]
  %147 = vmatprep.subr.mxu0 %v20
  %148 = vmatpush1.msra.mxu0 %v19
  %149 = vmatprep.subr.mxu0 %v24
  %150 = vmatpush1.msra.mxu0 %v23
  %151 = vmatprep.subr.mxu0 %v28
  %152 = vmatpush1.msra.mxu0 %v27
  %153 = vmatprep.subr.mxu0 %v32
  %154 = vmatpush1.msra.mxu0 %v31
  %155 = vmatprep.subr.mxu0 %v36
  %156 = vmatpush1.msra.mxu0 %v35
  %157 = vmatprep.subr.mxu0 %v40
  %158 = vmatpush1.msra.mxu0 %v39
  %159 = vmatprep.subr.mxu0 %v44
  %160 = vmatpush1.msra.mxu0 %v43
  %161 = vmatprep.subr.mxu0 %v48
  %162 = vmatpush1.msra.mxu0 %v47
  %163 = vmatprep.subr.mxu0 %v52
  %164 = vmatpush1.msra.mxu0 %v51
  %165 = vmatprep.subr.mxu0 %v56
  %166 = vmatpush1.msra.mxu0 %v55
  %167 = vmatprep.subr.mxu0 %v60
  %168 = vmatpush1.msra.mxu0 %v59
  %169 = vmatprep.subr.mxu0 %v64
  %170 = vmatpush1.msra.mxu0 %v63
  %171 = vmatprep.subr.mxu0 %v68
  %172 = vmatpush1.msra.mxu0 %v67
  %173 = vmatprep.subr.mxu0 %v72
  %174 = vmatpush1.msra.mxu0 %v71
  %175 = vmatprep.subr.mxu0 %v76
  %176 = vmatpush1.msra.mxu0 %v75
  %177 = vmatprep.subr.mxu0 %v80
  %178 = vmatpush1.msra.mxu0 %v79
  %179 = vmatprep.subr.mxu0 %v84
  %180 = vmatpush1.msra.mxu0 %v83
  %181 = vmatprep.subr.mxu0 %v88
  %182 = vmatpush1.msra.mxu0 %v87
  %183 = vmatprep.subr.mxu0 %v92
  %184 = vmatpush1.msra.mxu0 %v91
  %185 = vmatprep.subr.mxu0 %v96
  %186 = vmatpush1.msra.mxu0 %v95
  %187 = vmatprep.subr.mxu0 %v100
  %188 = vmatpush1.msra.mxu0 %v99
  %189 = vmatprep.subr.mxu0 %v104
  %190 = vmatpush1.msra.mxu0 %v103
  %191 = vmatprep.subr.mxu0 %v108
  %192 = vmatpush1.msra.mxu0 %v107
  %193 = vmatprep.subr.mxu0 %v112
  %194 = vmatpush1.msra.mxu0 %v111
  %195 = vmatprep.subr.mxu0 %v116
  %196 = vmatpush1.msra.mxu0 %v115
  %197 = vmatprep.subr.mxu0 %v120
  %198 = vmatpush1.msra.mxu0 %v119
  %199 = vmatprep.subr.mxu0 %v124
  %200 = vmatpush1.msra.mxu0 %v123
  %201 = vmatprep.subr.mxu0 %v128
  %202 = vmatpush1.msra.mxu0 %v127
  %203 = vmatprep.subr.mxu0 %v132
  %204 = vmatpush1.msra.mxu0 %v131
  %205 = vmatprep.subr.mxu0 %v136
  %206 = vmatpush1.msra.mxu0 %v135
  %207 = vmatprep.subr.mxu0 %v140
  %208 = vmatpush1.msra.mxu0 %v139
  %209 = vmatprep.subr.mxu0 %v144
  %210 = vmatpush1.msra.mxu0 %v143
  %211 = vmatprep.mubr.f32.mxu0 %v12
  %212 = vmatmul.mubr.f32.gmra.mrb[0].mxu0 %v11
  %v213 = vpop.f32.mrb[0].mxu0
  %v214 = vadd.f32 0.0, %v213
  %v215 = vpop.f32.mrb[0].mxu0
  %v216 = vadd.f32 0.0, %v215
  %217 = vmatprep.mubr.f32.mxu0 %v14
  %218 = vmatmul.mubr.f32.gmra.mrb[0].mxu0 %v13
  %v219 = vpop.f32.mrb[0].mxu0
  %v220 = vadd.f32 0.0, %v219
  %v221 = vpop.f32.mrb[0].mxu0
  %v222 = vadd.f32 0.0, %v221
  %223 = vmatprep.mubr.f32.mxu0 %v16
  %224 = vmatmul.mubr.f32.gmra.mrb[0].mxu0 %v15
  %v225 = vpop.f32.mrb[0].mxu0
  %v226 = vadd.f32 0.0, %v225
  %v227 = vpop.f32.mrb[0].mxu0
  %v228 = vadd.f32 0.0, %v227
  %229 = vmatprep.mubr.f32.mxu0 %v18
  %230 = vmatmul.mubr.f32.gmra.mrb[0].mxu0 %v17
  %v231 = vpop.f32.mrb[0].mxu0
  %v232 = vadd.f32 0.0, %v231
  %v233 = vpop.f32.mrb[0].mxu0
  %v234 = vadd.f32 0.0, %v233
  %235 = vdwg.mxu0
  %236 = vmatprep.subr.mxu0 %v22
  %237 = vmatpush1.msra.mxu0 %v21
  %238 = vmatprep.subr.mxu0 %v26
  %239 = vmatpush1.msra.mxu0 %v25
  %240 = vmatprep.subr.mxu0 %v30
  %241 = vmatpush1.msra.mxu0 %v29
  %242 = vmatprep.subr.mxu0 %v34
  %243 = vmatpush1.msra.mxu0 %v33
  %244 = vmatprep.subr.mxu0 %v38
  %245 = vmatpush1.msra.mxu0 %v37
  %246 = vmatprep.subr.mxu0 %v42
  %247 = vmatpush1.msra.mxu0 %v41
  %248 = vmatprep.subr.mxu0 %v46
  %249 = vmatpush1.msra.mxu0 %v45
  %250 = vmatprep.subr.mxu0 %v50
  %251 = vmatpush1.msra.mxu0 %v49
  %252 = vmatprep.subr.mxu0 %v54
  %253 = vmatpush1.msra.mxu0 %v53
  %254 = vmatprep.subr.mxu0 %v58
  %255 = vmatpush1.msra.mxu0 %v57
  %256 = vmatprep.subr.mxu0 %v62
  %257 = vmatpush1.msra.mxu0 %v61
  %258 = vmatprep.subr.mxu0 %v66
  %259 = vmatpush1.msra.mxu0 %v65
  %260 = vmatprep.subr.mxu0 %v70
  %261 = vmatpush1.msra.mxu0 %v69
  %262 = vmatprep.subr.mxu0 %v74
  %263 = vmatpush1.msra.mxu0 %v73
  %264 = vmatprep.subr.mxu0 %v78
  %265 = vmatpush1.msra.mxu0 %v77
  %266 = vmatprep.subr.mxu0 %v82
  %267 = vmatpush1.msra.mxu0 %v81
  %268 = vmatprep.subr.mxu0 %v86
  %269 = vmatpush1.msra.mxu0 %v85
  %270 = vmatprep.subr.mxu0 %v90
  %271 = vmatpush1.msra.mxu0 %v89
  %272 = vmatprep.subr.mxu0 %v94
  %273 = vmatpush1.msra.mxu0 %v93
  %274 = vmatprep.subr.mxu0 %v98
  %275 = vmatpush1.msra.mxu0 %v97
  %276 = vmatprep.subr.mxu0 %v102
  %277 = vmatpush1.msra.mxu0 %v101
  %278 = vmatprep.subr.mxu0 %v106
  %279 = vmatpush1.msra.mxu0 %v105
  %280 = vmatprep.subr.mxu0 %v110
  %281 = vmatpush1.msra.mxu0 %v109
  %282 = vmatprep.subr.mxu0 %v114
  %283 = vmatpush1.msra.mxu0 %v113
  %284 = vmatprep.subr.mxu0 %v118
  %285 = vmatpush1.msra.mxu0 %v117
  %286 = vmatprep.subr.mxu0 %v122
  %287 = vmatpush1.msra.mxu0 %v121
  %288 = vmatprep.subr.mxu0 %v126
  %289 = vmatpush1.msra.mxu0 %v125
  %290 = vmatprep.subr.mxu0 %v130
  %291 = vmatpush1.msra.mxu0 %v129
  %292 = vmatprep.subr.mxu0 %v134
  %293 = vmatpush1.msra.mxu0 %v133
  %294 = vmatprep.subr.mxu0 %v138
  %295 = vmatpush1.msra.mxu0 %v137
  %296 = vmatprep.subr.mxu0 %v142
  %297 = vmatpush1.msra.mxu0 %v141
  %298 = vmatprep.subr.mxu0 %v146
  %299 = vmatpush1.msra.mxu0 %v145
  %300 = vmatprep.mubr.f32.mxu0 %v12
  %301 = vmatmul.mubr.f32.gmra.mrb[0].mxu0 %v11
  %v302 = vpop.f32.mrb[0].mxu0
  %v303 = vadd.f32 0.0, %v302
  %v304 = vpop.f32.mrb[0].mxu0
  %v305 = vadd.f32 0.0, %v304
  %306 = vmatprep.mubr.f32.mxu0 %v14
  %307 = vmatmul.mubr.f32.gmra.mrb[0].mxu0 %v13
  %v308 = vpop.f32.mrb[0].mxu0
  %v309 = vadd.f32 0.0, %v308
  %v310 = vpop.f32.mrb[0].mxu0
  %v311 = vadd.f32 0.0, %v310
  %312 = vmatprep.mubr.f32.mxu0 %v16
  %313 = vmatmul.mubr.f32.gmra.mrb[0].mxu0 %v15
  %v314 = vpop.f32.mrb[0].mxu0
  %v315 = vadd.f32 0.0, %v314
  %v316 = vpop.f32.mrb[0].mxu0
  %v317 = vadd.f32 0.0, %v316
  %318 = vmatprep.mubr.f32.mxu0 %v18
  %319 = vmatmul.mubr.f32.gmra.mrb[0].mxu0 %v17
  %v320 = vpop.f32.mrb[0].mxu0
  %v321 = vadd.f32 0.0, %v320
  %v322 = vpop.f32.mrb[0].mxu0
  %v323 = vadd.f32 0.0, %v322
  %324 = vdwg.mxu0
  %vm325 = vcmp.ge.f32.partialorder %v214, 0.0
  %vm326 = vcmp.ge.f32.partialorder %v216, 0.0
  %vm327 = vcmp.ge.f32.partialorder %v303, 0.0
  %vm328 = vcmp.ge.f32.partialorder %v305, 0.0
  %vm329 = vcmp.ge.f32.partialorder %v220, 0.0
  %vm330 = vcmp.ge.f32.partialorder %v222, 0.0
  %vm331 = vcmp.ge.f32.partialorder %v309, 0.0
  %vm332 = vcmp.ge.f32.partialorder %v311, 0.0
  %vm333 = vcmp.ge.f32.partialorder %v226, 0.0
  %vm334 = vcmp.ge.f32.partialorder %v228, 0.0
  %vm335 = vcmp.ge.f32.partialorder %v315, 0.0
  %vm336 = vcmp.ge.f32.partialorder %v317, 0.0
  %vm337 = vcmp.ge.f32.partialorder %v232, 0.0
  %vm338 = vcmp.ge.f32.partialorder %v234, 0.0
  %vm339 = vcmp.ge.f32.partialorder %v321, 0.0
  %vm340 = vcmp.ge.f32.partialorder %v323, 0.0
  %v341 = vmul.f32 %v214, 0.2
  %v342 = vmul.f32 %v216, 0.2
  %v343 = vmul.f32 %v303, 0.2
  %v344 = vmul.f32 %v305, 0.2
  %v345 = vmul.f32 %v220, 0.2
  %v346 = vmul.f32 %v222, 0.2
  %v347 = vmul.f32 %v309, 0.2
  %v348 = vmul.f32 %v311, 0.2
  %v349 = vmul.f32 %v226, 0.2
  %v350 = vmul.f32 %v228, 0.2
  %v351 = vmul.f32 %v315, 0.2
  %v352 = vmul.f32 %v317, 0.2
  %v353 = vmul.f32 %v232, 0.2
  %v354 = vmul.f32 %v234, 0.2
  %v355 = vmul.f32 %v321, 0.2
  %v356 = vmul.f32 %v323, 0.2
  %v357 = vsel %vm325, %v214, %v341
  %v358 = vsel %vm326, %v216, %v342
  %v359 = vsel %vm327, %v303, %v343
  %v360 = vsel %vm328, %v305, %v344
  %v361 = vsel %vm329, %v220, %v345
  %v362 = vsel %vm330, %v222, %v346
  %v363 = vsel %vm331, %v309, %v347
  %v364 = vsel %vm332, %v311, %v348
  %v365 = vsel %vm333, %v226, %v349
  %v366 = vsel %vm334, %v228, %v350
  %v367 = vsel %vm335, %v315, %v351
  %v368 = vsel %vm336, %v317, %v352
  %v369 = vsel %vm337, %v232, %v353
  %v370 = vsel %vm338, %v234, %v354
  %v371 = vsel %vm339, %v321, %v355
  %v372 = vsel %vm340, %v323, %v356
  %373 = vst [vmem:[%s2] sm:$0xff] %v357
  %374 = vst [vmem:[%s2 + $0x8] sm:$0xff] %v358
  %375 = vst [vmem:[%s2 + $0x10] sm:$0xff] %v359
  %376 = vst [vmem:[%s2 + $0x18] sm:$0xff] %v360
  %377 = vst [vmem:[%s2 + $0x20] sm:$0xff] %v361
  %378 = vst [vmem:[%s2 + $0x28] sm:$0xff] %v362
  %379 = vst [vmem:[%s2 + $0x30] sm:$0xff] %v363
  %380 = vst [vmem:[%s2 + $0x38] sm:$0xff] %v364
  %381 = vst [vmem:[%s2 + $0x40] sm:$0xff] %v365
  %382 = vst [vmem:[%s2 + $0x48] sm:$0xff] %v366
  %383 = vst [vmem:[%s2 + $0x50] sm:$0xff] %v367
  %384 = vst [vmem:[%s2 + $0x58] sm:$0xff] %v368
  %385 = vst [vmem:[%s2 + $0x60] sm:$0xff] %v369
  %386 = vst [vmem:[%s2 + $0x68] sm:$0xff] %v370
  %387 = vst [vmem:[%s2 + $0x70] sm:$0xff] %v371
  %388 = vst [vmem:[%s2 + $0x78] sm:$0xff] %v372
  // Predicated region
  $region10: #{discriminator_forward.7} parent=0 // pred_check
    _
  $region11: #{discriminator_forward.7} parent=0 // pred_check_branch
    %390 = sbr.rel (0) target = $region13
  $region12: #{discriminator_forward.7} parent=0 // pred_region
    _
  $region13: #{discriminator_forward.7} parent=0 // pred_fallthru
    _
  // Predicated region
  $region14: #{discriminator_forward.7} parent=0 // pred_check
    _
  $region15: #{discriminator_forward.7} parent=0 // pred_check_branch
    %392 = sbr.rel (0) target = $region17
  $region16: #{discriminator_forward.7} parent=0 // pred_region
    _
  $region17: #{discriminator_forward.7} parent=0 // pred_fallthru
    _

// kernel: discriminator_forward.8
$region0: #{discriminator_forward.8}
  #allocation0 [shape = 'u32[]', space=smem, size = 0x4, offset = 0x4, fixed_abs, tag = 'smem constant byte address 0x4 - core index']
  #allocation1 [shape = 'u32[144,128]{1,0:T(1,128)}', space=vmem, size = 0x12000, scoped, tag = 'internal scratch']
  %s0 = inlined_call_operand.vmem [shape: f32[64,512], index: 0, kind: input, shape index: {}]
  %s1 = inlined_call_operand.vmem [shape: f32[512,128], index: 1, kind: input, shape index: {}]
  %s2 = inlined_call_operand.vmem [shape: f32[64,128], index: 2, kind: output, shape index: {}]
  %s3 = sld [smem:[#allocation0]]
  $region18: #{discriminator_forward.8} parent=0
    _
  %s5 = ssub.s32 1, %s3
  %s6 = scalar_select 0, %s5, %s3
  // Predicated region
  $region2: #{discriminator_forward.8} parent=0 // pred_check
    _
  $region3: #{discriminator_forward.8} parent=0 // pred_check_branch
    %8 = sbr.rel (0) target = $region5
  $region4: #{discriminator_forward.8} parent=0 // pred_region
    _
  $region5: #{discriminator_forward.8} parent=0 // pred_fallthru
    _
  // Predicated region
  $region6: #{discriminator_forward.8} parent=0 // pred_check
    _
  $region7: #{discriminator_forward.8} parent=0 // pred_check_branch
    %10 = sbr.rel (0) target = $region9
  $region8: #{discriminator_forward.8} parent=0 // pred_region
    _
  $region9: #{discriminator_forward.8} parent=0 // pred_fallthru
    _
  %v11 = vld [vmem:[%s0] sm:$0xff]
  %v12 = vld [vmem:[%s0 + $0x8] sm:$0xff]
  %v13 = vld [vmem:[%s0 + $0x10] sm:$0xff]
  %v14 = vld [vmem:[%s0 + $0x18] sm:$0xff]
  %v15 = vld [vmem:[%s0 + $0x20] sm:$0xff]
  %v16 = vld [vmem:[%s0 + $0x28] sm:$0xff]
  %v17 = vld [vmem:[%s0 + $0x30] sm:$0xff]
  %v18 = vld [vmem:[%s0 + $0x38] sm:$0xff]
  %v19 = vld [vmem:[%s0 + $0x40] sm:$0xff]
  %v20 = vld [vmem:[%s0 + $0x48] sm:$0xff]
  %v21 = vld [vmem:[%s0 + $0x50] sm:$0xff]
  %v22 = vld [vmem:[%s0 + $0x58] sm:$0xff]
  %v23 = vld [vmem:[%s0 + $0x60] sm:$0xff]
  %v24 = vld [vmem:[%s0 + $0x68] sm:$0xff]
  %v25 = vld [vmem:[%s0 + $0x70] sm:$0xff]
  %v26 = vld [vmem:[%s0 + $0x78] sm:$0xff]
  %v27 = vld [vmem:[%s0 + $0x80] sm:$0xff]
  %v28 = vld [vmem:[%s0 + $0x88] sm:$0xff]
  %v29 = vld [vmem:[%s0 + $0x90] sm:$0xff]
  %v30 = vld [vmem:[%s0 + $0x98] sm:$0xff]
  %v31 = vld [vmem:[%s0 + $0xa0] sm:$0xff]
  %v32 = vld [vmem:[%s0 + $0xa8] sm:$0xff]
  %v33 = vld [vmem:[%s0 + $0xb0] sm:$0xff]
  %v34 = vld [vmem:[%s0 + $0xb8] sm:$0xff]
  %v35 = vld [vmem:[%s0 + $0xc0] sm:$0xff]
  %v36 = vld [vmem:[%s0 + $0xc8] sm:$0xff]
  %v37 = vld [vmem:[%s0 + $0xd0] sm:$0xff]
  %v38 = vld [vmem:[%s0 + $0xd8] sm:$0xff]
  %v39 = vld [vmem:[%s0 + $0xe0] sm:$0xff]
  %v40 = vld [vmem:[%s0 + $0xe8] sm:$0xff]
  %v41 = vld [vmem:[%s0 + $0xf0] sm:$0xff]
  %v42 = vld [vmem:[%s0 + $0xf8] sm:$0xff]
  %v43 = vld [vmem:[%s1] sm:$0xff]
  %v44 = vld [vmem:[%s1 + $0x8] sm:$0xff]
  %v45 = vld [vmem:[%s1 + $0x10] sm:$0xff]
  %v46 = vld [vmem:[%s1 + $0x18] sm:$0xff]
  %v47 = vld [vmem:[%s1 + $0x20] sm:$0xff]
  %v48 = vld [vmem:[%s1 + $0x28] sm:$0xff]
  %v49 = vld [vmem:[%s1 + $0x30] sm:$0xff]
  %v50 = vld [vmem:[%s1 + $0x38] sm:$0xff]
  %v51 = vld [vmem:[%s1 + $0x40] sm:$0xff]
  %v52 = vld [vmem:[%s1 + $0x48] sm:$0xff]
  %v53 = vld [vmem:[%s1 + $0x50] sm:$0xff]
  %v54 = vld [vmem:[%s1 + $0x58] sm:$0xff]
  %v55 = vld [vmem:[%s1 + $0x60] sm:$0xff]
  %v56 = vld [vmem:[%s1 + $0x68] sm:$0xff]
  %v57 = vld [vmem:[%s1 + $0x70] sm:$0xff]
  %v58 = vld [vmem:[%s1 + $0x78] sm:$0xff]
  %v59 = vld [vmem:[%s1 + $0x80] sm:$0xff]
  %v60 = vld [vmem:[%s1 + $0x88] sm:$0xff]
  %v61 = vld [vmem:[%s1 + $0x90] sm:$0xff]
  %v62 = vld [vmem:[%s1 + $0x98] sm:$0xff]
  %v63 = vld [vmem:[%s1 + $0xa0] sm:$0xff]
  %v64 = vld [vmem:[%s1 + $0xa8] sm:$0xff]
  %v65 = vld [vmem:[%s1 + $0xb0] sm:$0xff]
  %v66 = vld [vmem:[%s1 + $0xb8] sm:$0xff]
  %v67 = vld [vmem:[%s1 + $0xc0] sm:$0xff]
  %v68 = vld [vmem:[%s1 + $0xc8] sm:$0xff]
  %v69 = vld [vmem:[%s1 + $0xd0] sm:$0xff]
  %v70 = vld [vmem:[%s1 + $0xd8] sm:$0xff]
  %v71 = vld [vmem:[%s1 + $0xe0] sm:$0xff]
  %v72 = vld [vmem:[%s1 + $0xe8] sm:$0xff]
  %v73 = vld [vmem:[%s1 + $0xf0] sm:$0xff]
  %v74 = vld [vmem:[%s1 + $0xf8] sm:$0xff]
  %v75 = vld [vmem:[%s1 + $0x100] sm:$0xff]
  %v76 = vld [vmem:[%s1 + $0x108] sm:$0xff]
  %v77 = vld [vmem:[%s1 + $0x110] sm:$0xff]
  %v78 = vld [vmem:[%s1 + $0x118] sm:$0xff]
  %v79 = vld [vmem:[%s1 + $0x120] sm:$0xff]
  %v80 = vld [vmem:[%s1 + $0x128] sm:$0xff]
  %v81 = vld [vmem:[%s1 + $0x130] sm:$0xff]
  %v82 = vld [vmem:[%s1 + $0x138] sm:$0xff]
  %v83 = vld [vmem:[%s1 + $0x140] sm:$0xff]
  %v84 = vld [vmem:[%s1 + $0x148] sm:$0xff]
  %v85 = vld [vmem:[%s1 + $0x150] sm:$0xff]
  %v86 = vld [vmem:[%s1 + $0x158] sm:$0xff]
  %v87 = vld [vmem:[%s1 + $0x160] sm:$0xff]
  %v88 = vld [vmem:[%s1 + $0x168] sm:$0xff]
  %v89 = vld [vmem:[%s1 + $0x170] sm:$0xff]
  %v90 = vld [vmem:[%s1 + $0x178] sm:$0xff]
  %v91 = vld [vmem:[%s1 + $0x180] sm:$0xff]
  %v92 = vld [vmem:[%s1 + $0x188] sm:$0xff]
  %v93 = vld [vmem:[%s1 + $0x190] sm:$0xff]
  %v94 = vld [vmem:[%s1 + $0x198] sm:$0xff]
  %v95 = vld [vmem:[%s1 + $0x1a0] sm:$0xff]
  %v96 = vld [vmem:[%s1 + $0x1a8] sm:$0xff]
  %v97 = vld [vmem:[%s1 + $0x1b0] sm:$0xff]
  %v98 = vld [vmem:[%s1 + $0x1b8] sm:$0xff]
  %v99 = vld [vmem:[%s1 + $0x1c0] sm:$0xff]
  %v100 = vld [vmem:[%s1 + $0x1c8] sm:$0xff]
  %v101 = vld [vmem:[%s1 + $0x1d0] sm:$0xff]
  %v102 = vld [vmem:[%s1 + $0x1d8] sm:$0xff]
  %v103 = vld [vmem:[%s1 + $0x1e0] sm:$0xff]
  %v104 = vld [vmem:[%s1 + $0x1e8] sm:$0xff]
  %v105 = vld [vmem:[%s1 + $0x1f0] sm:$0xff]
  %v106 = vld [vmem:[%s1 + $0x1f8] sm:$0xff]
  %107 = vmatprep.subr.mxu0 0.0
  %108 = vmatpush1.msra.mxu0 %v43
  %109 = vmatprep.subr.mxu0 0.0
  %110 = vmatpush1.msra.mxu0 %v44
  %111 = vmatprep.subr.mxu0 0.0
  %112 = vmatpush1.msra.mxu0 %v45
  %113 = vmatprep.subr.mxu0 0.0
  %114 = vmatpush1.msra.mxu0 %v46
  %115 = vmatprep.subr.mxu0 0.0
  %116 = vmatpush1.msra.mxu0 %v47
  %117 = vmatprep.subr.mxu0 0.0
  %118 = vmatpush1.msra.mxu0 %v48
  %119 = vmatprep.subr.mxu0 0.0
  %120 = vmatpush1.msra.mxu0 %v49
  %121 = vmatprep.subr.mxu0 0.0
  %122 = vmatpush1.msra.mxu0 %v50
  %123 = vmatprep.subr.mxu0 0.0
  %124 = vmatpush1.msra.mxu0 %v51
  %125 = vmatprep.subr.mxu0 0.0
  %126 = vmatpush1.msra.mxu0 %v52
  %127 = vmatprep.subr.mxu0 0.0
  %128 = vmatpush1.msra.mxu0 %v53
  %129 = vmatprep.subr.mxu0 0.0
  %130 = vmatpush1.msra.mxu0 %v54
  %131 = vmatprep.subr.mxu0 0.0
  %132 = vmatpush1.msra.mxu0 %v55
  %133 = vmatprep.subr.mxu0 0.0
  %134 = vmatpush1.msra.mxu0 %v56
  %135 = vmatprep.subr.mxu0 0.0
  %136 = vmatpush1.msra.mxu0 %v57
  %137 = vmatprep.subr.mxu0 0.0
  %138 = vmatpush1.msra.mxu0 %v58
  %139 = vmatprep.subr.mxu0 0.0
  %140 = vmatpush1.msra.mxu0 %v59
  %141 = vmatprep.subr.mxu0 0.0
  %142 = vmatpush1.msra.mxu0 %v60
  %143 = vmatprep.subr.mxu0 0.0
  %144 = vmatpush1.msra.mxu0 %v61
  %145 = vmatprep.subr.mxu0 0.0
  %146 = vmatpush1.msra.mxu0 %v62
  %147 = vmatprep.subr.mxu0 0.0
  %148 = vmatpush1.msra.mxu0 %v63
  %149 = vmatprep.subr.mxu0 0.0
  %150 = vmatpush1.msra.mxu0 %v64
  %151 = vmatprep.subr.mxu0 0.0
  %152 = vmatpush1.msra.mxu0 %v65
  %153 = vmatprep.subr.mxu0 0.0
  %154 = vmatpush1.msra.mxu0 %v66
  %155 = vmatprep.subr.mxu0 0.0
  %156 = vmatpush1.msra.mxu0 %v67
  %157 = vmatprep.subr.mxu0 0.0
  %158 = vmatpush1.msra.mxu0 %v68
  %159 = vmatprep.subr.mxu0 0.0
  %160 = vmatpush1.msra.mxu0 %v69
  %161 = vmatprep.subr.mxu0 0.0
  %162 = vmatpush1.msra.mxu0 %v70
  %163 = vmatprep.subr.mxu0 0.0
  %164 = vmatpush1.msra.mxu0 %v71
  %165 = vmatprep.subr.mxu0 0.0
  %166 = vmatpush1.msra.mxu0 %v72
  %167 = vmatprep.subr.mxu0 0.0
  %168 = vmatpush1.msra.mxu0 %v73
  %169 = vmatprep.subr.mxu0 0.0
  %170 = vmatpush1.msra.mxu0 %v74
  %171 = vmatprep.mubr.f32.mxu0 %v12
  %172 = vmatmul.mubr.f32.gmra.mrb[0].mxu0 %v11
  %v173 = vpop.f32.mrb[0].mxu0
  %v174 = vadd.f32 0.0, %v173
  %v175 = vpop.f32.mrb[0].mxu0
  %176 = vmatprep.mubr.f32.mxu0 %v16
  %177 = vmatmul.mubr.f32.gmra.mrb[0].mxu0 %v15
  %v178 = vpop.f32.mrb[0].mxu0
  %v179 = vadd.f32 0.0, %v178
  %v180 = vpop.f32.mrb[0].mxu0
  %181 = vmatprep.mubr.f32.mxu0 %v20
  %182 = vmatmul.mubr.f32.gmra.mrb[0].mxu0 %v19
  %v183 = vpop.f32.mrb[0].mxu0
  %v184 = vadd.f32 0.0, %v183
  %v185 = vpop.f32.mrb[0].mxu0
  %186 = vmatprep.mubr.f32.mxu0 %v24
  %187 = vmatmul.mubr.f32.gmra.mrb[0].mxu0 %v23
  %v188 = vpop.f32.mrb[0].mxu0
  %v189 = vadd.f32 0.0, %v188
  %v190 = vpop.f32.mrb[0].mxu0
  %191 = vmatprep.mubr.f32.mxu0 %v28
  %192 = vmatmul.mubr.f32.gmra.mrb[0].mxu0 %v27
  %v193 = vpop.f32.mrb[0].mxu0
  %v194 = vadd.f32 0.0, %v193
  %v195 = vpop.f32.mrb[0].mxu0
  %196 = vmatprep.mubr.f32.mxu0 %v32
  %197 = vmatmul.mubr.f32.gmra.mrb[0].mxu0 %v31
  %v198 = vpop.f32.mrb[0].mxu0
  %v199 = vadd.f32 0.0, %v198
  %v200 = vpop.f32.mrb[0].mxu0
  %201 = vmatprep.mubr.f32.mxu0 %v36
  %202 = vmatmul.mubr.f32.gmra.mrb[0].mxu0 %v35
  %v203 = vpop.f32.mrb[0].mxu0
  %v204 = vadd.f32 0.0, %v203
  %v205 = vpop.f32.mrb[0].mxu0
  %206 = vmatprep.mubr.f32.mxu0 %v40
  %207 = vmatmul.mubr.f32.gmra.mrb[0].mxu0 %v39
  %v208 = vpop.f32.mrb[0].mxu0
  %v209 = vadd.f32 0.0, %v208
  %v210 = vpop.f32.mrb[0].mxu0
  %211 = vdwg.mxu0
  %212 = vmatprep.subr.mxu0 0.0
  %213 = vmatpush1.msra.mxu0 %v75
  %214 = vmatprep.subr.mxu0 0.0
  %215 = vmatpush1.msra.mxu0 %v76
  %216 = vmatprep.subr.mxu0 0.0
  %217 = vmatpush1.msra.mxu0 %v77
  %218 = vmatprep.subr.mxu0 0.0
  %219 = vmatpush1.msra.mxu0 %v78
  %220 = vmatprep.subr.mxu0 0.0
  %221 = vmatpush1.msra.mxu0 %v79
  %222 = vmatprep.subr.mxu0 0.0
  %223 = vmatpush1.msra.mxu0 %v80
  %224 = vmatprep.subr.mxu0 0.0
  %225 = vmatpush1.msra.mxu0 %v81
  %226 = vmatprep.subr.mxu0 0.0
  %227 = vmatpush1.msra.mxu0 %v82
  %228 = vmatprep.subr.mxu0 0.0
  %229 = vmatpush1.msra.mxu0 %v83
  %230 = vmatprep.subr.mxu0 0.0
  %231 = vmatpush1.msra.mxu0 %v84
  %232 = vmatprep.subr.mxu0 0.0
  %233 = vmatpush1.msra.mxu0 %v85
  %234 = vmatprep.subr.mxu0 0.0
  %235 = vmatpush1.msra.mxu0 %v86
  %236 = vmatprep.subr.mxu0 0.0
  %237 = vmatpush1.msra.mxu0 %v87
  %238 = vmatprep.subr.mxu0 0.0
  %239 = vmatpush1.msra.mxu0 %v88
  %240 = vmatprep.subr.mxu0 0.0
  %241 = vmatpush1.msra.mxu0 %v89
  %242 = vmatprep.subr.mxu0 0.0
  %243 = vmatpush1.msra.mxu0 %v90
  %244 = vmatprep.subr.mxu0 0.0
  %245 = vmatpush1.msra.mxu0 %v91
  %246 = vmatprep.subr.mxu0 0.0
  %247 = vmatpush1.msra.mxu0 %v92
  %248 = vmatprep.subr.mxu0 0.0
  %249 = vmatpush1.msra.mxu0 %v93
  %250 = vmatprep.subr.mxu0 0.0
  %251 = vmatpush1.msra.mxu0 %v94
  %252 = vmatprep.subr.mxu0 0.0
  %253 = vmatpush1.msra.mxu0 %v95
  %254 = vmatprep.subr.mxu0 0.0
  %255 = vmatpush1.msra.mxu0 %v96
  %256 = vmatprep.subr.mxu0 0.0
  %257 = vmatpush1.msra.mxu0 %v97
  %258 = vmatprep.subr.mxu0 0.0
  %259 = vmatpush1.msra.mxu0 %v98
  %260 = vmatprep.subr.mxu0 0.0
  %261 = vmatpush1.msra.mxu0 %v99
  %262 = vmatprep.subr.mxu0 0.0
  %263 = vmatpush1.msra.mxu0 %v100
  %264 = vmatprep.subr.mxu0 0.0
  %265 = vmatpush1.msra.mxu0 %v101
  %266 = vmatprep.subr.mxu0 0.0
  %267 = vmatpush1.msra.mxu0 %v102
  %268 = vmatprep.subr.mxu0 0.0
  %269 = vmatpush1.msra.mxu0 %v103
  %270 = vmatprep.subr.mxu0 0.0
  %271 = vmatpush1.msra.mxu0 %v104
  %272 = vmatprep.subr.mxu0 0.0
  %273 = vmatpush1.msra.mxu0 %v105
  %274 = vmatprep.subr.mxu0 0.0
  %275 = vmatpush1.msra.mxu0 %v106
  %276 = vmatprep.mubr.f32.mxu0 %v14
  %277 = vmatmul.mubr.f32.gmra.mrb[0].mxu0 %v13
  %v278 = vpop.f32.mrb[0].mxu0
  %v279 = vadd.f32 %v174, %v278
  %v280 = vpop.f32.mrb[0].mxu0
  %281 = vmatprep.mubr.f32.mxu0 %v18
  %282 = vmatmul.mubr.f32.gmra.mrb[0].mxu0 %v17
  %v283 = vpop.f32.mrb[0].mxu0
  %v284 = vadd.f32 %v179, %v283
  %v285 = vpop.f32.mrb[0].mxu0
  %286 = vmatprep.mubr.f32.mxu0 %v22
  %287 = vmatmul.mubr.f32.gmra.mrb[0].mxu0 %v21
  %v288 = vpop.f32.mrb[0].mxu0
  %v289 = vadd.f32 %v184, %v288
  %v290 = vpop.f32.mrb[0].mxu0
  %291 = vmatprep.mubr.f32.mxu0 %v26
  %292 = vmatmul.mubr.f32.gmra.mrb[0].mxu0 %v25
  %v293 = vpop.f32.mrb[0].mxu0
  %v294 = vadd.f32 %v189, %v293
  %v295 = vpop.f32.mrb[0].mxu0
  %296 = vmatprep.mubr.f32.mxu0 %v30
  %297 = vmatmul.mubr.f32.gmra.mrb[0].mxu0 %v29
  %v298 = vpop.f32.mrb[0].mxu0
  %v299 = vadd.f32 %v194, %v298
  %v300 = vpop.f32.mrb[0].mxu0
  %301 = vmatprep.mubr.f32.mxu0 %v34
  %302 = vmatmul.mubr.f32.gmra.mrb[0].mxu0 %v33
  %v303 = vpop.f32.mrb[0].mxu0
  %v304 = vadd.f32 %v199, %v303
  %v305 = vpop.f32.mrb[0].mxu0
  %306 = vmatprep.mubr.f32.mxu0 %v38
  %307 = vmatmul.mubr.f32.gmra.mrb[0].mxu0 %v37
  %v308 = vpop.f32.mrb[0].mxu0
  %v309 = vadd.f32 %v204, %v308
  %v310 = vpop.f32.mrb[0].mxu0
  %311 = vmatprep.mubr.f32.mxu0 %v42
  %312 = vmatmul.mubr.f32.gmra.mrb[0].mxu0 %v41
  %v313 = vpop.f32.mrb[0].mxu0
  %v314 = vadd.f32 %v209, %v313
  %v315 = vpop.f32.mrb[0].mxu0
  %316 = vdwg.mxu0
  %vm317 = vcmp.ge.f32.partialorder %v279, 0.0
  %vm318 = vcmp.ge.f32.partialorder %v284, 0.0
  %vm319 = vcmp.ge.f32.partialorder %v289, 0.0
  %vm320 = vcmp.ge.f32.partialorder %v294, 0.0
  %vm321 = vcmp.ge.f32.partialorder %v299, 0.0
  %vm322 = vcmp.ge.f32.partialorder %v304, 0.0
  %vm323 = vcmp.ge.f32.partialorder %v309, 0.0
  %vm324 = vcmp.ge.f32.partialorder %v314, 0.0
  %v325 = vmul.f32 %v279, 0.2
  %v326 = vmul.f32 %v284, 0.2
  %v327 = vmul.f32 %v289, 0.2
  %v328 = vmul.f32 %v294, 0.2
  %v329 = vmul.f32 %v299, 0.2
  %v330 = vmul.f32 %v304, 0.2
  %v331 = vmul.f32 %v309, 0.2
  %v332 = vmul.f32 %v314, 0.2
  %v333 = vsel %vm317, %v279, %v325
  %v334 = vsel %vm318, %v284, %v326
  %v335 = vsel %vm319, %v289, %v327
  %v336 = vsel %vm320, %v294, %v328
  %v337 = vsel %vm321, %v299, %v329
  %v338 = vsel %vm322, %v304, %v330
  %v339 = vsel %vm323, %v309, %v331
  %v340 = vsel %vm324, %v314, %v332
  %341 = vst [vmem:[%s2] sm:$0xff] %v333
  %342 = vst [vmem:[%s2 + $0x8] sm:$0xff] %v334
  %343 = vst [vmem:[%s2 + $0x10] sm:$0xff] %v335
  %344 = vst [vmem:[%s2 + $0x18] sm:$0xff] %v336
  %345 = vst [vmem:[%s2 + $0x20] sm:$0xff] %v337
  %346 = vst [vmem:[%s2 + $0x28] sm:$0xff] %v338
  %347 = vst [vmem:[%s2 + $0x30] sm:$0xff] %v339
  %348 = vst [vmem:[%s2 + $0x38] sm:$0xff] %v340
  // Predicated region
  $region10: #{discriminator_forward.8} parent=0 // pred_check
    _
  $region11: #{discriminator_forward.8} parent=0 // pred_check_branch
    %350 = sbr.rel (0) target = $region13
  $region12: #{discriminator_forward.8} parent=0 // pred_region
    _
  $region13: #{discriminator_forward.8} parent=0 // pred_fallthru
    _
  // Predicated region
  $region14: #{discriminator_forward.8} parent=0 // pred_check
    _
  $region15: #{discriminator_forward.8} parent=0 // pred_check_branch
    %352 = sbr.rel (0) target = $region17
  $region16: #{discriminator_forward.8} parent=0 // pred_region
    _
  $region17: #{discriminator_forward.8} parent=0 // pred_fallthru
    _

// kernel: discriminator_forward.9
$region0: #{discriminator_forward.9}
  #allocation0 [shape = 'u32[]', space=smem, size = 0x4, offset = 0x4, fixed_abs, tag = 'smem constant byte address 0x4 - core index']
  #allocation1 [shape = 'u32[144,128]{1,0:T(1,128)}', space=vmem, size = 0x12000, scoped, tag = 'internal scratch']
  #allocation2 [shape = 'f32[8,512]{1,0:T(8,128)}', space=vmem, size = 0x4000, scoped, tag = 'scratch operand']
  #allocation3 [shape = 'f32[8,1536]{1,0:T(8,128)}', space=vmem, size = 0xc000, scoped, tag = 'scratch operand']
  %s0 = inlined_call_operand.vmem [shape: f32[32,1024], index: 0, kind: input, shape index: {}]
  %s1 = inlined_call_operand.vmem [shape: f32[1024,128], index: 1, kind: input, shape index: {}]
  %s2 = inlined_call_operand.vmem [shape: f32[1536,512], index: 2, kind: input, shape index: {}]
  %s3 = inlined_call_operand.vmem [shape: f32[1,512], index: 3, kind: input, shape index: {}]
  %s4 = inlined_call_operand.vmem [shape: f32[8,512], index: 4, kind: input, shape index: {}]
  %s5 = inlined_call_operand.vmem [shape: f32[2,8], index: 5, kind: input, shape index: {}]
  %s6 = inlined_call_operand.vmem [shape: f32[2,1], index: 6, kind: output, shape index: {}]
  %s7 = sld [smem:[#allocation0]]
  $region34: #{discriminator_forward.9} parent=0
    _
  %s9 = ssub.s32 1, %s7
  %s10 = scalar_select 0, %s9, %s7
  // Predicated region
  $region2: #{discriminator_forward.9} parent=0 // pred_check
    _
  $region3: #{discriminator_forward.9} parent=0 // pred_check_branch
    %12 = sbr.rel (0) target = $region5
  $region4: #{discriminator_forward.9} parent=0 // pred_region
    _
  $region5: #{discriminator_forward.9} parent=0 // pred_fallthru
    _
  // Predicated region
  $region6: #{discriminator_forward.9} parent=0 // pred_check
    _
  $region7: #{discriminator_forward.9} parent=0 // pred_check_branch
    %14 = sbr.rel (0) target = $region9
  $region8: #{discriminator_forward.9} parent=0 // pred_region
    _
  $region9: #{discriminator_forward.9} parent=0 // pred_fallthru
    _
  // Predicated region
  $region10: #{discriminator_forward.9} parent=0 // pred_check
    _
  $region11: #{discriminator_forward.9} parent=0 // pred_check_branch
    %16 = sbr.rel (0) target = $region13
  $region12: #{discriminator_forward.9} parent=0 // pred_region
    _
  $region13: #{discriminator_forward.9} parent=0 // pred_fallthru
    _
  // Predicated region
  $region14: #{discriminator_forward.9} parent=0 // pred_check
    _
  $region15: #{discriminator_forward.9} parent=0 // pred_check_branch
    %18 = sbr.rel (0) target = $region17
  $region16: #{discriminator_forward.9} parent=0 // pred_region
    _
  $region17: #{discriminator_forward.9} parent=0 // pred_fallthru
    _
  // Predicated region
  $region18: #{discriminator_forward.9} parent=0 // pred_check
    _
  $region19: #{discriminator_forward.9} parent=0 // pred_check_branch
    %20 = sbr.rel (0) target = $region21
  $region20: #{discriminator_forward.9} parent=0 // pred_region
    _
  $region21: #{discriminator_forward.9} parent=0 // pred_fallthru
    _
  // Predicated region
  $region22: #{discriminator_forward.9} parent=0 // pred_check
    _
  $region23: #{discriminator_forward.9} parent=0 // pred_check_branch
    %22 = sbr.rel (0) target = $region25
  $region24: #{discriminator_forward.9} parent=0 // pred_region
    _
  $region25: #{discriminator_forward.9} parent=0 // pred_fallthru
    _
  %v23 = vld [vmem:[%s0] sm:$0xff]
  %v24 = vld [vmem:[%s0 + $0x8] sm:$0xff]
  %v25 = vld [vmem:[%s0 + $0x10] sm:$0xff]
  %v26 = vld [vmem:[%s0 + $0x18] sm:$0xff]
  %v27 = vld [vmem:[%s0 + $0x20] sm:$0xff]
  %v28 = vld [vmem:[%s0 + $0x28] sm:$0xff]
  %v29 = vld [vmem:[%s0 + $0x30] sm:$0xff]
  %v30 = vld [vmem:[%s0 + $0x38] sm:$0xff]
  %v31 = vld [vmem:[%s0 + $0x40] sm:$0xff]
  %v32 = vld [vmem:[%s0 + $0x48] sm:$0xff]
  %v33 = vld [vmem:[%s0 + $0x50] sm:$0xff]
  %v34 = vld [vmem:[%s0 + $0x58] sm:$0xff]
  %v35 = vld [vmem:[%s0 + $0x60] sm:$0xff]
  %v36 = vld [vmem:[%s0 + $0x68] sm:$0xff]
  %v37 = vld [vmem:[%s0 + $0x70] sm:$0xff]
  %v38 = vld [vmem:[%s0 + $0x78] sm:$0xff]
  %v39 = vld [vmem:[%s0 + $0x80] sm:$0xff]
  %v40 = vld [vmem:[%s0 + $0x88] sm:$0xff]
  %v41 = vld [vmem:[%s0 + $0x90] sm:$0xff]
  %v42 = vld [vmem:[%s0 + $0x98] sm:$0xff]
  %v43 = vld [vmem:[%s0 + $0xa0] sm:$0xff]
  %v44 = vld [vmem:[%s0 + $0xa8] sm:$0xff]
  %v45 = vld [vmem:[%s0 + $0xb0] sm:$0xff]
  %v46 = vld [vmem:[%s0 + $0xb8] sm:$0xff]
  %v47 = vld [vmem:[%s0 + $0xc0] sm:$0xff]
  %v48 = vld [vmem:[%s0 + $0xc8] sm:$0xff]
  %v49 = vld [vmem:[%s0 + $0xd0] sm:$0xff]
  %v50 = vld [vmem:[%s0 + $0xd8] sm:$0xff]
  %v51 = vld [vmem:[%s0 + $0xe0] sm:$0xff]
  %v52 = vld [vmem:[%s0 + $0xe8] sm:$0xff]
  %v53 = vld [vmem:[%s0 + $0xf0] sm:$0xff]
  %v54 = vld [vmem:[%s0 + $0xf8] sm:$0xff]
  %v55 = vld [vmem:[%s1] sm:$0xff]
  %v56 = vld [vmem:[%s1 + $0x8] sm:$0xff]
  %v57 = vld [vmem:[%s1 + $0x10] sm:$0xff]
  %v58 = vld [vmem:[%s1 + $0x18] sm:$0xff]
  %v59 = vld [vmem:[%s1 + $0x20] sm:$0xff]
  %v60 = vld [vmem:[%s1 + $0x28] sm:$0xff]
  %v61 = vld [vmem:[%s1 + $0x30] sm:$0xff]
  %v62 = vld [vmem:[%s1 + $0x38] sm:$0xff]
  %v63 = vld [vmem:[%s1 + $0x40] sm:$0xff]
  %v64 = vld [vmem:[%s1 + $0x48] sm:$0xff]
  %v65 = vld [vmem:[%s1 + $0x50] sm:$0xff]
  %v66 = vld [vmem:[%s1 + $0x58] sm:$0xff]
  %v67 = vld [vmem:[%s1 + $0x60] sm:$0xff]
  %v68 = vld [vmem:[%s1 + $0x68] sm:$0xff]
  %v69 = vld [vmem:[%s1 + $0x70] sm:$0xff]
  %v70 = vld [vmem:[%s1 + $0x78] sm:$0xff]
  %v71 = vld [vmem:[%s1 + $0x80] sm:$0xff]
  %v72 = vld [vmem:[%s1 + $0x88] sm:$0xff]
  %v73 = vld [vmem:[%s1 + $0x90] sm:$0xff]
  %v74 = vld [vmem:[%s1 + $0x98] sm:$0xff]
  %v75 = vld [vmem:[%s1 + $0xa0] sm:$0xff]
  %v76 = vld [vmem:[%s1 + $0xa8] sm:$0xff]
  %v77 = vld [vmem:[%s1 + $0xb0] sm:$0xff]
  %v78 = vld [vmem:[%s1 + $0xb8] sm:$0xff]
  %v79 = vld [vmem:[%s1 + $0xc0] sm:$0xff]
  %v80 = vld [vmem:[%s1 + $0xc8] sm:$0xff]
  %v81 = vld [vmem:[%s1 + $0xd0] sm:$0xff]
  %v82 = vld [vmem:[%s1 + $0xd8] sm:$0xff]
  %v83 = vld [vmem:[%s1 + $0xe0] sm:$0xff]
  %v84 = vld [vmem:[%s1 + $0xe8] sm:$0xff]
  %v85 = vld [vmem:[%s1 + $0xf0] sm:$0xff]
  %v86 = vld [vmem:[%s1 + $0xf8] sm:$0xff]
  %v87 = vld [vmem:[%s1 + $0x100] sm:$0xff]
  %v88 = vld [vmem:[%s1 + $0x108] sm:$0xff]
  %v89 = vld [vmem:[%s1 + $0x110] sm:$0xff]
  %v90 = vld [vmem:[%s1 + $0x118] sm:$0xff]
  %v91 = vld [vmem:[%s1 + $0x120] sm:$0xff]
  %v92 = vld [vmem:[%s1 + $0x128] sm:$0xff]
  %v93 = vld [vmem:[%s1 + $0x130] sm:$0xff]
  %v94 = vld [vmem:[%s1 + $0x138] sm:$0xff]
  %v95 = vld [vmem:[%s1 + $0x140] sm:$0xff]
  %v96 = vld [vmem:[%s1 + $0x148] sm:$0xff]
  %v97 = vld [vmem:[%s1 + $0x150] sm:$0xff]
  %v98 = vld [vmem:[%s1 + $0x158] sm:$0xff]
  %v99 = vld [vmem:[%s1 + $0x160] sm:$0xff]
  %v100 = vld [vmem:[%s1 + $0x168] sm:$0xff]
  %v101 = vld [vmem:[%s1 + $0x170] sm:$0xff]
  %v102 = vld [vmem:[%s1 + $0x178] sm:$0xff]
  %v103 = vld [vmem:[%s1 + $0x180] sm:$0xff]
  %v104 = vld [vmem:[%s1 + $0x188] sm:$0xff]
  %v105 = vld [vmem:[%s1 + $0x190] sm:$0xff]
  %v106 = vld [vmem:[%s1 + $0x198] sm:$0xff]
  %v107 = vld [vmem:[%s1 + $0x1a0] sm:$0xff]
  %v108 = vld [vmem:[%s1 + $0x1a8] sm:$0xff]
  %v109 = vld [vmem:[%s1 + $0x1b0] sm:$0xff]
  %v110 = vld [vmem:[%s1 + $0x1b8] sm:$0xff]
  %v111 = vld [vmem:[%s1 + $0x1c0] sm:$0xff]
  %v112 = vld [vmem:[%s1 + $0x1c8] sm:$0xff]
  %v113 = vld [vmem:[%s1 + $0x1d0] sm:$0xff]
  %v114 = vld [vmem:[%s1 + $0x1d8] sm:$0xff]
  %v115 = vld [vmem:[%s1 + $0x1e0] sm:$0xff]
  %v116 = vld [vmem:[%s1 + $0x1e8] sm:$0xff]
  %v117 = vld [vmem:[%s1 + $0x1f0] sm:$0xff]
  %v118 = vld [vmem:[%s1 + $0x1f8] sm:$0xff]
  %v119 = vld [vmem:[%s1 + $0x200] sm:$0xff]
  %v120 = vld [vmem:[%s1 + $0x208] sm:$0xff]
  %v121 = vld [vmem:[%s1 + $0x210] sm:$0xff]
  %v122 = vld [vmem:[%s1 + $0x218] sm:$0xff]
  %v123 = vld [vmem:[%s1 + $0x220] sm:$0xff]
  %v124 = vld [vmem:[%s1 + $0x228] sm:$0xff]
  %v125 = vld [vmem:[%s1 + $0x230] sm:$0xff]
  %v126 = vld [vmem:[%s1 + $0x238] sm:$0xff]
  %v127 = vld [vmem:[%s1 + $0x240] sm:$0xff]
  %v128 = vld [vmem:[%s1 + $0x248] sm:$0xff]
  %v129 = vld [vmem:[%s1 + $0x250] sm:$0xff]
  %v130 = vld [vmem:[%s1 + $0x258] sm:$0xff]
  %v131 = vld [vmem:[%s1 + $0x260] sm:$0xff]
  %v132 = vld [vmem:[%s1 + $0x268] sm:$0xff]
  %v133 = vld [vmem:[%s1 + $0x270] sm:$0xff]
  %v134 = vld [vmem:[%s1 + $0x278] sm:$0xff]
  %v135 = vld [vmem:[%s1 + $0x280] sm:$0xff]
  %v136 = vld [vmem:[%s1 + $0x288] sm:$0xff]
  %v137 = vld [vmem:[%s1 + $0x290] sm:$0xff]
  %v138 = vld [vmem:[%s1 + $0x298] sm:$0xff]
  %v139 = vld [vmem:[%s1 + $0x2a0] sm:$0xff]
  %v140 = vld [vmem:[%s1 + $0x2a8] sm:$0xff]
  %v141 = vld [vmem:[%s1 + $0x2b0] sm:$0xff]
  %v142 = vld [vmem:[%s1 + $0x2b8] sm:$0xff]
  %v143 = vld [vmem:[%s1 + $0x2c0] sm:$0xff]
  %v144 = vld [vmem:[%s1 + $0x2c8] sm:$0xff]
  %v145 = vld [vmem:[%s1 + $0x2d0] sm:$0xff]
  %v146 = vld [vmem:[%s1 + $0x2d8] sm:$0xff]
  %v147 = vld [vmem:[%s1 + $0x2e0] sm:$0xff]
  %v148 = vld [vmem:[%s1 + $0x2e8] sm:$0xff]
  %v149 = vld [vmem:[%s1 + $0x2f0] sm:$0xff]
  %v150 = vld [vmem:[%s1 + $0x2f8] sm:$0xff]
  %v151 = vld [vmem:[%s1 + $0x300] sm:$0xff]
  %v152 = vld [vmem:[%s1 + $0x308] sm:$0xff]
  %v153 = vld [vmem:[%s1 + $0x310] sm:$0xff]
  %v154 = vld [vmem:[%s1 + $0x318] sm:$0xff]
  %v155 = vld [vmem:[%s1 + $0x320] sm:$0xff]
  %v156 = vld [vmem:[%s1 + $0x328] sm:$0xff]
  %v157 = vld [vmem:[%s1 + $0x330] sm:$0xff]
  %v158 = vld [vmem:[%s1 + $0x338] sm:$0xff]
  %v159 = vld [vmem:[%s1 + $0x340] sm:$0xff]
  %v160 = vld [vmem:[%s1 + $0x348] sm:$0xff]
  %v161 = vld [vmem:[%s1 + $0x350] sm:$0xff]
  %v162 = vld [vmem:[%s1 + $0x358] sm:$0xff]
  %v163 = vld [vmem:[%s1 + $0x360] sm:$0xff]
  %v164 = vld [vmem:[%s1 + $0x368] sm:$0xff]
  %v165 = vld [vmem:[%s1 + $0x370] sm:$0xff]
  %v166 = vld [vmem:[%s1 + $0x378] sm:$0xff]
  %v167 = vld [vmem:[%s1 + $0x380] sm:$0xff]
  %v168 = vld [vmem:[%s1 + $0x388] sm:$0xff]
  %v169 = vld [vmem:[%s1 + $0x390] sm:$0xff]
  %v170 = vld [vmem:[%s1 + $0x398] sm:$0xff]
  %v171 = vld [vmem:[%s1 + $0x3a0] sm:$0xff]
  %v172 = vld [vmem:[%s1 + $0x3a8] sm:$0xff]
  %v173 = vld [vmem:[%s1 + $0x3b0] sm:$0xff]
  %v174 = vld [vmem:[%s1 + $0x3b8] sm:$0xff]
  %v175 = vld [vmem:[%s1 + $0x3c0] sm:$0xff]
  %v176 = vld [vmem:[%s1 + $0x3c8] sm:$0xff]
  %v177 = vld [vmem:[%s1 + $0x3d0] sm:$0xff]
  %v178 = vld [vmem:[%s1 + $0x3d8] sm:$0xff]
  %v179 = vld [vmem:[%s1 + $0x3e0] sm:$0xff]
  %v180 = vld [vmem:[%s1 + $0x3e8] sm:$0xff]
  %v181 = vld [vmem:[%s1 + $0x3f0] sm:$0xff]
  %v182 = vld [vmem:[%s1 + $0x3f8] sm:$0xff]
  %183 = vmatprep.subr.mxu0 0.0
  %184 = vmatpush1.msra.mxu0 %v55
  %185 = vmatprep.subr.mxu0 0.0
  %186 = vmatpush1.msra.mxu0 %v56
  %187 = vmatprep.subr.mxu0 0.0
  %188 = vmatpush1.msra.mxu0 %v57
  %189 = vmatprep.subr.mxu0 0.0
  %190 = vmatpush1.msra.mxu0 %v58
  %191 = vmatprep.subr.mxu0 0.0
  %192 = vmatpush1.msra.mxu0 %v59
  %193 = vmatprep.subr.mxu0 0.0
  %194 = vmatpush1.msra.mxu0 %v60
  %195 = vmatprep.subr.mxu0 0.0
  %196 = vmatpush1.msra.mxu0 %v61
  %197 = vmatprep.subr.mxu0 0.0
  %198 = vmatpush1.msra.mxu0 %v62
  %199 = vmatprep.subr.mxu0 0.0
  %200 = vmatpush1.msra.mxu0 %v63
  %201 = vmatprep.subr.mxu0 0.0
  %202 = vmatpush1.msra.mxu0 %v64
  %203 = vmatprep.subr.mxu0 0.0
  %204 = vmatpush1.msra.mxu0 %v65
  %205 = vmatprep.subr.mxu0 0.0
  %206 = vmatpush1.msra.mxu0 %v66
  %207 = vmatprep.subr.mxu0 0.0
  %208 = vmatpush1.msra.mxu0 %v67
  %209 = vmatprep.subr.mxu0 0.0
  %210 = vmatpush1.msra.mxu0 %v68
  %211 = vmatprep.subr.mxu0 0.0
  %212 = vmatpush1.msra.mxu0 %v69
  %213 = vmatprep.subr.mxu0 0.0
  %214 = vmatpush1.msra.mxu0 %v70
  %215 = vmatprep.subr.mxu0 0.0
  %216 = vmatpush1.msra.mxu0 %v71
  %217 = vmatprep.subr.mxu0 0.0
  %218 = vmatpush1.msra.mxu0 %v72
  %219 = vmatprep.subr.mxu0 0.0
  %220 = vmatpush1.msra.mxu0 %v73
  %221 = vmatprep.subr.mxu0 0.0
  %222 = vmatpush1.msra.mxu0 %v74
  %223 = vmatprep.subr.mxu0 0.0
  %224 = vmatpush1.msra.mxu0 %v75
  %225 = vmatprep.subr.mxu0 0.0
  %226 = vmatpush1.msra.mxu0 %v76
  %227 = vmatprep.subr.mxu0 0.0
  %228 = vmatpush1.msra.mxu0 %v77
  %229 = vmatprep.subr.mxu0 0.0
  %230 = vmatpush1.msra.mxu0 %v78
  %231 = vmatprep.subr.mxu0 0.0
  %232 = vmatpush1.msra.mxu0 %v79
  %233 = vmatprep.subr.mxu0 0.0
  %234 = vmatpush1.msra.mxu0 %v80
  %235 = vmatprep.subr.mxu0 0.0
  %236 = vmatpush1.msra.mxu0 %v81
  %237 = vmatprep.subr.mxu0 0.0
  %238 = vmatpush1.msra.mxu0 %v82
  %239 = vmatprep.subr.mxu0 0.0
  %240 = vmatpush1.msra.mxu0 %v83
  %241 = vmatprep.subr.mxu0 0.0
  %242 = vmatpush1.msra.mxu0 %v84
  %243 = vmatprep.subr.mxu0 0.0
  %244 = vmatpush1.msra.mxu0 %v85
  %245 = vmatprep.subr.mxu0 0.0
  %246 = vmatpush1.msra.mxu0 %v86
  %247 = vmatprep.mubr.f32.mxu0 %v24
  %248 = vmatmul.mubr.f32.gmra.mrb[0].mxu0 %v23
  %v249 = vpop.f32.mrb[0].mxu0
  %v250 = vadd.f32 0.0, %v249
  %v251 = vpop.f32.mrb[0].mxu0
  %252 = vmatprep.mubr.f32.mxu0 %v32
  %253 = vmatmul.mubr.f32.gmra.mrb[0].mxu0 %v31
  %v254 = vpop.f32.mrb[0].mxu0
  %v255 = vadd.f32 0.0, %v254
  %v256 = vpop.f32.mrb[0].mxu0
  %257 = vmatprep.mubr.f32.mxu0 %v40
  %258 = vmatmul.mubr.f32.gmra.mrb[0].mxu0 %v39
  %v259 = vpop.f32.mrb[0].mxu0
  %v260 = vadd.f32 0.0, %v259
  %v261 = vpop.f32.mrb[0].mxu0
  %262 = vmatprep.mubr.f32.mxu0 %v48
  %263 = vmatmul.mubr.f32.gmra.mrb[0].mxu0 %v47
  %v264 = vpop.f32.mrb[0].mxu0
  %v265 = vadd.f32 0.0, %v264
  %v266 = vpop.f32.mrb[0].mxu0
  %267 = vdwg.mxu0
  %268 = vmatprep.subr.mxu0 0.0
  %269 = vmatpush1.msra.mxu0 %v87
  %270 = vmatprep.subr.mxu0 0.0
  %271 = vmatpush1.msra.mxu0 %v88
  %272 = vmatprep.subr.mxu0 0.0
  %273 = vmatpush1.msra.mxu0 %v89
  %274 = vmatprep.subr.mxu0 0.0
  %275 = vmatpush1.msra.mxu0 %v90
  %276 = vmatprep.subr.mxu0 0.0
  %277 = vmatpush1.msra.mxu0 %v91
  %278 = vmatprep.subr.mxu0 0.0
  %279 = vmatpush1.msra.mxu0 %v92
  %280 = vmatprep.subr.mxu0 0.0
  %281 = vmatpush1.msra.mxu0 %v93
  %282 = vmatprep.subr.mxu0 0.0
  %283 = vmatpush1.msra.mxu0 %v94
  %284 = vmatprep.subr.mxu0 0.0
  %285 = vmatpush1.msra.mxu0 %v95
  %286 = vmatprep.subr.mxu0 0.0
  %287 = vmatpush1.msra.mxu0 %v96
  %288 = vmatprep.subr.mxu0 0.0
  %289 = vmatpush1.msra.mxu0 %v97
  %290 = vmatprep.subr.mxu0 0.0
  %291 = vmatpush1.msra.mxu0 %v98
  %292 = vmatprep.subr.mxu0 0.0
  %293 = vmatpush1.msra.mxu0 %v99
  %294 = vmatprep.subr.mxu0 0.0
  %295 = vmatpush1.msra.mxu0 %v100
  %296 = vmatprep.subr.mxu0 0.0
  %297 = vmatpush1.msra.mxu0 %v101
  %298 = vmatprep.subr.mxu0 0.0
  %299 = vmatpush1.msra.mxu0 %v102
  %300 = vmatprep.subr.mxu0 0.0
  %301 = vmatpush1.msra.mxu0 %v103
  %302 = vmatprep.subr.mxu0 0.0
  %303 = vmatpush1.msra.mxu0 %v104
  %304 = vmatprep.subr.mxu0 0.0
  %305 = vmatpush1.msra.mxu0 %v105
  %306 = vmatprep.subr.mxu0 0.0
  %307 = vmatpush1.msra.mxu0 %v106
  %308 = vmatprep.subr.mxu0 0.0
  %309 = vmatpush1.msra.mxu0 %v107
  %310 = vmatprep.subr.mxu0 0.0
  %311 = vmatpush1.msra.mxu0 %v108
  %312 = vmatprep.subr.mxu0 0.0
  %313 = vmatpush1.msra.mxu0 %v109
  %314 = vmatprep.subr.mxu0 0.0
  %315 = vmatpush1.msra.mxu0 %v110
  %316 = vmatprep.subr.mxu0 0.0
  %317 = vmatpush1.msra.mxu0 %v111
  %318 = vmatprep.subr.mxu0 0.0
  %319 = vmatpush1.msra.mxu0 %v112
  %320 = vmatprep.subr.mxu0 0.0
  %321 = vmatpush1.msra.mxu0 %v113
  %322 = vmatprep.subr.mxu0 0.0
  %323 = vmatpush1.msra.mxu0 %v114
  %324 = vmatprep.subr.mxu0 0.0
  %325 = vmatpush1.msra.mxu0 %v115
  %326 = vmatprep.subr.mxu0 0.0
  %327 = vmatpush1.msra.mxu0 %v116
  %328 = vmatprep.subr.mxu0 0.0
  %329 = vmatpush1.msra.mxu0 %v117
  %330 = vmatprep.subr.mxu0 0.0
  %331 = vmatpush1.msra.mxu0 %v118
  %332 = vmatprep.mubr.f32.mxu0 %v26
  %333 = vmatmul.mubr.f32.gmra.mrb[0].mxu0 %v25
  %v334 = vpop.f32.mrb[0].mxu0
  %v335 = vadd.f32 %v250, %v334
  %v336 = vpop.f32.mrb[0].mxu0
  %337 = vmatprep.mubr.f32.mxu0 %v34
  %338 = vmatmul.mubr.f32.gmra.mrb[0].mxu0 %v33
  %v339 = vpop.f32.mrb[0].mxu0
  %v340 = vadd.f32 %v255, %v339
  %v341 = vpop.f32.mrb[0].mxu0
  %342 = vmatprep.mubr.f32.mxu0 %v42
  %343 = vmatmul.mubr.f32.gmra.mrb[0].mxu0 %v41
  %v344 = vpop.f32.mrb[0].mxu0
  %v345 = vadd.f32 %v260, %v344
  %v346 = vpop.f32.mrb[0].mxu0
  %347 = vmatprep.mubr.f32.mxu0 %v50
  %348 = vmatmul.mubr.f32.gmra.mrb[0].mxu0 %v49
  %v349 = vpop.f32.mrb[0].mxu0
  %v350 = vadd.f32 %v265, %v349
  %v351 = vpop.f32.mrb[0].mxu0
  %352 = vdwg.mxu0
  %353 = vmatprep.subr.mxu0 0.0
  %354 = vmatpush1.msra.mxu0 %v119
  %355 = vmatprep.subr.mxu0 0.0
  %356 = vmatpush1.msra.mxu0 %v120
  %357 = vmatprep.subr.mxu0 0.0
  %358 = vmatpush1.msra.mxu0 %v121
  %359 = vmatprep.subr.mxu0 0.0
  %360 = vmatpush1.msra.mxu0 %v122
  %361 = vmatprep.subr.mxu0 0.0
  %362 = vmatpush1.msra.mxu0 %v123
  %363 = vmatprep.subr.mxu0 0.0
  %364 = vmatpush1.msra.mxu0 %v124
  %365 = vmatprep.subr.mxu0 0.0
  %366 = vmatpush1.msra.mxu0 %v125
  %367 = vmatprep.subr.mxu0 0.0
  %368 = vmatpush1.msra.mxu0 %v126
  %369 = vmatprep.subr.mxu0 0.0
  %370 = vmatpush1.msra.mxu0 %v127
  %371 = vmatprep.subr.mxu0 0.0
  %372 = vmatpush1.msra.mxu0 %v128
  %373 = vmatprep.subr.mxu0 0.0
  %374 = vmatpush1.msra.mxu0 %v129
  %375 = vmatprep.subr.mxu0 0.0
  %376 = vmatpush1.msra.mxu0 %v130
  %377 = vmatprep.subr.mxu0 0.0
  %378 = vmatpush1.msra.mxu0 %v131
  %379 = vmatprep.subr.mxu0 0.0
  %380 = vmatpush1.msra.mxu0 %v132
  %381 = vmatprep.subr.mxu0 0.0
  %382 = vmatpush1.msra.mxu0 %v133
  %383 = vmatprep.subr.mxu0 0.0
  %384 = vmatpush1.msra.mxu0 %v134
  %385 = vmatprep.subr.mxu0 0.0
  %386 = vmatpush1.msra.mxu0 %v135
  %387 = vmatprep.subr.mxu0 0.0
  %388 = vmatpush1.msra.mxu0 %v136
  %389 = vmatprep.subr.mxu0 0.0
  %390 = vmatpush1.msra.mxu0 %v137
  %391 = vmatprep.subr.mxu0 0.0
  %392 = vmatpush1.msra.mxu0 %v138
  %393 = vmatprep.subr.mxu0 0.0
  %394 = vmatpush1.msra.mxu0 %v139
  %395 = vmatprep.subr.mxu0 0.0
  %396 = vmatpush1.msra.mxu0 %v140
  %397 = vmatprep.subr.mxu0 0.0
  %398 = vmatpush1.msra.mxu0 %v141
  %399 = vmatprep.subr.mxu0 0.0
  %400 = vmatpush1.msra.mxu0 %v142
  %401 = vmatprep.subr.mxu0 0.0
  %402 = vmatpush1.msra.mxu0 %v143
  %403 = vmatprep.subr.mxu0 0.0
  %404 = vmatpush1.msra.mxu0 %v144
  %405 = vmatprep.subr.mxu0 0.0
  %406 = vmatpush1.msra.mxu0 %v145
  %407 = vmatprep.subr.mxu0 0.0
  %408 = vmatpush1.msra.mxu0 %v146
  %409 = vmatprep.subr.mxu0 0.0
  %410 = vmatpush1.msra.mxu0 %v147
  %411 = vmatprep.subr.mxu0 0.0
  %412 = vmatpush1.msra.mxu0 %v148
  %413 = vmatprep.subr.mxu0 0.0
  %414 = vmatpush1.msra.mxu0 %v149
  %415 = vmatprep.subr.mxu0 0.0
  %416 = vmatpush1.msra.mxu0 %v150
  %417 = vmatprep.mubr.f32.mxu0 %v28
  %418 = vmatmul.mubr.f32.gmra.mrb[0].mxu0 %v27
  %v419 = vpop.f32.mrb[0].mxu0
  %v420 = vadd.f32 %v335, %v419
  %v421 = vpop.f32.mrb[0].mxu0
  %422 = vmatprep.mubr.f32.mxu0 %v36
  %423 = vmatmul.mubr.f32.gmra.mrb[0].mxu0 %v35
  %v424 = vpop.f32.mrb[0].mxu0
  %v425 = vadd.f32 %v340, %v424
  %v426 = vpop.f32.mrb[0].mxu0
  %427 = vmatprep.mubr.f32.mxu0 %v44
  %428 = vmatmul.mubr.f32.gmra.mrb[0].mxu0 %v43
  %v429 = vpop.f32.mrb[0].mxu0
  %v430 = vadd.f32 %v345, %v429
  %v431 = vpop.f32.mrb[0].mxu0
  %432 = vmatprep.mubr.f32.mxu0 %v52
  %433 = vmatmul.mubr.f32.gmra.mrb[0].mxu0 %v51
  %v434 = vpop.f32.mrb[0].mxu0
  %v435 = vadd.f32 %v350, %v434
  %v436 = vpop.f32.mrb[0].mxu0
  %437 = vdwg.mxu0
  %438 = vmatprep.subr.mxu0 0.0
  %439 = vmatpush1.msra.mxu0 %v151
  %440 = vmatprep.subr.mxu0 0.0
  %441 = vmatpush1.msra.mxu0 %v152
  %442 = vmatprep.subr.mxu0 0.0
  %443 = vmatpush1.msra.mxu0 %v153
  %444 = vmatprep.subr.mxu0 0.0
  %445 = vmatpush1.msra.mxu0 %v154
  %446 = vmatprep.subr.mxu0 0.0
  %447 = vmatpush1.msra.mxu0 %v155
  %448 = vmatprep.subr.mxu0 0.0
  %449 = vmatpush1.msra.mxu0 %v156
  %450 = vmatprep.subr.mxu0 0.0
  %451 = vmatpush1.msra.mxu0 %v157
  %452 = vmatprep.subr.mxu0 0.0
  %453 = vmatpush1.msra.mxu0 %v158
  %454 = vmatprep.subr.mxu0 0.0
  %455 = vmatpush1.msra.mxu0 %v159
  %456 = vmatprep.subr.mxu0 0.0
  %457 = vmatpush1.msra.mxu0 %v160
  %458 = vmatprep.subr.mxu0 0.0
  %459 = vmatpush1.msra.mxu0 %v161
  %460 = vmatprep.subr.mxu0 0.0
  %461 = vmatpush1.msra.mxu0 %v162
  %462 = vmatprep.subr.mxu0 0.0
  %463 = vmatpush1.msra.mxu0 %v163
  %464 = vmatprep.subr.mxu0 0.0
  %465 = vmatpush1.msra.mxu0 %v164
  %466 = vmatprep.subr.mxu0 0.0
  %467 = vmatpush1.msra.mxu0 %v165
  %468 = vmatprep.subr.mxu0 0.0
  %469 = vmatpush1.msra.mxu0 %v166
  %470 = vmatprep.subr.mxu0 0.0
  %471 = vmatpush1.msra.mxu0 %v167
  %472 = vmatprep.subr.mxu0 0.0
  %473 = vmatpush1.msra.mxu0 %v168
  %474 = vmatprep.subr.mxu0 0.0
  %475 = vmatpush1.msra.mxu0 %v169
  %476 = vmatprep.subr.mxu0 0.0
  %477 = vmatpush1.msra.mxu0 %v170
  %478 = vmatprep.subr.mxu0 0.0
  %479 = vmatpush1.msra.mxu0 %v171
  %480 = vmatprep.subr.mxu0 0.0
  %481 = vmatpush1.msra.mxu0 %v172
  %482 = vmatprep.subr.mxu0 0.0
  %483 = vmatpush1.msra.mxu0 %v173
  %484 = vmatprep.subr.mxu0 0.0
  %485 = vmatpush1.msra.mxu0 %v174
  %486 = vmatprep.subr.mxu0 0.0
  %487 = vmatpush1.msra.mxu0 %v175
  %488 = vmatprep.subr.mxu0 0.0
  %489 = vmatpush1.msra.mxu0 %v176
  %490 = vmatprep.subr.mxu0 0.0
  %491 = vmatpush1.msra.mxu0 %v177
  %492 = vmatprep.subr.mxu0 0.0
  %493 = vmatpush1.msra.mxu0 %v178
  %494 = vmatprep.subr.mxu0 0.0
  %495 = vmatpush1.msra.mxu0 %v179
  %496 = vmatprep.subr.mxu0 0.0
  %497 = vmatpush1.msra.mxu0 %v180
  %498 = vmatprep.subr.mxu0 0.0
  %499 = vmatpush1.msra.mxu0 %v181
  %500 = vmatprep.subr.mxu0 0.0
  %501 = vmatpush1.msra.mxu0 %v182
  %502 = vmatprep.mubr.f32.mxu0 %v30
  %503 = vmatmul.mubr.f32.gmra.mrb[0].mxu0 %v29
  %v504 = vpop.f32.mrb[0].mxu0
  %v505 = vadd.f32 %v420, %v504
  %v506 = vpop.f32.mrb[0].mxu0
  %507 = vmatprep.mubr.f32.mxu0 %v38
  %508 = vmatmul.mubr.f32.gmra.mrb[0].mxu0 %v37
  %v509 = vpop.f32.mrb[0].mxu0
  %v510 = vadd.f32 %v425, %v509
  %v511 = vpop.f32.mrb[0].mxu0
  %512 = vmatprep.mubr.f32.mxu0 %v46
  %513 = vmatmul.mubr.f32.gmra.mrb[0].mxu0 %v45
  %v514 = vpop.f32.mrb[0].mxu0
  %v515 = vadd.f32 %v430, %v514
  %v516 = vpop.f32.mrb[0].mxu0
  %517 = vmatprep.mubr.f32.mxu0 %v54
  %518 = vmatmul.mubr.f32.gmra.mrb[0].mxu0 %v53
  %v519 = vpop.f32.mrb[0].mxu0
  %v520 = vadd.f32 %v435, %v519
  %v521 = vpop.f32.mrb[0].mxu0
  %522 = vdwg.mxu0
  %vm523 = vcmp.ge.f32.partialorder %v505, 0.0
  %vm524 = vcmp.ge.f32.partialorder %v510, 0.0
  %vm525 = vcmp.ge.f32.partialorder %v515, 0.0
  %vm526 = vcmp.ge.f32.partialorder %v520, 0.0
  %v527 = vmul.f32 %v505, 0.2
  %v528 = vmul.f32 %v510, 0.2
  %v529 = vmul.f32 %v515, 0.2
  %v530 = vmul.f32 %v520, 0.2
  %v531 = vsel %vm523, %v505, %v527
  %v532 = vsel %vm524, %v510, %v528
  %v533 = vsel %vm525, %v515, %v529
  %v534 = vsel %vm526, %v520, %v530
  %535 = vst [vmem:[#allocation2] sm:$0xff] %v531
  %536 = vst [vmem:[#allocation2 + $0x8] sm:$0xff] %v532
  %537 = vst [vmem:[#allocation2 + $0x10] sm:$0xff] %v533
  %538 = vst [vmem:[#allocation2 + $0x18] sm:$0xff] %v534
  %539 = vst [vmem:[#allocation3] sm:$0xff] 0.0
  %540 = vst [vmem:[#allocation3 + $0x8] sm:$0xff] 0.0
  %541 = vst [vmem:[#allocation3 + $0x10] sm:$0xff] 0.0
  %542 = vst [vmem:[#allocation3 + $0x18] sm:$0xff] 0.0
  %543 = vst [vmem:[#allocation3 + $0x20] sm:$0xff] 0.0
  %544 = vst [vmem:[#allocation3 + $0x28] sm:$0xff] 0.0
  %545 = vst [vmem:[#allocation3 + $0x30] sm:$0xff] 0.0
  %546 = vst [vmem:[#allocation3 + $0x38] sm:$0xff] 0.0
  %547 = vst [vmem:[#allocation3 + $0x40] sm:$0xff] 0.0
  %548 = vst [vmem:[#allocation3 + $0x48] sm:$0xff] 0.0
  %549 = vst [vmem:[#allocation3 + $0x50] sm:$0xff] 0.0
  %550 = vst [vmem:[#allocation3 + $0x58] sm:$0xff] 0.0
  %v551 = vld [vmem:[#allocation2] sm:$0xf]
  %v552 = vld [vmem:[#allocation2 + $0x8] sm:$0xf]
  %v553 = vld [vmem:[#allocation2 + $0x10] sm:$0xf]
  %v554 = vld [vmem:[#allocation2 + $0x18] sm:$0xf]
  %555 = vst [vmem:[#allocation3 + $0x20] sm:$0xf] %v551
  %556 = vst [vmem:[#allocation3 + $0x28] sm:$0xf] %v552
  %557 = vst [vmem:[#allocation3 + $0x30] sm:$0xf] %v553
  %558 = vst [vmem:[#allocation3 + $0x38] sm:$0xf] %v554
  %v559 = vld [vmem:[#allocation2] sm:$0x7]
  %v560 = vld [vmem:[#allocation2 + $0x8] sm:$0x7]
  %v561 = vld [vmem:[#allocation2 + $0x10] sm:$0x7]
  %v562 = vld [vmem:[#allocation2 + $0x18] sm:$0x7]
  %v567 = vrot.slane %v559, 7
  %v568 = vrot.slane %v560, 7
  %v569 = vrot.slane %v561, 7
  %v570 = vrot.slane %v562, 7
  %575 = vst [vmem:[#allocation3] sm:$0xe] %v567
  %576 = vst [vmem:[#allocation3 + $0x8] sm:$0xe] %v568
  %577 = vst [vmem:[#allocation3 + $0x10] sm:$0xe] %v569
  %578 = vst [vmem:[#allocation3 + $0x18] sm:$0xe] %v570
  %v579 = vld [vmem:[#allocation2] sm:$0xe]
  %v580 = vld [vmem:[#allocation2 + $0x8] sm:$0xe]
  %v581 = vld [vmem:[#allocation2 + $0x10] sm:$0xe]
  %v582 = vld [vmem:[#allocation2 + $0x18] sm:$0xe]
  %v587 = vrot.slane %v579, 1
  %v588 = vrot.slane %v580, 1
  %v589 = vrot.slane %v581, 1
  %v590 = vrot.slane %v582, 1
  %595 = vst [vmem:[#allocation3 + $0x40] sm:$0x7] %v587
  %596 = vst [vmem:[#allocation3 + $0x48] sm:$0x7] %v588
  %597 = vst [vmem:[#allocation3 + $0x50] sm:$0x7] %v589
  %598 = vst [vmem:[#allocation3 + $0x58] sm:$0x7] %v590
  %v599 = vld [vmem:[#allocation2] sm:$0xf0]
  %v600 = vld [vmem:[#allocation2 + $0x8] sm:$0xf0]
  %v601 = vld [vmem:[#allocation2 + $0x10] sm:$0xf0]
  %v602 = vld [vmem:[#allocation2 + $0x18] sm:$0xf0]
  %603 = vst [vmem:[#allocation3 + $0x20] sm:$0xf0] %v599
  %604 = vst [vmem:[#allocation3 + $0x28] sm:$0xf0] %v600
  %605 = vst [vmem:[#allocation3 + $0x30] sm:$0xf0] %v601
  %606 = vst [vmem:[#allocation3 + $0x38] sm:$0xf0] %v602
  %v607 = vld [vmem:[#allocation2] sm:$0x70]
  %v608 = vld [vmem:[#allocation2 + $0x8] sm:$0x70]
  %v609 = vld [vmem:[#allocation2 + $0x10] sm:$0x70]
  %v610 = vld [vmem:[#allocation2 + $0x18] sm:$0x70]
  %v615 = vrot.slane %v607, 7
  %v616 = vrot.slane %v608, 7
  %v617 = vrot.slane %v609, 7
  %v618 = vrot.slane %v610, 7
  %623 = vst [vmem:[#allocation3] sm:$0xe0] %v615
  %624 = vst [vmem:[#allocation3 + $0x8] sm:$0xe0] %v616
  %625 = vst [vmem:[#allocation3 + $0x10] sm:$0xe0] %v617
  %626 = vst [vmem:[#allocation3 + $0x18] sm:$0xe0] %v618
  %v627 = vld [vmem:[#allocation2] sm:$0xe0]
  %v628 = vld [vmem:[#allocation2 + $0x8] sm:$0xe0]
  %v629 = vld [vmem:[#allocation2 + $0x10] sm:$0xe0]
  %v630 = vld [vmem:[#allocation2 + $0x18] sm:$0xe0]
  %v635 = vrot.slane %v627, 1
  %v636 = vrot.slane %v628, 1
  %v637 = vrot.slane %v629, 1
  %v638 = vrot.slane %v630, 1
  %643 = vst [vmem:[#allocation3 + $0x40] sm:$0x70] %v635
  %644 = vst [vmem:[#allocation3 + $0x48] sm:$0x70] %v636
  %645 = vst [vmem:[#allocation3 + $0x50] sm:$0x70] %v637
  %646 = vst [vmem:[#allocation3 + $0x58] sm:$0x70] %v638
  %v647 = vld [vmem:[#allocation3] sm:$0xff]
  %v648 = vld [vmem:[#allocation3 + $0x8] sm:$0xff]
  %v649 = vld [vmem:[#allocation3 + $0x10] sm:$0xff]
  %v650 = vld [vmem:[#allocation3 + $0x18] sm:$0xff]
  %v651 = vld [vmem:[#allocation3 + $0x20] sm:$0xff]
  %v652 = vld [vmem:[#allocation3 + $0x28] sm:$0xff]
  %v653 = vld [vmem:[#allocation3 + $0x30] sm:$0xff]
  %v654 = vld [vmem:[#allocation3 + $0x38] sm:$0xff]
  %v655 = vld [vmem:[#allocation3 + $0x40] sm:$0xff]
  %v656 = vld [vmem:[#allocation3 + $0x48] sm:$0xff]
  %v657 = vld [vmem:[#allocation3 + $0x50] sm:$0xff]
  %v658 = vld [vmem:[#allocation3 + $0x58] sm:$0xff]
  %v659 = vld [vmem:[%s2] sm:$0xff]
  %v660 = vld [vmem:[%s2 + $0x8] sm:$0xff]
  %v661 = vld [vmem:[%s2 + $0x10] sm:$0xff]
  %v662 = vld [vmem:[%s2 + $0x18] sm:$0xff]
  %v663 = vld [vmem:[%s2 + $0x20] sm:$0xff]
  %v664 = vld [vmem:[%s2 + $0x28] sm:$0xff]
  %v665 = vld [vmem:[%s2 + $0x30] sm:$0xff]
  %v666 = vld [vmem:[%s2 + $0x38] sm:$0xff]
  %v667 = vld [vmem:[%s2 + $0x40] sm:$0xff]
  %v668 = vld [vmem:[%s2 + $0x48] sm:$0xff]
  %v669 = vld [vmem:[%s2 + $0x50] sm:$0xff]
  %v670 = vld [vmem:[%s2 + $0x58] sm:$0xff]
  %v671 = vld [vmem:[%s2 + $0x60] sm:$0xff]
  %v672 = vld [vmem:[%s2 + $0x68] sm:$0xff]
  %v673 = vld [vmem:[%s2 + $0x70] sm:$0xff]
  %v674 = vld [vmem:[%s2 + $0x78] sm:$0xff]
  %v675 = vld [vmem:[%s2 + $0x80] sm:$0xff]
  %v676 = vld [vmem:[%s2 + $0x88] sm:$0xff]
  %v677 = vld [vmem:[%s2 + $0x90] sm:$0xff]
  %v678 = vld [vmem:[%s2 + $0x98] sm:$0xff]
  %v679 = vld [vmem:[%s2 + $0xa0] sm:$0xff]
  %v680 = vld [vmem:[%s2 + $0xa8] sm:$0xff]
  %v681 = vld [vmem:[%s2 + $0xb0] sm:$0xff]
  %v682 = vld [vmem:[%s2 + $0xb8] sm:$0xff]
  %v683 = vld [vmem:[%s2 + $0xc0] sm:$0xff]
  %v684 = vld [vmem:[%s2 + $0xc8] sm:$0xff]
  %v685 = vld [vmem:[%s2 + $0xd0] sm:$0xff]
  %v686 = vld [vmem:[%s2 + $0xd8] sm:$0xff]
  %v687 = vld [vmem:[%s2 + $0xe0] sm:$0xff]
  %v688 = vld [vmem:[%s2 + $0xe8] sm:$0xff]
  %v689 = vld [vmem:[%s2 + $0xf0] sm:$0xff]
  %v690 = vld [vmem:[%s2 + $0xf8] sm:$0xff]
  %v691 = vld [vmem:[%s2 + $0x100] sm:$0xff]
  %v692 = vld [vmem:[%s2 + $0x108] sm:$0xff]
  %v693 = vld [vmem:[%s2 + $0x110] sm:$0xff]
  %v694 = vld [vmem:[%s2 + $0x118] sm:$0xff]
  %v695 = vld [vmem:[%s2 + $0x120] sm:$0xff]
  %v696 = vld [vmem:[%s2 + $0x128] sm:$0xff]
  %v697 = vld [vmem:[%s2 + $0x130] sm:$0xff]
  %v698 = vld [vmem:[%s2 + $0x138] sm:$0xff]
  %v699 = vld [vmem:[%s2 + $0x140] sm:$0xff]
  %v700 = vld [vmem:[%s2 + $0x148] sm:$0xff]
  %v701 = vld [vmem:[%s2 + $0x150] sm:$0xff]
  %v702 = vld [vmem:[%s2 + $0x158] sm:$0xff]
  %v703 = vld [vmem:[%s2 + $0x160] sm:$0xff]
  %v704 = vld [vmem:[%s2 + $0x168] sm:$0xff]
  %v705 = vld [vmem:[%s2 + $0x170] sm:$0xff]
  %v706 = vld [vmem:[%s2 + $0x178] sm:$0xff]
  %v707 = vld [vmem:[%s2 + $0x180] sm:$0xff]
  %v708 = vld [vmem:[%s2 + $0x188] sm:$0xff]
  %v709 = vld [vmem:[%s2 + $0x190] sm:$0xff]
  %v710 = vld [vmem:[%s2 + $0x198] sm:$0xff]
  %v711 = vld [vmem:[%s2 + $0x1a0] sm:$0xff]
  %v712 = vld [vmem:[%s2 + $0x1a8] sm:$0xff]
  %v713 = vld [vmem:[%s2 + $0x1b0] sm:$0xff]
  %v714 = vld [vmem:[%s2 + $0x1b8] sm:$0xff]
  %v715 = vld [vmem:[%s2 + $0x1c0] sm:$0xff]
  %v716 = vld [vmem:[%s2 + $0x1c8] sm:$0xff]
  %v717 = vld [vmem:[%s2 + $0x1d0] sm:$0xff]
  %v718 = vld [vmem:[%s2 + $0x1d8] sm:$0xff]
  %v719 = vld [vmem:[%s2 + $0x1e0] sm:$0xff]
  %v720 = vld [vmem:[%s2 + $0x1e8] sm:$0xff]
  %v721 = vld [vmem:[%s2 + $0x1f0] sm:$0xff]
  %v722 = vld [vmem:[%s2 + $0x1f8] sm:$0xff]
  %v723 = vld [vmem:[%s2 + $0x200] sm:$0xff]
  %v724 = vld [vmem:[%s2 + $0x208] sm:$0xff]
  %v725 = vld [vmem:[%s2 + $0x210] sm:$0xff]
  %v726 = vld [vmem:[%s2 + $0x218] sm:$0xff]
  %v727 = vld [vmem:[%s2 + $0x220] sm:$0xff]
  %v728 = vld [vmem:[%s2 + $0x228] sm:$0xff]
  %v729 = vld [vmem:[%s2 + $0x230] sm:$0xff]
  %v730 = vld [vmem:[%s2 + $0x238] sm:$0xff]
  %v731 = vld [vmem:[%s2 + $0x240] sm:$0xff]
  %v732 = vld [vmem:[%s2 + $0x248] sm:$0xff]
  %v733 = vld [vmem:[%s2 + $0x250] sm:$0xff]
  %v734 = vld [vmem:[%s2 + $0x258] sm:$0xff]
  %v735 = vld [vmem:[%s2 + $0x260] sm:$0xff]
  %v736 = vld [vmem:[%s2 + $0x268] sm:$0xff]
  %v737 = vld [vmem:[%s2 + $0x270] sm:$0xff]
  %v738 = vld [vmem:[%s2 + $0x278] sm:$0xff]
  %v739 = vld [vmem:[%s2 + $0x280] sm:$0xff]
  %v740 = vld [vmem:[%s2 + $0x288] sm:$0xff]
  %v741 = vld [vmem:[%s2 + $0x290] sm:$0xff]
  %v742 = vld [vmem:[%s2 + $0x298] sm:$0xff]
  %v743 = vld [vmem:[%s2 + $0x2a0] sm:$0xff]
  %v744 = vld [vmem:[%s2 + $0x2a8] sm:$0xff]
  %v745 = vld [vmem:[%s2 + $0x2b0] sm:$0xff]
  %v746 = vld [vmem:[%s2 + $0x2b8] sm:$0xff]
  %v747 = vld [vmem:[%s2 + $0x2c0] sm:$0xff]
  %v748 = vld [vmem:[%s2 + $0x2c8] sm:$0xff]
  %v749 = vld [vmem:[%s2 + $0x2d0] sm:$0xff]
  %v750 = vld [vmem:[%s2 + $0x2d8] sm:$0xff]
  %v751 = vld [vmem:[%s2 + $0x2e0] sm:$0xff]
  %v752 = vld [vmem:[%s2 + $0x2e8] sm:$0xff]
  %v753 = vld [vmem:[%s2 + $0x2f0] sm:$0xff]
  %v754 = vld [vmem:[%s2 + $0x2f8] sm:$0xff]
  %v755 = vld [vmem:[%s2 + $0x300] sm:$0xff]
  %v756 = vld [vmem:[%s2 + $0x308] sm:$0xff]
  %v757 = vld [vmem:[%s2 + $0x310] sm:$0xff]
  %v758 = vld [vmem:[%s2 + $0x318] sm:$0xff]
  %v759 = vld [vmem:[%s2 + $0x320] sm:$0xff]
  %v760 = vld [vmem:[%s2 + $0x328] sm:$0xff]
  %v761 = vld [vmem:[%s2 + $0x330] sm:$0xff]
  %v762 = vld [vmem:[%s2 + $0x338] sm:$0xff]
  %v763 = vld [vmem:[%s2 + $0x340] sm:$0xff]
  %v764 = vld [vmem:[%s2 + $0x348] sm:$0xff]
  %v765 = vld [vmem:[%s2 + $0x350] sm:$0xff]
  %v766 = vld [vmem:[%s2 + $0x358] sm:$0xff]
  %v767 = vld [vmem:[%s2 + $0x360] sm:$0xff]
  %v768 = vld [vmem:[%s2 + $0x368] sm:$0xff]
  %v769 = vld [vmem:[%s2 + $0x370] sm:$0xff]
  %v770 = vld [vmem:[%s2 + $0x378] sm:$0xff]
  %v771 = vld [vmem:[%s2 + $0x380] sm:$0xff]
  %v772 = vld [vmem:[%s2 + $0x388] sm:$0xff]
  %v773 = vld [vmem:[%s2 + $0x390] sm:$0xff]
  %v774 = vld [vmem:[%s2 + $0x398] sm:$0xff]
  %v775 = vld [vmem:[%s2 + $0x3a0] sm:$0xff]
  %v776 = vld [vmem:[%s2 + $0x3a8] sm:$0xff]
  %v777 = vld [vmem:[%s2 + $0x3b0] sm:$0xff]
  %v778 = vld [vmem:[%s2 + $0x3b8] sm:$0xff]
  %v779 = vld [vmem:[%s2 + $0x3c0] sm:$0xff]
  %v780 = vld [vmem:[%s2 + $0x3c8] sm:$0xff]
  %v781 = vld [vmem:[%s2 + $0x3d0] sm:$0xff]
  %v782 = vld [vmem:[%s2 + $0x3d8] sm:$0xff]
  %v783 = vld [vmem:[%s2 + $0x3e0] sm:$0xff]
  %v784 = vld [vmem:[%s2 + $0x3e8] sm:$0xff]
  %v785 = vld [vmem:[%s2 + $0x3f0] sm:$0xff]
  %v786 = vld [vmem:[%s2 + $0x3f8] sm:$0xff]
  %v787 = vld [vmem:[%s2 + $0x400] sm:$0xff]
  %v788 = vld [vmem:[%s2 + $0x408] sm:$0xff]
  %v789 = vld [vmem:[%s2 + $0x410] sm:$0xff]
  %v790 = vld [vmem:[%s2 + $0x418] sm:$0xff]
  %v791 = vld [vmem:[%s2 + $0x420] sm:$0xff]
  %v792 = vld [vmem:[%s2 + $0x428] sm:$0xff]
  %v793 = vld [vmem:[%s2 + $0x430] sm:$0xff]
  %v794 = vld [vmem:[%s2 + $0x438] sm:$0xff]
  %v795 = vld [vmem:[%s2 + $0x440] sm:$0xff]
  %v796 = vld [vmem:[%s2 + $0x448] sm:$0xff]
  %v797 = vld [vmem:[%s2 + $0x450] sm:$0xff]
  %v798 = vld [vmem:[%s2 + $0x458] sm:$0xff]
  %v799 = vld [vmem:[%s2 + $0x460] sm:$0xff]
  %v800 = vld [vmem:[%s2 + $0x468] sm:$0xff]
  %v801 = vld [vmem:[%s2 + $0x470] sm:$0xff]
  %v802 = vld [vmem:[%s2 + $0x478] sm:$0xff]
  %v803 = vld [vmem:[%s2 + $0x480] sm:$0xff]
  %v804 = vld [vmem:[%s2 + $0x488] sm:$0xff]
  %v805 = vld [vmem:[%s2 + $0x490] sm:$0xff]
  %v806 = vld [vmem:[%s2 + $0x498] sm:$0xff]
  %v807 = vld [vmem:[%s2 + $0x4a0] sm:$0xff]
  %v808 = vld [vmem:[%s2 + $0x4a8] sm:$0xff]
  %v809 = vld [vmem:[%s2 + $0x4b0] sm:$0xff]
  %v810 = vld [vmem:[%s2 + $0x4b8] sm:$0xff]
  %v811 = vld [vmem:[%s2 + $0x4c0] sm:$0xff]
  %v812 = vld [vmem:[%s2 + $0x4c8] sm:$0xff]
  %v813 = vld [vmem:[%s2 + $0x4d0] sm:$0xff]
  %v814 = vld [vmem:[%s2 + $0x4d8] sm:$0xff]
  %v815 = vld [vmem:[%s2 + $0x4e0] sm:$0xff]
  %v816 = vld [vmem:[%s2 + $0x4e8] sm:$0xff]
  %v817 = vld [vmem:[%s2 + $0x4f0] sm:$0xff]
  %v818 = vld [vmem:[%s2 + $0x4f8] sm:$0xff]
  %v819 = vld [vmem:[%s2 + $0x500] sm:$0xff]
  %v820 = vld [vmem:[%s2 + $0x508] sm:$0xff]
  %v821 = vld [vmem:[%s2 + $0x510] sm:$0xff]
  %v822 = vld [vmem:[%s2 + $0x518] sm:$0xff]
  %v823 = vld [vmem:[%s2 + $0x520] sm:$0xff]
  %v824 = vld [vmem:[%s2 + $0x528] sm:$0xff]
  %v825 = vld [vmem:[%s2 + $0x530] sm:$0xff]
  %v826 = vld [vmem:[%s2 + $0x538] sm:$0xff]
  %v827 = vld [vmem:[%s2 + $0x540] sm:$0xff]
  %v828 = vld [vmem:[%s2 + $0x548] sm:$0xff]
  %v829 = vld [vmem:[%s2 + $0x550] sm:$0xff]
  %v830 = vld [vmem:[%s2 + $0x558] sm:$0xff]
  %v831 = vld [vmem:[%s2 + $0x560] sm:$0xff]
  %v832 = vld [vmem:[%s2 + $0x568] sm:$0xff]
  %v833 = vld [vmem:[%s2 + $0x570] sm:$0xff]
  %v834 = vld [vmem:[%s2 + $0x578] sm:$0xff]
  %v835 = vld [vmem:[%s2 + $0x580] sm:$0xff]
  %v836 = vld [vmem:[%s2 + $0x588] sm:$0xff]
  %v837 = vld [vmem:[%s2 + $0x590] sm:$0xff]
  %v838 = vld [vmem:[%s2 + $0x598] sm:$0xff]
  %v839 = vld [vmem:[%s2 + $0x5a0] sm:$0xff]
  %v840 = vld [vmem:[%s2 + $0x5a8] sm:$0xff]
  %v841 = vld [vmem:[%s2 + $0x5b0] sm:$0xff]
  %v842 = vld [vmem:[%s2 + $0x5b8] sm:$0xff]
  %v843 = vld [vmem:[%s2 + $0x5c0] sm:$0xff]
  %v844 = vld [vmem:[%s2 + $0x5c8] sm:$0xff]
  %v845 = vld [vmem:[%s2 + $0x5d0] sm:$0xff]
  %v846 = vld [vmem:[%s2 + $0x5d8] sm:$0xff]
  %v847 = vld [vmem:[%s2 + $0x5e0] sm:$0xff]
  %v848 = vld [vmem:[%s2 + $0x5e8] sm:$0xff]
  %v849 = vld [vmem:[%s2 + $0x5f0] sm:$0xff]
  %v850 = vld [vmem:[%s2 + $0x5f8] sm:$0xff]
  %v851 = vld [vmem:[%s2 + $0x600] sm:$0xff]
  %v852 = vld [vmem:[%s2 + $0x608] sm:$0xff]
  %v853 = vld [vmem:[%s2 + $0x610] sm:$0xff]
  %v854 = vld [vmem:[%s2 + $0x618] sm:$0xff]
  %v855 = vld [vmem:[%s2 + $0x620] sm:$0xff]
  %v856 = vld [vmem:[%s2 + $0x628] sm:$0xff]
  %v857 = vld [vmem:[%s2 + $0x630] sm:$0xff]
  %v858 = vld [vmem:[%s2 + $0x638] sm:$0xff]
  %v859 = vld [vmem:[%s2 + $0x640] sm:$0xff]
  %v860 = vld [vmem:[%s2 + $0x648] sm:$0xff]
  %v861 = vld [vmem:[%s2 + $0x650] sm:$0xff]
  %v862 = vld [vmem:[%s2 + $0x658] sm:$0xff]
  %v863 = vld [vmem:[%s2 + $0x660] sm:$0xff]
  %v864 = vld [vmem:[%s2 + $0x668] sm:$0xff]
  %v865 = vld [vmem:[%s2 + $0x670] sm:$0xff]
  %v866 = vld [vmem:[%s2 + $0x678] sm:$0xff]
  %v867 = vld [vmem:[%s2 + $0x680] sm:$0xff]
  %v868 = vld [vmem:[%s2 + $0x688] sm:$0xff]
  %v869 = vld [vmem:[%s2 + $0x690] sm:$0xff]
  %v870 = vld [vmem:[%s2 + $0x698] sm:$0xff]
  %v871 = vld [vmem:[%s2 + $0x6a0] sm:$0xff]
  %v872 = vld [vmem:[%s2 + $0x6a8] sm:$0xff]
  %v873 = vld [vmem:[%s2 + $0x6b0] sm:$0xff]
  %v874 = vld [vmem:[%s2 + $0x6b8] sm:$0xff]
  %v875 = vld [vmem:[%s2 + $0x6c0] sm:$0xff]
  %v876 = vld [vmem:[%s2 + $0x6c8] sm:$0xff]
  %v877 = vld [vmem:[%s2 + $0x6d0] sm:$0xff]
  %v878 = vld [vmem:[%s2 + $0x6d8] sm:$0xff]
  %v879 = vld [vmem:[%s2 + $0x6e0] sm:$0xff]
  %v880 = vld [vmem:[%s2 + $0x6e8] sm:$0xff]
  %v881 = vld [vmem:[%s2 + $0x6f0] sm:$0xff]
  %v882 = vld [vmem:[%s2 + $0x6f8] sm:$0xff]
  %v883 = vld [vmem:[%s2 + $0x700] sm:$0xff]
  %v884 = vld [vmem:[%s2 + $0x708] sm:$0xff]
  %v885 = vld [vmem:[%s2 + $0x710] sm:$0xff]
  %v886 = vld [vmem:[%s2 + $0x718] sm:$0xff]
  %v887 = vld [vmem:[%s2 + $0x720] sm:$0xff]
  %v888 = vld [vmem:[%s2 + $0x728] sm:$0xff]
  %v889 = vld [vmem:[%s2 + $0x730] sm:$0xff]
  %v890 = vld [vmem:[%s2 + $0x738] sm:$0xff]
  %v891 = vld [vmem:[%s2 + $0x740] sm:$0xff]
  %v892 = vld [vmem:[%s2 + $0x748] sm:$0xff]
  %v893 = vld [vmem:[%s2 + $0x750] sm:$0xff]
  %v894 = vld [vmem:[%s2 + $0x758] sm:$0xff]
  %v895 = vld [vmem:[%s2 + $0x760] sm:$0xff]
  %v896 = vld [vmem:[%s2 + $0x768] sm:$0xff]
  %v897 = vld [vmem:[%s2 + $0x770] sm:$0xff]
  %v898 = vld [vmem:[%s2 + $0x778] sm:$0xff]
  %v899 = vld [vmem:[%s2 + $0x780] sm:$0xff]
  %v900 = vld [vmem:[%s2 + $0x788] sm:$0xff]
  %v901 = vld [vmem:[%s2 + $0x790] sm:$0xff]
  %v902 = vld [vmem:[%s2 + $0x798] sm:$0xff]
  %v903 = vld [vmem:[%s2 + $0x7a0] sm:$0xff]
  %v904 = vld [vmem:[%s2 + $0x7a8] sm:$0xff]
  %v905 = vld [vmem:[%s2 + $0x7b0] sm:$0xff]
  %v906 = vld [vmem:[%s2 + $0x7b8] sm:$0xff]
  %v907 = vld [vmem:[%s2 + $0x7c0] sm:$0xff]
  %v908 = vld [vmem:[%s2 + $0x7c8] sm:$0xff]
  %v909 = vld [vmem:[%s2 + $0x7d0] sm:$0xff]
  %v910 = vld [vmem:[%s2 + $0x7d8] sm:$0xff]
  %v911 = vld [vmem:[%s2 + $0x7e0] sm:$0xff]
  %v912 = vld [vmem:[%s2 + $0x7e8] sm:$0xff]
  %v913 = vld [vmem:[%s2 + $0x7f0] sm:$0xff]
  %v914 = vld [vmem:[%s2 + $0x7f8] sm:$0xff]
  %v915 = vld [vmem:[%s2 + $0x800] sm:$0xff]
  %v916 = vld [vmem:[%s2 + $0x808] sm:$0xff]
  %v917 = vld [vmem:[%s2 + $0x810] sm:$0xff]
  %v918 = vld [vmem:[%s2 + $0x818] sm:$0xff]
  %v919 = vld [vmem:[%s2 + $0x820] sm:$0xff]
  %v920 = vld [vmem:[%s2 + $0x828] sm:$0xff]
  %v921 = vld [vmem:[%s2 + $0x830] sm:$0xff]
  %v922 = vld [vmem:[%s2 + $0x838] sm:$0xff]
  %v923 = vld [vmem:[%s2 + $0x840] sm:$0xff]
  %v924 = vld [vmem:[%s2 + $0x848] sm:$0xff]
  %v925 = vld [vmem:[%s2 + $0x850] sm:$0xff]
  %v926 = vld [vmem:[%s2 + $0x858] sm:$0xff]
  %v927 = vld [vmem:[%s2 + $0x860] sm:$0xff]
  %v928 = vld [vmem:[%s2 + $0x868] sm:$0xff]
  %v929 = vld [vmem:[%s2 + $0x870] sm:$0xff]
  %v930 = vld [vmem:[%s2 + $0x878] sm:$0xff]
  %v931 = vld [vmem:[%s2 + $0x880] sm:$0xff]
  %v932 = vld [vmem:[%s2 + $0x888] sm:$0xff]
  %v933 = vld [vmem:[%s2 + $0x890] sm:$0xff]
  %v934 = vld [vmem:[%s2 + $0x898] sm:$0xff]
  %v935 = vld [vmem:[%s2 + $0x8a0] sm:$0xff]
  %v936 = vld [vmem:[%s2 + $0x8a8] sm:$0xff]
  %v937 = vld [vmem:[%s2 + $0x8b0] sm:$0xff]
  %v938 = vld [vmem:[%s2 + $0x8b8] sm:$0xff]
  %v939 = vld [vmem:[%s2 + $0x8c0] sm:$0xff]
  %v940 = vld [vmem:[%s2 + $0x8c8] sm:$0xff]
  %v941 = vld [vmem:[%s2 + $0x8d0] sm:$0xff]
  %v942 = vld [vmem:[%s2 + $0x8d8] sm:$0xff]
  %v943 = vld [vmem:[%s2 + $0x8e0] sm:$0xff]
  %v944 = vld [vmem:[%s2 + $0x8e8] sm:$0xff]
  %v945 = vld [vmem:[%s2 + $0x8f0] sm:$0xff]
  %v946 = vld [vmem:[%s2 + $0x8f8] sm:$0xff]
  %v947 = vld [vmem:[%s2 + $0x900] sm:$0xff]
  %v948 = vld [vmem:[%s2 + $0x908] sm:$0xff]
  %v949 = vld [vmem:[%s2 + $0x910] sm:$0xff]
  %v950 = vld [vmem:[%s2 + $0x918] sm:$0xff]
  %v951 = vld [vmem:[%s2 + $0x920] sm:$0xff]
  %v952 = vld [vmem:[%s2 + $0x928] sm:$0xff]
  %v953 = vld [vmem:[%s2 + $0x930] sm:$0xff]
  %v954 = vld [vmem:[%s2 + $0x938] sm:$0xff]
  %v955 = vld [vmem:[%s2 + $0x940] sm:$0xff]
  %v956 = vld [vmem:[%s2 + $0x948] sm:$0xff]
  %v957 = vld [vmem:[%s2 + $0x950] sm:$0xff]
  %v958 = vld [vmem:[%s2 + $0x958] sm:$0xff]
  %v959 = vld [vmem:[%s2 + $0x960] sm:$0xff]
  %v960 = vld [vmem:[%s2 + $0x968] sm:$0xff]
  %v961 = vld [vmem:[%s2 + $0x970] sm:$0xff]
  %v962 = vld [vmem:[%s2 + $0x978] sm:$0xff]
  %v963 = vld [vmem:[%s2 + $0x980] sm:$0xff]
  %v964 = vld [vmem:[%s2 + $0x988] sm:$0xff]
  %v965 = vld [vmem:[%s2 + $0x990] sm:$0xff]
  %v966 = vld [vmem:[%s2 + $0x998] sm:$0xff]
  %v967 = vld [vmem:[%s2 + $0x9a0] sm:$0xff]
  %v968 = vld [vmem:[%s2 + $0x9a8] sm:$0xff]
  %v969 = vld [vmem:[%s2 + $0x9b0] sm:$0xff]
  %v970 = vld [vmem:[%s2 + $0x9b8] sm:$0xff]
  %v971 = vld [vmem:[%s2 + $0x9c0] sm:$0xff]
  %v972 = vld [vmem:[%s2 + $0x9c8] sm:$0xff]
  %v973 = vld [vmem:[%s2 + $0x9d0] sm:$0xff]
  %v974 = vld [vmem:[%s2 + $0x9d8] sm:$0xff]
  %v975 = vld [vmem:[%s2 + $0x9e0] sm:$0xff]
  %v976 = vld [vmem:[%s2 + $0x9e8] sm:$0xff]
  %v977 = vld [vmem:[%s2 + $0x9f0] sm:$0xff]
  %v978 = vld [vmem:[%s2 + $0x9f8] sm:$0xff]
  %v979 = vld [vmem:[%s2 + $0xa00] sm:$0xff]
  %v980 = vld [vmem:[%s2 + $0xa08] sm:$0xff]
  %v981 = vld [vmem:[%s2 + $0xa10] sm:$0xff]
  %v982 = vld [vmem:[%s2 + $0xa18] sm:$0xff]
  %v983 = vld [vmem:[%s2 + $0xa20] sm:$0xff]
  %v984 = vld [vmem:[%s2 + $0xa28] sm:$0xff]
  %v985 = vld [vmem:[%s2 + $0xa30] sm:$0xff]
  %v986 = vld [vmem:[%s2 + $0xa38] sm:$0xff]
  %v987 = vld [vmem:[%s2 + $0xa40] sm:$0xff]
  %v988 = vld [vmem:[%s2 + $0xa48] sm:$0xff]
  %v989 = vld [vmem:[%s2 + $0xa50] sm:$0xff]
  %v990 = vld [vmem:[%s2 + $0xa58] sm:$0xff]
  %v991 = vld [vmem:[%s2 + $0xa60] sm:$0xff]
  %v992 = vld [vmem:[%s2 + $0xa68] sm:$0xff]
  %v993 = vld [vmem:[%s2 + $0xa70] sm:$0xff]
  %v994 = vld [vmem:[%s2 + $0xa78] sm:$0xff]
  %v995 = vld [vmem:[%s2 + $0xa80] sm:$0xff]
  %v996 = vld [vmem:[%s2 + $0xa88] sm:$0xff]
  %v997 = vld [vmem:[%s2 + $0xa90] sm:$0xff]
  %v998 = vld [vmem:[%s2 + $0xa98] sm:$0xff]
  %v999 = vld [vmem:[%s2 + $0xaa0] sm:$0xff]
  %v1000 = vld [vmem:[%s2 + $0xaa8] sm:$0xff]
  %v1001 = vld [vmem:[%s2 + $0xab0] sm:$0xff]
  %v1002 = vld [vmem:[%s2 + $0xab8] sm:$0xff]
  %v1003 = vld [vmem:[%s2 + $0xac0] sm:$0xff]
  %v1004 = vld [vmem:[%s2 + $0xac8] sm:$0xff]
  %v1005 = vld [vmem:[%s2 + $0xad0] sm:$0xff]
  %v1006 = vld [vmem:[%s2 + $0xad8] sm:$0xff]
  %v1007 = vld [vmem:[%s2 + $0xae0] sm:$0xff]
  %v1008 = vld [vmem:[%s2 + $0xae8] sm:$0xff]
  %v1009 = vld [vmem:[%s2 + $0xaf0] sm:$0xff]
  %v1010 = vld [vmem:[%s2 + $0xaf8] sm:$0xff]
  %v1011 = vld [vmem:[%s2 + $0xb00] sm:$0xff]
  %v1012 = vld [vmem:[%s2 + $0xb08] sm:$0xff]
  %v1013 = vld [vmem:[%s2 + $0xb10] sm:$0xff]
  %v1014 = vld [vmem:[%s2 + $0xb18] sm:$0xff]
  %v1015 = vld [vmem:[%s2 + $0xb20] sm:$0xff]
  %v1016 = vld [vmem:[%s2 + $0xb28] sm:$0xff]
  %v1017 = vld [vmem:[%s2 + $0xb30] sm:$0xff]
  %v1018 = vld [vmem:[%s2 + $0xb38] sm:$0xff]
  %v1019 = vld [vmem:[%s2 + $0xb40] sm:$0xff]
  %v1020 = vld [vmem:[%s2 + $0xb48] sm:$0xff]
  %v1021 = vld [vmem:[%s2 + $0xb50] sm:$0xff]
  %v1022 = vld [vmem:[%s2 + $0xb58] sm:$0xff]
  %v1023 = vld [vmem:[%s2 + $0xb60] sm:$0xff]
  %v1024 = vld [vmem:[%s2 + $0xb68] sm:$0xff]
  %v1025 = vld [vmem:[%s2 + $0xb70] sm:$0xff]
  %v1026 = vld [vmem:[%s2 + $0xb78] sm:$0xff]
  %v1027 = vld [vmem:[%s2 + $0xb80] sm:$0xff]
  %v1028 = vld [vmem:[%s2 + $0xb88] sm:$0xff]
  %v1029 = vld [vmem:[%s2 + $0xb90] sm:$0xff]
  %v1030 = vld [vmem:[%s2 + $0xb98] sm:$0xff]
  %v1031 = vld [vmem:[%s2 + $0xba0] sm:$0xff]
  %v1032 = vld [vmem:[%s2 + $0xba8] sm:$0xff]
  %v1033 = vld [vmem:[%s2 + $0xbb0] sm:$0xff]
  %v1034 = vld [vmem:[%s2 + $0xbb8] sm:$0xff]
  %v1035 = vld [vmem:[%s2 + $0xbc0] sm:$0xff]
  %v1036 = vld [vmem:[%s2 + $0xbc8] sm:$0xff]
  %v1037 = vld [vmem:[%s2 + $0xbd0] sm:$0xff]
  %v1038 = vld [vmem:[%s2 + $0xbd8] sm:$0xff]
  %v1039 = vld [vmem:[%s2 + $0xbe0] sm:$0xff]
  %v1040 = vld [vmem:[%s2 + $0xbe8] sm:$0xff]
  %v1041 = vld [vmem:[%s2 + $0xbf0] sm:$0xff]
  %v1042 = vld [vmem:[%s2 + $0xbf8] sm:$0xff]
  %v1043 = vld [vmem:[%s2 + $0xc00] sm:$0xff]
  %v1044 = vld [vmem:[%s2 + $0xc08] sm:$0xff]
  %v1045 = vld [vmem:[%s2 + $0xc10] sm:$0xff]
  %v1046 = vld [vmem:[%s2 + $0xc18] sm:$0xff]
  %v1047 = vld [vmem:[%s2 + $0xc20] sm:$0xff]
  %v1048 = vld [vmem:[%s2 + $0xc28] sm:$0xff]
  %v1049 = vld [vmem:[%s2 + $0xc30] sm:$0xff]
  %v1050 = vld [vmem:[%s2 + $0xc38] sm:$0xff]
  %v1051 = vld [vmem:[%s2 + $0xc40] sm:$0xff]
  %v1052 = vld [vmem:[%s2 + $0xc48] sm:$0xff]
  %v1053 = vld [vmem:[%s2 + $0xc50] sm:$0xff]
  %v1054 = vld [vmem:[%s2 + $0xc58] sm:$0xff]
  %v1055 = vld [vmem:[%s2 + $0xc60] sm:$0xff]
  %v1056 = vld [vmem:[%s2 + $0xc68] sm:$0xff]
  %v1057 = vld [vmem:[%s2 + $0xc70] sm:$0xff]
  %v1058 = vld [vmem:[%s2 + $0xc78] sm:$0xff]
  %v1059 = vld [vmem:[%s2 + $0xc80] sm:$0xff]
  %v1060 = vld [vmem:[%s2 + $0xc88] sm:$0xff]
  %v1061 = vld [vmem:[%s2 + $0xc90] sm:$0xff]
  %v1062 = vld [vmem:[%s2 + $0xc98] sm:$0xff]
  %v1063 = vld [vmem:[%s2 + $0xca0] sm:$0xff]
  %v1064 = vld [vmem:[%s2 + $0xca8] sm:$0xff]
  %v1065 = vld [vmem:[%s2 + $0xcb0] sm:$0xff]
  %v1066 = vld [vmem:[%s2 + $0xcb8] sm:$0xff]
  %v1067 = vld [vmem:[%s2 + $0xcc0] sm:$0xff]
  %v1068 = vld [vmem:[%s2 + $0xcc8] sm:$0xff]
  %v1069 = vld [vmem:[%s2 + $0xcd0] sm:$0xff]
  %v1070 = vld [vmem:[%s2 + $0xcd8] sm:$0xff]
  %v1071 = vld [vmem:[%s2 + $0xce0] sm:$0xff]
  %v1072 = vld [vmem:[%s2 + $0xce8] sm:$0xff]
  %v1073 = vld [vmem:[%s2 + $0xcf0] sm:$0xff]
  %v1074 = vld [vmem:[%s2 + $0xcf8] sm:$0xff]
  %v1075 = vld [vmem:[%s2 + $0xd00] sm:$0xff]
  %v1076 = vld [vmem:[%s2 + $0xd08] sm:$0xff]
  %v1077 = vld [vmem:[%s2 + $0xd10] sm:$0xff]
  %v1078 = vld [vmem:[%s2 + $0xd18] sm:$0xff]
  %v1079 = vld [vmem:[%s2 + $0xd20] sm:$0xff]
  %v1080 = vld [vmem:[%s2 + $0xd28] sm:$0xff]
  %v1081 = vld [vmem:[%s2 + $0xd30] sm:$0xff]
  %v1082 = vld [vmem:[%s2 + $0xd38] sm:$0xff]
  %v1083 = vld [vmem:[%s2 + $0xd40] sm:$0xff]
  %v1084 = vld [vmem:[%s2 + $0xd48] sm:$0xff]
  %v1085 = vld [vmem:[%s2 + $0xd50] sm:$0xff]
  %v1086 = vld [vmem:[%s2 + $0xd58] sm:$0xff]
  %v1087 = vld [vmem:[%s2 + $0xd60] sm:$0xff]
  %v1088 = vld [vmem:[%s2 + $0xd68] sm:$0xff]
  %v1089 = vld [vmem:[%s2 + $0xd70] sm:$0xff]
  %v1090 = vld [vmem:[%s2 + $0xd78] sm:$0xff]
  %v1091 = vld [vmem:[%s2 + $0xd80] sm:$0xff]
  %v1092 = vld [vmem:[%s2 + $0xd88] sm:$0xff]
  %v1093 = vld [vmem:[%s2 + $0xd90] sm:$0xff]
  %v1094 = vld [vmem:[%s2 + $0xd98] sm:$0xff]
  %v1095 = vld [vmem:[%s2 + $0xda0] sm:$0xff]
  %v1096 = vld [vmem:[%s2 + $0xda8] sm:$0xff]
  %v1097 = vld [vmem:[%s2 + $0xdb0] sm:$0xff]
  %v1098 = vld [vmem:[%s2 + $0xdb8] sm:$0xff]
  %v1099 = vld [vmem:[%s2 + $0xdc0] sm:$0xff]
  %v1100 = vld [vmem:[%s2 + $0xdc8] sm:$0xff]
  %v1101 = vld [vmem:[%s2 + $0xdd0] sm:$0xff]
  %v1102 = vld [vmem:[%s2 + $0xdd8] sm:$0xff]
  %v1103 = vld [vmem:[%s2 + $0xde0] sm:$0xff]
  %v1104 = vld [vmem:[%s2 + $0xde8] sm:$0xff]
  %v1105 = vld [vmem:[%s2 + $0xdf0] sm:$0xff]
  %v1106 = vld [vmem:[%s2 + $0xdf8] sm:$0xff]
  %v1107 = vld [vmem:[%s2 + $0xe00] sm:$0xff]
  %v1108 = vld [vmem:[%s2 + $0xe08] sm:$0xff]
  %v1109 = vld [vmem:[%s2 + $0xe10] sm:$0xff]
  %v1110 = vld [vmem:[%s2 + $0xe18] sm:$0xff]
  %v1111 = vld [vmem:[%s2 + $0xe20] sm:$0xff]
  %v1112 = vld [vmem:[%s2 + $0xe28] sm:$0xff]
  %v1113 = vld [vmem:[%s2 + $0xe30] sm:$0xff]
  %v1114 = vld [vmem:[%s2 + $0xe38] sm:$0xff]
  %v1115 = vld [vmem:[%s2 + $0xe40] sm:$0xff]
  %v1116 = vld [vmem:[%s2 + $0xe48] sm:$0xff]
  %v1117 = vld [vmem:[%s2 + $0xe50] sm:$0xff]
  %v1118 = vld [vmem:[%s2 + $0xe58] sm:$0xff]
  %v1119 = vld [vmem:[%s2 + $0xe60] sm:$0xff]
  %v1120 = vld [vmem:[%s2 + $0xe68] sm:$0xff]
  %v1121 = vld [vmem:[%s2 + $0xe70] sm:$0xff]
  %v1122 = vld [vmem:[%s2 + $0xe78] sm:$0xff]
  %v1123 = vld [vmem:[%s2 + $0xe80] sm:$0xff]
  %v1124 = vld [vmem:[%s2 + $0xe88] sm:$0xff]
  %v1125 = vld [vmem:[%s2 + $0xe90] sm:$0xff]
  %v1126 = vld [vmem:[%s2 + $0xe98] sm:$0xff]
  %v1127 = vld [vmem:[%s2 + $0xea0] sm:$0xff]
  %v1128 = vld [vmem:[%s2 + $0xea8] sm:$0xff]
  %v1129 = vld [vmem:[%s2 + $0xeb0] sm:$0xff]
  %v1130 = vld [vmem:[%s2 + $0xeb8] sm:$0xff]
  %v1131 = vld [vmem:[%s2 + $0xec0] sm:$0xff]
  %v1132 = vld [vmem:[%s2 + $0xec8] sm:$0xff]
  %v1133 = vld [vmem:[%s2 + $0xed0] sm:$0xff]
  %v1134 = vld [vmem:[%s2 + $0xed8] sm:$0xff]
  %v1135 = vld [vmem:[%s2 + $0xee0] sm:$0xff]
  %v1136 = vld [vmem:[%s2 + $0xee8] sm:$0xff]
  %v1137 = vld [vmem:[%s2 + $0xef0] sm:$0xff]
  %v1138 = vld [vmem:[%s2 + $0xef8] sm:$0xff]
  %v1139 = vld [vmem:[%s2 + $0xf00] sm:$0xff]
  %v1140 = vld [vmem:[%s2 + $0xf08] sm:$0xff]
  %v1141 = vld [vmem:[%s2 + $0xf10] sm:$0xff]
  %v1142 = vld [vmem:[%s2 + $0xf18] sm:$0xff]
  %v1143 = vld [vmem:[%s2 + $0xf20] sm:$0xff]
  %v1144 = vld [vmem:[%s2 + $0xf28] sm:$0xff]
  %v1145 = vld [vmem:[%s2 + $0xf30] sm:$0xff]
  %v1146 = vld [vmem:[%s2 + $0xf38] sm:$0xff]
  %v1147 = vld [vmem:[%s2 + $0xf40] sm:$0xff]
  %v1148 = vld [vmem:[%s2 + $0xf48] sm:$0xff]
  %v1149 = vld [vmem:[%s2 + $0xf50] sm:$0xff]
  %v1150 = vld [vmem:[%s2 + $0xf58] sm:$0xff]
  %v1151 = vld [vmem:[%s2 + $0xf60] sm:$0xff]
  %v1152 = vld [vmem:[%s2 + $0xf68] sm:$0xff]
  %v1153 = vld [vmem:[%s2 + $0xf70] sm:$0xff]
  %v1154 = vld [vmem:[%s2 + $0xf78] sm:$0xff]
  %v1155 = vld [vmem:[%s2 + $0xf80] sm:$0xff]
  %v1156 = vld [vmem:[%s2 + $0xf88] sm:$0xff]
  %v1157 = vld [vmem:[%s2 + $0xf90] sm:$0xff]
  %v1158 = vld [vmem:[%s2 + $0xf98] sm:$0xff]
  %v1159 = vld [vmem:[%s2 + $0xfa0] sm:$0xff]
  %v1160 = vld [vmem:[%s2 + $0xfa8] sm:$0xff]
  %v1161 = vld [vmem:[%s2 + $0xfb0] sm:$0xff]
  %v1162 = vld [vmem:[%s2 + $0xfb8] sm:$0xff]
  %v1163 = vld [vmem:[%s2 + $0xfc0] sm:$0xff]
  %v1164 = vld [vmem:[%s2 + $0xfc8] sm:$0xff]
  %v1165 = vld [vmem:[%s2 + $0xfd0] sm:$0xff]
  %v1166 = vld [vmem:[%s2 + $0xfd8] sm:$0xff]
  %v1167 = vld [vmem:[%s2 + $0xfe0] sm:$0xff]
  %v1168 = vld [vmem:[%s2 + $0xfe8] sm:$0xff]
  %v1169 = vld [vmem:[%s2 + $0xff0] sm:$0xff]
  %v1170 = vld [vmem:[%s2 + $0xff8] sm:$0xff]
  %v1171 = vld [vmem:[%s2 + $0x1000] sm:$0xff]
  %v1172 = vld [vmem:[%s2 + $0x1008] sm:$0xff]
  %v1173 = vld [vmem:[%s2 + $0x1010] sm:$0xff]
  %v1174 = vld [vmem:[%s2 + $0x1018] sm:$0xff]
  %v1175 = vld [vmem:[%s2 + $0x1020] sm:$0xff]
  %v1176 = vld [vmem:[%s2 + $0x1028] sm:$0xff]
  %v1177 = vld [vmem:[%s2 + $0x1030] sm:$0xff]
  %v1178 = vld [vmem:[%s2 + $0x1038] sm:$0xff]
  %v1179 = vld [vmem:[%s2 + $0x1040] sm:$0xff]
  %v1180 = vld [vmem:[%s2 + $0x1048] sm:$0xff]
  %v1181 = vld [vmem:[%s2 + $0x1050] sm:$0xff]
  %v1182 = vld [vmem:[%s2 + $0x1058] sm:$0xff]
  %v1183 = vld [vmem:[%s2 + $0x1060] sm:$0xff]
  %v1184 = vld [vmem:[%s2 + $0x1068] sm:$0xff]
  %v1185 = vld [vmem:[%s2 + $0x1070] sm:$0xff]
  %v1186 = vld [vmem:[%s2 + $0x1078] sm:$0xff]
  %v1187 = vld [vmem:[%s2 + $0x1080] sm:$0xff]
  %v1188 = vld [vmem:[%s2 + $0x1088] sm:$0xff]
  %v1189 = vld [vmem:[%s2 + $0x1090] sm:$0xff]
  %v1190 = vld [vmem:[%s2 + $0x1098] sm:$0xff]
  %v1191 = vld [vmem:[%s2 + $0x10a0] sm:$0xff]
  %v1192 = vld [vmem:[%s2 + $0x10a8] sm:$0xff]
  %v1193 = vld [vmem:[%s2 + $0x10b0] sm:$0xff]
  %v1194 = vld [vmem:[%s2 + $0x10b8] sm:$0xff]
  %v1195 = vld [vmem:[%s2 + $0x10c0] sm:$0xff]
  %v1196 = vld [vmem:[%s2 + $0x10c8] sm:$0xff]
  %v1197 = vld [vmem:[%s2 + $0x10d0] sm:$0xff]
  %v1198 = vld [vmem:[%s2 + $0x10d8] sm:$0xff]
  %v1199 = vld [vmem:[%s2 + $0x10e0] sm:$0xff]
  %v1200 = vld [vmem:[%s2 + $0x10e8] sm:$0xff]
  %v1201 = vld [vmem:[%s2 + $0x10f0] sm:$0xff]
  %v1202 = vld [vmem:[%s2 + $0x10f8] sm:$0xff]
  %v1203 = vld [vmem:[%s2 + $0x1100] sm:$0xff]
  %v1204 = vld [vmem:[%s2 + $0x1108] sm:$0xff]
  %v1205 = vld [vmem:[%s2 + $0x1110] sm:$0xff]
  %v1206 = vld [vmem:[%s2 + $0x1118] sm:$0xff]
  %v1207 = vld [vmem:[%s2 + $0x1120] sm:$0xff]
  %v1208 = vld [vmem:[%s2 + $0x1128] sm:$0xff]
  %v1209 = vld [vmem:[%s2 + $0x1130] sm:$0xff]
  %v1210 = vld [vmem:[%s2 + $0x1138] sm:$0xff]
  %v1211 = vld [vmem:[%s2 + $0x1140] sm:$0xff]
  %v1212 = vld [vmem:[%s2 + $0x1148] sm:$0xff]
  %v1213 = vld [vmem:[%s2 + $0x1150] sm:$0xff]
  %v1214 = vld [vmem:[%s2 + $0x1158] sm:$0xff]
  %v1215 = vld [vmem:[%s2 + $0x1160] sm:$0xff]
  %v1216 = vld [vmem:[%s2 + $0x1168] sm:$0xff]
  %v1217 = vld [vmem:[%s2 + $0x1170] sm:$0xff]
  %v1218 = vld [vmem:[%s2 + $0x1178] sm:$0xff]
  %v1219 = vld [vmem:[%s2 + $0x1180] sm:$0xff]
  %v1220 = vld [vmem:[%s2 + $0x1188] sm:$0xff]
  %v1221 = vld [vmem:[%s2 + $0x1190] sm:$0xff]
  %v1222 = vld [vmem:[%s2 + $0x1198] sm:$0xff]
  %v1223 = vld [vmem:[%s2 + $0x11a0] sm:$0xff]
  %v1224 = vld [vmem:[%s2 + $0x11a8] sm:$0xff]
  %v1225 = vld [vmem:[%s2 + $0x11b0] sm:$0xff]
  %v1226 = vld [vmem:[%s2 + $0x11b8] sm:$0xff]
  %v1227 = vld [vmem:[%s2 + $0x11c0] sm:$0xff]
  %v1228 = vld [vmem:[%s2 + $0x11c8] sm:$0xff]
  %v1229 = vld [vmem:[%s2 + $0x11d0] sm:$0xff]
  %v1230 = vld [vmem:[%s2 + $0x11d8] sm:$0xff]
  %v1231 = vld [vmem:[%s2 + $0x11e0] sm:$0xff]
  %v1232 = vld [vmem:[%s2 + $0x11e8] sm:$0xff]
  %v1233 = vld [vmem:[%s2 + $0x11f0] sm:$0xff]
  %v1234 = vld [vmem:[%s2 + $0x11f8] sm:$0xff]
  %v1235 = vld [vmem:[%s2 + $0x1200] sm:$0xff]
  %v1236 = vld [vmem:[%s2 + $0x1208] sm:$0xff]
  %v1237 = vld [vmem:[%s2 + $0x1210] sm:$0xff]
  %v1238 = vld [vmem:[%s2 + $0x1218] sm:$0xff]
  %v1239 = vld [vmem:[%s2 + $0x1220] sm:$0xff]
  %v1240 = vld [vmem:[%s2 + $0x1228] sm:$0xff]
  %v1241 = vld [vmem:[%s2 + $0x1230] sm:$0xff]
  %v1242 = vld [vmem:[%s2 + $0x1238] sm:$0xff]
  %v1243 = vld [vmem:[%s2 + $0x1240] sm:$0xff]
  %v1244 = vld [vmem:[%s2 + $0x1248] sm:$0xff]
  %v1245 = vld [vmem:[%s2 + $0x1250] sm:$0xff]
  %v1246 = vld [vmem:[%s2 + $0x1258] sm:$0xff]
  %v1247 = vld [vmem:[%s2 + $0x1260] sm:$0xff]
  %v1248 = vld [vmem:[%s2 + $0x1268] sm:$0xff]
  %v1249 = vld [vmem:[%s2 + $0x1270] sm:$0xff]
  %v1250 = vld [vmem:[%s2 + $0x1278] sm:$0xff]
  %v1251 = vld [vmem:[%s2 + $0x1280] sm:$0xff]
  %v1252 = vld [vmem:[%s2 + $0x1288] sm:$0xff]
  %v1253 = vld [vmem:[%s2 + $0x1290] sm:$0xff]
  %v1254 = vld [vmem:[%s2 + $0x1298] sm:$0xff]
  %v1255 = vld [vmem:[%s2 + $0x12a0] sm:$0xff]
  %v1256 = vld [vmem:[%s2 + $0x12a8] sm:$0xff]
  %v1257 = vld [vmem:[%s2 + $0x12b0] sm:$0xff]
  %v1258 = vld [vmem:[%s2 + $0x12b8] sm:$0xff]
  %v1259 = vld [vmem:[%s2 + $0x12c0] sm:$0xff]
  %v1260 = vld [vmem:[%s2 + $0x12c8] sm:$0xff]
  %v1261 = vld [vmem:[%s2 + $0x12d0] sm:$0xff]
  %v1262 = vld [vmem:[%s2 + $0x12d8] sm:$0xff]
  %v1263 = vld [vmem:[%s2 + $0x12e0] sm:$0xff]
  %v1264 = vld [vmem:[%s2 + $0x12e8] sm:$0xff]
  %v1265 = vld [vmem:[%s2 + $0x12f0] sm:$0xff]
  %v1266 = vld [vmem:[%s2 + $0x12f8] sm:$0xff]
  %v1267 = vld [vmem:[%s2 + $0x1300] sm:$0xff]
  %v1268 = vld [vmem:[%s2 + $0x1308] sm:$0xff]
  %v1269 = vld [vmem:[%s2 + $0x1310] sm:$0xff]
  %v1270 = vld [vmem:[%s2 + $0x1318] sm:$0xff]
  %v1271 = vld [vmem:[%s2 + $0x1320] sm:$0xff]
  %v1272 = vld [vmem:[%s2 + $0x1328] sm:$0xff]
  %v1273 = vld [vmem:[%s2 + $0x1330] sm:$0xff]
  %v1274 = vld [vmem:[%s2 + $0x1338] sm:$0xff]
  %v1275 = vld [vmem:[%s2 + $0x1340] sm:$0xff]
  %v1276 = vld [vmem:[%s2 + $0x1348] sm:$0xff]
  %v1277 = vld [vmem:[%s2 + $0x1350] sm:$0xff]
  %v1278 = vld [vmem:[%s2 + $0x1358] sm:$0xff]
  %v1279 = vld [vmem:[%s2 + $0x1360] sm:$0xff]
  %v1280 = vld [vmem:[%s2 + $0x1368] sm:$0xff]
  %v1281 = vld [vmem:[%s2 + $0x1370] sm:$0xff]
  %v1282 = vld [vmem:[%s2 + $0x1378] sm:$0xff]
  %v1283 = vld [vmem:[%s2 + $0x1380] sm:$0xff]
  %v1284 = vld [vmem:[%s2 + $0x1388] sm:$0xff]
  %v1285 = vld [vmem:[%s2 + $0x1390] sm:$0xff]
  %v1286 = vld [vmem:[%s2 + $0x1398] sm:$0xff]
  %v1287 = vld [vmem:[%s2 + $0x13a0] sm:$0xff]
  %v1288 = vld [vmem:[%s2 + $0x13a8] sm:$0xff]
  %v1289 = vld [vmem:[%s2 + $0x13b0] sm:$0xff]
  %v1290 = vld [vmem:[%s2 + $0x13b8] sm:$0xff]
  %v1291 = vld [vmem:[%s2 + $0x13c0] sm:$0xff]
  %v1292 = vld [vmem:[%s2 + $0x13c8] sm:$0xff]
  %v1293 = vld [vmem:[%s2 + $0x13d0] sm:$0xff]
  %v1294 = vld [vmem:[%s2 + $0x13d8] sm:$0xff]
  %v1295 = vld [vmem:[%s2 + $0x13e0] sm:$0xff]
  %v1296 = vld [vmem:[%s2 + $0x13e8] sm:$0xff]
  %v1297 = vld [vmem:[%s2 + $0x13f0] sm:$0xff]
  %v1298 = vld [vmem:[%s2 + $0x13f8] sm:$0xff]
  %v1299 = vld [vmem:[%s2 + $0x1400] sm:$0xff]
  %v1300 = vld [vmem:[%s2 + $0x1408] sm:$0xff]
  %v1301 = vld [vmem:[%s2 + $0x1410] sm:$0xff]
  %v1302 = vld [vmem:[%s2 + $0x1418] sm:$0xff]
  %v1303 = vld [vmem:[%s2 + $0x1420] sm:$0xff]
  %v1304 = vld [vmem:[%s2 + $0x1428] sm:$0xff]
  %v1305 = vld [vmem:[%s2 + $0x1430] sm:$0xff]
  %v1306 = vld [vmem:[%s2 + $0x1438] sm:$0xff]
  %v1307 = vld [vmem:[%s2 + $0x1440] sm:$0xff]
  %v1308 = vld [vmem:[%s2 + $0x1448] sm:$0xff]
  %v1309 = vld [vmem:[%s2 + $0x1450] sm:$0xff]
  %v1310 = vld [vmem:[%s2 + $0x1458] sm:$0xff]
  %v1311 = vld [vmem:[%s2 + $0x1460] sm:$0xff]
  %v1312 = vld [vmem:[%s2 + $0x1468] sm:$0xff]
  %v1313 = vld [vmem:[%s2 + $0x1470] sm:$0xff]
  %v1314 = vld [vmem:[%s2 + $0x1478] sm:$0xff]
  %v1315 = vld [vmem:[%s2 + $0x1480] sm:$0xff]
  %v1316 = vld [vmem:[%s2 + $0x1488] sm:$0xff]
  %v1317 = vld [vmem:[%s2 + $0x1490] sm:$0xff]
  %v1318 = vld [vmem:[%s2 + $0x1498] sm:$0xff]
  %v1319 = vld [vmem:[%s2 + $0x14a0] sm:$0xff]
  %v1320 = vld [vmem:[%s2 + $0x14a8] sm:$0xff]
  %v1321 = vld [vmem:[%s2 + $0x14b0] sm:$0xff]
  %v1322 = vld [vmem:[%s2 + $0x14b8] sm:$0xff]
  %v1323 = vld [vmem:[%s2 + $0x14c0] sm:$0xff]
  %v1324 = vld [vmem:[%s2 + $0x14c8] sm:$0xff]
  %v1325 = vld [vmem:[%s2 + $0x14d0] sm:$0xff]
  %v1326 = vld [vmem:[%s2 + $0x14d8] sm:$0xff]
  %v1327 = vld [vmem:[%s2 + $0x14e0] sm:$0xff]
  %v1328 = vld [vmem:[%s2 + $0x14e8] sm:$0xff]
  %v1329 = vld [vmem:[%s2 + $0x14f0] sm:$0xff]
  %v1330 = vld [vmem:[%s2 + $0x14f8] sm:$0xff]
  %v1331 = vld [vmem:[%s2 + $0x1500] sm:$0xff]
  %v1332 = vld [vmem:[%s2 + $0x1508] sm:$0xff]
  %v1333 = vld [vmem:[%s2 + $0x1510] sm:$0xff]
  %v1334 = vld [vmem:[%s2 + $0x1518] sm:$0xff]
  %v1335 = vld [vmem:[%s2 + $0x1520] sm:$0xff]
  %v1336 = vld [vmem:[%s2 + $0x1528] sm:$0xff]
  %v1337 = vld [vmem:[%s2 + $0x1530] sm:$0xff]
  %v1338 = vld [vmem:[%s2 + $0x1538] sm:$0xff]
  %v1339 = vld [vmem:[%s2 + $0x1540] sm:$0xff]
  %v1340 = vld [vmem:[%s2 + $0x1548] sm:$0xff]
  %v1341 = vld [vmem:[%s2 + $0x1550] sm:$0xff]
  %v1342 = vld [vmem:[%s2 + $0x1558] sm:$0xff]
  %v1343 = vld [vmem:[%s2 + $0x1560] sm:$0xff]
  %v1344 = vld [vmem:[%s2 + $0x1568] sm:$0xff]
  %v1345 = vld [vmem:[%s2 + $0x1570] sm:$0xff]
  %v1346 = vld [vmem:[%s2 + $0x1578] sm:$0xff]
  %v1347 = vld [vmem:[%s2 + $0x1580] sm:$0xff]
  %v1348 = vld [vmem:[%s2 + $0x1588] sm:$0xff]
  %v1349 = vld [vmem:[%s2 + $0x1590] sm:$0xff]
  %v1350 = vld [vmem:[%s2 + $0x1598] sm:$0xff]
  %v1351 = vld [vmem:[%s2 + $0x15a0] sm:$0xff]
  %v1352 = vld [vmem:[%s2 + $0x15a8] sm:$0xff]
  %v1353 = vld [vmem:[%s2 + $0x15b0] sm:$0xff]
  %v1354 = vld [vmem:[%s2 + $0x15b8] sm:$0xff]
  %v1355 = vld [vmem:[%s2 + $0x15c0] sm:$0xff]
  %v1356 = vld [vmem:[%s2 + $0x15c8] sm:$0xff]
  %v1357 = vld [vmem:[%s2 + $0x15d0] sm:$0xff]
  %v1358 = vld [vmem:[%s2 + $0x15d8] sm:$0xff]
  %v1359 = vld [vmem:[%s2 + $0x15e0] sm:$0xff]
  %v1360 = vld [vmem:[%s2 + $0x15e8] sm:$0xff]
  %v1361 = vld [vmem:[%s2 + $0x15f0] sm:$0xff]
  %v1362 = vld [vmem:[%s2 + $0x15f8] sm:$0xff]
  %v1363 = vld [vmem:[%s2 + $0x1600] sm:$0xff]
  %v1364 = vld [vmem:[%s2 + $0x1608] sm:$0xff]
  %v1365 = vld [vmem:[%s2 + $0x1610] sm:$0xff]
  %v1366 = vld [vmem:[%s2 + $0x1618] sm:$0xff]
  %v1367 = vld [vmem:[%s2 + $0x1620] sm:$0xff]
  %v1368 = vld [vmem:[%s2 + $0x1628] sm:$0xff]
  %v1369 = vld [vmem:[%s2 + $0x1630] sm:$0xff]
  %v1370 = vld [vmem:[%s2 + $0x1638] sm:$0xff]
  %v1371 = vld [vmem:[%s2 + $0x1640] sm:$0xff]
  %v1372 = vld [vmem:[%s2 + $0x1648] sm:$0xff]
  %v1373 = vld [vmem:[%s2 + $0x1650] sm:$0xff]
  %v1374 = vld [vmem:[%s2 + $0x1658] sm:$0xff]
  %v1375 = vld [vmem:[%s2 + $0x1660] sm:$0xff]
  %v1376 = vld [vmem:[%s2 + $0x1668] sm:$0xff]
  %v1377 = vld [vmem:[%s2 + $0x1670] sm:$0xff]
  %v1378 = vld [vmem:[%s2 + $0x1678] sm:$0xff]
  %v1379 = vld [vmem:[%s2 + $0x1680] sm:$0xff]
  %v1380 = vld [vmem:[%s2 + $0x1688] sm:$0xff]
  %v1381 = vld [vmem:[%s2 + $0x1690] sm:$0xff]
  %v1382 = vld [vmem:[%s2 + $0x1698] sm:$0xff]
  %v1383 = vld [vmem:[%s2 + $0x16a0] sm:$0xff]
  %v1384 = vld [vmem:[%s2 + $0x16a8] sm:$0xff]
  %v1385 = vld [vmem:[%s2 + $0x16b0] sm:$0xff]
  %v1386 = vld [vmem:[%s2 + $0x16b8] sm:$0xff]
  %v1387 = vld [vmem:[%s2 + $0x16c0] sm:$0xff]
  %v1388 = vld [vmem:[%s2 + $0x16c8] sm:$0xff]
  %v1389 = vld [vmem:[%s2 + $0x16d0] sm:$0xff]
  %v1390 = vld [vmem:[%s2 + $0x16d8] sm:$0xff]
  %v1391 = vld [vmem:[%s2 + $0x16e0] sm:$0xff]
  %v1392 = vld [vmem:[%s2 + $0x16e8] sm:$0xff]
  %v1393 = vld [vmem:[%s2 + $0x16f0] sm:$0xff]
  %v1394 = vld [vmem:[%s2 + $0x16f8] sm:$0xff]
  %v1395 = vld [vmem:[%s2 + $0x1700] sm:$0xff]
  %v1396 = vld [vmem:[%s2 + $0x1708] sm:$0xff]
  %v1397 = vld [vmem:[%s2 + $0x1710] sm:$0xff]
  %v1398 = vld [vmem:[%s2 + $0x1718] sm:$0xff]
  %v1399 = vld [vmem:[%s2 + $0x1720] sm:$0xff]
  %v1400 = vld [vmem:[%s2 + $0x1728] sm:$0xff]
  %v1401 = vld [vmem:[%s2 + $0x1730] sm:$0xff]
  %v1402 = vld [vmem:[%s2 + $0x1738] sm:$0xff]
  %v1403 = vld [vmem:[%s2 + $0x1740] sm:$0xff]
  %v1404 = vld [vmem:[%s2 + $0x1748] sm:$0xff]
  %v1405 = vld [vmem:[%s2 + $0x1750] sm:$0xff]
  %v1406 = vld [vmem:[%s2 + $0x1758] sm:$0xff]
  %v1407 = vld [vmem:[%s2 + $0x1760] sm:$0xff]
  %v1408 = vld [vmem:[%s2 + $0x1768] sm:$0xff]
  %v1409 = vld [vmem:[%s2 + $0x1770] sm:$0xff]
  %v1410 = vld [vmem:[%s2 + $0x1778] sm:$0xff]
  %v1411 = vld [vmem:[%s2 + $0x1780] sm:$0xff]
  %v1412 = vld [vmem:[%s2 + $0x1788] sm:$0xff]
  %v1413 = vld [vmem:[%s2 + $0x1790] sm:$0xff]
  %v1414 = vld [vmem:[%s2 + $0x1798] sm:$0xff]
  %v1415 = vld [vmem:[%s2 + $0x17a0] sm:$0xff]
  %v1416 = vld [vmem:[%s2 + $0x17a8] sm:$0xff]
  %v1417 = vld [vmem:[%s2 + $0x17b0] sm:$0xff]
  %v1418 = vld [vmem:[%s2 + $0x17b8] sm:$0xff]
  %v1419 = vld [vmem:[%s2 + $0x17c0] sm:$0xff]
  %v1420 = vld [vmem:[%s2 + $0x17c8] sm:$0xff]
  %v1421 = vld [vmem:[%s2 + $0x17d0] sm:$0xff]
  %v1422 = vld [vmem:[%s2 + $0x17d8] sm:$0xff]
  %v1423 = vld [vmem:[%s2 + $0x17e0] sm:$0xff]
  %v1424 = vld [vmem:[%s2 + $0x17e8] sm:$0xff]
  %v1425 = vld [vmem:[%s2 + $0x17f0] sm:$0xff]
  %v1426 = vld [vmem:[%s2 + $0x17f8] sm:$0xff]
  %v1427 = vld [vmem:[%s3] sm:$0xf]
  %v1429 = vlaneseq
  %v1430 = vshrl.u32 %v1429, 7
  %v1431 = vsub.s32 0, %v1430
  %v1432 = vrot.slane %v1427, %v1431
  %v1433 = vlaneseq
  %v1434 = vshrl.u32 %v1433, 7
  %v1435 = vsub.s32 1, %v1434
  %v1436 = vrot.slane %v1427, %v1435
  %v1437 = vlaneseq
  %v1438 = vshrl.u32 %v1437, 7
  %v1439 = vsub.s32 2, %v1438
  %v1440 = vrot.slane %v1427, %v1439
  %v1441 = vlaneseq
  %v1442 = vshrl.u32 %v1441, 7
  %v1443 = vsub.s32 3, %v1442
  %v1444 = vrot.slane %v1427, %v1443
  %1449 = vmatprep.subr.mxu0 %v660
  %1450 = vmatpush1.msra.mxu0 %v659
  %1451 = vmatprep.subr.mxu0 %v664
  %1452 = vmatpush1.msra.mxu0 %v663
  %1453 = vmatprep.subr.mxu0 %v668
  %1454 = vmatpush1.msra.mxu0 %v667
  %1455 = vmatprep.subr.mxu0 %v672
  %1456 = vmatpush1.msra.mxu0 %v671
  %1457 = vmatprep.subr.mxu0 %v676
  %1458 = vmatpush1.msra.mxu0 %v675
  %1459 = vmatprep.subr.mxu0 %v680
  %1460 = vmatpush1.msra.mxu0 %v679
  %1461 = vmatprep.subr.mxu0 %v684
  %1462 = vmatpush1.msra.mxu0 %v683
  %1463 = vmatprep.subr.mxu0 %v688
  %1464 = vmatpush1.msra.mxu0 %v687
  %1465 = vmatprep.subr.mxu0 %v692
  %1466 = vmatpush1.msra.mxu0 %v691
  %1467 = vmatprep.subr.mxu0 %v696
  %1468 = vmatpush1.msra.mxu0 %v695
  %1469 = vmatprep.subr.mxu0 %v700
  %1470 = vmatpush1.msra.mxu0 %v699
  %1471 = vmatprep.subr.mxu0 %v704
  %1472 = vmatpush1.msra.mxu0 %v703
  %1473 = vmatprep.subr.mxu0 %v708
  %1474 = vmatpush1.msra.mxu0 %v707
  %1475 = vmatprep.subr.mxu0 %v712
  %1476 = vmatpush1.msra.mxu0 %v711
  %1477 = vmatprep.subr.mxu0 %v716
  %1478 = vmatpush1.msra.mxu0 %v715
  %1479 = vmatprep.subr.mxu0 %v720
  %1480 = vmatpush1.msra.mxu0 %v719
  %1481 = vmatprep.subr.mxu0 %v724
  %1482 = vmatpush1.msra.mxu0 %v723
  %1483 = vmatprep.subr.mxu0 %v728
  %1484 = vmatpush1.msra.mxu0 %v727
  %1485 = vmatprep.subr.mxu0 %v732
  %1486 = vmatpush1.msra.mxu0 %v731
  %1487 = vmatprep.subr.mxu0 %v736
  %1488 = vmatpush1.msra.mxu0 %v735
  %1489 = vmatprep.subr.mxu0 %v740
  %1490 = vmatpush1.msra.mxu0 %v739
  %1491 = vmatprep.subr.mxu0 %v744
  %1492 = vmatpush1.msra.mxu0 %v743
  %1493 = vmatprep.subr.mxu0 %v748
  %1494 = vmatpush1.msra.mxu0 %v747
  %1495 = vmatprep.subr.mxu0 %v752
  %1496 = vmatpush1.msra.mxu0 %v751
  %1497 = vmatprep.subr.mxu0 %v756
  %1498 = vmatpush1.msra.mxu0 %v755
  %1499 = vmatprep.subr.mxu0 %v760
  %1500 = vmatpush1.msra.mxu0 %v759
  %1501 = vmatprep.subr.mxu0 %v764
  %1502 = vmatpush1.msra.mxu0 %v763
  %1503 = vmatprep.subr.mxu0 %v768
  %1504 = vmatpush1.msra.mxu0 %v767
  %1505 = vmatprep.subr.mxu0 %v772
  %1506 = vmatpush1.msra.mxu0 %v771
  %1507 = vmatprep.subr.mxu0 %v776
  %1508 = vmatpush1.msra.mxu0 %v775
  %1509 = vmatprep.subr.mxu0 %v780
  %1510 = vmatpush1.msra.mxu0 %v779
  %1511 = vmatprep.subr.mxu0 %v784
  %1512 = vmatpush1.msra.mxu0 %v783
  %1513 = vmatprep.mubr.f32.mxu0 %v648
  %1514 = vmatmul.mubr.f32.gmra.mrb[0].mxu0 %v647
  %v1515 = vpop.f32.mrb[0].mxu0
  %v1516 = vadd.f32 %v1432, %v1515
  %v1517 = vpop.f32.mrb[0].mxu0
  %v1518 = vadd.f32 %v1436, %v1517
  %1519 = vdwg.mxu0
  %1520 = vmatprep.subr.mxu0 %v788
  %1521 = vmatpush1.msra.mxu0 %v787
  %1522 = vmatprep.subr.mxu0 %v792
  %1523 = vmatpush1.msra.mxu0 %v791
  %1524 = vmatprep.subr.mxu0 %v796
  %1525 = vmatpush1.msra.mxu0 %v795
  %1526 = vmatprep.subr.mxu0 %v800
  %1527 = vmatpush1.msra.mxu0 %v799
  %1528 = vmatprep.subr.mxu0 %v804
  %1529 = vmatpush1.msra.mxu0 %v803
  %1530 = vmatprep.subr.mxu0 %v808
  %1531 = vmatpush1.msra.mxu0 %v807
  %1532 = vmatprep.subr.mxu0 %v812
  %1533 = vmatpush1.msra.mxu0 %v811
  %1534 = vmatprep.subr.mxu0 %v816
  %1535 = vmatpush1.msra.mxu0 %v815
  %1536 = vmatprep.subr.mxu0 %v820
  %1537 = vmatpush1.msra.mxu0 %v819
  %1538 = vmatprep.subr.mxu0 %v824
  %1539 = vmatpush1.msra.mxu0 %v823
  %1540 = vmatprep.subr.mxu0 %v828
  %1541 = vmatpush1.msra.mxu0 %v827
  %1542 = vmatprep.subr.mxu0 %v832
  %1543 = vmatpush1.msra.mxu0 %v831
  %1544 = vmatprep.subr.mxu0 %v836
  %1545 = vmatpush1.msra.mxu0 %v835
  %1546 = vmatprep.subr.mxu0 %v840
  %1547 = vmatpush1.msra.mxu0 %v839
  %1548 = vmatprep.subr.mxu0 %v844
  %1549 = vmatpush1.msra.mxu0 %v843
  %1550 = vmatprep.subr.mxu0 %v848
  %1551 = vmatpush1.msra.mxu0 %v847
  %1552 = vmatprep.subr.mxu0 %v852
  %1553 = vmatpush1.msra.mxu0 %v851
  %1554 = vmatprep.subr.mxu0 %v856
  %1555 = vmatpush1.msra.mxu0 %v855
  %1556 = vmatprep.subr.mxu0 %v860
  %1557 = vmatpush1.msra.mxu0 %v859
  %1558 = vmatprep.subr.mxu0 %v864
  %1559 = vmatpush1.msra.mxu0 %v863
  %1560 = vmatprep.subr.mxu0 %v868
  %1561 = vmatpush1.msra.mxu0 %v867
  %1562 = vmatprep.subr.mxu0 %v872
  %1563 = vmatpush1.msra.mxu0 %v871
  %1564 = vmatprep.subr.mxu0 %v876
  %1565 = vmatpush1.msra.mxu0 %v875
  %1566 = vmatprep.subr.mxu0 %v880
  %1567 = vmatpush1.msra.mxu0 %v879
  %1568 = vmatprep.subr.mxu0 %v884
  %1569 = vmatpush1.msra.mxu0 %v883
  %1570 = vmatprep.subr.mxu0 %v888
  %1571 = vmatpush1.msra.mxu0 %v887
  %1572 = vmatprep.subr.mxu0 %v892
  %1573 = vmatpush1.msra.mxu0 %v891
  %1574 = vmatprep.subr.mxu0 %v896
  %1575 = vmatpush1.msra.mxu0 %v895
  %1576 = vmatprep.subr.mxu0 %v900
  %1577 = vmatpush1.msra.mxu0 %v899
  %1578 = vmatprep.subr.mxu0 %v904
  %1579 = vmatpush1.msra.mxu0 %v903
  %1580 = vmatprep.subr.mxu0 %v908
  %1581 = vmatpush1.msra.mxu0 %v907
  %1582 = vmatprep.subr.mxu0 %v912
  %1583 = vmatpush1.msra.mxu0 %v911
  %1584 = vmatprep.mubr.f32.mxu0 %v650
  %1585 = vmatmul.mubr.f32.gmra.mrb[0].mxu0 %v649
  %v1586 = vpop.f32.mrb[0].mxu0
  %v1587 = vadd.f32 %v1516, %v1586
  %v1588 = vpop.f32.mrb[0].mxu0
  %v1589 = vadd.f32 %v1518, %v1588
  %1590 = vdwg.mxu0
  %1591 = vmatprep.subr.mxu0 %v916
  %1592 = vmatpush1.msra.mxu0 %v915
  %1593 = vmatprep.subr.mxu0 %v920
  %1594 = vmatpush1.msra.mxu0 %v919
  %1595 = vmatprep.subr.mxu0 %v924
  %1596 = vmatpush1.msra.mxu0 %v923
  %1597 = vmatprep.subr.mxu0 %v928
  %1598 = vmatpush1.msra.mxu0 %v927
  %1599 = vmatprep.subr.mxu0 %v932
  %1600 = vmatpush1.msra.mxu0 %v931
  %1601 = vmatprep.subr.mxu0 %v936
  %1602 = vmatpush1.msra.mxu0 %v935
  %1603 = vmatprep.subr.mxu0 %v940
  %1604 = vmatpush1.msra.mxu0 %v939
  %1605 = vmatprep.subr.mxu0 %v944
  %1606 = vmatpush1.msra.mxu0 %v943
  %1607 = vmatprep.subr.mxu0 %v948
  %1608 = vmatpush1.msra.mxu0 %v947
  %1609 = vmatprep.subr.mxu0 %v952
  %1610 = vmatpush1.msra.mxu0 %v951
  %1611 = vmatprep.subr.mxu0 %v956
  %1612 = vmatpush1.msra.mxu0 %v955
  %1613 = vmatprep.subr.mxu0 %v960
  %1614 = vmatpush1.msra.mxu0 %v959
  %1615 = vmatprep.subr.mxu0 %v964
  %1616 = vmatpush1.msra.mxu0 %v963
  %1617 = vmatprep.subr.mxu0 %v968
  %1618 = vmatpush1.msra.mxu0 %v967
  %1619 = vmatprep.subr.mxu0 %v972
  %1620 = vmatpush1.msra.mxu0 %v971
  %1621 = vmatprep.subr.mxu0 %v976
  %1622 = vmatpush1.msra.mxu0 %v975
  %1623 = vmatprep.subr.mxu0 %v980
  %1624 = vmatpush1.msra.mxu0 %v979
  %1625 = vmatprep.subr.mxu0 %v984
  %1626 = vmatpush1.msra.mxu0 %v983
  %1627 = vmatprep.subr.mxu0 %v988
  %1628 = vmatpush1.msra.mxu0 %v987
  %1629 = vmatprep.subr.mxu0 %v992
  %1630 = vmatpush1.msra.mxu0 %v991
  %1631 = vmatprep.subr.mxu0 %v996
  %1632 = vmatpush1.msra.mxu0 %v995
  %1633 = vmatprep.subr.mxu0 %v1000
  %1634 = vmatpush1.msra.mxu0 %v999
  %1635 = vmatprep.subr.mxu0 %v1004
  %1636 = vmatpush1.msra.mxu0 %v1003
  %1637 = vmatprep.subr.mxu0 %v1008
  %1638 = vmatpush1.msra.mxu0 %v1007
  %1639 = vmatprep.subr.mxu0 %v1012
  %1640 = vmatpush1.msra.mxu0 %v1011
  %1641 = vmatprep.subr.mxu0 %v1016
  %1642 = vmatpush1.msra.mxu0 %v1015
  %1643 = vmatprep.subr.mxu0 %v1020
  %1644 = vmatpush1.msra.mxu0 %v1019
  %1645 = vmatprep.subr.mxu0 %v1024
  %1646 = vmatpush1.msra.mxu0 %v1023
  %1647 = vmatprep.subr.mxu0 %v1028
  %1648 = vmatpush1.msra.mxu0 %v1027
  %1649 = vmatprep.subr.mxu0 %v1032
  %1650 = vmatpush1.msra.mxu0 %v1031
  %1651 = vmatprep.subr.mxu0 %v1036
  %1652 = vmatpush1.msra.mxu0 %v1035
  %1653 = vmatprep.subr.mxu0 %v1040
  %1654 = vmatpush1.msra.mxu0 %v1039
  %1655 = vmatprep.mubr.f32.mxu0 %v652
  %1656 = vmatmul.mubr.f32.gmra.mrb[0].mxu0 %v651
  %v1657 = vpop.f32.mrb[0].mxu0
  %v1658 = vadd.f32 %v1587, %v1657
  %v1659 = vpop.f32.mrb[0].mxu0
  %v1660 = vadd.f32 %v1589, %v1659
  %1661 = vdwg.mxu0
  %1662 = vmatprep.subr.mxu0 %v1044
  %1663 = vmatpush1.msra.mxu0 %v1043
  %1664 = vmatprep.subr.mxu0 %v1048
  %1665 = vmatpush1.msra.mxu0 %v1047
  %1666 = vmatprep.subr.mxu0 %v1052
  %1667 = vmatpush1.msra.mxu0 %v1051
  %1668 = vmatprep.subr.mxu0 %v1056
  %1669 = vmatpush1.msra.mxu0 %v1055
  %1670 = vmatprep.subr.mxu0 %v1060
  %1671 = vmatpush1.msra.mxu0 %v1059
  %1672 = vmatprep.subr.mxu0 %v1064
  %1673 = vmatpush1.msra.mxu0 %v1063
  %1674 = vmatprep.subr.mxu0 %v1068
  %1675 = vmatpush1.msra.mxu0 %v1067
  %1676 = vmatprep.subr.mxu0 %v1072
  %1677 = vmatpush1.msra.mxu0 %v1071
  %1678 = vmatprep.subr.mxu0 %v1076
  %1679 = vmatpush1.msra.mxu0 %v1075
  %1680 = vmatprep.subr.mxu0 %v1080
  %1681 = vmatpush1.msra.mxu0 %v1079
  %1682 = vmatprep.subr.mxu0 %v1084
  %1683 = vmatpush1.msra.mxu0 %v1083
  %1684 = vmatprep.subr.mxu0 %v1088
  %1685 = vmatpush1.msra.mxu0 %v1087
  %1686 = vmatprep.subr.mxu0 %v1092
  %1687 = vmatpush1.msra.mxu0 %v1091
  %1688 = vmatprep.subr.mxu0 %v1096
  %1689 = vmatpush1.msra.mxu0 %v1095
  %1690 = vmatprep.subr.mxu0 %v1100
  %1691 = vmatpush1.msra.mxu0 %v1099
  %1692 = vmatprep.subr.mxu0 %v1104
  %1693 = vmatpush1.msra.mxu0 %v1103
  %1694 = vmatprep.subr.mxu0 %v1108
  %1695 = vmatpush1.msra.mxu0 %v1107
  %1696 = vmatprep.subr.mxu0 %v1112
  %1697 = vmatpush1.msra.mxu0 %v1111
  %1698 = vmatprep.subr.mxu0 %v1116
  %1699 = vmatpush1.msra.mxu0 %v1115
  %1700 = vmatprep.subr.mxu0 %v1120
  %1701 = vmatpush1.msra.mxu0 %v1119
  %1702 = vmatprep.subr.mxu0 %v1124
  %1703 = vmatpush1.msra.mxu0 %v1123
  %1704 = vmatprep.subr.mxu0 %v1128
  %1705 = vmatpush1.msra.mxu0 %v1127
  %1706 = vmatprep.subr.mxu0 %v1132
  %1707 = vmatpush1.msra.mxu0 %v1131
  %1708 = vmatprep.subr.mxu0 %v1136
  %1709 = vmatpush1.msra.mxu0 %v1135
  %1710 = vmatprep.subr.mxu0 %v1140
  %1711 = vmatpush1.msra.mxu0 %v1139
  %1712 = vmatprep.subr.mxu0 %v1144
  %1713 = vmatpush1.msra.mxu0 %v1143
  %1714 = vmatprep.subr.mxu0 %v1148
  %1715 = vmatpush1.msra.mxu0 %v1147
  %1716 = vmatprep.subr.mxu0 %v1152
  %1717 = vmatpush1.msra.mxu0 %v1151
  %1718 = vmatprep.subr.mxu0 %v1156
  %1719 = vmatpush1.msra.mxu0 %v1155
  %1720 = vmatprep.subr.mxu0 %v1160
  %1721 = vmatpush1.msra.mxu0 %v1159
  %1722 = vmatprep.subr.mxu0 %v1164
  %1723 = vmatpush1.msra.mxu0 %v1163
  %1724 = vmatprep.subr.mxu0 %v1168
  %1725 = vmatpush1.msra.mxu0 %v1167
  %1726 = vmatprep.mubr.f32.mxu0 %v654
  %1727 = vmatmul.mubr.f32.gmra.mrb[0].mxu0 %v653
  %v1728 = vpop.f32.mrb[0].mxu0
  %v1729 = vadd.f32 %v1658, %v1728
  %v1730 = vpop.f32.mrb[0].mxu0
  %v1731 = vadd.f32 %v1660, %v1730
  %1732 = vdwg.mxu0
  %1733 = vmatprep.subr.mxu0 %v1172
  %1734 = vmatpush1.msra.mxu0 %v1171
  %1735 = vmatprep.subr.mxu0 %v1176
  %1736 = vmatpush1.msra.mxu0 %v1175
  %1737 = vmatprep.subr.mxu0 %v1180
  %1738 = vmatpush1.msra.mxu0 %v1179
  %1739 = vmatprep.subr.mxu0 %v1184
  %1740 = vmatpush1.msra.mxu0 %v1183
  %1741 = vmatprep.subr.mxu0 %v1188
  %1742 = vmatpush1.msra.mxu0 %v1187
  %1743 = vmatprep.subr.mxu0 %v1192
  %1744 = vmatpush1.msra.mxu0 %v1191
  %1745 = vmatprep.subr.mxu0 %v1196
  %1746 = vmatpush1.msra.mxu0 %v1195
  %1747 = vmatprep.subr.mxu0 %v1200
  %1748 = vmatpush1.msra.mxu0 %v1199
  %1749 = vmatprep.subr.mxu0 %v1204
  %1750 = vmatpush1.msra.mxu0 %v1203
  %1751 = vmatprep.subr.mxu0 %v1208
  %1752 = vmatpush1.msra.mxu0 %v1207
  %1753 = vmatprep.subr.mxu0 %v1212
  %1754 = vmatpush1.msra.mxu0 %v1211
  %1755 = vmatprep.subr.mxu0 %v1216
  %1756 = vmatpush1.msra.mxu0 %v1215
  %1757 = vmatprep.subr.mxu0 %v1220
  %1758 = vmatpush1.msra.mxu0 %v1219
  %1759 = vmatprep.subr.mxu0 %v1224
  %1760 = vmatpush1.msra.mxu0 %v1223
  %1761 = vmatprep.subr.mxu0 %v1228
  %1762 = vmatpush1.msra.mxu0 %v1227
  %1763 = vmatprep.subr.mxu0 %v1232
  %1764 = vmatpush1.msra.mxu0 %v1231
  %1765 = vmatprep.subr.mxu0 %v1236
  %1766 = vmatpush1.msra.mxu0 %v1235
  %1767 = vmatprep.subr.mxu0 %v1240
  %1768 = vmatpush1.msra.mxu0 %v1239
  %1769 = vmatprep.subr.mxu0 %v1244
  %1770 = vmatpush1.msra.mxu0 %v1243
  %1771 = vmatprep.subr.mxu0 %v1248
  %1772 = vmatpush1.msra.mxu0 %v1247
  %1773 = vmatprep.subr.mxu0 %v1252
  %1774 = vmatpush1.msra.mxu0 %v1251
  %1775 = vmatprep.subr.mxu0 %v1256
  %1776 = vmatpush1.msra.mxu0 %v1255
  %1777 = vmatprep.subr.mxu0 %v1260
  %1778 = vmatpush1.msra.mxu0 %v1259
  %1779 = vmatprep.subr.mxu0 %v1264
  %1780 = vmatpush1.msra.mxu0 %v1263
  %1781 = vmatprep.subr.mxu0 %v1268
  %1782 = vmatpush1.msra.mxu0 %v1267
  %1783 = vmatprep.subr.mxu0 %v1272
  %1784 = vmatpush1.msra.mxu0 %v1271
  %1785 = vmatprep.subr.mxu0 %v1276
  %1786 = vmatpush1.msra.mxu0 %v1275
  %1787 = vmatprep.subr.mxu0 %v1280
  %1788 = vmatpush1.msra.mxu0 %v1279
  %1789 = vmatprep.subr.mxu0 %v1284
  %1790 = vmatpush1.msra.mxu0 %v1283
  %1791 = vmatprep.subr.mxu0 %v1288
  %1792 = vmatpush1.msra.mxu0 %v1287
  %1793 = vmatprep.subr.mxu0 %v1292
  %1794 = vmatpush1.msra.mxu0 %v1291
  %1795 = vmatprep.subr.mxu0 %v1296
  %1796 = vmatpush1.msra.mxu0 %v1295
  %1797 = vmatprep.mubr.f32.mxu0 %v656
  %1798 = vmatmul.mubr.f32.gmra.mrb[0].mxu0 %v655
  %v1799 = vpop.f32.mrb[0].mxu0
  %v1800 = vadd.f32 %v1729, %v1799
  %v1801 = vpop.f32.mrb[0].mxu0
  %v1802 = vadd.f32 %v1731, %v1801
  %1803 = vdwg.mxu0
  %1804 = vmatprep.subr.mxu0 %v1300
  %1805 = vmatpush1.msra.mxu0 %v1299
  %1806 = vmatprep.subr.mxu0 %v1304
  %1807 = vmatpush1.msra.mxu0 %v1303
  %1808 = vmatprep.subr.mxu0 %v1308
  %1809 = vmatpush1.msra.mxu0 %v1307
  %1810 = vmatprep.subr.mxu0 %v1312
  %1811 = vmatpush1.msra.mxu0 %v1311
  %1812 = vmatprep.subr.mxu0 %v1316
  %1813 = vmatpush1.msra.mxu0 %v1315
  %1814 = vmatprep.subr.mxu0 %v1320
  %1815 = vmatpush1.msra.mxu0 %v1319
  %1816 = vmatprep.subr.mxu0 %v1324
  %1817 = vmatpush1.msra.mxu0 %v1323
  %1818 = vmatprep.subr.mxu0 %v1328
  %1819 = vmatpush1.msra.mxu0 %v1327
  %1820 = vmatprep.subr.mxu0 %v1332
  %1821 = vmatpush1.msra.mxu0 %v1331
  %1822 = vmatprep.subr.mxu0 %v1336
  %1823 = vmatpush1.msra.mxu0 %v1335
  %1824 = vmatprep.subr.mxu0 %v1340
  %1825 = vmatpush1.msra.mxu0 %v1339
  %1826 = vmatprep.subr.mxu0 %v1344
  %1827 = vmatpush1.msra.mxu0 %v1343
  %1828 = vmatprep.subr.mxu0 %v1348
  %1829 = vmatpush1.msra.mxu0 %v1347
  %1830 = vmatprep.subr.mxu0 %v1352
  %1831 = vmatpush1.msra.mxu0 %v1351
  %1832 = vmatprep.subr.mxu0 %v1356
  %1833 = vmatpush1.msra.mxu0 %v1355
  %1834 = vmatprep.subr.mxu0 %v1360
  %1835 = vmatpush1.msra.mxu0 %v1359
  %1836 = vmatprep.subr.mxu0 %v1364
  %1837 = vmatpush1.msra.mxu0 %v1363
  %1838 = vmatprep.subr.mxu0 %v1368
  %1839 = vmatpush1.msra.mxu0 %v1367
  %1840 = vmatprep.subr.mxu0 %v1372
  %1841 = vmatpush1.msra.mxu0 %v1371
  %1842 = vmatprep.subr.mxu0 %v1376
  %1843 = vmatpush1.msra.mxu0 %v1375
  %1844 = vmatprep.subr.mxu0 %v1380
  %1845 = vmatpush1.msra.mxu0 %v1379
  %1846 = vmatprep.subr.mxu0 %v1384
  %1847 = vmatpush1.msra.mxu0 %v1383
  %1848 = vmatprep.subr.mxu0 %v1388
  %1849 = vmatpush1.msra.mxu0 %v1387
  %1850 = vmatprep.subr.mxu0 %v1392
  %1851 = vmatpush1.msra.mxu0 %v1391
  %1852 = vmatprep.subr.mxu0 %v1396
  %1853 = vmatpush1.msra.mxu0 %v1395
  %1854 = vmatprep.subr.mxu0 %v1400
  %1855 = vmatpush1.msra.mxu0 %v1399
  %1856 = vmatprep.subr.mxu0 %v1404
  %1857 = vmatpush1.msra.mxu0 %v1403
  %1858 = vmatprep.subr.mxu0 %v1408
  %1859 = vmatpush1.msra.mxu0 %v1407
  %1860 = vmatprep.subr.mxu0 %v1412
  %1861 = vmatpush1.msra.mxu0 %v1411
  %1862 = vmatprep.subr.mxu0 %v1416
  %1863 = vmatpush1.msra.mxu0 %v1415
  %1864 = vmatprep.subr.mxu0 %v1420
  %1865 = vmatpush1.msra.mxu0 %v1419
  %1866 = vmatprep.subr.mxu0 %v1424
  %1867 = vmatpush1.msra.mxu0 %v1423
  %1868 = vmatprep.mubr.f32.mxu0 %v658
  %1869 = vmatmul.mubr.f32.gmra.mrb[0].mxu0 %v657
  %v1870 = vpop.f32.mrb[0].mxu0
  %v1871 = vadd.f32 %v1800, %v1870
  %v1872 = vpop.f32.mrb[0].mxu0
  %v1873 = vadd.f32 %v1802, %v1872
  %1874 = vdwg.mxu0
  %1875 = vmatprep.subr.mxu0 %v662
  %1876 = vmatpush1.msra.mxu0 %v661
  %1877 = vmatprep.subr.mxu0 %v666
  %1878 = vmatpush1.msra.mxu0 %v665
  %1879 = vmatprep.subr.mxu0 %v670
  %1880 = vmatpush1.msra.mxu0 %v669
  %1881 = vmatprep.subr.mxu0 %v674
  %1882 = vmatpush1.msra.mxu0 %v673
  %1883 = vmatprep.subr.mxu0 %v678
  %1884 = vmatpush1.msra.mxu0 %v677
  %1885 = vmatprep.subr.mxu0 %v682
  %1886 = vmatpush1.msra.mxu0 %v681
  %1887 = vmatprep.subr.mxu0 %v686
  %1888 = vmatpush1.msra.mxu0 %v685
  %1889 = vmatprep.subr.mxu0 %v690
  %1890 = vmatpush1.msra.mxu0 %v689
  %1891 = vmatprep.subr.mxu0 %v694
  %1892 = vmatpush1.msra.mxu0 %v693
  %1893 = vmatprep.subr.mxu0 %v698
  %1894 = vmatpush1.msra.mxu0 %v697
  %1895 = vmatprep.subr.mxu0 %v702
  %1896 = vmatpush1.msra.mxu0 %v701
  %1897 = vmatprep.subr.mxu0 %v706
  %1898 = vmatpush1.msra.mxu0 %v705
  %1899 = vmatprep.subr.mxu0 %v710
  %1900 = vmatpush1.msra.mxu0 %v709
  %1901 = vmatprep.subr.mxu0 %v714
  %1902 = vmatpush1.msra.mxu0 %v713
  %1903 = vmatprep.subr.mxu0 %v718
  %1904 = vmatpush1.msra.mxu0 %v717
  %1905 = vmatprep.subr.mxu0 %v722
  %1906 = vmatpush1.msra.mxu0 %v721
  %1907 = vmatprep.subr.mxu0 %v726
  %1908 = vmatpush1.msra.mxu0 %v725
  %1909 = vmatprep.subr.mxu0 %v730
  %1910 = vmatpush1.msra.mxu0 %v729
  %1911 = vmatprep.subr.mxu0 %v734
  %1912 = vmatpush1.msra.mxu0 %v733
  %1913 = vmatprep.subr.mxu0 %v738
  %1914 = vmatpush1.msra.mxu0 %v737
  %1915 = vmatprep.subr.mxu0 %v742
  %1916 = vmatpush1.msra.mxu0 %v741
  %1917 = vmatprep.subr.mxu0 %v746
  %1918 = vmatpush1.msra.mxu0 %v745
  %1919 = vmatprep.subr.mxu0 %v750
  %1920 = vmatpush1.msra.mxu0 %v749
  %1921 = vmatprep.subr.mxu0 %v754
  %1922 = vmatpush1.msra.mxu0 %v753
  %1923 = vmatprep.subr.mxu0 %v758
  %1924 = vmatpush1.msra.mxu0 %v757
  %1925 = vmatprep.subr.mxu0 %v762
  %1926 = vmatpush1.msra.mxu0 %v761
  %1927 = vmatprep.subr.mxu0 %v766
  %1928 = vmatpush1.msra.mxu0 %v765
  %1929 = vmatprep.subr.mxu0 %v770
  %1930 = vmatpush1.msra.mxu0 %v769
  %1931 = vmatprep.subr.mxu0 %v774
  %1932 = vmatpush1.msra.mxu0 %v773
  %1933 = vmatprep.subr.mxu0 %v778
  %1934 = vmatpush1.msra.mxu0 %v777
  %1935 = vmatprep.subr.mxu0 %v782
  %1936 = vmatpush1.msra.mxu0 %v781
  %1937 = vmatprep.subr.mxu0 %v786
  %1938 = vmatpush1.msra.mxu0 %v785
  %1939 = vmatprep.mubr.f32.mxu0 %v648
  %1940 = vmatmul.mubr.f32.gmra.mrb[0].mxu0 %v647
  %v1941 = vpop.f32.mrb[0].mxu0
  %v1942 = vadd.f32 %v1440, %v1941
  %v1943 = vpop.f32.mrb[0].mxu0
  %v1944 = vadd.f32 %v1444, %v1943
  %1945 = vdwg.mxu0
  %1946 = vmatprep.subr.mxu0 %v790
  %1947 = vmatpush1.msra.mxu0 %v789
  %1948 = vmatprep.subr.mxu0 %v794
  %1949 = vmatpush1.msra.mxu0 %v793
  %1950 = vmatprep.subr.mxu0 %v798
  %1951 = vmatpush1.msra.mxu0 %v797
  %1952 = vmatprep.subr.mxu0 %v802
  %1953 = vmatpush1.msra.mxu0 %v801
  %1954 = vmatprep.subr.mxu0 %v806
  %1955 = vmatpush1.msra.mxu0 %v805
  %1956 = vmatprep.subr.mxu0 %v810
  %1957 = vmatpush1.msra.mxu0 %v809
  %1958 = vmatprep.subr.mxu0 %v814
  %1959 = vmatpush1.msra.mxu0 %v813
  %1960 = vmatprep.subr.mxu0 %v818
  %1961 = vmatpush1.msra.mxu0 %v817
  %1962 = vmatprep.subr.mxu0 %v822
  %1963 = vmatpush1.msra.mxu0 %v821
  %1964 = vmatprep.subr.mxu0 %v826
  %1965 = vmatpush1.msra.mxu0 %v825
  %1966 = vmatprep.subr.mxu0 %v830
  %1967 = vmatpush1.msra.mxu0 %v829
  %1968 = vmatprep.subr.mxu0 %v834
  %1969 = vmatpush1.msra.mxu0 %v833
  %1970 = vmatprep.subr.mxu0 %v838
  %1971 = vmatpush1.msra.mxu0 %v837
  %1972 = vmatprep.subr.mxu0 %v842
  %1973 = vmatpush1.msra.mxu0 %v841
  %1974 = vmatprep.subr.mxu0 %v846
  %1975 = vmatpush1.msra.mxu0 %v845
  %1976 = vmatprep.subr.mxu0 %v850
  %1977 = vmatpush1.msra.mxu0 %v849
  %1978 = vmatprep.subr.mxu0 %v854
  %1979 = vmatpush1.msra.mxu0 %v853
  %1980 = vmatprep.subr.mxu0 %v858
  %1981 = vmatpush1.msra.mxu0 %v857
  %1982 = vmatprep.subr.mxu0 %v862
  %1983 = vmatpush1.msra.mxu0 %v861
  %1984 = vmatprep.subr.mxu0 %v866
  %1985 = vmatpush1.msra.mxu0 %v865
  %1986 = vmatprep.subr.mxu0 %v870
  %1987 = vmatpush1.msra.mxu0 %v869
  %1988 = vmatprep.subr.mxu0 %v874
  %1989 = vmatpush1.msra.mxu0 %v873
  %1990 = vmatprep.subr.mxu0 %v878
  %1991 = vmatpush1.msra.mxu0 %v877
  %1992 = vmatprep.subr.mxu0 %v882
  %1993 = vmatpush1.msra.mxu0 %v881
  %1994 = vmatprep.subr.mxu0 %v886
  %1995 = vmatpush1.msra.mxu0 %v885
  %1996 = vmatprep.subr.mxu0 %v890
  %1997 = vmatpush1.msra.mxu0 %v889
  %1998 = vmatprep.subr.mxu0 %v894
  %1999 = vmatpush1.msra.mxu0 %v893
  %2000 = vmatprep.subr.mxu0 %v898
  %2001 = vmatpush1.msra.mxu0 %v897
  %2002 = vmatprep.subr.mxu0 %v902
  %2003 = vmatpush1.msra.mxu0 %v901
  %2004 = vmatprep.subr.mxu0 %v906
  %2005 = vmatpush1.msra.mxu0 %v905
  %2006 = vmatprep.subr.mxu0 %v910
  %2007 = vmatpush1.msra.mxu0 %v909
  %2008 = vmatprep.subr.mxu0 %v914
  %2009 = vmatpush1.msra.mxu0 %v913
  %2010 = vmatprep.mubr.f32.mxu0 %v650
  %2011 = vmatmul.mubr.f32.gmra.mrb[0].mxu0 %v649
  %v2012 = vpop.f32.mrb[0].mxu0
  %v2013 = vadd.f32 %v1942, %v2012
  %v2014 = vpop.f32.mrb[0].mxu0
  %v2015 = vadd.f32 %v1944, %v2014
  %2016 = vdwg.mxu0
  %2017 = vmatprep.subr.mxu0 %v918
  %2018 = vmatpush1.msra.mxu0 %v917
  %2019 = vmatprep.subr.mxu0 %v922
  %2020 = vmatpush1.msra.mxu0 %v921
  %2021 = vmatprep.subr.mxu0 %v926
  %2022 = vmatpush1.msra.mxu0 %v925
  %2023 = vmatprep.subr.mxu0 %v930
  %2024 = vmatpush1.msra.mxu0 %v929
  %2025 = vmatprep.subr.mxu0 %v934
  %2026 = vmatpush1.msra.mxu0 %v933
  %2027 = vmatprep.subr.mxu0 %v938
  %2028 = vmatpush1.msra.mxu0 %v937
  %2029 = vmatprep.subr.mxu0 %v942
  %2030 = vmatpush1.msra.mxu0 %v941
  %2031 = vmatprep.subr.mxu0 %v946
  %2032 = vmatpush1.msra.mxu0 %v945
  %2033 = vmatprep.subr.mxu0 %v950
  %2034 = vmatpush1.msra.mxu0 %v949
  %2035 = vmatprep.subr.mxu0 %v954
  %2036 = vmatpush1.msra.mxu0 %v953
  %2037 = vmatprep.subr.mxu0 %v958
  %2038 = vmatpush1.msra.mxu0 %v957
  %2039 = vmatprep.subr.mxu0 %v962
  %2040 = vmatpush1.msra.mxu0 %v961
  %2041 = vmatprep.subr.mxu0 %v966
  %2042 = vmatpush1.msra.mxu0 %v965
  %2043 = vmatprep.subr.mxu0 %v970
  %2044 = vmatpush1.msra.mxu0 %v969
  %2045 = vmatprep.subr.mxu0 %v974
  %2046 = vmatpush1.msra.mxu0 %v973
  %2047 = vmatprep.subr.mxu0 %v978
  %2048 = vmatpush1.msra.mxu0 %v977
  %2049 = vmatprep.subr.mxu0 %v982
  %2050 = vmatpush1.msra.mxu0 %v981
  %2051 = vmatprep.subr.mxu0 %v986
  %2052 = vmatpush1.msra.mxu0 %v985
  %2053 = vmatprep.subr.mxu0 %v990
  %2054 = vmatpush1.msra.mxu0 %v989
  %2055 = vmatprep.subr.mxu0 %v994
  %2056 = vmatpush1.msra.mxu0 %v993
  %2057 = vmatprep.subr.mxu0 %v998
  %2058 = vmatpush1.msra.mxu0 %v997
  %2059 = vmatprep.subr.mxu0 %v1002
  %2060 = vmatpush1.msra.mxu0 %v1001
  %2061 = vmatprep.subr.mxu0 %v1006
  %2062 = vmatpush1.msra.mxu0 %v1005
  %2063 = vmatprep.subr.mxu0 %v1010
  %2064 = vmatpush1.msra.mxu0 %v1009
  %2065 = vmatprep.subr.mxu0 %v1014
  %2066 = vmatpush1.msra.mxu0 %v1013
  %2067 = vmatprep.subr.mxu0 %v1018
  %2068 = vmatpush1.msra.mxu0 %v1017
  %2069 = vmatprep.subr.mxu0 %v1022
  %2070 = vmatpush1.msra.mxu0 %v1021
  %2071 = vmatprep.subr.mxu0 %v1026
  %2072 = vmatpush1.msra.mxu0 %v1025
  %2073 = vmatprep.subr.mxu0 %v1030
  %2074 = vmatpush1.msra.mxu0 %v1029
  %2075 = vmatprep.subr.mxu0 %v1034
  %2076 = vmatpush1.msra.mxu0 %v1033
  %2077 = vmatprep.subr.mxu0 %v1038
  %2078 = vmatpush1.msra.mxu0 %v1037
  %2079 = vmatprep.subr.mxu0 %v1042
  %2080 = vmatpush1.msra.mxu0 %v1041
  %2081 = vmatprep.mubr.f32.mxu0 %v652
  %2082 = vmatmul.mubr.f32.gmra.mrb[0].mxu0 %v651
  %v2083 = vpop.f32.mrb[0].mxu0
  %v2084 = vadd.f32 %v2013, %v2083
  %v2085 = vpop.f32.mrb[0].mxu0
  %v2086 = vadd.f32 %v2015, %v2085
  %2087 = vdwg.mxu0
  %2088 = vmatprep.subr.mxu0 %v1046
  %2089 = vmatpush1.msra.mxu0 %v1045
  %2090 = vmatprep.subr.mxu0 %v1050
  %2091 = vmatpush1.msra.mxu0 %v1049
  %2092 = vmatprep.subr.mxu0 %v1054
  %2093 = vmatpush1.msra.mxu0 %v1053
  %2094 = vmatprep.subr.mxu0 %v1058
  %2095 = vmatpush1.msra.mxu0 %v1057
  %2096 = vmatprep.subr.mxu0 %v1062
  %2097 = vmatpush1.msra.mxu0 %v1061
  %2098 = vmatprep.subr.mxu0 %v1066
  %2099 = vmatpush1.msra.mxu0 %v1065
  %2100 = vmatprep.subr.mxu0 %v1070
  %2101 = vmatpush1.msra.mxu0 %v1069
  %2102 = vmatprep.subr.mxu0 %v1074
  %2103 = vmatpush1.msra.mxu0 %v1073
  %2104 = vmatprep.subr.mxu0 %v1078
  %2105 = vmatpush1.msra.mxu0 %v1077
  %2106 = vmatprep.subr.mxu0 %v1082
  %2107 = vmatpush1.msra.mxu0 %v1081
  %2108 = vmatprep.subr.mxu0 %v1086
  %2109 = vmatpush1.msra.mxu0 %v1085
  %2110 = vmatprep.subr.mxu0 %v1090
  %2111 = vmatpush1.msra.mxu0 %v1089
  %2112 = vmatprep.subr.mxu0 %v1094
  %2113 = vmatpush1.msra.mxu0 %v1093
  %2114 = vmatprep.subr.mxu0 %v1098
  %2115 = vmatpush1.msra.mxu0 %v1097
  %2116 = vmatprep.subr.mxu0 %v1102
  %2117 = vmatpush1.msra.mxu0 %v1101
  %2118 = vmatprep.subr.mxu0 %v1106
  %2119 = vmatpush1.msra.mxu0 %v1105
  %2120 = vmatprep.subr.mxu0 %v1110
  %2121 = vmatpush1.msra.mxu0 %v1109
  %2122 = vmatprep.subr.mxu0 %v1114
  %2123 = vmatpush1.msra.mxu0 %v1113
  %2124 = vmatprep.subr.mxu0 %v1118
  %2125 = vmatpush1.msra.mxu0 %v1117
  %2126 = vmatprep.subr.mxu0 %v1122
  %2127 = vmatpush1.msra.mxu0 %v1121
  %2128 = vmatprep.subr.mxu0 %v1126
  %2129 = vmatpush1.msra.mxu0 %v1125
  %2130 = vmatprep.subr.mxu0 %v1130
  %2131 = vmatpush1.msra.mxu0 %v1129
  %2132 = vmatprep.subr.mxu0 %v1134
  %2133 = vmatpush1.msra.mxu0 %v1133
  %2134 = vmatprep.subr.mxu0 %v1138
  %2135 = vmatpush1.msra.mxu0 %v1137
  %2136 = vmatprep.subr.mxu0 %v1142
  %2137 = vmatpush1.msra.mxu0 %v1141
  %2138 = vmatprep.subr.mxu0 %v1146
  %2139 = vmatpush1.msra.mxu0 %v1145
  %2140 = vmatprep.subr.mxu0 %v1150
  %2141 = vmatpush1.msra.mxu0 %v1149
  %2142 = vmatprep.subr.mxu0 %v1154
  %2143 = vmatpush1.msra.mxu0 %v1153
  %2144 = vmatprep.subr.mxu0 %v1158
  %2145 = vmatpush1.msra.mxu0 %v1157
  %2146 = vmatprep.subr.mxu0 %v1162
  %2147 = vmatpush1.msra.mxu0 %v1161
  %2148 = vmatprep.subr.mxu0 %v1166
  %2149 = vmatpush1.msra.mxu0 %v1165
  %2150 = vmatprep.subr.mxu0 %v1170
  %2151 = vmatpush1.msra.mxu0 %v1169
  %2152 = vmatprep.mubr.f32.mxu0 %v654
  %2153 = vmatmul.mubr.f32.gmra.mrb[0].mxu0 %v653
  %v2154 = vpop.f32.mrb[0].mxu0
  %v2155 = vadd.f32 %v2084, %v2154
  %v2156 = vpop.f32.mrb[0].mxu0
  %v2157 = vadd.f32 %v2086, %v2156
  %2158 = vdwg.mxu0
  %2159 = vmatprep.subr.mxu0 %v1174
  %2160 = vmatpush1.msra.mxu0 %v1173
  %2161 = vmatprep.subr.mxu0 %v1178
  %2162 = vmatpush1.msra.mxu0 %v1177
  %2163 = vmatprep.subr.mxu0 %v1182
  %2164 = vmatpush1.msra.mxu0 %v1181
  %2165 = vmatprep.subr.mxu0 %v1186
  %2166 = vmatpush1.msra.mxu0 %v1185
  %2167 = vmatprep.subr.mxu0 %v1190
  %2168 = vmatpush1.msra.mxu0 %v1189
  %2169 = vmatprep.subr.mxu0 %v1194
  %2170 = vmatpush1.msra.mxu0 %v1193
  %2171 = vmatprep.subr.mxu0 %v1198
  %2172 = vmatpush1.msra.mxu0 %v1197
  %2173 = vmatprep.subr.mxu0 %v1202
  %2174 = vmatpush1.msra.mxu0 %v1201
  %2175 = vmatprep.subr.mxu0 %v1206
  %2176 = vmatpush1.msra.mxu0 %v1205
  %2177 = vmatprep.subr.mxu0 %v1210
  %2178 = vmatpush1.msra.mxu0 %v1209
  %2179 = vmatprep.subr.mxu0 %v1214
  %2180 = vmatpush1.msra.mxu0 %v1213
  %2181 = vmatprep.subr.mxu0 %v1218
  %2182 = vmatpush1.msra.mxu0 %v1217
  %2183 = vmatprep.subr.mxu0 %v1222
  %2184 = vmatpush1.msra.mxu0 %v1221
  %2185 = vmatprep.subr.mxu0 %v1226
  %2186 = vmatpush1.msra.mxu0 %v1225
  %2187 = vmatprep.subr.mxu0 %v1230
  %2188 = vmatpush1.msra.mxu0 %v1229
  %2189 = vmatprep.subr.mxu0 %v1234
  %2190 = vmatpush1.msra.mxu0 %v1233
  %2191 = vmatprep.subr.mxu0 %v1238
  %2192 = vmatpush1.msra.mxu0 %v1237
  %2193 = vmatprep.subr.mxu0 %v1242
  %2194 = vmatpush1.msra.mxu0 %v1241
  %2195 = vmatprep.subr.mxu0 %v1246
  %2196 = vmatpush1.msra.mxu0 %v1245
  %2197 = vmatprep.subr.mxu0 %v1250
  %2198 = vmatpush1.msra.mxu0 %v1249
  %2199 = vmatprep.subr.mxu0 %v1254
  %2200 = vmatpush1.msra.mxu0 %v1253
  %2201 = vmatprep.subr.mxu0 %v1258
  %2202 = vmatpush1.msra.mxu0 %v1257
  %2203 = vmatprep.subr.mxu0 %v1262
  %2204 = vmatpush1.msra.mxu0 %v1261
  %2205 = vmatprep.subr.mxu0 %v1266
  %2206 = vmatpush1.msra.mxu0 %v1265
  %2207 = vmatprep.subr.mxu0 %v1270
  %2208 = vmatpush1.msra.mxu0 %v1269
  %2209 = vmatprep.subr.mxu0 %v1274
  %2210 = vmatpush1.msra.mxu0 %v1273
  %2211 = vmatprep.subr.mxu0 %v1278
  %2212 = vmatpush1.msra.mxu0 %v1277
  %2213 = vmatprep.subr.mxu0 %v1282
  %2214 = vmatpush1.msra.mxu0 %v1281
  %2215 = vmatprep.subr.mxu0 %v1286
  %2216 = vmatpush1.msra.mxu0 %v1285
  %2217 = vmatprep.subr.mxu0 %v1290
  %2218 = vmatpush1.msra.mxu0 %v1289
  %2219 = vmatprep.subr.mxu0 %v1294
  %2220 = vmatpush1.msra.mxu0 %v1293
  %2221 = vmatprep.subr.mxu0 %v1298
  %2222 = vmatpush1.msra.mxu0 %v1297
  %2223 = vmatprep.mubr.f32.mxu0 %v656
  %2224 = vmatmul.mubr.f32.gmra.mrb[0].mxu0 %v655
  %v2225 = vpop.f32.mrb[0].mxu0
  %v2226 = vadd.f32 %v2155, %v2225
  %v2227 = vpop.f32.mrb[0].mxu0
  %v2228 = vadd.f32 %v2157, %v2227
  %2229 = vdwg.mxu0
  %2230 = vmatprep.subr.mxu0 %v1302
  %2231 = vmatpush1.msra.mxu0 %v1301
  %2232 = vmatprep.subr.mxu0 %v1306
  %2233 = vmatpush1.msra.mxu0 %v1305
  %2234 = vmatprep.subr.mxu0 %v1310
  %2235 = vmatpush1.msra.mxu0 %v1309
  %2236 = vmatprep.subr.mxu0 %v1314
  %2237 = vmatpush1.msra.mxu0 %v1313
  %2238 = vmatprep.subr.mxu0 %v1318
  %2239 = vmatpush1.msra.mxu0 %v1317
  %2240 = vmatprep.subr.mxu0 %v1322
  %2241 = vmatpush1.msra.mxu0 %v1321
  %2242 = vmatprep.subr.mxu0 %v1326
  %2243 = vmatpush1.msra.mxu0 %v1325
  %2244 = vmatprep.subr.mxu0 %v1330
  %2245 = vmatpush1.msra.mxu0 %v1329
  %2246 = vmatprep.subr.mxu0 %v1334
  %2247 = vmatpush1.msra.mxu0 %v1333
  %2248 = vmatprep.subr.mxu0 %v1338
  %2249 = vmatpush1.msra.mxu0 %v1337
  %2250 = vmatprep.subr.mxu0 %v1342
  %2251 = vmatpush1.msra.mxu0 %v1341
  %2252 = vmatprep.subr.mxu0 %v1346
  %2253 = vmatpush1.msra.mxu0 %v1345
  %2254 = vmatprep.subr.mxu0 %v1350
  %2255 = vmatpush1.msra.mxu0 %v1349
  %2256 = vmatprep.subr.mxu0 %v1354
  %2257 = vmatpush1.msra.mxu0 %v1353
  %2258 = vmatprep.subr.mxu0 %v1358
  %2259 = vmatpush1.msra.mxu0 %v1357
  %2260 = vmatprep.subr.mxu0 %v1362
  %2261 = vmatpush1.msra.mxu0 %v1361
  %2262 = vmatprep.subr.mxu0 %v1366
  %2263 = vmatpush1.msra.mxu0 %v1365
  %2264 = vmatprep.subr.mxu0 %v1370
  %2265 = vmatpush1.msra.mxu0 %v1369
  %2266 = vmatprep.subr.mxu0 %v1374
  %2267 = vmatpush1.msra.mxu0 %v1373
  %2268 = vmatprep.subr.mxu0 %v1378
  %2269 = vmatpush1.msra.mxu0 %v1377
  %2270 = vmatprep.subr.mxu0 %v1382
  %2271 = vmatpush1.msra.mxu0 %v1381
  %2272 = vmatprep.subr.mxu0 %v1386
  %2273 = vmatpush1.msra.mxu0 %v1385
  %2274 = vmatprep.subr.mxu0 %v1390
  %2275 = vmatpush1.msra.mxu0 %v1389
  %2276 = vmatprep.subr.mxu0 %v1394
  %2277 = vmatpush1.msra.mxu0 %v1393
  %2278 = vmatprep.subr.mxu0 %v1398
  %2279 = vmatpush1.msra.mxu0 %v1397
  %2280 = vmatprep.subr.mxu0 %v1402
  %2281 = vmatpush1.msra.mxu0 %v1401
  %2282 = vmatprep.subr.mxu0 %v1406
  %2283 = vmatpush1.msra.mxu0 %v1405
  %2284 = vmatprep.subr.mxu0 %v1410
  %2285 = vmatpush1.msra.mxu0 %v1409
  %2286 = vmatprep.subr.mxu0 %v1414
  %2287 = vmatpush1.msra.mxu0 %v1413
  %2288 = vmatprep.subr.mxu0 %v1418
  %2289 = vmatpush1.msra.mxu0 %v1417
  %2290 = vmatprep.subr.mxu0 %v1422
  %2291 = vmatpush1.msra.mxu0 %v1421
  %2292 = vmatprep.subr.mxu0 %v1426
  %2293 = vmatpush1.msra.mxu0 %v1425
  %2294 = vmatprep.mubr.f32.mxu0 %v658
  %2295 = vmatmul.mubr.f32.gmra.mrb[0].mxu0 %v657
  %v2296 = vpop.f32.mrb[0].mxu0
  %v2297 = vadd.f32 %v2226, %v2296
  %v2298 = vpop.f32.mrb[0].mxu0
  %v2299 = vadd.f32 %v2228, %v2298
  %2300 = vdwg.mxu0
  %vm2301 = vcmp.ge.f32.partialorder %v1871, 0.0
  %vm2302 = vcmp.ge.f32.partialorder %v1873, 0.0
  %vm2303 = vcmp.ge.f32.partialorder %v2297, 0.0
  %vm2304 = vcmp.ge.f32.partialorder %v2299, 0.0
  %v2305 = vmul.f32 %v1871, 0.2
  %v2306 = vmul.f32 %v1873, 0.2
  %v2307 = vmul.f32 %v2297, 0.2
  %v2308 = vmul.f32 %v2299, 0.2
  %v2309 = vsel %vm2301, %v1871, %v2305
  %v2310 = vsel %vm2302, %v1873, %v2306
  %v2311 = vsel %vm2303, %v2297, %v2307
  %v2312 = vsel %vm2304, %v2299, %v2308
  %v2313 = vld [vmem:[%s4] sm:$0xff]
  %v2314 = vld [vmem:[%s4 + $0x8] sm:$0xff]
  %v2315 = vld [vmem:[%s4 + $0x10] sm:$0xff]
  %v2316 = vld [vmem:[%s4 + $0x18] sm:$0xff]
  %v2317 = vmul.f32 %v2309, %v2313
  %v2318 = vmul.f32 %v2310, %v2314
  %v2319 = vmul.f32 %v2311, %v2315
  %v2320 = vmul.f32 %v2312, %v2316
  %v2321 = vadd.f32 %v2317, %v2318
  %v2322 = vadd.f32 %v2321, %v2319
  %v2323 = vadd.f32 %v2322, %v2320
  %2324 = vadd.xlane.f32.xlu0 %v2323
  %v2325 = vpop.xlane.xlu0 %2324
  %v2326 = vld [vmem:[%s5] sm:$0x3]
  %vm2327 = vcmask 64512
  %v2329 = vsel %vm2327, %v2326, 0
  %2331 = vmatprep.subr.mxu0 0.0
  %2332 = vmatpush1.msra.mxu0 %v2325
  %2333 = vmatprep.subr.mxu0 0.0
  %2334 = vmatpush1.msra.mxu0 0.0
  %2335 = vmatprep.subr.mxu0 0.0
  %2336 = vmatpush1.msra.mxu0 0.0
  %2337 = vmatprep.subr.mxu0 0.0
  %2338 = vmatpush1.msra.mxu0 0.0
  %2339 = vmatprep.subr.mxu0 0.0
  %2340 = vmatpush1.msra.mxu0 0.0
  %2341 = vmatprep.subr.mxu0 0.0
  %2342 = vmatpush1.msra.mxu0 0.0
  %2343 = vmatprep.subr.mxu0 0.0
  %2344 = vmatpush1.msra.mxu0 0.0
  %2345 = vmatprep.subr.mxu0 0.0
  %2346 = vmatpush1.msra.mxu0 0.0
  %2347 = vmatprep.subr.mxu0 0.0
  %2348 = vmatpush1.msra.mxu0 0.0
  %2349 = vmatprep.subr.mxu0 0.0
  %2350 = vmatpush1.msra.mxu0 0.0
  %2351 = vmatprep.subr.mxu0 0.0
  %2352 = vmatpush1.msra.mxu0 0.0
  %2353 = vmatprep.subr.mxu0 0.0
  %2354 = vmatpush1.msra.mxu0 0.0
  %2355 = vmatprep.subr.mxu0 0.0
  %2356 = vmatpush1.msra.mxu0 0.0
  %2357 = vmatprep.subr.mxu0 0.0
  %2358 = vmatpush1.msra.mxu0 0.0
  %2359 = vmatprep.subr.mxu0 0.0
  %2360 = vmatpush1.msra.mxu0 0.0
  %2361 = vmatprep.subr.mxu0 0.0
  %2362 = vmatpush1.msra.mxu0 0.0
  %2363 = vmatprep.subr.mxu0 0.0
  %2364 = vmatpush1.msra.mxu0 0.0
  %2365 = vmatprep.subr.mxu0 0.0
  %2366 = vmatpush1.msra.mxu0 0.0
  %2367 = vmatprep.subr.mxu0 0.0
  %2368 = vmatpush1.msra.mxu0 0.0
  %2369 = vmatprep.subr.mxu0 0.0
  %2370 = vmatpush1.msra.mxu0 0.0
  %2371 = vmatprep.subr.mxu0 0.0
  %2372 = vmatpush1.msra.mxu0 0.0
  %2373 = vmatprep.subr.mxu0 0.0
  %2374 = vmatpush1.msra.mxu0 0.0
  %2375 = vmatprep.subr.mxu0 0.0
  %2376 = vmatpush1.msra.mxu0 0.0
  %2377 = vmatprep.subr.mxu0 0.0
  %2378 = vmatpush1.msra.mxu0 0.0
  %2379 = vmatprep.subr.mxu0 0.0
  %2380 = vmatpush1.msra.mxu0 0.0
  %2381 = vmatprep.subr.mxu0 0.0
  %2382 = vmatpush1.msra.mxu0 0.0
  %2383 = vmatprep.subr.mxu0 0.0
  %2384 = vmatpush1.msra.mxu0 0.0
  %2385 = vmatprep.subr.mxu0 0.0
  %2386 = vmatpush1.msra.mxu0 0.0
  %2387 = vmatprep.subr.mxu0 0.0
  %2388 = vmatpush1.msra.mxu0 0.0
  %2389 = vmatprep.subr.mxu0 0.0
  %2390 = vmatpush1.msra.mxu0 0.0
  %2391 = vmatprep.subr.mxu0 0.0
  %2392 = vmatpush1.msra.mxu0 0.0
  %2393 = vmatprep.subr.mxu0 0.0
  %2394 = vmatpush1.msra.mxu0 0.0
  %2395 = vmatprep.mubr.f32.mxu0 0.0
  %2396 = vmatmul.mubr.f32.gmra.mrb[0].mxu0 %v2329
  %v2397 = vpop.f32.mrb[0].mxu0
  %v2398 = vadd.f32 0.0, %v2397
  %v2399 = vpop.f32.mrb[0].mxu0
  %2400 = vdwg.mxu0
  %v2401 = vxor.u32 %v2398, 2147483648
  %v2402 = vmul.f32 %v2401, 1.442695
  %v2403 = vpow.pop %v2402
  %v2404 = vadd.f32 %v2403, 1.0
  %v2405 = vrcp.pop %v2404
  %v2406 = vmul.f32 1.0, %v2405
  %vm2407 = vcmask 1024
  %2408 = vst.msk [vmem:[%s6] sm:$0x3] %vm2407, %v2406
  // Predicated region
  $region26: #{discriminator_forward.9} parent=0 // pred_check
    _
  $region27: #{discriminator_forward.9} parent=0 // pred_check_branch
    %2410 = sbr.rel (0) target = $region29
  $region28: #{discriminator_forward.9} parent=0 // pred_region
    _
  $region29: #{discriminator_forward.9} parent=0 // pred_fallthru
    _
  // Predicated region
  $region30: #{discriminator_forward.9} parent=0 // pred_check
    _
  $region31: #{discriminator_forward.9} parent=0 // pred_check_branch
    %2412 = sbr.rel (0) target = $region33
  $region32: #{discriminator_forward.9} parent=0 // pred_region
    _
  $region33: #{discriminator_forward.9} parent=0 // pred_fallthru
    _

</llo_original>
